<compile_context>
chip_gen: v7x
topology: tpu7x:2x2x1
jax: 0.10.0
libtpu: 0.0.40
codegen_flags: <defaults>
</compile_context>

<pallas_src>
import functools

import jax
import jax.numpy as jnp
from jax.experimental import pallas as pl
from jax.experimental.pallas import tpu as pltpu

_LEAKY_SLOPE = 0.1
_VMEM_LIMIT_BYTES = 32 * 1024 * 1024
# ~2M bf16 elements (~4 MiB) per block before double-buffering.  Do NOT grow
# this with a 128 MiB mindset: v7x only has 64 MiB of physical VMEM.
_BLOCK_BUDGET_ELEMS = 2 * 1024 * 1024


def _round_up(x, m):
    return (x + m - 1) // m * m


# ----------------------------------------------------------------------------
# Static tiling plan (pure Python, derived from static shapes only)
# ----------------------------------------------------------------------------
def _choose_tk(kp0, max_tk, min_steps=4):
    """Largest multiple-of-128 divisor of kp0 that is <= max_tk and leaves at
    least `min_steps` K-grid steps (so the weight/activation stream pipelines);
    falls back to the largest fitting divisor when kp0 is too small."""
    max_tk = max(128, max_tk)
    units = kp0 // 128
    cands = [128 * d for d in range(1, units + 1) if units % d == 0]
    pipelined = [t for t in cands if t <= max_tk and kp0 // t >= min_steps]
    if pipelined:
        return max(pipelined)
    fitting = [t for t in cands if t <= max_tk]
    return max(fitting) if fitting else 128


def _plan_kn(K, N):
    np0 = _round_up(N, 128)
    tn = np0 if np0 <= 512 else 512          # N=1024 -> two parallel N tiles
    Np = _round_up(np0, tn)
    kp0 = _round_up(K, 128)
    tk = _choose_tk(kp0, min(16384, _BLOCK_BUDGET_ELEMS // tn))
    Kp = _round_up(kp0, tk)
    return tk, tn, Kp, Np


def _plan_m(M, tk):
    """Balanced M tiles; even tile count (when split) for v7x megacore."""
    mp0 = _round_up(M, 8)
    if mp0 <= 128:
        ntiles = 1
    else:
        ntiles = -(-mp0 // 512)              # ~<=512 rows per tile
        ntiles += ntiles % 2                 # even tile count for 2 TCs
    tm = _round_up(-(-mp0 // ntiles), 8)
    cap = max(8, (_BLOCK_BUDGET_ELEMS // tk) // 8 * 8)
    tm = min(tm, cap)
    Mp = _round_up(mp0, tm)
    return tm, Mp


# ----------------------------------------------------------------------------
# Pallas kernel: y = act((x @ W) * scale + b), K-tiled, f32 VMEM accumulator.
# W may be bf16 (scale == 1) or int8 (dequantized to bf16 before the MXU,
# per-output-channel scale applied once in the epilogue).
# ----------------------------------------------------------------------------
def _mm_bias_act_kernel(x_ref, w_ref, s_ref, b_ref, o_ref, acc_ref, *, act):
    k = pl.program_id(2)

    @pl.when(k == 0)
    def _():
        acc_ref[...] = jnp.zeros_like(acc_ref)

    acc_ref[...] += jnp.dot(x_ref[...], w_ref[...].astype(jnp.bfloat16),
                            preferred_element_type=jnp.float32)

    @pl.when(k == pl.num_programs(2) - 1)
    def _():
        y = acc_ref[...] * s_ref[...] + b_ref[...]
        if act == "leaky_relu":
            y = jnp.where(y > 0, y, _LEAKY_SLOPE * y)
        elif act == "tanh":
            y = jnp.tanh(y)
        o_ref[...] = y.astype(o_ref.dtype)


def matmul_bias_act(patches, wq, sq, bq, *, act, out_dtype):
    """act((patches @ W) * scale + b) with pre-packed weight/scale/bias.

    Returns the (Mp, Np) padded result; caller slices rows/channels."""
    M, K = patches.shape
    Kp, Np = wq.shape
    tk, tn, Kp2, Np2 = _plan_kn(Kp, Np)      # identical to the prep-time plan
    assert (Kp2, Np2) == (Kp, Np), ((Kp2, Np2), (Kp, Np))
    tm, Mp = _plan_m(M, tk)

    patches = patches.astype(jnp.bfloat16)
    if (M, K) != (Mp, Kp):                   # <=14 pad rows; K pad only conv1
        patches = jnp.pad(patches, ((0, Mp - M), (0, Kp - K)))

    out = pl.pallas_call(
        functools.partial(_mm_bias_act_kernel, act=act),
        out_shape=jax.ShapeDtypeStruct((Mp, Np), out_dtype),
        grid_spec=pltpu.PrefetchScalarGridSpec(
            num_scalar_prefetch=0,
            grid=(Mp // tm, Np // tn, Kp // tk),
            in_specs=[
                pl.BlockSpec((tm, tk), lambda i, j, k: (i, k)),
                pl.BlockSpec((tk, tn), lambda i, j, k: (k, j)),
                pl.BlockSpec((1, tn), lambda i, j, k: (0, j)),
                pl.BlockSpec((1, tn), lambda i, j, k: (0, j)),
            ],
            out_specs=pl.BlockSpec((tm, tn), lambda i, j, k: (i, j)),
            scratch_shapes=[pltpu.VMEM((tm, tn), jnp.float32)],
        ),
        compiler_params=pltpu.CompilerParams(
            dimension_semantics=("parallel", "parallel", "arbitrary"),
            vmem_limit_bytes=_VMEM_LIMIT_BYTES,
        ),
    )(patches, wq, sq, bq)
    return out


# ----------------------------------------------------------------------------
# Fused conv4 + flatten + linear + tanh kernel (tail GEMM runs in-VMEM)
# ----------------------------------------------------------------------------
def _conv4_linear_kernel(x_ref, w4_ref, s4_ref, b4_ref, wl_ref, bl_ref,
                         o_ref, acc_ref):
    k = pl.program_id(0)

    @pl.when(k == 0)
    def _():
        acc_ref[...] = jnp.zeros_like(acc_ref)

    acc_ref[...] += jnp.dot(x_ref[...], w4_ref[...].astype(jnp.bfloat16),
                            preferred_element_type=jnp.float32)

    @pl.when(k == pl.num_programs(0) - 1)
    def _():
        h = acc_ref[...] * s4_ref[...] + b4_ref[...]        # dequant + bias
        h = jnp.where(h > 0, h, _LEAKY_SLOPE * h)           # leaky_relu(conv4)
        y = jnp.dot(h, wl_ref[...], preferred_element_type=jnp.float32)
        o_ref[...] = jnp.tanh(y + bl_ref[...]).astype(o_ref.dtype)


def conv4_linear_tanh(h, w4q, s4q, b4q, wlq, blq, *, code_dim):
    """h: (B,5,5,1024) NHWC.  conv4 (k5,s2,p0) has kernel == spatial extent, so
    its im2col patch matrix is exactly the NHWC flatten (a pure reshape)."""
    B = h.shape[0]
    assert h.shape[1:] == (5, 5, 1024), h.shape
    patches = h.reshape(B, 5 * 5 * 1024)                    # (B, 25600) bf16
    M, K = patches.shape
    Kp, Np4 = w4q.shape
    assert Kp == K, (Kp, K)
    Npl = wlq.shape[1]
    tk = _choose_tk(Kp, 3200)                               # 8 K steps
    Mp = _round_up(M, 8)
    xp = jnp.pad(patches, ((0, Mp - M), (0, 0)))            # +6 rows only

    out = pl.pallas_call(
        _conv4_linear_kernel,
        out_shape=jax.ShapeDtypeStruct((Mp, Npl), jnp.float32),
        grid_spec=pltpu.PrefetchScalarGridSpec(
            num_scalar_prefetch=0,
            grid=(Kp // tk,),
            in_specs=[
                pl.BlockSpec((Mp, tk), lambda k: (0, k)),
                pl.BlockSpec((tk, Np4), lambda k: (k, 0)),
                pl.BlockSpec((1, Np4), lambda k: (0, 0)),
                pl.BlockSpec((1, Np4), lambda k: (0, 0)),
                pl.BlockSpec((Np4, Npl), lambda k: (0, 0)),
                pl.BlockSpec((1, Npl), lambda k: (0, 0)),
            ],
            out_specs=pl.BlockSpec((Mp, Npl), lambda k: (0, 0)),
            scratch_shapes=[pltpu.VMEM((Mp, Np4), jnp.float32)],
        ),
        compiler_params=pltpu.CompilerParams(
            dimension_semantics=("arbitrary",),
            vmem_limit_bytes=_VMEM_LIMIT_BYTES,
        ),
    )(xp, w4q, s4q, b4q, wlq, blq)
    return out[:B, :code_dim]


# ----------------------------------------------------------------------------
# Conv2d = im2col (XLA glue, bf16) + fused Pallas matmul/scale/bias/leaky_relu
# ----------------------------------------------------------------------------
def _im2col(x, kh, kw, stride, pad):
    # layout: NHWC
    B, H, W, C = x.shape
    if pad:
        x = jnp.pad(x, ((0, 0), (pad, pad), (pad, pad), (0, 0)))
    Hp, Wp = H + 2 * pad, W + 2 * pad
    oh = (Hp - kh) // stride + 1
    ow = (Wp - kw) // stride + 1
    cols = []
    for i in range(kh):
        for j in range(kw):
            cols.append(x[:, i:i + stride * oh:stride, j:j + stride * ow:stride, :])
    patches = jnp.stack(cols, axis=3)                        # (B,oh,ow,kh*kw,C)
    return patches.reshape(B * oh * ow, kh * kw * C), oh, ow


def conv2d_leaky(x, wq, sq, bq, *, kh, kw, stride, pad, out_channels):
    B = x.shape[0]
    patches, oh, ow = _im2col(x, kh, kw, stride, pad)
    M = B * oh * ow
    y = matmul_bias_act(patches, wq, sq, bq, act="leaky_relu",
                        out_dtype=jnp.bfloat16)
    return y[:M, :out_channels].reshape(B, oh, ow, out_channels)


# ----------------------------------------------------------------------------
# Parameters (deterministic, PyTorch-default-style uniform init) + packing
# ----------------------------------------------------------------------------
def _conv_params(key, oc, ic, kh, kw):
    k1, k2 = jax.random.split(key)
    bound = 1.0 / float(jnp.sqrt(ic * kh * kw))
    w = jax.random.uniform(k1, (oc, ic, kh, kw), jnp.float32, -bound, bound)
    b = jax.random.uniform(k2, (oc,), jnp.float32, -bound, bound)
    return w, b


def _linear_params(key, out_f, in_f):
    k1, k2 = jax.random.split(key)
    bound = 1.0 / float(jnp.sqrt(in_f))
    w = jax.random.uniform(k1, (out_f, in_f), jnp.float32, -bound, bound)
    b = jax.random.uniform(k2, (out_f,), jnp.float32, -bound, bound)
    return w, b


def init_params(key, code_dim):
    k1, k2, k3, k4, k5 = jax.random.split(key, 5)
    p = {}
    p["w1"], p["b1"] = _conv_params(k1, 64, 1, 6, 6)
    p["w2"], p["b2"] = _conv_params(k2, 128, 64, 7, 7)
    p["w3"], p["b3"] = _conv_params(k3, 1024, 128, 7, 7)
    p["w4"], p["b4"] = _conv_params(k4, 128, 1024, 5, 5)
    p["wl"], p["bl"] = _linear_params(k5, code_dim, 128)
    return p


def _quantize_int8(wmat):
    """Per-output-channel symmetric int8 quantization of a (K, N) matrix."""
    absmax = jnp.max(jnp.abs(wmat), axis=0, keepdims=True)       # (1, N)
    scale = jnp.maximum(absmax, 1e-8) / 127.0
    q = jnp.clip(jnp.round(wmat / scale), -127, 127).astype(jnp.int8)
    return q, scale.astype(jnp.float32)


def _prep_conv_weight(w, b, *, ic_pad=None, quantize=False):
    """Torch (OC,IC,KH,KW) -> matmul-ready (Kp,Np) weight + (1,Np) scale/bias.

    ic_pad: optionally zero-pad IC (conv2 consumes conv1's 128-ch padded
    output, so its K becomes 128-aligned and no activation K pad is needed).
    quantize: store the weight int8 (halves the HBM weight stream); the kernel
    dequantizes to bf16 in-VMEM and applies the scale in the f32 epilogue."""
    OC, IC, KH, KW = w.shape
    icp = IC if ic_pad is None else ic_pad
    wmat = jnp.transpose(w, (2, 3, 1, 0))                        # (KH,KW,IC,OC)
    if icp != IC:
        wmat = jnp.pad(wmat, ((0, 0), (0, 0), (0, icp - IC), (0, 0)))
    K, N = KH * KW * icp, OC
    wmat = wmat.reshape(K, N)
    _tk, _tn, Kp, Np = _plan_kn(K, N)
    wpad = jnp.zeros((Kp, Np), jnp.float32).at[:K, :N].set(wmat)
    bq = jnp.zeros((1, Np), jnp.float32).at[0, :N].set(b)
    if quantize:
        wq, sq = _quantize_int8(wpad)
    else:
        wq = wpad.astype(jnp.bfloat16)
        sq = jnp.ones((1, Np), jnp.float32)
    return wq, sq, bq


def prepare_params(params):
    """One-time weight packing (transpose/pad/quantize) hoisted out of forward."""
    prep = {}
    # conv1: output channels kept zero-padded to 128 (extras stay exactly 0).
    prep["w1"], prep["s1"], prep["b1"] = _prep_conv_weight(params["w1"], params["b1"])
    # conv2: IC padded 64->128 so its im2col K (=6272) is 128-aligned.
    prep["w2"], prep["s2"], prep["b2"] = _prep_conv_weight(params["w2"], params["b2"],
                                                           ic_pad=128)
    # conv3/conv4 dominate the weight stream -> int8 + per-channel scale.
    prep["w3"], prep["s3"], prep["b3"] = _prep_conv_weight(params["w3"], params["b3"],
                                                           quantize=True)
    prep["w4"], prep["s4"], prep["b4"] = _prep_conv_weight(params["w4"], params["b4"],
                                                           quantize=True)
    # linear weight kept f32 (tiny) for accuracy in the fused tail GEMM
    wl, bl = params["wl"], params["bl"]                          # (code_dim,128)
    out_f, in_f = wl.shape
    npl = _round_up(out_f, 128)
    prep["wl"] = jnp.zeros((in_f, npl), jnp.float32).at[:, :out_f].set(wl.T)
    prep["bl"] = jnp.zeros((1, npl), jnp.float32).at[0, :out_f].set(bl)
    return prep


# ----------------------------------------------------------------------------
# Full forward pass (Pallas) and a pure-JAX f32 reference
# ----------------------------------------------------------------------------
def embedding_forward(x, prep, *, code_dim):
    B = x.shape[0]
    # x.view(B,1,4,50,50).sum(2) -> (B,1,50,50); cast to bf16 once, stay bf16.
    h = x.reshape(B, 1, 4, 50, 50).sum(axis=2)
    h = jnp.transpose(h, (0, 2, 3, 1)).astype(jnp.bfloat16)     # NHWC (B,50,50,1)
    h = conv2d_leaky(h, prep["w1"], prep["s1"], prep["b1"],
                     kh=6, kw=6, stride=2, pad=0, out_channels=128)  # 64 real + 64 zero
    h = conv2d_leaky(h, prep["w2"], prep["s2"], prep["b2"],
                     kh=7, kw=7, stride=2, pad=2, out_channels=128)
    h = conv2d_leaky(h, prep["w3"], prep["s3"], prep["b3"],
                     kh=7, kw=7, stride=2, pad=2, out_channels=1024)
    # conv4 + flatten + linear + tanh fused into a single pallas_call
    return conv4_linear_tanh(h, prep["w4"], prep["s4"], prep["b4"],
                             prep["wl"], prep["bl"], code_dim=code_dim)


def embedding_forward_ref(x, params):
    """Pure-JAX f32 reference of the PyTorch module (for tolerance testing)."""
    B = x.shape[0]
    h = x.reshape(B, 1, 4, 50, 50).sum(axis=2)                  # NCHW (B,1,50,50)

    def conv(h, w, b, stride, pad):
        y = jax.lax.conv_general_dilated(
            h, w, (stride, stride), [(pad, pad), (pad, pad)],
            dimension_numbers=("NCHW", "OIHW", "NCHW"))
        return y + b[None, :, None, None]

    h = jax.nn.leaky_relu(conv(h, params["w1"], params["b1"], 2, 0), 0.1)
    h = jax.nn.leaky_relu(conv(h, params["w2"], params["b2"], 2, 2), 0.1)
    h = jax.nn.leaky_relu(conv(h, params["w3"], params["b3"], 2, 2), 0.1)
    h = jax.nn.leaky_relu(conv(h, params["w4"], params["b4"], 2, 0), 0.1)
    h = h.reshape(B, -1)
    return jnp.tanh(h @ params["wl"].T + params["bl"])


if __name__ == "__main__":
    code_dim = 16
    key = jax.random.PRNGKey(0)
    kx, kp = jax.random.split(key)

    # The module's forward implies an input reshapeable to (B,1,4,50,50).
    x = jax.random.normal(kx, (2, 4, 50, 50), jnp.float32)
    params = init_params(kp, code_dim)
    prep = prepare_params(params)                # one-time weight packing

    fwd = jax.jit(functools.partial(embedding_forward, code_dim=code_dim))
    out = jax.block_until_ready(fwd(x, prep))

    assert out.shape == (2, code_dim), out.shape
    assert bool(jnp.all(jnp.isfinite(out)))
    assert bool(jnp.all(jnp.abs(out) <= 1.0))    # tanh range

    # Loose-tolerance check vs. the f32 reference (bf16 activations + int8
    # conv3/conv4 weights drift slightly; outputs here are O(0.03)).
    ref = embedding_forward_ref(x, params)
    max_err = float(jnp.max(jnp.abs(out - ref)))
    assert max_err < 5e-2, f"max abs diff vs f32 reference: {max_err}"

    print("KERNEL_OK")
</pallas_src>

<mosaic_0001>
module attributes {stable_mosaic.version = 11 : i64} {
  func.func @_mm_bias_act_kernel(%arg0: i32, %arg1: i32, %arg2: i32, %arg3: memref<272x128xbf16, #tpu.memory_space<vmem>>, %arg4: memref<128x128xbf16, #tpu.memory_space<vmem>>, %arg5: memref<1x128xf32, #tpu.memory_space<vmem>>, %arg6: memref<1x128xf32, #tpu.memory_space<vmem>>, %arg7: memref<272x128xbf16, #tpu.memory_space<vmem>>, %arg8: memref<272x128xf32, #tpu.memory_space<vmem>>) attributes {dimension_semantics = [#tpu.dimension_semantics<parallel>, #tpu.dimension_semantics<parallel>, #tpu.dimension_semantics<arbitrary>], iteration_bounds = array<i64: 4, 1, 1>, scalar_prefetch = 0 : i64, scratch_operands = 1 : i64, tpu.core_type = #tpu.core_type<tc>, window_params = [{transform_indices = @transform_0, window_bounds = array<i64: 272, 128>}, {transform_indices = @transform_1, window_bounds = array<i64: 128, 128>}, {transform_indices = @transform_2, window_bounds = array<i64: 1, 128>}, {transform_indices = @transform_3, window_bounds = array<i64: 1, 128>}, {transform_indices = @transform_4, window_bounds = array<i64: 272, 128>}]} {
    %c0_i32 = arith.constant 0 : i32
    %0 = arith.cmpi eq, %arg2, %c0_i32 : i32
    %1 = arith.extui %0 : i1 to i32
    %c0_i32_0 = arith.constant 0 : i32
    %2 = arith.cmpi ne, %1, %c0_i32_0 : i32
    scf.if %2 {
      %cst_10 = arith.constant 0.000000e+00 : f32
      %12 = vector.broadcast %cst_10 : f32 to vector<272x128xf32>
      %c0_11 = arith.constant 0 : index
      %c0_12 = arith.constant 0 : index
      %13 = vector.load %arg8[%c0_11, %c0_12] : memref<272x128xf32, #tpu.memory_space<vmem>>, vector<272x128xf32>
      tpu.vector_store %arg8[%c0_11, %c0_12], %12 {strides = array<i32>} : memref<272x128xf32, #tpu.memory_space<vmem>>, vector<272x128xf32>,
    } else {
    }
    %c0 = arith.constant 0 : index
    %c0_1 = arith.constant 0 : index
    %3 = vector.load %arg8[%c0, %c0_1] : memref<272x128xf32, #tpu.memory_space<vmem>>, vector<272x128xf32>
    %c0_2 = arith.constant 0 : index
    %c0_3 = arith.constant 0 : index
    %4 = vector.load %arg3[%c0_2, %c0_3] : memref<272x128xbf16, #tpu.memory_space<vmem>>, vector<272x128xbf16>
    %c0_4 = arith.constant 0 : index
    %c0_5 = arith.constant 0 : index
    %5 = vector.load %arg4[%c0_4, %c0_5] : memref<128x128xbf16, #tpu.memory_space<vmem>>, vector<128x128xbf16>
    %cst = arith.constant dense<0.000000e+00> : vector<272x128xf32>
    %6 = tpu.matmul %4, %5, %cst {dimension_numbers = #tpu.dot_dimension_numbers<[1], [0], [0], [1], [0, 0, 1, 1], [], []>} : vector<272x128xbf16>, vector<128x128xbf16>, vector<272x128xf32> -> vector<272x128xf32>
    %7 = arith.addf %3, %6 : vector<272x128xf32>
    %c0_6 = arith.constant 0 : index
    %c0_7 = arith.constant 0 : index
    %8 = vector.load %arg8[%c0_6, %c0_7] : memref<272x128xf32, #tpu.memory_space<vmem>>, vector<272x128xf32>
    tpu.vector_store %arg8[%c0_6, %c0_7], %7 {strides = array<i32>} : memref<272x128xf32, #tpu.memory_space<vmem>>, vector<272x128xf32>,
    %c0_i32_8 = arith.constant 0 : i32
    %9 = arith.cmpi eq, %arg2, %c0_i32_8 : i32
    %10 = arith.extui %9 : i1 to i32
    %c0_i32_9 = arith.constant 0 : i32
    %11 = arith.cmpi ne, %10, %c0_i32_9 : i32
    scf.if %11 {
      %c0_10 = arith.constant 0 : index
      %c0_11 = arith.constant 0 : index
      %12 = vector.load %arg8[%c0_10, %c0_11] : memref<272x128xf32, #tpu.memory_space<vmem>>, vector<272x128xf32>
      %c0_12 = arith.constant 0 : index
      %c0_13 = arith.constant 0 : index
      %13 = vector.load %arg5[%c0_12, %c0_13] : memref<1x128xf32, #tpu.memory_space<vmem>>, vector<1x128xf32>
      %14 = vector.broadcast %13 : vector<1x128xf32> to vector<272x128xf32>
      %15 = arith.mulf %12, %14 : vector<272x128xf32>
      %c0_14 = arith.constant 0 : index
      %c0_15 = arith.constant 0 : index
      %16 = vector.load %arg6[%c0_14, %c0_15] : memref<1x128xf32, #tpu.memory_space<vmem>>, vector<1x128xf32>
      %17 = vector.broadcast %16 : vector<1x128xf32> to vector<272x128xf32>
      %18 = arith.addf %15, %17 : vector<272x128xf32>
      %cst_16 = arith.constant 0.000000e+00 : f32
      %19 = vector.broadcast %cst_16 : f32 to vector<272x128xf32>
      %20 = arith.cmpf ogt, %18, %19 : vector<272x128xf32>
      %cst_17 = arith.constant 1.000000e-01 : f32
      %21 = vector.broadcast %cst_17 : f32 to vector<272x128xf32>
      %22 = arith.mulf %21, %18 : vector<272x128xf32>
      %23 = arith.select %20, %18, %22 : vector<272x128xi1>, vector<272x128xf32>
      %24 = arith.truncf %23 : vector<272x128xf32> to vector<272x128xbf16>
      %c0_18 = arith.constant 0 : index
      %c0_19 = arith.constant 0 : index
      %25 = vector.load %arg7[%c0_18, %c0_19] : memref<272x128xbf16, #tpu.memory_space<vmem>>, vector<272x128xbf16>
      tpu.vector_store %arg7[%c0_18, %c0_19], %24 {strides = array<i32>} : memref<272x128xbf16, #tpu.memory_space<vmem>>, vector<272x128xbf16>,
    } else {
    }
    return
  }
  func.func @transform_0(%arg0: i32, %arg1: i32, %arg2: i32) -> (i32, i32) {
    %c0_i32 = arith.constant 0 : i32
    return %arg0, %arg2 : i32, i32
  }
  func.func @transform_1(%arg0: i32, %arg1: i32, %arg2: i32) -> (i32, i32) {
    %c0_i32 = arith.constant 0 : i32
    return %arg2, %arg1 : i32, i32
  }
  func.func @transform_2(%arg0: i32, %arg1: i32, %arg2: i32) -> (i32, i32) {
    %c0_i32 = arith.constant 0 : i32
    %c0_i32_0 = arith.constant 0 : i32
    return %c0_i32, %arg1 : i32, i32
  }
  func.func @transform_3(%arg0: i32, %arg1: i32, %arg2: i32) -> (i32, i32) {
    %c0_i32 = arith.constant 0 : i32
    %c0_i32_0 = arith.constant 0 : i32
    return %c0_i32, %arg1 : i32, i32
  }
  func.func @transform_4(%arg0: i32, %arg1: i32, %arg2: i32) -> (i32, i32) {
    %c0_i32 = arith.constant 0 : i32
    return %arg0, %arg1 : i32, i32
  }
}

module attributes {stable_mosaic.version = 11 : i64} {
  func.func @_mm_bias_act_kernel(%arg0: i32, %arg1: i32, %arg2: i32, %arg3: memref<128x896xbf16, #tpu.memory_space<vmem>>, %arg4: memref<896x128xbf16, #tpu.memory_space<vmem>>, %arg5: memref<1x128xf32, #tpu.memory_space<vmem>>, %arg6: memref<1x128xf32, #tpu.memory_space<vmem>>, %arg7: memref<128x128xbf16, #tpu.memory_space<vmem>>, %arg8: memref<128x128xf32, #tpu.memory_space<vmem>>) attributes {dimension_semantics = [#tpu.dimension_semantics<parallel>, #tpu.dimension_semantics<parallel>, #tpu.dimension_semantics<arbitrary>], iteration_bounds = array<i64: 2, 1, 7>, scalar_prefetch = 0 : i64, scratch_operands = 1 : i64, tpu.core_type = #tpu.core_type<tc>, window_params = [{transform_indices = @transform_0, window_bounds = array<i64: 128, 896>}, {transform_indices = @transform_1, window_bounds = array<i64: 896, 128>}, {transform_indices = @transform_2, window_bounds = array<i64: 1, 128>}, {transform_indices = @transform_3, window_bounds = array<i64: 1, 128>}, {transform_indices = @transform_4, window_bounds = array<i64: 128, 128>}]} {
    %c0_i32 = arith.constant 0 : i32
    %0 = arith.cmpi eq, %arg2, %c0_i32 : i32
    %1 = arith.extui %0 : i1 to i32
    %c0_i32_0 = arith.constant 0 : i32
    %2 = arith.cmpi ne, %1, %c0_i32_0 : i32
    scf.if %2 {
      %cst_9 = arith.constant 0.000000e+00 : f32
      %12 = vector.broadcast %cst_9 : f32 to vector<128x128xf32>
      %c0_10 = arith.constant 0 : index
      %c0_11 = arith.constant 0 : index
      %13 = vector.load %arg8[%c0_10, %c0_11] : memref<128x128xf32, #tpu.memory_space<vmem>>, vector<128x128xf32>
      tpu.vector_store %arg8[%c0_10, %c0_11], %12 {strides = array<i32>} : memref<128x128xf32, #tpu.memory_space<vmem>>, vector<128x128xf32>,
    } else {
    }
    %c0 = arith.constant 0 : index
    %c0_1 = arith.constant 0 : index
    %3 = vector.load %arg8[%c0, %c0_1] : memref<128x128xf32, #tpu.memory_space<vmem>>, vector<128x128xf32>
    %c0_2 = arith.constant 0 : index
    %c0_3 = arith.constant 0 : index
    %4 = vector.load %arg3[%c0_2, %c0_3] : memref<128x896xbf16, #tpu.memory_space<vmem>>, vector<128x896xbf16>
    %c0_4 = arith.constant 0 : index
    %c0_5 = arith.constant 0 : index
    %5 = vector.load %arg4[%c0_4, %c0_5] : memref<896x128xbf16, #tpu.memory_space<vmem>>, vector<896x128xbf16>
    %cst = arith.constant dense<0.000000e+00> : vector<128x128xf32>
    %6 = tpu.matmul %4, %5, %cst {dimension_numbers = #tpu.dot_dimension_numbers<[1], [0], [0], [1], [0, 0, 1, 1], [], []>} : vector<128x896xbf16>, vector<896x128xbf16>, vector<128x128xf32> -> vector<128x128xf32>
    %7 = arith.addf %3, %6 : vector<128x128xf32>
    %c0_6 = arith.constant 0 : index
    %c0_7 = arith.constant 0 : index
    %8 = vector.load %arg8[%c0_6, %c0_7] : memref<128x128xf32, #tpu.memory_space<vmem>>, vector<128x128xf32>
    tpu.vector_store %arg8[%c0_6, %c0_7], %7 {strides = array<i32>} : memref<128x128xf32, #tpu.memory_space<vmem>>, vector<128x128xf32>,
    %c6_i32 = arith.constant 6 : i32
    %9 = arith.cmpi eq, %arg2, %c6_i32 : i32
    %10 = arith.extui %9 : i1 to i32
    %c0_i32_8 = arith.constant 0 : i32
    %11 = arith.cmpi ne, %10, %c0_i32_8 : i32
    scf.if %11 {
      %c0_9 = arith.constant 0 : index
      %c0_10 = arith.constant 0 : index
      %12 = vector.load %arg8[%c0_9, %c0_10] : memref<128x128xf32, #tpu.memory_space<vmem>>, vector<128x128xf32>
      %c0_11 = arith.constant 0 : index
      %c0_12 = arith.constant 0 : index
      %13 = vector.load %arg5[%c0_11, %c0_12] : memref<1x128xf32, #tpu.memory_space<vmem>>, vector<1x128xf32>
      %14 = vector.broadcast %13 : vector<1x128xf32> to vector<128x128xf32>
      %15 = arith.mulf %12, %14 : vector<128x128xf32>
      %c0_13 = arith.constant 0 : index
      %c0_14 = arith.constant 0 : index
      %16 = vector.load %arg6[%c0_13, %c0_14] : memref<1x128xf32, #tpu.memory_space<vmem>>, vector<1x128xf32>
      %17 = vector.broadcast %16 : vector<1x128xf32> to vector<128x128xf32>
      %18 = arith.addf %15, %17 : vector<128x128xf32>
      %cst_15 = arith.constant 0.000000e+00 : f32
      %19 = vector.broadcast %cst_15 : f32 to vector<128x128xf32>
      %20 = arith.cmpf ogt, %18, %19 : vector<128x128xf32>
      %cst_16 = arith.constant 1.000000e-01 : f32
      %21 = vector.broadcast %cst_16 : f32 to vector<128x128xf32>
      %22 = arith.mulf %21, %18 : vector<128x128xf32>
      %23 = arith.select %20, %18, %22 : vector<128x128xi1>, vector<128x128xf32>
      %24 = arith.truncf %23 : vector<128x128xf32> to vector<128x128xbf16>
      %c0_17 = arith.constant 0 : index
      %c0_18 = arith.constant 0 : index
      %25 = vector.load %arg7[%c0_17, %c0_18] : memref<128x128xbf16, #tpu.memory_space<vmem>>, vector<128x128xbf16>
      tpu.vector_store %arg7[%c0_17, %c0_18], %24 {strides = array<i32>} : memref<128x128xbf16, #tpu.memory_space<vmem>>, vector<128x128xbf16>,
    } else {
    }
    return
  }
  func.func @transform_0(%arg0: i32, %arg1: i32, %arg2: i32) -> (i32, i32) {
    %c0_i32 = arith.constant 0 : i32
    return %arg0, %arg2 : i32, i32
  }
  func.func @transform_1(%arg0: i32, %arg1: i32, %arg2: i32) -> (i32, i32) {
    %c0_i32 = arith.constant 0 : i32
    return %arg2, %arg1 : i32, i32
  }
  func.func @transform_2(%arg0: i32, %arg1: i32, %arg2: i32) -> (i32, i32) {
    %c0_i32 = arith.constant 0 : i32
    %c0_i32_0 = arith.constant 0 : i32
    return %c0_i32, %arg1 : i32, i32
  }
  func.func @transform_3(%arg0: i32, %arg1: i32, %arg2: i32) -> (i32, i32) {
    %c0_i32 = arith.constant 0 : i32
    %c0_i32_0 = arith.constant 0 : i32
    return %c0_i32, %arg1 : i32, i32
  }
  func.func @transform_4(%arg0: i32, %arg1: i32, %arg2: i32) -> (i32, i32) {
    %c0_i32 = arith.constant 0 : i32
    return %arg0, %arg1 : i32, i32
  }
}

module attributes {stable_mosaic.version = 11 : i64} {
  func.func @_mm_bias_act_kernel(%arg0: i32, %arg1: i32, %arg2: i32, %arg3: memref<56x896xbf16, #tpu.memory_space<vmem>>, %arg4: memref<896x512xi8, #tpu.memory_space<vmem>>, %arg5: memref<1x512xf32, #tpu.memory_space<vmem>>, %arg6: memref<1x512xf32, #tpu.memory_space<vmem>>, %arg7: memref<56x512xbf16, #tpu.memory_space<vmem>>, %arg8: memref<56x512xf32, #tpu.memory_space<vmem>>) attributes {dimension_semantics = [#tpu.dimension_semantics<parallel>, #tpu.dimension_semantics<parallel>, #tpu.dimension_semantics<arbitrary>], iteration_bounds = array<i64: 1, 2, 7>, scalar_prefetch = 0 : i64, scratch_operands = 1 : i64, tpu.core_type = #tpu.core_type<tc>, window_params = [{transform_indices = @transform_0, window_bounds = array<i64: 56, 896>}, {transform_indices = @transform_1, window_bounds = array<i64: 896, 512>}, {transform_indices = @transform_2, window_bounds = array<i64: 1, 512>}, {transform_indices = @transform_3, window_bounds = array<i64: 1, 512>}, {transform_indices = @transform_4, window_bounds = array<i64: 56, 512>}]} {
    %c0_i32 = arith.constant 0 : i32
    %0 = arith.cmpi eq, %arg2, %c0_i32 : i32
    %1 = arith.extui %0 : i1 to i32
    %c0_i32_0 = arith.constant 0 : i32
    %2 = arith.cmpi ne, %1, %c0_i32_0 : i32
    scf.if %2 {
      %cst_9 = arith.constant 0.000000e+00 : f32
      %13 = vector.broadcast %cst_9 : f32 to vector<56x512xf32>
      %c0_10 = arith.constant 0 : index
      %c0_11 = arith.constant 0 : index
      %14 = vector.load %arg8[%c0_10, %c0_11] : memref<56x512xf32, #tpu.memory_space<vmem>>, vector<56x512xf32>
      tpu.vector_store %arg8[%c0_10, %c0_11], %13 {strides = array<i32>} : memref<56x512xf32, #tpu.memory_space<vmem>>, vector<56x512xf32>,
    } else {
    }
    %c0 = arith.constant 0 : index
    %c0_1 = arith.constant 0 : index
    %3 = vector.load %arg8[%c0, %c0_1] : memref<56x512xf32, #tpu.memory_space<vmem>>, vector<56x512xf32>
    %c0_2 = arith.constant 0 : index
    %c0_3 = arith.constant 0 : index
    %4 = vector.load %arg3[%c0_2, %c0_3] : memref<56x896xbf16, #tpu.memory_space<vmem>>, vector<56x896xbf16>
    %c0_4 = arith.constant 0 : index
    %c0_5 = arith.constant 0 : index
    %5 = vector.load %arg4[%c0_4, %c0_5] : memref<896x512xi8, #tpu.memory_space<vmem>>, vector<896x512xi8>
    %6 = arith.sitofp %5 : vector<896x512xi8> to vector<896x512xbf16>
    %cst = arith.constant dense<0.000000e+00> : vector<56x512xf32>
    %7 = tpu.matmul %4, %6, %cst {dimension_numbers = #tpu.dot_dimension_numbers<[1], [0], [0], [1], [0, 0, 1, 1], [], []>} : vector<56x896xbf16>, vector<896x512xbf16>, vector<56x512xf32> -> vector<56x512xf32>
    %8 = arith.addf %3, %7 : vector<56x512xf32>
    %c0_6 = arith.constant 0 : index
    %c0_7 = arith.constant 0 : index
    %9 = vector.load %arg8[%c0_6, %c0_7] : memref<56x512xf32, #tpu.memory_space<vmem>>, vector<56x512xf32>
    tpu.vector_store %arg8[%c0_6, %c0_7], %8 {strides = array<i32>} : memref<56x512xf32, #tpu.memory_space<vmem>>, vector<56x512xf32>,
    %c6_i32 = arith.constant 6 : i32
    %10 = arith.cmpi eq, %arg2, %c6_i32 : i32
    %11 = arith.extui %10 : i1 to i32
    %c0_i32_8 = arith.constant 0 : i32
    %12 = arith.cmpi ne, %11, %c0_i32_8 : i32
    scf.if %12 {
      %c0_9 = arith.constant 0 : index
      %c0_10 = arith.constant 0 : index
      %13 = vector.load %arg8[%c0_9, %c0_10] : memref<56x512xf32, #tpu.memory_space<vmem>>, vector<56x512xf32>
      %c0_11 = arith.constant 0 : index
      %c0_12 = arith.constant 0 : index
      %14 = vector.load %arg5[%c0_11, %c0_12] : memref<1x512xf32, #tpu.memory_space<vmem>>, vector<1x512xf32>
      %15 = vector.broadcast %14 : vector<1x512xf32> to vector<56x512xf32>
      %16 = arith.mulf %13, %15 : vector<56x512xf32>
      %c0_13 = arith.constant 0 : index
      %c0_14 = arith.constant 0 : index
      %17 = vector.load %arg6[%c0_13, %c0_14] : memref<1x512xf32, #tpu.memory_space<vmem>>, vector<1x512xf32>
      %18 = vector.broadcast %17 : vector<1x512xf32> to vector<56x512xf32>
      %19 = arith.addf %16, %18 : vector<56x512xf32>
      %cst_15 = arith.constant 0.000000e+00 : f32
      %20 = vector.broadcast %cst_15 : f32 to vector<56x512xf32>
      %21 = arith.cmpf ogt, %19, %20 : vector<56x512xf32>
      %cst_16 = arith.constant 1.000000e-01 : f32
      %22 = vector.broadcast %cst_16 : f32 to vector<56x512xf32>
      %23 = arith.mulf %22, %19 : vector<56x512xf32>
      %24 = arith.select %21, %19, %23 : vector<56x512xi1>, vector<56x512xf32>
      %25 = arith.truncf %24 : vector<56x512xf32> to vector<56x512xbf16>
      %c0_17 = arith.constant 0 : index
      %c0_18 = arith.constant 0 : index
      %26 = vector.load %arg7[%c0_17, %c0_18] : memref<56x512xbf16, #tpu.memory_space<vmem>>, vector<56x512xbf16>
      tpu.vector_store %arg7[%c0_17, %c0_18], %25 {strides = array<i32>} : memref<56x512xbf16, #tpu.memory_space<vmem>>, vector<56x512xbf16>,
    } else {
    }
    return
  }
  func.func @transform_0(%arg0: i32, %arg1: i32, %arg2: i32) -> (i32, i32) {
    %c0_i32 = arith.constant 0 : i32
    return %arg0, %arg2 : i32, i32
  }
  func.func @transform_1(%arg0: i32, %arg1: i32, %arg2: i32) -> (i32, i32) {
    %c0_i32 = arith.constant 0 : i32
    return %arg2, %arg1 : i32, i32
  }
  func.func @transform_2(%arg0: i32, %arg1: i32, %arg2: i32) -> (i32, i32) {
    %c0_i32 = arith.constant 0 : i32
    %c0_i32_0 = arith.constant 0 : i32
    return %c0_i32, %arg1 : i32, i32
  }
  func.func @transform_3(%arg0: i32, %arg1: i32, %arg2: i32) -> (i32, i32) {
    %c0_i32 = arith.constant 0 : i32
    %c0_i32_0 = arith.constant 0 : i32
    return %c0_i32, %arg1 : i32, i32
  }
  func.func @transform_4(%arg0: i32, %arg1: i32, %arg2: i32) -> (i32, i32) {
    %c0_i32 = arith.constant 0 : i32
    return %arg0, %arg1 : i32, i32
  }
}

module attributes {stable_mosaic.version = 11 : i64} {
  func.func @_conv4_linear_kernel(%arg0: i32, %arg1: memref<8x3200xbf16, #tpu.memory_space<vmem>>, %arg2: memref<3200x128xi8, #tpu.memory_space<vmem>>, %arg3: memref<1x128xf32, #tpu.memory_space<vmem>>, %arg4: memref<1x128xf32, #tpu.memory_space<vmem>>, %arg5: memref<128x128xf32, #tpu.memory_space<vmem>>, %arg6: memref<1x128xf32, #tpu.memory_space<vmem>>, %arg7: memref<8x128xf32, #tpu.memory_space<vmem>>, %arg8: memref<8x128xf32, #tpu.memory_space<vmem>>) attributes {dimension_semantics = [#tpu.dimension_semantics<arbitrary>], iteration_bounds = array<i64: 8>, scalar_prefetch = 0 : i64, scratch_operands = 1 : i64, tpu.core_type = #tpu.core_type<tc>, window_params = [{transform_indices = @transform_0, window_bounds = array<i64: 8, 3200>}, {transform_indices = @transform_1, window_bounds = array<i64: 3200, 128>}, {pipeline_mode = #tpu.pipeline_mode<synchronous>, transform_indices = @transform_2, window_bounds = array<i64: 1, 128>}, {pipeline_mode = #tpu.pipeline_mode<synchronous>, transform_indices = @transform_3, window_bounds = array<i64: 1, 128>}, {pipeline_mode = #tpu.pipeline_mode<synchronous>, transform_indices = @transform_4, window_bounds = array<i64: 128, 128>}, {pipeline_mode = #tpu.pipeline_mode<synchronous>, transform_indices = @transform_5, window_bounds = array<i64: 1, 128>}, {pipeline_mode = #tpu.pipeline_mode<synchronous>, transform_indices = @transform_6, window_bounds = array<i64: 8, 128>}]} {
    %c0_i32 = arith.constant 0 : i32
    %0 = arith.cmpi eq, %arg0, %c0_i32 : i32
    %1 = arith.extui %0 : i1 to i32
    %c0_i32_0 = arith.constant 0 : i32
    %2 = arith.cmpi ne, %1, %c0_i32_0 : i32
    scf.if %2 {
      %cst_9 = arith.constant 0.000000e+00 : f32
      %13 = vector.broadcast %cst_9 : f32 to vector<8x128xf32>
      %c0_10 = arith.constant 0 : index
      %c0_11 = arith.constant 0 : index
      %14 = vector.load %arg8[%c0_10, %c0_11] : memref<8x128xf32, #tpu.memory_space<vmem>>, vector<8x128xf32>
      tpu.vector_store %arg8[%c0_10, %c0_11], %13 {strides = array<i32>} : memref<8x128xf32, #tpu.memory_space<vmem>>, vector<8x128xf32>,
    } else {
    }
    %c0 = arith.constant 0 : index
    %c0_1 = arith.constant 0 : index
    %3 = vector.load %arg8[%c0, %c0_1] : memref<8x128xf32, #tpu.memory_space<vmem>>, vector<8x128xf32>
    %c0_2 = arith.constant 0 : index
    %c0_3 = arith.constant 0 : index
    %4 = vector.load %arg1[%c0_2, %c0_3] : memref<8x3200xbf16, #tpu.memory_space<vmem>>, vector<8x3200xbf16>
    %c0_4 = arith.constant 0 : index
    %c0_5 = arith.constant 0 : index
    %5 = vector.load %arg2[%c0_4, %c0_5] : memref<3200x128xi8, #tpu.memory_space<vmem>>, vector<3200x128xi8>
    %6 = arith.sitofp %5 : vector<3200x128xi8> to vector<3200x128xbf16>
    %cst = arith.constant dense<0.000000e+00> : vector<8x128xf32>
    %7 = tpu.matmul %4, %6, %cst {dimension_numbers = #tpu.dot_dimension_numbers<[1], [0], [0], [1], [0, 0, 1, 1], [], []>} : vector<8x3200xbf16>, vector<3200x128xbf16>, vector<8x128xf32> -> vector<8x128xf32>
    %8 = arith.addf %3, %7 : vector<8x128xf32>
    %c0_6 = arith.constant 0 : index
    %c0_7 = arith.constant 0 : index
    %9 = vector.load %arg8[%c0_6, %c0_7] : memref<8x128xf32, #tpu.memory_space<vmem>>, vector<8x128xf32>
    tpu.vector_store %arg8[%c0_6, %c0_7], %8 {strides = array<i32>} : memref<8x128xf32, #tpu.memory_space<vmem>>, vector<8x128xf32>,
    %c7_i32 = arith.constant 7 : i32
    %10 = arith.cmpi eq, %arg0, %c7_i32 : i32
    %11 = arith.extui %10 : i1 to i32
    %c0_i32_8 = arith.constant 0 : i32
    %12 = arith.cmpi ne, %11, %c0_i32_8 : i32
    scf.if %12 {
      %c0_9 = arith.constant 0 : index
      %c0_10 = arith.constant 0 : index
      %13 = vector.load %arg8[%c0_9, %c0_10] : memref<8x128xf32, #tpu.memory_space<vmem>>, vector<8x128xf32>
      %c0_11 = arith.constant 0 : index
      %c0_12 = arith.constant 0 : index
      %14 = vector.load %arg3[%c0_11, %c0_12] : memref<1x128xf32, #tpu.memory_space<vmem>>, vector<1x128xf32>
      %15 = vector.broadcast %14 : vector<1x128xf32> to vector<8x128xf32>
      %16 = arith.mulf %13, %15 : vector<8x128xf32>
      %c0_13 = arith.constant 0 : index
      %c0_14 = arith.constant 0 : index
      %17 = vector.load %arg4[%c0_13, %c0_14] : memref<1x128xf32, #tpu.memory_space<vmem>>, vector<1x128xf32>
      %18 = vector.broadcast %17 : vector<1x128xf32> to vector<8x128xf32>
      %19 = arith.addf %16, %18 : vector<8x128xf32>
      %cst_15 = arith.constant 0.000000e+00 : f32
      %20 = vector.broadcast %cst_15 : f32 to vector<8x128xf32>
      %21 = arith.cmpf ogt, %19, %20 : vector<8x128xf32>
      %cst_16 = arith.constant 1.000000e-01 : f32
      %22 = vector.broadcast %cst_16 : f32 to vector<8x128xf32>
      %23 = arith.mulf %22, %19 : vector<8x128xf32>
      %24 = arith.select %21, %19, %23 : vector<8x128xi1>, vector<8x128xf32>
      %c0_17 = arith.constant 0 : index
      %c0_18 = arith.constant 0 : index
      %25 = vector.load %arg5[%c0_17, %c0_18] : memref<128x128xf32, #tpu.memory_space<vmem>>, vector<128x128xf32>
      %cst_19 = arith.constant dense<0.000000e+00> : vector<8x128xf32>
      %26 = tpu.matmul %24, %25, %cst_19 {dimension_numbers = #tpu.dot_dimension_numbers<[1], [0], [0], [1], [0, 0, 1, 1], [], []>} : vector<8x128xf32>, vector<128x128xf32>, vector<8x128xf32> -> vector<8x128xf32>
      %c0_20 = arith.constant 0 : index
      %c0_21 = arith.constant 0 : index
      %27 = vector.load %arg6[%c0_20, %c0_21] : memref<1x128xf32, #tpu.memory_space<vmem>>, vector<1x128xf32>
      %28 = vector.broadcast %27 : vector<1x128xf32> to vector<8x128xf32>
      %29 = arith.addf %26, %28 : vector<8x128xf32>
      %30 = math.tanh %29 : vector<8x128xf32>
      %c0_22 = arith.constant 0 : index
      %c0_23 = arith.constant 0 : index
      %31 = vector.load %arg7[%c0_22, %c0_23] : memref<8x128xf32, #tpu.memory_space<vmem>>, vector<8x128xf32>
      tpu.vector_store %arg7[%c0_22, %c0_23], %30 {strides = array<i32>} : memref<8x128xf32, #tpu.memory_space<vmem>>, vector<8x128xf32>,
    } else {
    }
    return
  }
  func.func @transform_0(%arg0: i32) -> (i32, i32) {
    %c0_i32 = arith.constant 0 : i32
    %c0_i32_0 = arith.constant 0 : i32
    return %c0_i32, %arg0 : i32, i32
  }
  func.func @transform_1(%arg0: i32) -> (i32, i32) {
    %c0_i32 = arith.constant 0 : i32
    %c0_i32_0 = arith.constant 0 : i32
    return %arg0, %c0_i32 : i32, i32
  }
  func.func @transform_2(%arg0: i32) -> (i32, i32) {
    %c0_i32 = arith.constant 0 : i32
    %c0_i32_0 = arith.constant 0 : i32
    %c0_i32_1 = arith.constant 0 : i32
    return %c0_i32, %c0_i32_0 : i32, i32
  }
  func.func @transform_3(%arg0: i32) -> (i32, i32) {
    %c0_i32 = arith.constant 0 : i32
    %c0_i32_0 = arith.constant 0 : i32
    %c0_i32_1 = arith.constant 0 : i32
    return %c0_i32, %c0_i32_0 : i32, i32
  }
  func.func @transform_4(%arg0: i32) -> (i32, i32) {
    %c0_i32 = arith.constant 0 : i32
    %c0_i32_0 = arith.constant 0 : i32
    %c0_i32_1 = arith.constant 0 : i32
    return %c0_i32, %c0_i32_0 : i32, i32
  }
  func.func @transform_5(%arg0: i32) -> (i32, i32) {
    %c0_i32 = arith.constant 0 : i32
    %c0_i32_0 = arith.constant 0 : i32
    %c0_i32_1 = arith.constant 0 : i32
    return %c0_i32, %c0_i32_0 : i32, i32
  }
  func.func @transform_6(%arg0: i32) -> (i32, i32) {
    %c0_i32 = arith.constant 0 : i32
    %c0_i32_0 = arith.constant 0 : i32
    %c0_i32_1 = arith.constant 0 : i32
    return %c0_i32, %c0_i32_0 : i32, i32
  }
}

</mosaic_0001>

<llo_original>
// kernel: embedding_forward.4
$region0: #{embedding_forward.4}
  #allocation0 [shape = 'u32[]', space=smem, size = 0x4, offset = 0x4, fixed_abs, tag = 'smem constant byte address 0x4 - core index']
  #allocation1 [shape = 'u32[144,128]{1,0:T(1,128)}', space=vmem, size = 0x12000, scoped, tag = 'internal scratch']
  #allocation2 [shape = 'f32[272,128]{1,0:T(8,128)}', space=vmem, size = 0x22000, scoped, tag = 'scratch operand']
  %s0 = inlined_call_operand.vmem [shape: bf16[1088,128], index: 0, kind: input, shape index: {}]
  %s1 = inlined_call_operand.hbm [shape: bf16[128,128], index: 1, kind: input, shape index: {}]
  %s2 = inlined_call_operand.hbm [shape: f32[1,128], index: 2, kind: input, shape index: {}]
  %s3 = inlined_call_operand.hbm [shape: f32[1,128], index: 3, kind: input, shape index: {}]
  %s4 = inlined_call_operand.vmem [shape: bf16[1088,128], index: 4, kind: output, shape index: {}]
  %s5 = sld [smem:[#allocation0]]
  $region69: #{embedding_forward.4} parent=0
    _
  %s7 = ssub.s32 1, %s5
  %s8 = scalar_select 0, %s7, %s5
  $region1: #{embedding_forward.4} parent=0
    #allocation3 [shape = 'u8[32768]{0}', space=vmem, size = 0x8000, scoped, tag = 'input window, operand 1, single buffered']
    #allocation4 [shape = 's32[2]{0}', space=sflag, size = 0x8, scoped, tag = 'scoped memory for embedding_forward.4']
    #allocation5 [shape = 'u8[512]{0}', space=vmem, size = 0x400, scoped, tag = 'input window, operand 2, single buffered']
    #allocation6 [shape = 's32[1]{0}', space=sflag, size = 0x4, scoped, tag = 'scoped memory for embedding_forward.4']
    #allocation7 [shape = 'u8[512]{0}', space=vmem, size = 0x400, scoped, tag = 'input window, operand 3, single buffered']
    %9 = vsyncpa [#allocation4], 0
    %10 = vsyncpa [#allocation6], 0
    loop: start=0, step=1, limit=6
    $region2: #{embedding_forward.4} parent=1 // loop_pre_header
      _
    $region3: #{embedding_forward.4} parent=1 // loop_header
      %s12 = sphi 0, %s16
      %p13 = scmp.ge.s32.totalorder %s12, 6
      %s19 = sphi 0, %s38
      %s20 = sphi 0, %s34
      %s21 = sphi 0, %s30
      %s22 = sphi 0, %s19
      %s23 = sphi 0, %s20
      %s24 = sphi 0, %s21
      %s25 = sphi 0, %s22
      %s26 = sphi 0, %s23
      %s27 = sphi 0, %s24
      %s43 = sphi 0, %s45
      %s46 = sphi 0, %s43
      %s47 = sphi 0, %s46
      %s63 = sphi 0, %s47
      %s71 = sphi 0, %s73
      %s74 = sphi 0, %s71
      %s75 = sphi 0, %s74
      %s91 = sphi 0, %s75
      %s97 = sphi 0, %s99
      %s100 = sphi 0, %s97
      %s101 = sphi 0, %s100
      %s117 = sphi 0, %s101
      %s123 = sphi 0, %s125
      %s126 = sphi 0, %s123
      %s127 = sphi 0, %s126
      %s143 = sphi 0, %s127
      %s151 = sphi 0, %s153
      %s154 = sphi 0, %s151
      %s155 = sphi 0, %s154
      %s171 = sphi 0, %s155
    $region4: #{embedding_forward.4} parent=1 // loop_header_branch
      %15 = sbr.rel (%p13) target = $region8
    $region5: #{embedding_forward.4} parent=1 // loop_body
      %s17 = ssub.s32 %s12, 1
      %s18 = ssub.s32 %s12, 2
      %s28 = sadd.s32 1, %s21
      %p29 = scmp.ge.s32.totalorder %s28, 1
      %s30 = scalar_select %p29, 0, %s28
      %s31 = sadd.s32 1, %s20
      %s32 = scalar_select %p29, %s31, %s20
      %p33 = scmp.ge.s32.totalorder %s32, 1
      %s34 = scalar_select %p33, 0, %s32
      %s35 = sadd.s32 1, %s19
      %s36 = scalar_select %p33, %s35, %s19
      %p37 = scmp.ge.s32.totalorder %s36, 4
      %s38 = scalar_select %p37, 0, %s36
      %s39 = ssub.s32 %s19, %s38
      %s40 = ssub.s32 %s21, %s30
      %s41 = sor.u32 %s39, %s40
      %p42 = scmp.eq.s32.totalorder %s41, 0
      %s44 = sadd.s32 %s43, 1
      %s45 = scalar_select %p42, %s43, %s44
      %p48 = pneg %p42
      %p49 = scmp.eq.s32.totalorder %s12, 3
      %p50 = por %p48, %p49
      %p51 = scmp.ne.s32.totalorder %s43, %s46
      %p52 = scmp.eq.s32.totalorder %s12, 0
      %p53 = por %p51, %p52
      %p54 = scmp.ne.s32.totalorder %s43, %s46
      %p55 = scmp.eq.s32.totalorder %s17, 3
      %p56 = por %p54, %p55
      %p57 = scmp.ne.s32.totalorder %s46, %s47
      %p58 = scmp.eq.s32.totalorder %s17, 0
      %p59 = por %p57, %p58
      %p60 = scmp.ne.s32.totalorder %s46, %s47
      %p61 = scmp.eq.s32.totalorder %s18, 3
      %p62 = por %p60, %p61
      %p64 = scmp.ne.s32.totalorder %s47, %s63
      %p65 = scmp.eq.s32.totalorder %s18, 0
      %p66 = por %p64, %p65
      %s67 = ssub.s32 %s21, %s30
      %s68 = ssub.s32 %s20, %s34
      %s69 = sor.u32 %s67, %s68
      %p70 = scmp.eq.s32.totalorder %s69, 0
      %s72 = sadd.s32 %s71, 1
      %s73 = scalar_select %p70, %s71, %s72
      %p76 = pneg %p70
      %p77 = scmp.eq.s32.totalorder %s12, 3
      %p78 = por %p76, %p77
      %p79 = scmp.ne.s32.totalorder %s71, %s74
      %p80 = scmp.eq.s32.totalorder %s12, 0
      %p81 = por %p79, %p80
      %p82 = scmp.ne.s32.totalorder %s71, %s74
      %p83 = scmp.eq.s32.totalorder %s17, 3
      %p84 = por %p82, %p83
      %p85 = scmp.ne.s32.totalorder %s74, %s75
      %p86 = scmp.eq.s32.totalorder %s17, 0
      %p87 = por %p85, %p86
      %p88 = scmp.ne.s32.totalorder %s74, %s75
      %p89 = scmp.eq.s32.totalorder %s18, 3
      %p90 = por %p88, %p89
      %p92 = scmp.ne.s32.totalorder %s75, %s91
      %p93 = scmp.eq.s32.totalorder %s18, 0
      %p94 = por %p92, %p93
      %s95 = ssub.s32 %s20, %s34
      %p96 = scmp.eq.s32.totalorder %s95, 0
      %s98 = sadd.s32 %s97, 1
      %s99 = scalar_select %p96, %s97, %s98
      %p102 = pneg %p96
      %p103 = scmp.eq.s32.totalorder %s12, 3
      %p104 = por %p102, %p103
      %p105 = scmp.ne.s32.totalorder %s97, %s100
      %p106 = scmp.eq.s32.totalorder %s12, 0
      %p107 = por %p105, %p106
      %p108 = scmp.ne.s32.totalorder %s97, %s100
      %p109 = scmp.eq.s32.totalorder %s17, 3
      %p110 = por %p108, %p109
      %p111 = scmp.ne.s32.totalorder %s100, %s101
      %p112 = scmp.eq.s32.totalorder %s17, 0
      %p113 = por %p111, %p112
      %p114 = scmp.ne.s32.totalorder %s100, %s101
      %p115 = scmp.eq.s32.totalorder %s18, 3
      %p116 = por %p114, %p115
      %p118 = scmp.ne.s32.totalorder %s101, %s117
      %p119 = scmp.eq.s32.totalorder %s18, 0
      %p120 = por %p118, %p119
      %s121 = ssub.s32 %s20, %s34
      %p122 = scmp.eq.s32.totalorder %s121, 0
      %s124 = sadd.s32 %s123, 1
      %s125 = scalar_select %p122, %s123, %s124
      %p128 = pneg %p122
      %p129 = scmp.eq.s32.totalorder %s12, 3
      %p130 = por %p128, %p129
      %p131 = scmp.ne.s32.totalorder %s123, %s126
      %p132 = scmp.eq.s32.totalorder %s12, 0
      %p133 = por %p131, %p132
      %p134 = scmp.ne.s32.totalorder %s123, %s126
      %p135 = scmp.eq.s32.totalorder %s17, 3
      %p136 = por %p134, %p135
      %p137 = scmp.ne.s32.totalorder %s126, %s127
      %p138 = scmp.eq.s32.totalorder %s17, 0
      %p139 = por %p137, %p138
      %p140 = scmp.ne.s32.totalorder %s126, %s127
      %p141 = scmp.eq.s32.totalorder %s18, 3
      %p142 = por %p140, %p141
      %p144 = scmp.ne.s32.totalorder %s127, %s143
      %p145 = scmp.eq.s32.totalorder %s18, 0
      %p146 = por %p144, %p145
      %s147 = ssub.s32 %s19, %s38
      %s148 = ssub.s32 %s20, %s34
      %s149 = sor.u32 %s147, %s148
      %p150 = scmp.eq.s32.totalorder %s149, 0
      %s152 = sadd.s32 %s151, 1
      %s153 = scalar_select %p150, %s151, %s152
      %p156 = pneg %p150
      %p157 = scmp.eq.s32.totalorder %s12, 3
      %p158 = por %p156, %p157
      %p159 = scmp.ne.s32.totalorder %s151, %s154
      %p160 = scmp.eq.s32.totalorder %s12, 0
      %p161 = por %p159, %p160
      %p162 = scmp.ne.s32.totalorder %s151, %s154
      %p163 = scmp.eq.s32.totalorder %s17, 3
      %p164 = por %p162, %p163
      %p165 = scmp.ne.s32.totalorder %s154, %s155
      %p166 = scmp.eq.s32.totalorder %s17, 0
      %p167 = por %p165, %p166
      %p168 = scmp.ne.s32.totalorder %s154, %s155
      %p169 = scmp.eq.s32.totalorder %s18, 3
      %p170 = por %p168, %p169
      %p172 = scmp.ne.s32.totalorder %s155, %s171
      %p173 = scmp.eq.s32.totalorder %s18, 0
      %p174 = por %p172, %p173
      %p175 = scmp.le.s32.totalorder 1, %s12
      %p176 = scmp.lt.s32.totalorder %s12, 5
      %p177 = pnand %p175, %p176
      %p178 = pneg %p177
      // Predicated region
      $region9: #{embedding_forward.4} parent=5 // pred_check
        _
      $region10: #{embedding_forward.4} parent=5 // pred_check_branch
        %180 = sbr.rel (%p177) target = $region12
      $region11: #{embedding_forward.4} parent=5 // pred_region
        %s181 = ssub.s32 %s12, 1
        // Predicated region
        $region13: #{embedding_forward.4} parent=11 // pred_check
          %p182 = pneg %p87
        $region14: #{embedding_forward.4} parent=11 // pred_check_branch
          %184 = sbr.rel (%p182) target = $region16
        $region15: #{embedding_forward.4} parent=11 // pred_region
          %s185 = smul.u32 16, %s24
          %s187 = ssub.s32 1024, 1024
          %188 = vsyncadd [#allocation4], %s187
          %s189 = sadd.s32 %s23, %s185
          %s190 = smul.addr %s189, 64
          %s191 = scalar_lea.hbm %s1, %s190
          %s192 = sshll.u32 [#allocation3], 4
          %s193 = int_to_ptr.vmem [resolvable:$true] %s192
          %198 = dma.hbm_to_vmem [thread:$0]  %s191, 1024, %s193, [#allocation4], 64, 64, 4
        $region16: #{embedding_forward.4} parent=11 // pred_fallthru
          _
        // Predicated region
        $region17: #{embedding_forward.4} parent=11 // pred_check
          %p199 = pneg %p113
        $region18: #{embedding_forward.4} parent=11 // pred_check_branch
          %201 = sbr.rel (%p199) target = $region20
        $region19: #{embedding_forward.4} parent=11 // pred_region
          %s203 = ssub.s32 16, 16
          %204 = vsyncadd [#allocation6], %s203
          %s205 = smul.addr %s23, 16
          %s206 = scalar_lea.hbm %s2, %s205
          %s208 = sshll.u32 [#allocation5], 4
          %s209 = int_to_ptr.vmem [resolvable:$true] %s208
          %211 = dma.hbm_to_vmem [thread:$0]  %s206, 16, %s209, [#allocation6]
        $region20: #{embedding_forward.4} parent=11 // pred_fallthru
          _
        // Predicated region
        $region21: #{embedding_forward.4} parent=11 // pred_check
          %p212 = pneg %p139
        $region22: #{embedding_forward.4} parent=11 // pred_check_branch
          %214 = sbr.rel (%p212) target = $region24
        $region23: #{embedding_forward.4} parent=11 // pred_region
          %s216 = ssub.s32 16, 16
          %217 = vsyncadd [#allocation6], %s216
          %s218 = smul.addr %s23, 16
          %s219 = scalar_lea.hbm %s3, %s218
          %s221 = sshll.u32 [#allocation7], 4
          %s222 = int_to_ptr.vmem [resolvable:$true] %s221
          %224 = dma.hbm_to_vmem [thread:$0]  %s219, 16, %s222, [#allocation6]
        $region24: #{embedding_forward.4} parent=11 // pred_fallthru
          _
      $region12: #{embedding_forward.4} parent=5 // pred_fallthru
        _
      %p225 = scmp.lt.s32.totalorder %s12, 4
      // Predicated region
      $region25: #{embedding_forward.4} parent=5 // pred_check
        %p226 = pneg %p225
      $region26: #{embedding_forward.4} parent=5 // pred_check_branch
        %228 = sbr.rel (%p226) target = $region28
      $region27: #{embedding_forward.4} parent=5 // pred_region
        // Predicated region
        $region29: #{embedding_forward.4} parent=27 // pred_check
          %p229 = pneg %p53
        $region30: #{embedding_forward.4} parent=27 // pred_check_branch
          %231 = sbr.rel (%p229) target = $region32
        $region31: #{embedding_forward.4} parent=27 // pred_region
          %s232 = smul.u32 34, %s19
          %p233 = scmp.lt.s32.totalorder %s232, 135
          %s234 = scalar_select %p233, %s232, 135
          %p235 = scmp.lt.s32.totalorder %s21, 0
          %s236 = scalar_select %p235, %s21, 0
          %s237 = sadd.s32 %s236, %s234
          %s238 = smul.addr %s237, 4
          %s239 = scalar_lea.vmem %s0, %s238
          %s240 = smul.u32 34, %s19
        $region32: #{embedding_forward.4} parent=27 // pred_fallthru
          _
      $region28: #{embedding_forward.4} parent=5 // pred_fallthru
        _
      %p241 = scmp.le.s32.totalorder 1, %s12
      %p242 = scmp.lt.s32.totalorder %s12, 5
      %p243 = pnand %p241, %p242
      %p244 = pneg %p243
      // Predicated region
      $region33: #{embedding_forward.4} parent=5 // pred_check
        _
      $region34: #{embedding_forward.4} parent=5 // pred_check_branch
        %246 = sbr.rel (%p243) target = $region36
      $region35: #{embedding_forward.4} parent=5 // pred_region
        %s247 = ssub.s32 %s12, 1
        // Predicated region
        $region37: #{embedding_forward.4} parent=35 // pred_check
          %p248 = pneg %p87
        $region38: #{embedding_forward.4} parent=35 // pred_check_branch
          %250 = sbr.rel (%p248) target = $region40
        $region39: #{embedding_forward.4} parent=35 // pred_region
          %251 = dma.done [#allocation4], 1024
        $region40: #{embedding_forward.4} parent=35 // pred_fallthru
          _
        // Predicated region
        $region41: #{embedding_forward.4} parent=35 // pred_check
          %p252 = pneg %p113
        $region42: #{embedding_forward.4} parent=35 // pred_check_branch
          %254 = sbr.rel (%p252) target = $region44
        $region43: #{embedding_forward.4} parent=35 // pred_region
          %255 = dma.done [#allocation6], 16
        $region44: #{embedding_forward.4} parent=35 // pred_fallthru
          _
        // Predicated region
        $region45: #{embedding_forward.4} parent=35 // pred_check
          %p256 = pneg %p139
        $region46: #{embedding_forward.4} parent=35 // pred_check_branch
          %258 = sbr.rel (%p256) target = $region48
        $region47: #{embedding_forward.4} parent=35 // pred_region
          %259 = dma.done [#allocation6], 16
        $region48: #{embedding_forward.4} parent=35 // pred_fallthru
          _
        %s260 = smul.u32 34, %s22
        %p261 = scmp.lt.s32.totalorder %s260, 135
        %s262 = scalar_select %p261, %s260, 135
        %p263 = scmp.lt.s32.totalorder %s24, 0
        %s264 = scalar_select %p263, %s24, 0
        %s265 = sadd.s32 %s264, %s262
        %s266 = smul.addr %s265, 4
        %s267 = scalar_lea.vmem %s0, %s266
        %p268 = pneg %p59
        %p269 = pneg %p56
        %p270 = pneg %p87
        %p271 = pneg %p84
        %p272 = pneg %p113
        %p273 = pneg %p110
        %p274 = pneg %p139
        %p275 = pneg %p136
        %p276 = pneg %p167
        %p277 = pneg %p164
        %s278 = smul.u32 34, %s22
        %p279 = scmp.lt.s32.totalorder %s278, 135
        %s280 = scalar_select %p279, %s278, 135
        %p281 = scmp.lt.s32.totalorder %s23, 0
        %s282 = scalar_select %p281, %s23, 0
        %s283 = sadd.s32 %s282, %s280
        %s284 = smul.addr %s283, 4
        %s285 = scalar_lea.vmem %s4, %s284
        %s286 = smul.u32 34, %s22
        %p287 = scmp.lt.s32.totalorder %s286, 135
        %s288 = scalar_select %p287, %s286, 135
        %p289 = scmp.lt.s32.totalorder %s24, 0
        %s290 = scalar_select %p289, %s24, 0
        %s291 = sadd.s32 %s290, %s288
        %s292 = smul.addr %s291, 4
        %s293 = scalar_lea.vmem %s0, %s292
        %s294 = smul.u32 34, %s22
        %s295 = smul.u32 16, %s24
        %s296 = smul.u32 34, %s22
        %p297 = scmp.lt.s32.totalorder %s296, 135
        %s298 = scalar_select %p297, %s296, 135
        %p299 = scmp.lt.s32.totalorder %s23, 0
        %s300 = scalar_select %p299, %s23, 0
        %s301 = sadd.s32 %s300, %s298
        %s302 = smul.addr %s301, 4
        %s303 = scalar_lea.vmem %s4, %s302
        %s304 = smul.u32 34, %s22
        %p306 = scmp.eq.s32.totalorder %s24, 0
        // Predicated region
        $region49: #{embedding_forward.4} parent=35 // pred_check
          %p307 = pneg %p306
        $region50: #{embedding_forward.4} parent=35 // pred_check_branch
          %309 = sbr.rel (%p307) target = $region52
        $region51: #{embedding_forward.4} parent=35 // pred_region
          %310 = vst [vmem:[#allocation2] sm:$0xff] 0.0
          %311 = vst [vmem:[#allocation2 + $0x8] sm:$0xff] 0.0
          %312 = vst [vmem:[#allocation2 + $0x10] sm:$0xff] 0.0
          %313 = vst [vmem:[#allocation2 + $0x18] sm:$0xff] 0.0
          %314 = vst [vmem:[#allocation2 + $0x20] sm:$0xff] 0.0
          %315 = vst [vmem:[#allocation2 + $0x28] sm:$0xff] 0.0
          %316 = vst [vmem:[#allocation2 + $0x30] sm:$0xff] 0.0
          %317 = vst [vmem:[#allocation2 + $0x38] sm:$0xff] 0.0
          %318 = vst [vmem:[#allocation2 + $0x40] sm:$0xff] 0.0
          %319 = vst [vmem:[#allocation2 + $0x48] sm:$0xff] 0.0
          %320 = vst [vmem:[#allocation2 + $0x50] sm:$0xff] 0.0
          %321 = vst [vmem:[#allocation2 + $0x58] sm:$0xff] 0.0
          %322 = vst [vmem:[#allocation2 + $0x60] sm:$0xff] 0.0
          %323 = vst [vmem:[#allocation2 + $0x68] sm:$0xff] 0.0
          %324 = vst [vmem:[#allocation2 + $0x70] sm:$0xff] 0.0
          %325 = vst [vmem:[#allocation2 + $0x78] sm:$0xff] 0.0
          %326 = vst [vmem:[#allocation2 + $0x80] sm:$0xff] 0.0
          %327 = vst [vmem:[#allocation2 + $0x88] sm:$0xff] 0.0
          %328 = vst [vmem:[#allocation2 + $0x90] sm:$0xff] 0.0
          %329 = vst [vmem:[#allocation2 + $0x98] sm:$0xff] 0.0
          %330 = vst [vmem:[#allocation2 + $0xa0] sm:$0xff] 0.0
          %331 = vst [vmem:[#allocation2 + $0xa8] sm:$0xff] 0.0
          %332 = vst [vmem:[#allocation2 + $0xb0] sm:$0xff] 0.0
          %333 = vst [vmem:[#allocation2 + $0xb8] sm:$0xff] 0.0
          %334 = vst [vmem:[#allocation2 + $0xc0] sm:$0xff] 0.0
          %335 = vst [vmem:[#allocation2 + $0xc8] sm:$0xff] 0.0
          %336 = vst [vmem:[#allocation2 + $0xd0] sm:$0xff] 0.0
          %337 = vst [vmem:[#allocation2 + $0xd8] sm:$0xff] 0.0
          %338 = vst [vmem:[#allocation2 + $0xe0] sm:$0xff] 0.0
          %339 = vst [vmem:[#allocation2 + $0xe8] sm:$0xff] 0.0
          %340 = vst [vmem:[#allocation2 + $0xf0] sm:$0xff] 0.0
          %341 = vst [vmem:[#allocation2 + $0xf8] sm:$0xff] 0.0
          %342 = vst [vmem:[#allocation2 + $0x100] sm:$0xff] 0.0
          %343 = vst [vmem:[#allocation2 + $0x108] sm:$0xff] 0.0
        $region52: #{embedding_forward.4} parent=35 // pred_fallthru
          _
        %v344 = vld [vmem:[#allocation2] sm:$0xff]
        %v345 = vld [vmem:[#allocation2 + $0x8] sm:$0xff]
        %v346 = vld [vmem:[#allocation2 + $0x10] sm:$0xff]
        %v347 = vld [vmem:[#allocation2 + $0x18] sm:$0xff]
        %v348 = vld [vmem:[#allocation2 + $0x20] sm:$0xff]
        %v349 = vld [vmem:[#allocation2 + $0x28] sm:$0xff]
        %v350 = vld [vmem:[#allocation2 + $0x30] sm:$0xff]
        %v351 = vld [vmem:[#allocation2 + $0x38] sm:$0xff]
        %v352 = vld [vmem:[#allocation2 + $0x40] sm:$0xff]
        %v353 = vld [vmem:[#allocation2 + $0x48] sm:$0xff]
        %v354 = vld [vmem:[#allocation2 + $0x50] sm:$0xff]
        %v355 = vld [vmem:[#allocation2 + $0x58] sm:$0xff]
        %v356 = vld [vmem:[#allocation2 + $0x60] sm:$0xff]
        %v357 = vld [vmem:[#allocation2 + $0x68] sm:$0xff]
        %v358 = vld [vmem:[#allocation2 + $0x70] sm:$0xff]
        %v359 = vld [vmem:[#allocation2 + $0x78] sm:$0xff]
        %v360 = vld [vmem:[#allocation2 + $0x80] sm:$0xff]
        %v361 = vld [vmem:[#allocation2 + $0x88] sm:$0xff]
        %v362 = vld [vmem:[#allocation2 + $0x90] sm:$0xff]
        %v363 = vld [vmem:[#allocation2 + $0x98] sm:$0xff]
        %v364 = vld [vmem:[#allocation2 + $0xa0] sm:$0xff]
        %v365 = vld [vmem:[#allocation2 + $0xa8] sm:$0xff]
        %v366 = vld [vmem:[#allocation2 + $0xb0] sm:$0xff]
        %v367 = vld [vmem:[#allocation2 + $0xb8] sm:$0xff]
        %v368 = vld [vmem:[#allocation2 + $0xc0] sm:$0xff]
        %v369 = vld [vmem:[#allocation2 + $0xc8] sm:$0xff]
        %v370 = vld [vmem:[#allocation2 + $0xd0] sm:$0xff]
        %v371 = vld [vmem:[#allocation2 + $0xd8] sm:$0xff]
        %v372 = vld [vmem:[#allocation2 + $0xe0] sm:$0xff]
        %v373 = vld [vmem:[#allocation2 + $0xe8] sm:$0xff]
        %v374 = vld [vmem:[#allocation2 + $0xf0] sm:$0xff]
        %v375 = vld [vmem:[#allocation2 + $0xf8] sm:$0xff]
        %v376 = vld [vmem:[#allocation2 + $0x100] sm:$0xff]
        %v377 = vld [vmem:[#allocation2 + $0x108] sm:$0xff]
        %v378 = vld [vmem:[%s293] sm:$0xf]
        %v379 = vld [vmem:[%s293 + $0x4] sm:$0xf]
        %v380 = vld [vmem:[%s293 + $0x8] sm:$0xf]
        %v381 = vld [vmem:[%s293 + $0xc] sm:$0xf]
        %v382 = vld [vmem:[%s293 + $0x10] sm:$0xf]
        %v383 = vld [vmem:[%s293 + $0x14] sm:$0xf]
        %v384 = vld [vmem:[%s293 + $0x18] sm:$0xf]
        %v385 = vld [vmem:[%s293 + $0x1c] sm:$0xf]
        %v386 = vld [vmem:[%s293 + $0x20] sm:$0xf]
        %v387 = vld [vmem:[%s293 + $0x24] sm:$0xf]
        %v388 = vld [vmem:[%s293 + $0x28] sm:$0xf]
        %v389 = vld [vmem:[%s293 + $0x2c] sm:$0xf]
        %v390 = vld [vmem:[%s293 + $0x30] sm:$0xf]
        %v391 = vld [vmem:[%s293 + $0x34] sm:$0xf]
        %v392 = vld [vmem:[%s293 + $0x38] sm:$0xf]
        %v393 = vld [vmem:[%s293 + $0x3c] sm:$0xf]
        %v394 = vld [vmem:[%s293 + $0x40] sm:$0xf]
        %v395 = vld [vmem:[%s293 + $0x44] sm:$0xf]
        %v396 = vld [vmem:[%s293 + $0x48] sm:$0xf]
        %v397 = vld [vmem:[%s293 + $0x4c] sm:$0xf]
        %v398 = vld [vmem:[%s293 + $0x50] sm:$0xf]
        %v399 = vld [vmem:[%s293 + $0x54] sm:$0xf]
        %v400 = vld [vmem:[%s293 + $0x58] sm:$0xf]
        %v401 = vld [vmem:[%s293 + $0x5c] sm:$0xf]
        %v402 = vld [vmem:[%s293 + $0x60] sm:$0xf]
        %v403 = vld [vmem:[%s293 + $0x64] sm:$0xf]
        %v404 = vld [vmem:[%s293 + $0x68] sm:$0xf]
        %v405 = vld [vmem:[%s293 + $0x6c] sm:$0xf]
        %v406 = vld [vmem:[%s293 + $0x70] sm:$0xf]
        %v407 = vld [vmem:[%s293 + $0x74] sm:$0xf]
        %v408 = vld [vmem:[%s293 + $0x78] sm:$0xf]
        %v409 = vld [vmem:[%s293 + $0x7c] sm:$0xf]
        %v410 = vld [vmem:[%s293 + $0x80] sm:$0xf]
        %v411 = vld [vmem:[%s293 + $0x84] sm:$0xf]
        %v412 = vld [vmem:[#allocation3] sm:$0xf]
        %v413 = vld [vmem:[#allocation3 + $0x4] sm:$0xf]
        %v414 = vld [vmem:[#allocation3 + $0x8] sm:$0xf]
        %v415 = vld [vmem:[#allocation3 + $0xc] sm:$0xf]
        %v416 = vld [vmem:[#allocation3 + $0x10] sm:$0xf]
        %v417 = vld [vmem:[#allocation3 + $0x14] sm:$0xf]
        %v418 = vld [vmem:[#allocation3 + $0x18] sm:$0xf]
        %v419 = vld [vmem:[#allocation3 + $0x1c] sm:$0xf]
        %v420 = vld [vmem:[#allocation3 + $0x20] sm:$0xf]
        %v421 = vld [vmem:[#allocation3 + $0x24] sm:$0xf]
        %v422 = vld [vmem:[#allocation3 + $0x28] sm:$0xf]
        %v423 = vld [vmem:[#allocation3 + $0x2c] sm:$0xf]
        %v424 = vld [vmem:[#allocation3 + $0x30] sm:$0xf]
        %v425 = vld [vmem:[#allocation3 + $0x34] sm:$0xf]
        %v426 = vld [vmem:[#allocation3 + $0x38] sm:$0xf]
        %v427 = vld [vmem:[#allocation3 + $0x3c] sm:$0xf]
        %v462 = vunpack.c.l.b16 %v378
        %v463 = vunpack.c.l.b16 %v379
        %v464 = vunpack.c.l.b16 %v380
        %v465 = vunpack.c.l.b16 %v381
        %v466 = vunpack.c.l.b16 %v382
        %v467 = vunpack.c.l.b16 %v383
        %v468 = vunpack.c.l.b16 %v384
        %v469 = vunpack.c.l.b16 %v385
        %v470 = vunpack.c.l.b16 %v386
        %v471 = vunpack.c.l.b16 %v387
        %v472 = vunpack.c.l.b16 %v388
        %v473 = vunpack.c.l.b16 %v389
        %v474 = vunpack.c.l.b16 %v390
        %v475 = vunpack.c.l.b16 %v391
        %v476 = vunpack.c.l.b16 %v392
        %v477 = vunpack.c.l.b16 %v393
        %v478 = vunpack.c.l.b16 %v394
        %v479 = vunpack.c.l.b16 %v395
        %v480 = vunpack.c.l.b16 %v396
        %v481 = vunpack.c.l.b16 %v397
        %v482 = vunpack.c.l.b16 %v398
        %v483 = vunpack.c.l.b16 %v399
        %v484 = vunpack.c.l.b16 %v400
        %v485 = vunpack.c.l.b16 %v401
        %v486 = vunpack.c.l.b16 %v402
        %v487 = vunpack.c.l.b16 %v403
        %v488 = vunpack.c.l.b16 %v404
        %v489 = vunpack.c.l.b16 %v405
        %v490 = vunpack.c.l.b16 %v406
        %v491 = vunpack.c.l.b16 %v407
        %v492 = vunpack.c.l.b16 %v408
        %v493 = vunpack.c.l.b16 %v409
        %v494 = vunpack.c.l.b16 %v410
        %v495 = vunpack.c.l.b16 %v411
        %v496 = vpack.c.b16 %v463, %v462
        %v497 = vpack.c.b16 %v465, %v464
        %v498 = vpack.c.b16 %v467, %v466
        %v499 = vpack.c.b16 %v469, %v468
        %v500 = vpack.c.b16 %v471, %v470
        %v501 = vpack.c.b16 %v473, %v472
        %v502 = vpack.c.b16 %v475, %v474
        %v503 = vpack.c.b16 %v477, %v476
        %v504 = vpack.c.b16 %v479, %v478
        %v505 = vpack.c.b16 %v481, %v480
        %v506 = vpack.c.b16 %v483, %v482
        %v507 = vpack.c.b16 %v485, %v484
        %v508 = vpack.c.b16 %v487, %v486
        %v509 = vpack.c.b16 %v489, %v488
        %v510 = vpack.c.b16 %v491, %v490
        %v511 = vpack.c.b16 %v493, %v492
        %v512 = vpack.c.b16 %v495, %v494
        %v546 = vunpack.c.l.b16 %v412
        %v547 = vunpack.c.l.b16 %v413
        %v548 = vunpack.c.l.b16 %v414
        %v549 = vunpack.c.l.b16 %v415
        %v550 = vunpack.c.l.b16 %v416
        %v551 = vunpack.c.l.b16 %v417
        %v552 = vunpack.c.l.b16 %v418
        %v553 = vunpack.c.l.b16 %v419
        %v554 = vunpack.c.l.b16 %v420
        %v555 = vunpack.c.l.b16 %v421
        %v556 = vunpack.c.l.b16 %v422
        %v557 = vunpack.c.l.b16 %v423
        %v558 = vunpack.c.l.b16 %v424
        %v559 = vunpack.c.l.b16 %v425
        %v560 = vunpack.c.l.b16 %v426
        %v561 = vunpack.c.l.b16 %v427
        %v562 = vpack.c.b16 %v547, %v546
        %v563 = vpack.c.b16 %v549, %v548
        %v564 = vpack.c.b16 %v551, %v550
        %v565 = vpack.c.b16 %v553, %v552
        %v566 = vpack.c.b16 %v555, %v554
        %v567 = vpack.c.b16 %v557, %v556
        %v568 = vpack.c.b16 %v559, %v558
        %v569 = vpack.c.b16 %v561, %v560
        %578 = vmatprep.subr.bf16.mxu0 0
        %579 = vmatpush1.bf16.msra.mxu0 %v562
        %580 = vmatprep.subr.bf16.mxu0 0
        %581 = vmatpush1.bf16.msra.mxu0 %v563
        %582 = vmatprep.subr.bf16.mxu0 0
        %583 = vmatpush1.bf16.msra.mxu0 %v564
        %584 = vmatprep.subr.bf16.mxu0 0
        %585 = vmatpush1.bf16.msra.mxu0 %v565
        %586 = vmatprep.subr.bf16.mxu0 0
        %587 = vmatpush1.bf16.msra.mxu0 %v566
        %588 = vmatprep.subr.bf16.mxu0 0
        %589 = vmatpush1.bf16.msra.mxu0 %v567
        %590 = vmatprep.subr.bf16.mxu0 0
        %591 = vmatpush1.bf16.msra.mxu0 %v568
        %592 = vmatprep.subr.bf16.mxu0 0
        %593 = vmatpush1.bf16.msra.mxu0 %v569
        %594 = vmatprep.subr.bf16.mxu0 0
        %595 = vmatpush1.bf16.msra.mxu0 0
        %596 = vmatprep.subr.bf16.mxu0 0
        %597 = vmatpush1.bf16.msra.mxu0 0
        %598 = vmatprep.subr.bf16.mxu0 0
        %599 = vmatpush1.bf16.msra.mxu0 0
        %600 = vmatprep.subr.bf16.mxu0 0
        %601 = vmatpush1.bf16.msra.mxu0 0
        %602 = vmatprep.subr.bf16.mxu0 0
        %603 = vmatpush1.bf16.msra.mxu0 0
        %604 = vmatprep.subr.bf16.mxu0 0
        %605 = vmatpush1.bf16.msra.mxu0 0
        %606 = vmatprep.subr.bf16.mxu0 0
        %607 = vmatpush1.bf16.msra.mxu0 0
        %608 = vmatprep.subr.bf16.mxu0 0
        %609 = vmatpush1.bf16.msra.mxu0 0
        %610 = vmatprep.mubr.bf16.mxu0 0
        %611 = vmatmul.mubr.bf16.gmra.mrb[0].mxu0 %v496
        %v612 = vpop.f32.mrb[0].mxu0
        %v613 = vadd.f32 0.0, %v612
        %v614 = vpop.f32.mrb[0].mxu0
        %v615 = vpop.f32.mrb[0].mxu0
        %v616 = vadd.f32 0.0, %v615
        %v617 = vpop.f32.mrb[0].mxu0
        %618 = vmatprep.mubr.bf16.mxu0 0
        %619 = vmatmul.mubr.bf16.gmra.mrb[0].mxu0 %v497
        %v620 = vpop.f32.mrb[0].mxu0
        %v621 = vadd.f32 0.0, %v620
        %v622 = vpop.f32.mrb[0].mxu0
        %v623 = vpop.f32.mrb[0].mxu0
        %v624 = vadd.f32 0.0, %v623
        %v625 = vpop.f32.mrb[0].mxu0
        %626 = vmatprep.mubr.bf16.mxu0 0
        %627 = vmatmul.mubr.bf16.gmra.mrb[0].mxu0 %v498
        %v628 = vpop.f32.mrb[0].mxu0
        %v629 = vadd.f32 0.0, %v628
        %v630 = vpop.f32.mrb[0].mxu0
        %v631 = vpop.f32.mrb[0].mxu0
        %v632 = vadd.f32 0.0, %v631
        %v633 = vpop.f32.mrb[0].mxu0
        %634 = vmatprep.mubr.bf16.mxu0 0
        %635 = vmatmul.mubr.bf16.gmra.mrb[0].mxu0 %v499
        %v636 = vpop.f32.mrb[0].mxu0
        %v637 = vadd.f32 0.0, %v636
        %v638 = vpop.f32.mrb[0].mxu0
        %v639 = vpop.f32.mrb[0].mxu0
        %v640 = vadd.f32 0.0, %v639
        %v641 = vpop.f32.mrb[0].mxu0
        %642 = vmatprep.mubr.bf16.mxu0 0
        %643 = vmatmul.mubr.bf16.gmra.mrb[0].mxu0 %v500
        %v644 = vpop.f32.mrb[0].mxu0
        %v645 = vadd.f32 0.0, %v644
        %v646 = vpop.f32.mrb[0].mxu0
        %v647 = vpop.f32.mrb[0].mxu0
        %v648 = vadd.f32 0.0, %v647
        %v649 = vpop.f32.mrb[0].mxu0
        %650 = vmatprep.mubr.bf16.mxu0 0
        %651 = vmatmul.mubr.bf16.gmra.mrb[0].mxu0 %v501
        %v652 = vpop.f32.mrb[0].mxu0
        %v653 = vadd.f32 0.0, %v652
        %v654 = vpop.f32.mrb[0].mxu0
        %v655 = vpop.f32.mrb[0].mxu0
        %v656 = vadd.f32 0.0, %v655
        %v657 = vpop.f32.mrb[0].mxu0
        %658 = vmatprep.mubr.bf16.mxu0 0
        %659 = vmatmul.mubr.bf16.gmra.mrb[0].mxu0 %v502
        %v660 = vpop.f32.mrb[0].mxu0
        %v661 = vadd.f32 0.0, %v660
        %v662 = vpop.f32.mrb[0].mxu0
        %v663 = vpop.f32.mrb[0].mxu0
        %v664 = vadd.f32 0.0, %v663
        %v665 = vpop.f32.mrb[0].mxu0
        %666 = vmatprep.mubr.bf16.mxu0 0
        %667 = vmatmul.mubr.bf16.gmra.mrb[0].mxu0 %v503
        %v668 = vpop.f32.mrb[0].mxu0
        %v669 = vadd.f32 0.0, %v668
        %v670 = vpop.f32.mrb[0].mxu0
        %v671 = vpop.f32.mrb[0].mxu0
        %v672 = vadd.f32 0.0, %v671
        %v673 = vpop.f32.mrb[0].mxu0
        %674 = vmatprep.mubr.bf16.mxu0 0
        %675 = vmatmul.mubr.bf16.gmra.mrb[0].mxu0 %v504
        %v676 = vpop.f32.mrb[0].mxu0
        %v677 = vadd.f32 0.0, %v676
        %v678 = vpop.f32.mrb[0].mxu0
        %v679 = vpop.f32.mrb[0].mxu0
        %v680 = vadd.f32 0.0, %v679
        %v681 = vpop.f32.mrb[0].mxu0
        %682 = vmatprep.mubr.bf16.mxu0 0
        %683 = vmatmul.mubr.bf16.gmra.mrb[0].mxu0 %v505
        %v684 = vpop.f32.mrb[0].mxu0
        %v685 = vadd.f32 0.0, %v684
        %v686 = vpop.f32.mrb[0].mxu0
        %v687 = vpop.f32.mrb[0].mxu0
        %v688 = vadd.f32 0.0, %v687
        %v689 = vpop.f32.mrb[0].mxu0
        %690 = vmatprep.mubr.bf16.mxu0 0
        %691 = vmatmul.mubr.bf16.gmra.mrb[0].mxu0 %v506
        %v692 = vpop.f32.mrb[0].mxu0
        %v693 = vadd.f32 0.0, %v692
        %v694 = vpop.f32.mrb[0].mxu0
        %v695 = vpop.f32.mrb[0].mxu0
        %v696 = vadd.f32 0.0, %v695
        %v697 = vpop.f32.mrb[0].mxu0
        %698 = vmatprep.mubr.bf16.mxu0 0
        %699 = vmatmul.mubr.bf16.gmra.mrb[0].mxu0 %v507
        %v700 = vpop.f32.mrb[0].mxu0
        %v701 = vadd.f32 0.0, %v700
        %v702 = vpop.f32.mrb[0].mxu0
        %v703 = vpop.f32.mrb[0].mxu0
        %v704 = vadd.f32 0.0, %v703
        %v705 = vpop.f32.mrb[0].mxu0
        %706 = vmatprep.mubr.bf16.mxu0 0
        %707 = vmatmul.mubr.bf16.gmra.mrb[0].mxu0 %v508
        %v708 = vpop.f32.mrb[0].mxu0
        %v709 = vadd.f32 0.0, %v708
        %v710 = vpop.f32.mrb[0].mxu0
        %v711 = vpop.f32.mrb[0].mxu0
        %v712 = vadd.f32 0.0, %v711
        %v713 = vpop.f32.mrb[0].mxu0
        %714 = vmatprep.mubr.bf16.mxu0 0
        %715 = vmatmul.mubr.bf16.gmra.mrb[0].mxu0 %v509
        %v716 = vpop.f32.mrb[0].mxu0
        %v717 = vadd.f32 0.0, %v716
        %v718 = vpop.f32.mrb[0].mxu0
        %v719 = vpop.f32.mrb[0].mxu0
        %v720 = vadd.f32 0.0, %v719
        %v721 = vpop.f32.mrb[0].mxu0
        %722 = vmatprep.mubr.bf16.mxu0 0
        %723 = vmatmul.mubr.bf16.gmra.mrb[0].mxu0 %v510
        %v724 = vpop.f32.mrb[0].mxu0
        %v725 = vadd.f32 0.0, %v724
        %v726 = vpop.f32.mrb[0].mxu0
        %v727 = vpop.f32.mrb[0].mxu0
        %v728 = vadd.f32 0.0, %v727
        %v729 = vpop.f32.mrb[0].mxu0
        %730 = vmatprep.mubr.bf16.mxu0 0
        %731 = vmatmul.mubr.bf16.gmra.mrb[0].mxu0 %v511
        %v732 = vpop.f32.mrb[0].mxu0
        %v733 = vadd.f32 0.0, %v732
        %v734 = vpop.f32.mrb[0].mxu0
        %v735 = vpop.f32.mrb[0].mxu0
        %v736 = vadd.f32 0.0, %v735
        %v737 = vpop.f32.mrb[0].mxu0
        %738 = vmatprep.mubr.bf16.mxu0 0
        %739 = vmatmul.mubr.bf16.gmra.mrb[0].mxu0 %v512
        %v740 = vpop.f32.mrb[0].mxu0
        %v741 = vadd.f32 0.0, %v740
        %v742 = vpop.f32.mrb[0].mxu0
        %v743 = vpop.f32.mrb[0].mxu0
        %v744 = vadd.f32 0.0, %v743
        %v745 = vpop.f32.mrb[0].mxu0
        %746 = vdwg.mxu0
        %v747 = vadd.f32 %v344, %v613
        %v748 = vadd.f32 %v345, %v616
        %v749 = vadd.f32 %v346, %v621
        %v750 = vadd.f32 %v347, %v624
        %v751 = vadd.f32 %v348, %v629
        %v752 = vadd.f32 %v349, %v632
        %v753 = vadd.f32 %v350, %v637
        %v754 = vadd.f32 %v351, %v640
        %v755 = vadd.f32 %v352, %v645
        %v756 = vadd.f32 %v353, %v648
        %v757 = vadd.f32 %v354, %v653
        %v758 = vadd.f32 %v355, %v656
        %v759 = vadd.f32 %v356, %v661
        %v760 = vadd.f32 %v357, %v664
        %v761 = vadd.f32 %v358, %v669
        %v762 = vadd.f32 %v359, %v672
        %v763 = vadd.f32 %v360, %v677
        %v764 = vadd.f32 %v361, %v680
        %v765 = vadd.f32 %v362, %v685
        %v766 = vadd.f32 %v363, %v688
        %v767 = vadd.f32 %v364, %v693
        %v768 = vadd.f32 %v365, %v696
        %v769 = vadd.f32 %v366, %v701
        %v770 = vadd.f32 %v367, %v704
        %v771 = vadd.f32 %v368, %v709
        %v772 = vadd.f32 %v369, %v712
        %v773 = vadd.f32 %v370, %v717
        %v774 = vadd.f32 %v371, %v720
        %v775 = vadd.f32 %v372, %v725
        %v776 = vadd.f32 %v373, %v728
        %v777 = vadd.f32 %v374, %v733
        %v778 = vadd.f32 %v375, %v736
        %v779 = vadd.f32 %v376, %v741
        %v780 = vadd.f32 %v377, %v744
        %781 = vst [vmem:[#allocation2] sm:$0xff] %v747
        %782 = vst [vmem:[#allocation2 + $0x8] sm:$0xff] %v748
        %783 = vst [vmem:[#allocation2 + $0x10] sm:$0xff] %v749
        %784 = vst [vmem:[#allocation2 + $0x18] sm:$0xff] %v750
        %785 = vst [vmem:[#allocation2 + $0x20] sm:$0xff] %v751
        %786 = vst [vmem:[#allocation2 + $0x28] sm:$0xff] %v752
        %787 = vst [vmem:[#allocation2 + $0x30] sm:$0xff] %v753
        %788 = vst [vmem:[#allocation2 + $0x38] sm:$0xff] %v754
        %789 = vst [vmem:[#allocation2 + $0x40] sm:$0xff] %v755
        %790 = vst [vmem:[#allocation2 + $0x48] sm:$0xff] %v756
        %791 = vst [vmem:[#allocation2 + $0x50] sm:$0xff] %v757
        %792 = vst [vmem:[#allocation2 + $0x58] sm:$0xff] %v758
        %793 = vst [vmem:[#allocation2 + $0x60] sm:$0xff] %v759
        %794 = vst [vmem:[#allocation2 + $0x68] sm:$0xff] %v760
        %795 = vst [vmem:[#allocation2 + $0x70] sm:$0xff] %v761
        %796 = vst [vmem:[#allocation2 + $0x78] sm:$0xff] %v762
        %797 = vst [vmem:[#allocation2 + $0x80] sm:$0xff] %v763
        %798 = vst [vmem:[#allocation2 + $0x88] sm:$0xff] %v764
        %799 = vst [vmem:[#allocation2 + $0x90] sm:$0xff] %v765
        %800 = vst [vmem:[#allocation2 + $0x98] sm:$0xff] %v766
        %801 = vst [vmem:[#allocation2 + $0xa0] sm:$0xff] %v767
        %802 = vst [vmem:[#allocation2 + $0xa8] sm:$0xff] %v768
        %803 = vst [vmem:[#allocation2 + $0xb0] sm:$0xff] %v769
        %804 = vst [vmem:[#allocation2 + $0xb8] sm:$0xff] %v770
        %805 = vst [vmem:[#allocation2 + $0xc0] sm:$0xff] %v771
        %806 = vst [vmem:[#allocation2 + $0xc8] sm:$0xff] %v772
        %807 = vst [vmem:[#allocation2 + $0xd0] sm:$0xff] %v773
        %808 = vst [vmem:[#allocation2 + $0xd8] sm:$0xff] %v774
        %809 = vst [vmem:[#allocation2 + $0xe0] sm:$0xff] %v775
        %810 = vst [vmem:[#allocation2 + $0xe8] sm:$0xff] %v776
        %811 = vst [vmem:[#allocation2 + $0xf0] sm:$0xff] %v777
        %812 = vst [vmem:[#allocation2 + $0xf8] sm:$0xff] %v778
        %813 = vst [vmem:[#allocation2 + $0x100] sm:$0xff] %v779
        %814 = vst [vmem:[#allocation2 + $0x108] sm:$0xff] %v780
        // Predicated region
        $region53: #{embedding_forward.4} parent=35 // pred_check
          %p815 = pneg %p306
        $region54: #{embedding_forward.4} parent=35 // pred_check_branch
          %817 = sbr.rel (%p815) target = $region56
        $region55: #{embedding_forward.4} parent=35 // pred_region
          %v818 = vld [vmem:[#allocation2] sm:$0xff]
          %v819 = vld [vmem:[#allocation2 + $0x8] sm:$0xff]
          %v820 = vld [vmem:[#allocation2 + $0x10] sm:$0xff]
          %v821 = vld [vmem:[#allocation2 + $0x18] sm:$0xff]
          %v822 = vld [vmem:[#allocation2 + $0x20] sm:$0xff]
          %v823 = vld [vmem:[#allocation2 + $0x28] sm:$0xff]
          %v824 = vld [vmem:[#allocation2 + $0x30] sm:$0xff]
          %v825 = vld [vmem:[#allocation2 + $0x38] sm:$0xff]
          %v826 = vld [vmem:[#allocation2 + $0x40] sm:$0xff]
          %v827 = vld [vmem:[#allocation2 + $0x48] sm:$0xff]
          %v828 = vld [vmem:[#allocation2 + $0x50] sm:$0xff]
          %v829 = vld [vmem:[#allocation2 + $0x58] sm:$0xff]
          %v830 = vld [vmem:[#allocation2 + $0x60] sm:$0xff]
          %v831 = vld [vmem:[#allocation2 + $0x68] sm:$0xff]
          %v832 = vld [vmem:[#allocation2 + $0x70] sm:$0xff]
          %v833 = vld [vmem:[#allocation2 + $0x78] sm:$0xff]
          %v834 = vld [vmem:[#allocation2 + $0x80] sm:$0xff]
          %v835 = vld [vmem:[#allocation2 + $0x88] sm:$0xff]
          %v836 = vld [vmem:[#allocation2 + $0x90] sm:$0xff]
          %v837 = vld [vmem:[#allocation2 + $0x98] sm:$0xff]
          %v838 = vld [vmem:[#allocation2 + $0xa0] sm:$0xff]
          %v839 = vld [vmem:[#allocation2 + $0xa8] sm:$0xff]
          %v840 = vld [vmem:[#allocation2 + $0xb0] sm:$0xff]
          %v841 = vld [vmem:[#allocation2 + $0xb8] sm:$0xff]
          %v842 = vld [vmem:[#allocation2 + $0xc0] sm:$0xff]
          %v843 = vld [vmem:[#allocation2 + $0xc8] sm:$0xff]
          %v844 = vld [vmem:[#allocation2 + $0xd0] sm:$0xff]
          %v845 = vld [vmem:[#allocation2 + $0xd8] sm:$0xff]
          %v846 = vld [vmem:[#allocation2 + $0xe0] sm:$0xff]
          %v847 = vld [vmem:[#allocation2 + $0xe8] sm:$0xff]
          %v848 = vld [vmem:[#allocation2 + $0xf0] sm:$0xff]
          %v849 = vld [vmem:[#allocation2 + $0xf8] sm:$0xff]
          %v850 = vld [vmem:[#allocation2 + $0x100] sm:$0xff]
          %v851 = vld [vmem:[#allocation2 + $0x108] sm:$0xff]
          %v852 = vld [vmem:[#allocation5] sm:$0x1]
          %v854 = vlaneseq
          %v855 = vshrl.u32 %v854, 7
          %v856 = vsub.s32 0, %v855
          %v857 = vrot.slane %v852, %v856
          %v859 = vmul.f32 %v818, %v857
          %v860 = vmul.f32 %v819, %v857
          %v861 = vmul.f32 %v820, %v857
          %v862 = vmul.f32 %v821, %v857
          %v863 = vmul.f32 %v822, %v857
          %v864 = vmul.f32 %v823, %v857
          %v865 = vmul.f32 %v824, %v857
          %v866 = vmul.f32 %v825, %v857
          %v867 = vmul.f32 %v826, %v857
          %v868 = vmul.f32 %v827, %v857
          %v869 = vmul.f32 %v828, %v857
          %v870 = vmul.f32 %v829, %v857
          %v871 = vmul.f32 %v830, %v857
          %v872 = vmul.f32 %v831, %v857
          %v873 = vmul.f32 %v832, %v857
          %v874 = vmul.f32 %v833, %v857
          %v875 = vmul.f32 %v834, %v857
          %v876 = vmul.f32 %v835, %v857
          %v877 = vmul.f32 %v836, %v857
          %v878 = vmul.f32 %v837, %v857
          %v879 = vmul.f32 %v838, %v857
          %v880 = vmul.f32 %v839, %v857
          %v881 = vmul.f32 %v840, %v857
          %v882 = vmul.f32 %v841, %v857
          %v883 = vmul.f32 %v842, %v857
          %v884 = vmul.f32 %v843, %v857
          %v885 = vmul.f32 %v844, %v857
          %v886 = vmul.f32 %v845, %v857
          %v887 = vmul.f32 %v846, %v857
          %v888 = vmul.f32 %v847, %v857
          %v889 = vmul.f32 %v848, %v857
          %v890 = vmul.f32 %v849, %v857
          %v891 = vmul.f32 %v850, %v857
          %v892 = vmul.f32 %v851, %v857
          %v893 = vld [vmem:[#allocation7] sm:$0x1]
          %v895 = vlaneseq
          %v896 = vshrl.u32 %v895, 7
          %v897 = vsub.s32 0, %v896
          %v898 = vrot.slane %v893, %v897
          %v900 = vadd.f32 %v859, %v898
          %v901 = vadd.f32 %v860, %v898
          %v902 = vadd.f32 %v861, %v898
          %v903 = vadd.f32 %v862, %v898
          %v904 = vadd.f32 %v863, %v898
          %v905 = vadd.f32 %v864, %v898
          %v906 = vadd.f32 %v865, %v898
          %v907 = vadd.f32 %v866, %v898
          %v908 = vadd.f32 %v867, %v898
          %v909 = vadd.f32 %v868, %v898
          %v910 = vadd.f32 %v869, %v898
          %v911 = vadd.f32 %v870, %v898
          %v912 = vadd.f32 %v871, %v898
          %v913 = vadd.f32 %v872, %v898
          %v914 = vadd.f32 %v873, %v898
          %v915 = vadd.f32 %v874, %v898
          %v916 = vadd.f32 %v875, %v898
          %v917 = vadd.f32 %v876, %v898
          %v918 = vadd.f32 %v877, %v898
          %v919 = vadd.f32 %v878, %v898
          %v920 = vadd.f32 %v879, %v898
          %v921 = vadd.f32 %v880, %v898
          %v922 = vadd.f32 %v881, %v898
          %v923 = vadd.f32 %v882, %v898
          %v924 = vadd.f32 %v883, %v898
          %v925 = vadd.f32 %v884, %v898
          %v926 = vadd.f32 %v885, %v898
          %v927 = vadd.f32 %v886, %v898
          %v928 = vadd.f32 %v887, %v898
          %v929 = vadd.f32 %v888, %v898
          %v930 = vadd.f32 %v889, %v898
          %v931 = vadd.f32 %v890, %v898
          %v932 = vadd.f32 %v891, %v898
          %v933 = vadd.f32 %v892, %v898
          %vm934 = vcmp.gt.f32.partialorder %v900, 0.0
          %vm935 = vcmp.gt.f32.partialorder %v901, 0.0
          %vm936 = vcmp.gt.f32.partialorder %v902, 0.0
          %vm937 = vcmp.gt.f32.partialorder %v903, 0.0
          %vm938 = vcmp.gt.f32.partialorder %v904, 0.0
          %vm939 = vcmp.gt.f32.partialorder %v905, 0.0
          %vm940 = vcmp.gt.f32.partialorder %v906, 0.0
          %vm941 = vcmp.gt.f32.partialorder %v907, 0.0
          %vm942 = vcmp.gt.f32.partialorder %v908, 0.0
          %vm943 = vcmp.gt.f32.partialorder %v909, 0.0
          %vm944 = vcmp.gt.f32.partialorder %v910, 0.0
          %vm945 = vcmp.gt.f32.partialorder %v911, 0.0
          %vm946 = vcmp.gt.f32.partialorder %v912, 0.0
          %vm947 = vcmp.gt.f32.partialorder %v913, 0.0
          %vm948 = vcmp.gt.f32.partialorder %v914, 0.0
          %vm949 = vcmp.gt.f32.partialorder %v915, 0.0
          %vm950 = vcmp.gt.f32.partialorder %v916, 0.0
          %vm951 = vcmp.gt.f32.partialorder %v917, 0.0
          %vm952 = vcmp.gt.f32.partialorder %v918, 0.0
          %vm953 = vcmp.gt.f32.partialorder %v919, 0.0
          %vm954 = vcmp.gt.f32.partialorder %v920, 0.0
          %vm955 = vcmp.gt.f32.partialorder %v921, 0.0
          %vm956 = vcmp.gt.f32.partialorder %v922, 0.0
          %vm957 = vcmp.gt.f32.partialorder %v923, 0.0
          %vm958 = vcmp.gt.f32.partialorder %v924, 0.0
          %vm959 = vcmp.gt.f32.partialorder %v925, 0.0
          %vm960 = vcmp.gt.f32.partialorder %v926, 0.0
          %vm961 = vcmp.gt.f32.partialorder %v927, 0.0
          %vm962 = vcmp.gt.f32.partialorder %v928, 0.0
          %vm963 = vcmp.gt.f32.partialorder %v929, 0.0
          %vm964 = vcmp.gt.f32.partialorder %v930, 0.0
          %vm965 = vcmp.gt.f32.partialorder %v931, 0.0
          %vm966 = vcmp.gt.f32.partialorder %v932, 0.0
          %vm967 = vcmp.gt.f32.partialorder %v933, 0.0
          %v968 = vmul.f32 %v900, 0.1
          %v969 = vmul.f32 %v901, 0.1
          %v970 = vmul.f32 %v902, 0.1
          %v971 = vmul.f32 %v903, 0.1
          %v972 = vmul.f32 %v904, 0.1
          %v973 = vmul.f32 %v905, 0.1
          %v974 = vmul.f32 %v906, 0.1
          %v975 = vmul.f32 %v907, 0.1
          %v976 = vmul.f32 %v908, 0.1
          %v977 = vmul.f32 %v909, 0.1
          %v978 = vmul.f32 %v910, 0.1
          %v979 = vmul.f32 %v911, 0.1
          %v980 = vmul.f32 %v912, 0.1
          %v981 = vmul.f32 %v913, 0.1
          %v982 = vmul.f32 %v914, 0.1
          %v983 = vmul.f32 %v915, 0.1
          %v984 = vmul.f32 %v916, 0.1
          %v985 = vmul.f32 %v917, 0.1
          %v986 = vmul.f32 %v918, 0.1
          %v987 = vmul.f32 %v919, 0.1
          %v988 = vmul.f32 %v920, 0.1
          %v989 = vmul.f32 %v921, 0.1
          %v990 = vmul.f32 %v922, 0.1
          %v991 = vmul.f32 %v923, 0.1
          %v992 = vmul.f32 %v924, 0.1
          %v993 = vmul.f32 %v925, 0.1
          %v994 = vmul.f32 %v926, 0.1
          %v995 = vmul.f32 %v927, 0.1
          %v996 = vmul.f32 %v928, 0.1
          %v997 = vmul.f32 %v929, 0.1
          %v998 = vmul.f32 %v930, 0.1
          %v999 = vmul.f32 %v931, 0.1
          %v1000 = vmul.f32 %v932, 0.1
          %v1001 = vmul.f32 %v933, 0.1
          %v1002 = vsel %vm934, %v900, %v968
          %v1003 = vsel %vm935, %v901, %v969
          %v1004 = vsel %vm936, %v902, %v970
          %v1005 = vsel %vm937, %v903, %v971
          %v1006 = vsel %vm938, %v904, %v972
          %v1007 = vsel %vm939, %v905, %v973
          %v1008 = vsel %vm940, %v906, %v974
          %v1009 = vsel %vm941, %v907, %v975
          %v1010 = vsel %vm942, %v908, %v976
          %v1011 = vsel %vm943, %v909, %v977
          %v1012 = vsel %vm944, %v910, %v978
          %v1013 = vsel %vm945, %v911, %v979
          %v1014 = vsel %vm946, %v912, %v980
          %v1015 = vsel %vm947, %v913, %v981
          %v1016 = vsel %vm948, %v914, %v982
          %v1017 = vsel %vm949, %v915, %v983
          %v1018 = vsel %vm950, %v916, %v984
          %v1019 = vsel %vm951, %v917, %v985
          %v1020 = vsel %vm952, %v918, %v986
          %v1021 = vsel %vm953, %v919, %v987
          %v1022 = vsel %vm954, %v920, %v988
          %v1023 = vsel %vm955, %v921, %v989
          %v1024 = vsel %vm956, %v922, %v990
          %v1025 = vsel %vm957, %v923, %v991
          %v1026 = vsel %vm958, %v924, %v992
          %v1027 = vsel %vm959, %v925, %v993
          %v1028 = vsel %vm960, %v926, %v994
          %v1029 = vsel %vm961, %v927, %v995
          %v1030 = vsel %vm962, %v928, %v996
          %v1031 = vsel %vm963, %v929, %v997
          %v1032 = vsel %vm964, %v930, %v998
          %v1033 = vsel %vm965, %v931, %v999
          %v1034 = vsel %vm966, %v932, %v1000
          %v1035 = vsel %vm967, %v933, %v1001
          %v1036 = vpack.c.bf16 %v1003, %v1002
          %v1037 = vpack.c.bf16 %v1005, %v1004
          %v1038 = vpack.c.bf16 %v1007, %v1006
          %v1039 = vpack.c.bf16 %v1009, %v1008
          %v1040 = vpack.c.bf16 %v1011, %v1010
          %v1041 = vpack.c.bf16 %v1013, %v1012
          %v1042 = vpack.c.bf16 %v1015, %v1014
          %v1043 = vpack.c.bf16 %v1017, %v1016
          %v1044 = vpack.c.bf16 %v1019, %v1018
          %v1045 = vpack.c.bf16 %v1021, %v1020
          %v1046 = vpack.c.bf16 %v1023, %v1022
          %v1047 = vpack.c.bf16 %v1025, %v1024
          %v1048 = vpack.c.bf16 %v1027, %v1026
          %v1049 = vpack.c.bf16 %v1029, %v1028
          %v1050 = vpack.c.bf16 %v1031, %v1030
          %v1051 = vpack.c.bf16 %v1033, %v1032
          %v1052 = vpack.c.bf16 %v1035, %v1034
          %v1070 = vunpack.c.l.b16 %v1036
          %v1071 = vunpack.c.h.b16 %v1036
          %v1072 = vunpack.c.l.b16 %v1037
          %v1073 = vunpack.c.h.b16 %v1037
          %v1074 = vunpack.c.l.b16 %v1038
          %v1075 = vunpack.c.h.b16 %v1038
          %v1076 = vunpack.c.l.b16 %v1039
          %v1077 = vunpack.c.h.b16 %v1039
          %v1078 = vunpack.c.l.b16 %v1040
          %v1079 = vunpack.c.h.b16 %v1040
          %v1080 = vunpack.c.l.b16 %v1041
          %v1081 = vunpack.c.h.b16 %v1041
          %v1082 = vunpack.c.l.b16 %v1042
          %v1083 = vunpack.c.h.b16 %v1042
          %v1084 = vunpack.c.l.b16 %v1043
          %v1085 = vunpack.c.h.b16 %v1043
          %v1086 = vunpack.c.l.b16 %v1044
          %v1087 = vunpack.c.h.b16 %v1044
          %v1088 = vunpack.c.l.b16 %v1045
          %v1089 = vunpack.c.h.b16 %v1045
          %v1090 = vunpack.c.l.b16 %v1046
          %v1091 = vunpack.c.h.b16 %v1046
          %v1092 = vunpack.c.l.b16 %v1047
          %v1093 = vunpack.c.h.b16 %v1047
          %v1094 = vunpack.c.l.b16 %v1048
          %v1095 = vunpack.c.h.b16 %v1048
          %v1096 = vunpack.c.l.b16 %v1049
          %v1097 = vunpack.c.h.b16 %v1049
          %v1098 = vunpack.c.l.b16 %v1050
          %v1099 = vunpack.c.h.b16 %v1050
          %v1100 = vunpack.c.l.b16 %v1051
          %v1101 = vunpack.c.h.b16 %v1051
          %v1102 = vunpack.c.l.b16 %v1052
          %v1103 = vunpack.c.h.b16 %v1052
          %v1104 = vpack.c.b16 %v1070, %v1070
          %v1105 = vpack.c.b16 %v1071, %v1071
          %v1106 = vpack.c.b16 %v1072, %v1072
          %v1107 = vpack.c.b16 %v1073, %v1073
          %v1108 = vpack.c.b16 %v1074, %v1074
          %v1109 = vpack.c.b16 %v1075, %v1075
          %v1110 = vpack.c.b16 %v1076, %v1076
          %v1111 = vpack.c.b16 %v1077, %v1077
          %v1112 = vpack.c.b16 %v1078, %v1078
          %v1113 = vpack.c.b16 %v1079, %v1079
          %v1114 = vpack.c.b16 %v1080, %v1080
          %v1115 = vpack.c.b16 %v1081, %v1081
          %v1116 = vpack.c.b16 %v1082, %v1082
          %v1117 = vpack.c.b16 %v1083, %v1083
          %v1118 = vpack.c.b16 %v1084, %v1084
          %v1119 = vpack.c.b16 %v1085, %v1085
          %v1120 = vpack.c.b16 %v1086, %v1086
          %v1121 = vpack.c.b16 %v1087, %v1087
          %v1122 = vpack.c.b16 %v1088, %v1088
          %v1123 = vpack.c.b16 %v1089, %v1089
          %v1124 = vpack.c.b16 %v1090, %v1090
          %v1125 = vpack.c.b16 %v1091, %v1091
          %v1126 = vpack.c.b16 %v1092, %v1092
          %v1127 = vpack.c.b16 %v1093, %v1093
          %v1128 = vpack.c.b16 %v1094, %v1094
          %v1129 = vpack.c.b16 %v1095, %v1095
          %v1130 = vpack.c.b16 %v1096, %v1096
          %v1131 = vpack.c.b16 %v1097, %v1097
          %v1132 = vpack.c.b16 %v1098, %v1098
          %v1133 = vpack.c.b16 %v1099, %v1099
          %v1134 = vpack.c.b16 %v1100, %v1100
          %v1135 = vpack.c.b16 %v1101, %v1101
          %v1136 = vpack.c.b16 %v1102, %v1102
          %v1137 = vpack.c.b16 %v1103, %v1103
          %1172 = vst [vmem:[%s303] sm:$0xf] %v1104
          %1173 = vst [vmem:[%s303 + $0x4] sm:$0xf] %v1105
          %1174 = vst [vmem:[%s303 + $0x8] sm:$0xf] %v1106
          %1175 = vst [vmem:[%s303 + $0xc] sm:$0xf] %v1107
          %1176 = vst [vmem:[%s303 + $0x10] sm:$0xf] %v1108
          %1177 = vst [vmem:[%s303 + $0x14] sm:$0xf] %v1109
          %1178 = vst [vmem:[%s303 + $0x18] sm:$0xf] %v1110
          %1179 = vst [vmem:[%s303 + $0x1c] sm:$0xf] %v1111
          %1180 = vst [vmem:[%s303 + $0x20] sm:$0xf] %v1112
          %1181 = vst [vmem:[%s303 + $0x24] sm:$0xf] %v1113
          %1182 = vst [vmem:[%s303 + $0x28] sm:$0xf] %v1114
          %1183 = vst [vmem:[%s303 + $0x2c] sm:$0xf] %v1115
          %1184 = vst [vmem:[%s303 + $0x30] sm:$0xf] %v1116
          %1185 = vst [vmem:[%s303 + $0x34] sm:$0xf] %v1117
          %1186 = vst [vmem:[%s303 + $0x38] sm:$0xf] %v1118
          %1187 = vst [vmem:[%s303 + $0x3c] sm:$0xf] %v1119
          %1188 = vst [vmem:[%s303 + $0x40] sm:$0xf] %v1120
          %1189 = vst [vmem:[%s303 + $0x44] sm:$0xf] %v1121
          %1190 = vst [vmem:[%s303 + $0x48] sm:$0xf] %v1122
          %1191 = vst [vmem:[%s303 + $0x4c] sm:$0xf] %v1123
          %1192 = vst [vmem:[%s303 + $0x50] sm:$0xf] %v1124
          %1193 = vst [vmem:[%s303 + $0x54] sm:$0xf] %v1125
          %1194 = vst [vmem:[%s303 + $0x58] sm:$0xf] %v1126
          %1195 = vst [vmem:[%s303 + $0x5c] sm:$0xf] %v1127
          %1196 = vst [vmem:[%s303 + $0x60] sm:$0xf] %v1128
          %1197 = vst [vmem:[%s303 + $0x64] sm:$0xf] %v1129
          %1198 = vst [vmem:[%s303 + $0x68] sm:$0xf] %v1130
          %1199 = vst [vmem:[%s303 + $0x6c] sm:$0xf] %v1131
          %1200 = vst [vmem:[%s303 + $0x70] sm:$0xf] %v1132
          %1201 = vst [vmem:[%s303 + $0x74] sm:$0xf] %v1133
          %1202 = vst [vmem:[%s303 + $0x78] sm:$0xf] %v1134
          %1203 = vst [vmem:[%s303 + $0x7c] sm:$0xf] %v1135
          %1204 = vst [vmem:[%s303 + $0x80] sm:$0xf] %v1136
          %1205 = vst [vmem:[%s303 + $0x84] sm:$0xf] %v1137
        $region56: #{embedding_forward.4} parent=35 // pred_fallthru
          _
        %s1206 = smul.u32 34, %s22
        %p1207 = scmp.lt.s32.totalorder %s1206, 135
        %s1208 = scalar_select %p1207, %s1206, 135
        %p1209 = scmp.lt.s32.totalorder %s23, 0
        %s1210 = scalar_select %p1209, %s23, 0
        %s1211 = sadd.s32 %s1210, %s1208
        %s1212 = smul.addr %s1211, 4
        %s1213 = scalar_lea.vmem %s4, %s1212
        // Predicated region
        $region57: #{embedding_forward.4} parent=35 // pred_check
          %p1214 = pneg %p164
        $region58: #{embedding_forward.4} parent=35 // pred_check_branch
          %1216 = sbr.rel (%p1214) target = $region60
        $region59: #{embedding_forward.4} parent=35 // pred_region
          %s1217 = smul.u32 34, %s22
        $region60: #{embedding_forward.4} parent=35 // pred_fallthru
          _
      $region36: #{embedding_forward.4} parent=5 // pred_fallthru
        _
      %p1218 = scmp.le.s32.totalorder 2, %s12
      // Predicated region
      $region61: #{embedding_forward.4} parent=5 // pred_check
        %p1219 = pneg %p1218
      $region62: #{embedding_forward.4} parent=5 // pred_check_branch
        %1221 = sbr.rel (%p1219) target = $region64
      $region63: #{embedding_forward.4} parent=5 // pred_region
        %s1222 = ssub.s32 %s12, 2
        // Predicated region
        $region65: #{embedding_forward.4} parent=63 // pred_check
          %p1223 = pneg %p170
        $region66: #{embedding_forward.4} parent=63 // pred_check_branch
          %1225 = sbr.rel (%p1223) target = $region68
        $region67: #{embedding_forward.4} parent=63 // pred_region
          %s1226 = smul.u32 34, %s25
          %p1227 = scmp.lt.s32.totalorder %s1226, 135
          %s1228 = scalar_select %p1227, %s1226, 135
          %p1229 = scmp.lt.s32.totalorder %s26, 0
          %s1230 = scalar_select %p1229, %s26, 0
          %s1231 = sadd.s32 %s1230, %s1228
          %s1232 = smul.addr %s1231, 4
          %s1233 = scalar_lea.vmem %s4, %s1232
        $region68: #{embedding_forward.4} parent=63 // pred_fallthru
          _
      $region64: #{embedding_forward.4} parent=5 // pred_fallthru
        _
    $region6: #{embedding_forward.4} parent=1 // loop_footer
      %s16 = sadd.s32 1, %s12
    $region7: #{embedding_forward.4} parent=1 // loop_footer_branch
      %11 = sbr.rel target = $region3
    $region8: #{embedding_forward.4} parent=1 // loop_exit
      _
    %1234 = vsyncpa [#allocation4], 1
    %s1235 = scalar_lea.sflag [#allocation4], 1
    %1236 = vsyncpa %s1235, 1
    %1237 = vsyncpa [#allocation6], 1

// kernel: embedding_forward.5
$region0: #{embedding_forward.5}
  #allocation0 [shape = 'u32[]', space=smem, size = 0x4, offset = 0x4, fixed_abs, tag = 'smem constant byte address 0x4 - core index']
  #allocation1 [shape = 'u32[144,128]{1,0:T(1,128)}', space=vmem, size = 0x12000, scoped, tag = 'internal scratch']
  #allocation2 [shape = 'f32[128,128]{1,0:T(8,128)}', space=vmem, size = 0x10000, scoped, tag = 'scratch operand']
  %s0 = inlined_call_operand.vmem [shape: bf16[256,6272], index: 0, kind: input, shape index: {}]
  %s1 = inlined_call_operand.vmem [shape: bf16[6272,128], index: 1, kind: input, shape index: {}]
  %s2 = inlined_call_operand.vmem [shape: f32[1,128], index: 2, kind: input, shape index: {}]
  %s3 = inlined_call_operand.vmem [shape: f32[1,128], index: 3, kind: input, shape index: {}]
  %s4 = inlined_call_operand.vmem [shape: bf16[256,128], index: 4, kind: output, shape index: {}]
  %s5 = sld [smem:[#allocation0]]
  $region83: #{embedding_forward.5} parent=0
    _
  %s7 = ssub.s32 1, %s5
  %s8 = scalar_select 0, %s7, %s5
  $region1: #{embedding_forward.5} parent=0
    #allocation3 [shape = 'u8[458752]{0}', space=vmem, size = 0x70000, scoped, tag = 'input window, operand 0']
    loop: start=0, step=1, limit=16
    $region2: #{embedding_forward.5} parent=1 // loop_pre_header
      _
    $region3: #{embedding_forward.5} parent=1 // loop_header
      %s10 = sphi 0, %s14
      %p11 = scmp.ge.s32.totalorder %s10, 16
      %s17 = sphi 0, %s36
      %s18 = sphi 0, %s32
      %s19 = sphi 0, %s28
      %s20 = sphi 0, %s17
      %s21 = sphi 0, %s18
      %s22 = sphi 0, %s19
      %s23 = sphi 0, %s20
      %s24 = sphi 0, %s21
      %s25 = sphi 0, %s22
      %s41 = sphi 0, %s43
      %s44 = sphi 0, %s41
      %s45 = sphi 0, %s44
      %s61 = sphi 0, %s45
      %s69 = sphi 0, %s71
      %s72 = sphi 0, %s69
      %s73 = sphi 0, %s72
      %s89 = sphi 0, %s73
      %s95 = sphi 0, %s97
      %s98 = sphi 0, %s95
      %s99 = sphi 0, %s98
      %s115 = sphi 0, %s99
      %s121 = sphi 0, %s123
      %s124 = sphi 0, %s121
      %s125 = sphi 0, %s124
      %s141 = sphi 0, %s125
      %s149 = sphi 0, %s151
      %s152 = sphi 0, %s149
      %s153 = sphi 0, %s152
      %s169 = sphi 0, %s153
    $region4: #{embedding_forward.5} parent=1 // loop_header_branch
      %13 = sbr.rel (%p11) target = $region8
    $region5: #{embedding_forward.5} parent=1 // loop_body
      %s15 = ssub.s32 %s10, 1
      %s16 = ssub.s32 %s10, 2
      %s26 = sadd.s32 1, %s19
      %p27 = scmp.ge.s32.totalorder %s26, 7
      %s28 = scalar_select %p27, 0, %s26
      %s29 = sadd.s32 1, %s18
      %s30 = scalar_select %p27, %s29, %s18
      %p31 = scmp.ge.s32.totalorder %s30, 1
      %s32 = scalar_select %p31, 0, %s30
      %s33 = sadd.s32 1, %s17
      %s34 = scalar_select %p31, %s33, %s17
      %p35 = scmp.ge.s32.totalorder %s34, 2
      %s36 = scalar_select %p35, 0, %s34
      %s37 = ssub.s32 %s17, %s36
      %s38 = ssub.s32 %s19, %s28
      %s39 = sor.u32 %s37, %s38
      %p40 = scmp.eq.s32.totalorder %s39, 0
      %s42 = sadd.s32 %s41, 1
      %s43 = scalar_select %p40, %s41, %s42
      %p46 = pneg %p40
      %p47 = scmp.eq.s32.totalorder %s10, 13
      %p48 = por %p46, %p47
      %p49 = scmp.ne.s32.totalorder %s41, %s44
      %p50 = scmp.eq.s32.totalorder %s10, 0
      %p51 = por %p49, %p50
      %p52 = scmp.ne.s32.totalorder %s41, %s44
      %p53 = scmp.eq.s32.totalorder %s15, 13
      %p54 = por %p52, %p53
      %p55 = scmp.ne.s32.totalorder %s44, %s45
      %p56 = scmp.eq.s32.totalorder %s15, 0
      %p57 = por %p55, %p56
      %p58 = scmp.ne.s32.totalorder %s44, %s45
      %p59 = scmp.eq.s32.totalorder %s16, 13
      %p60 = por %p58, %p59
      %p62 = scmp.ne.s32.totalorder %s45, %s61
      %p63 = scmp.eq.s32.totalorder %s16, 0
      %p64 = por %p62, %p63
      %s65 = ssub.s32 %s19, %s28
      %s66 = ssub.s32 %s18, %s32
      %s67 = sor.u32 %s65, %s66
      %p68 = scmp.eq.s32.totalorder %s67, 0
      %s70 = sadd.s32 %s69, 1
      %s71 = scalar_select %p68, %s69, %s70
      %p74 = pneg %p68
      %p75 = scmp.eq.s32.totalorder %s10, 13
      %p76 = por %p74, %p75
      %p77 = scmp.ne.s32.totalorder %s69, %s72
      %p78 = scmp.eq.s32.totalorder %s10, 0
      %p79 = por %p77, %p78
      %p80 = scmp.ne.s32.totalorder %s69, %s72
      %p81 = scmp.eq.s32.totalorder %s15, 13
      %p82 = por %p80, %p81
      %p83 = scmp.ne.s32.totalorder %s72, %s73
      %p84 = scmp.eq.s32.totalorder %s15, 0
      %p85 = por %p83, %p84
      %p86 = scmp.ne.s32.totalorder %s72, %s73
      %p87 = scmp.eq.s32.totalorder %s16, 13
      %p88 = por %p86, %p87
      %p90 = scmp.ne.s32.totalorder %s73, %s89
      %p91 = scmp.eq.s32.totalorder %s16, 0
      %p92 = por %p90, %p91
      %s93 = ssub.s32 %s18, %s32
      %p94 = scmp.eq.s32.totalorder %s93, 0
      %s96 = sadd.s32 %s95, 1
      %s97 = scalar_select %p94, %s95, %s96
      %p100 = pneg %p94
      %p101 = scmp.eq.s32.totalorder %s10, 13
      %p102 = por %p100, %p101
      %p103 = scmp.ne.s32.totalorder %s95, %s98
      %p104 = scmp.eq.s32.totalorder %s10, 0
      %p105 = por %p103, %p104
      %p106 = scmp.ne.s32.totalorder %s95, %s98
      %p107 = scmp.eq.s32.totalorder %s15, 13
      %p108 = por %p106, %p107
      %p109 = scmp.ne.s32.totalorder %s98, %s99
      %p110 = scmp.eq.s32.totalorder %s15, 0
      %p111 = por %p109, %p110
      %p112 = scmp.ne.s32.totalorder %s98, %s99
      %p113 = scmp.eq.s32.totalorder %s16, 13
      %p114 = por %p112, %p113
      %p116 = scmp.ne.s32.totalorder %s99, %s115
      %p117 = scmp.eq.s32.totalorder %s16, 0
      %p118 = por %p116, %p117
      %s119 = ssub.s32 %s18, %s32
      %p120 = scmp.eq.s32.totalorder %s119, 0
      %s122 = sadd.s32 %s121, 1
      %s123 = scalar_select %p120, %s121, %s122
      %p126 = pneg %p120
      %p127 = scmp.eq.s32.totalorder %s10, 13
      %p128 = por %p126, %p127
      %p129 = scmp.ne.s32.totalorder %s121, %s124
      %p130 = scmp.eq.s32.totalorder %s10, 0
      %p131 = por %p129, %p130
      %p132 = scmp.ne.s32.totalorder %s121, %s124
      %p133 = scmp.eq.s32.totalorder %s15, 13
      %p134 = por %p132, %p133
      %p135 = scmp.ne.s32.totalorder %s124, %s125
      %p136 = scmp.eq.s32.totalorder %s15, 0
      %p137 = por %p135, %p136
      %p138 = scmp.ne.s32.totalorder %s124, %s125
      %p139 = scmp.eq.s32.totalorder %s16, 13
      %p140 = por %p138, %p139
      %p142 = scmp.ne.s32.totalorder %s125, %s141
      %p143 = scmp.eq.s32.totalorder %s16, 0
      %p144 = por %p142, %p143
      %s145 = ssub.s32 %s17, %s36
      %s146 = ssub.s32 %s18, %s32
      %s147 = sor.u32 %s145, %s146
      %p148 = scmp.eq.s32.totalorder %s147, 0
      %s150 = sadd.s32 %s149, 1
      %s151 = scalar_select %p148, %s149, %s150
      %p154 = pneg %p148
      %p155 = scmp.eq.s32.totalorder %s10, 13
      %p156 = por %p154, %p155
      %p157 = scmp.ne.s32.totalorder %s149, %s152
      %p158 = scmp.eq.s32.totalorder %s10, 0
      %p159 = por %p157, %p158
      %p160 = scmp.ne.s32.totalorder %s149, %s152
      %p161 = scmp.eq.s32.totalorder %s15, 13
      %p162 = por %p160, %p161
      %p163 = scmp.ne.s32.totalorder %s152, %s153
      %p164 = scmp.eq.s32.totalorder %s15, 0
      %p165 = por %p163, %p164
      %p166 = scmp.ne.s32.totalorder %s152, %s153
      %p167 = scmp.eq.s32.totalorder %s16, 13
      %p168 = por %p166, %p167
      %p170 = scmp.ne.s32.totalorder %s153, %s169
      %p171 = scmp.eq.s32.totalorder %s16, 0
      %p172 = por %p170, %p171
      %p173 = scmp.le.s32.totalorder 1, %s10
      %p174 = scmp.lt.s32.totalorder %s10, 15
      %p175 = pnand %p173, %p174
      %p176 = pneg %p175
      // Predicated region
      $region9: #{embedding_forward.5} parent=5 // pred_check
        _
      $region10: #{embedding_forward.5} parent=5 // pred_check_branch
        %178 = sbr.rel (%p175) target = $region12
      $region11: #{embedding_forward.5} parent=5 // pred_region
        %s179 = ssub.s32 %s10, 1
        // Predicated region
        $region13: #{embedding_forward.5} parent=11 // pred_check
          %p180 = pneg %p111
        $region14: #{embedding_forward.5} parent=11 // pred_check_branch
          %182 = sbr.rel (%p180) target = $region16
        $region15: #{embedding_forward.5} parent=11 // pred_region
          %p183 = scmp.lt.s32.totalorder %s21, 0
          %s184 = scalar_select %p183, %s21, 0
          %s185 = scalar_lea.vmem %s2, %s184
        $region16: #{embedding_forward.5} parent=11 // pred_fallthru
          _
        // Predicated region
        $region17: #{embedding_forward.5} parent=11 // pred_check
          %p186 = pneg %p137
        $region18: #{embedding_forward.5} parent=11 // pred_check_branch
          %188 = sbr.rel (%p186) target = $region20
        $region19: #{embedding_forward.5} parent=11 // pred_region
          %p189 = scmp.lt.s32.totalorder %s21, 0
          %s190 = scalar_select %p189, %s21, 0
          %s191 = scalar_lea.vmem %s3, %s190
        $region20: #{embedding_forward.5} parent=11 // pred_fallthru
          _
      $region12: #{embedding_forward.5} parent=5 // pred_fallthru
        _
      %p192 = scmp.lt.s32.totalorder %s10, 14
      // Predicated region
      $region21: #{embedding_forward.5} parent=5 // pred_check
        %p193 = pneg %p192
      $region22: #{embedding_forward.5} parent=5 // pred_check_branch
        %195 = sbr.rel (%p193) target = $region24
      $region23: #{embedding_forward.5} parent=5 // pred_region
        // Predicated region
        $region25: #{embedding_forward.5} parent=23 // pred_check
          %p196 = pneg %p51
        $region26: #{embedding_forward.5} parent=23 // pred_check_branch
          %198 = sbr.rel (%p196) target = $region28
        $region27: #{embedding_forward.5} parent=23 // pred_region
          %s199 = sand.u32 %s41, 1
          %s200 = sand.u32 %s41, 1
          %s201 = smul.addr %s200, 448
          %s202 = scalar_lea.vmem [#allocation3], %s201
          %s203 = smul.u32 16, %s17
          %s204 = smul.u32 7, %s19
          %s205 = smul.addr %s203, 49
          %s206 = sadd.s32 %s204, %s205
          %s207 = smul.addr %s206, 4
          %s208 = scalar_lea.vmem %s0, %s207
          // Predicated region
          $region29: #{embedding_forward.5} parent=27 // pred_check
            _
          $region30: #{embedding_forward.5} parent=27 // pred_check_branch
            %210 = sbr.rel (0) target = $region32
          $region31: #{embedding_forward.5} parent=27 // pred_region
            // Predicated region
            $region33: #{embedding_forward.5} parent=31 // pred_check
              _
            $region34: #{embedding_forward.5} parent=31 // pred_check_branch
              %212 = sbr.rel (0) target = $region36
            $region35: #{embedding_forward.5} parent=31 // pred_region
              %s213 = scalar_lea.vmem %s208, 24
              %s214 = scalar_lea.vmem %s202, 24 [#allocation3]
              loop: start=0, step=1, limit=1
              $region37: #{embedding_forward.5} parent=35 // loop_pre_header
                _
              $region38: #{embedding_forward.5} parent=35 // loop_header
                %s216 = sphi 0, %s220
                %p217 = scmp.ge.s32.totalorder %s216, 1
                %s221 = sphi %s208, %s208
                %s222 = sphi %s202, %s202
              $region39: #{embedding_forward.5} parent=35 // loop_header_branch
                %219 = sbr.rel (%p217) target = $region43
              $region40: #{embedding_forward.5} parent=35 // loop_body
                %v223 = vld [vmem:[%s221] sm:$0xff]
                %224 = vst [vmem:[%s222] sm:$0xff] %v223
                %v225 = vld [vmem:[%s221 + $0x8] sm:$0xff]
                %226 = vst [vmem:[%s222 + $0x8] sm:$0xff] %v225
                %v227 = vld [vmem:[%s221 + $0x10] sm:$0xff]
                %228 = vst [vmem:[%s222 + $0x10] sm:$0xff] %v227
                %v229 = vld [vmem:[%s221 + $0xc4] sm:$0xff]
                %230 = vst [vmem:[%s222 + $0x1c] sm:$0xff] %v229
                %v231 = vld [vmem:[%s221 + $0xcc] sm:$0xff]
                %232 = vst [vmem:[%s222 + $0x24] sm:$0xff] %v231
                %v233 = vld [vmem:[%s221 + $0xd4] sm:$0xff]
                %234 = vst [vmem:[%s222 + $0x2c] sm:$0xff] %v233
                %v235 = vld [vmem:[%s221 + $0x188] sm:$0xff]
                %236 = vst [vmem:[%s222 + $0x38] sm:$0xff] %v235
                %v237 = vld [vmem:[%s221 + $0x190] sm:$0xff]
                %238 = vst [vmem:[%s222 + $0x40] sm:$0xff] %v237
                %v239 = vld [vmem:[%s221 + $0x198] sm:$0xff]
                %240 = vst [vmem:[%s222 + $0x48] sm:$0xff] %v239
                %v241 = vld [vmem:[%s221 + $0x24c] sm:$0xff]
                %242 = vst [vmem:[%s222 + $0x54] sm:$0xff] %v241
                %v243 = vld [vmem:[%s221 + $0x254] sm:$0xff]
                %244 = vst [vmem:[%s222 + $0x5c] sm:$0xff] %v243
                %v245 = vld [vmem:[%s221 + $0x25c] sm:$0xff]
                %246 = vst [vmem:[%s222 + $0x64] sm:$0xff] %v245
                %v247 = vld [vmem:[%s221 + $0x310] sm:$0xff]
                %248 = vst [vmem:[%s222 + $0x70] sm:$0xff] %v247
                %v249 = vld [vmem:[%s221 + $0x318] sm:$0xff]
                %250 = vst [vmem:[%s222 + $0x78] sm:$0xff] %v249
                %v251 = vld [vmem:[%s221 + $0x320] sm:$0xff]
                %252 = vst [vmem:[%s222 + $0x80] sm:$0xff] %v251
                %v253 = vld [vmem:[%s221 + $0x3d4] sm:$0xff]
                %254 = vst [vmem:[%s222 + $0x8c] sm:$0xff] %v253
                %v255 = vld [vmem:[%s221 + $0x3dc] sm:$0xff]
                %256 = vst [vmem:[%s222 + $0x94] sm:$0xff] %v255
                %v257 = vld [vmem:[%s221 + $0x3e4] sm:$0xff]
                %258 = vst [vmem:[%s222 + $0x9c] sm:$0xff] %v257
                %v259 = vld [vmem:[%s221 + $0x498] sm:$0xff]
                %260 = vst [vmem:[%s222 + $0xa8] sm:$0xff] %v259
                %v261 = vld [vmem:[%s221 + $0x4a0] sm:$0xff]
                %262 = vst [vmem:[%s222 + $0xb0] sm:$0xff] %v261
                %v263 = vld [vmem:[%s221 + $0x4a8] sm:$0xff]
                %264 = vst [vmem:[%s222 + $0xb8] sm:$0xff] %v263
                %v265 = vld [vmem:[%s221 + $0x55c] sm:$0xff]
                %266 = vst [vmem:[%s222 + $0xc4] sm:$0xff] %v265
                %v267 = vld [vmem:[%s221 + $0x564] sm:$0xff]
                %268 = vst [vmem:[%s222 + $0xcc] sm:$0xff] %v267
                %v269 = vld [vmem:[%s221 + $0x56c] sm:$0xff]
                %270 = vst [vmem:[%s222 + $0xd4] sm:$0xff] %v269
                %v271 = vld [vmem:[%s221 + $0x620] sm:$0xff]
                %272 = vst [vmem:[%s222 + $0xe0] sm:$0xff] %v271
                %v273 = vld [vmem:[%s221 + $0x628] sm:$0xff]
                %274 = vst [vmem:[%s222 + $0xe8] sm:$0xff] %v273
                %v275 = vld [vmem:[%s221 + $0x630] sm:$0xff]
                %276 = vst [vmem:[%s222 + $0xf0] sm:$0xff] %v275
                %v277 = vld [vmem:[%s221 + $0x6e4] sm:$0xff]
                %278 = vst [vmem:[%s222 + $0xfc] sm:$0xff] %v277
                %v279 = vld [vmem:[%s221 + $0x6ec] sm:$0xff]
                %280 = vst [vmem:[%s222 + $0x104] sm:$0xff] %v279
                %v281 = vld [vmem:[%s221 + $0x6f4] sm:$0xff]
                %282 = vst [vmem:[%s222 + $0x10c] sm:$0xff] %v281
                %v283 = vld [vmem:[%s221 + $0x7a8] sm:$0xff]
                %284 = vst [vmem:[%s222 + $0x118] sm:$0xff] %v283
                %v285 = vld [vmem:[%s221 + $0x7b0] sm:$0xff]
                %286 = vst [vmem:[%s222 + $0x120] sm:$0xff] %v285
                %v287 = vld [vmem:[%s221 + $0x7b8] sm:$0xff]
                %288 = vst [vmem:[%s222 + $0x128] sm:$0xff] %v287
                %v289 = vld [vmem:[%s221 + $0x86c] sm:$0xff]
                %290 = vst [vmem:[%s222 + $0x134] sm:$0xff] %v289
                %v291 = vld [vmem:[%s221 + $0x874] sm:$0xff]
                %292 = vst [vmem:[%s222 + $0x13c] sm:$0xff] %v291
                %v293 = vld [vmem:[%s221 + $0x87c] sm:$0xff]
                %294 = vst [vmem:[%s222 + $0x144] sm:$0xff] %v293
                %v295 = vld [vmem:[%s221 + $0x930] sm:$0xff]
                %296 = vst [vmem:[%s222 + $0x150] sm:$0xff] %v295
                %v297 = vld [vmem:[%s221 + $0x938] sm:$0xff]
                %298 = vst [vmem:[%s222 + $0x158] sm:$0xff] %v297
                %v299 = vld [vmem:[%s221 + $0x940] sm:$0xff]
                %300 = vst [vmem:[%s222 + $0x160] sm:$0xff] %v299
                %v301 = vld [vmem:[%s221 + $0x9f4] sm:$0xff]
                %302 = vst [vmem:[%s222 + $0x16c] sm:$0xff] %v301
                %v303 = vld [vmem:[%s221 + $0x9fc] sm:$0xff]
                %304 = vst [vmem:[%s222 + $0x174] sm:$0xff] %v303
                %v305 = vld [vmem:[%s221 + $0xa04] sm:$0xff]
                %306 = vst [vmem:[%s222 + $0x17c] sm:$0xff] %v305
                %v307 = vld [vmem:[%s221 + $0xab8] sm:$0xff]
                %308 = vst [vmem:[%s222 + $0x188] sm:$0xff] %v307
                %v309 = vld [vmem:[%s221 + $0xac0] sm:$0xff]
                %310 = vst [vmem:[%s222 + $0x190] sm:$0xff] %v309
                %v311 = vld [vmem:[%s221 + $0xac8] sm:$0xff]
                %312 = vst [vmem:[%s222 + $0x198] sm:$0xff] %v311
                %v313 = vld [vmem:[%s221 + $0xb7c] sm:$0xff]
                %314 = vst [vmem:[%s222 + $0x1a4] sm:$0xff] %v313
                %v315 = vld [vmem:[%s221 + $0xb84] sm:$0xff]
                %316 = vst [vmem:[%s222 + $0x1ac] sm:$0xff] %v315
                %v317 = vld [vmem:[%s221 + $0xb8c] sm:$0xff]
                %318 = vst [vmem:[%s222 + $0x1b4] sm:$0xff] %v317
              $region41: #{embedding_forward.5} parent=35 // loop_footer
                %s220 = sadd.s32 1, %s216
              $region42: #{embedding_forward.5} parent=35 // loop_footer_branch
                %215 = sbr.rel target = $region38
              $region43: #{embedding_forward.5} parent=35 // loop_exit
                _
              loop: start=0, step=1, limit=1
              $region44: #{embedding_forward.5} parent=35 // loop_pre_header
                _
              $region45: #{embedding_forward.5} parent=35 // loop_header
                %s321 = sphi 0, %s325
                %p322 = scmp.ge.s32.totalorder %s321, 1
                %s326 = sphi %s213, %s213
                %s327 = sphi %s214, %s214
              $region46: #{embedding_forward.5} parent=35 // loop_header_branch
                %324 = sbr.rel (%p322) target = $region50
              $region47: #{embedding_forward.5} parent=35 // loop_body
                %v328 = vld [vmem:[%s326] sm:$0xf]
                %329 = vst [vmem:[%s327] sm:$0xf] %v328
                %v330 = vld [vmem:[%s326 + $0xc4] sm:$0xf]
                %331 = vst [vmem:[%s327 + $0x1c] sm:$0xf] %v330
                %v332 = vld [vmem:[%s326 + $0x188] sm:$0xf]
                %333 = vst [vmem:[%s327 + $0x38] sm:$0xf] %v332
                %v334 = vld [vmem:[%s326 + $0x24c] sm:$0xf]
                %335 = vst [vmem:[%s327 + $0x54] sm:$0xf] %v334
                %v336 = vld [vmem:[%s326 + $0x310] sm:$0xf]
                %337 = vst [vmem:[%s327 + $0x70] sm:$0xf] %v336
                %v338 = vld [vmem:[%s326 + $0x3d4] sm:$0xf]
                %339 = vst [vmem:[%s327 + $0x8c] sm:$0xf] %v338
                %v340 = vld [vmem:[%s326 + $0x498] sm:$0xf]
                %341 = vst [vmem:[%s327 + $0xa8] sm:$0xf] %v340
                %v342 = vld [vmem:[%s326 + $0x55c] sm:$0xf]
                %343 = vst [vmem:[%s327 + $0xc4] sm:$0xf] %v342
                %v344 = vld [vmem:[%s326 + $0x620] sm:$0xf]
                %345 = vst [vmem:[%s327 + $0xe0] sm:$0xf] %v344
                %v346 = vld [vmem:[%s326 + $0x6e4] sm:$0xf]
                %347 = vst [vmem:[%s327 + $0xfc] sm:$0xf] %v346
                %v348 = vld [vmem:[%s326 + $0x7a8] sm:$0xf]
                %349 = vst [vmem:[%s327 + $0x118] sm:$0xf] %v348
                %v350 = vld [vmem:[%s326 + $0x86c] sm:$0xf]
                %351 = vst [vmem:[%s327 + $0x134] sm:$0xf] %v350
                %v352 = vld [vmem:[%s326 + $0x930] sm:$0xf]
                %353 = vst [vmem:[%s327 + $0x150] sm:$0xf] %v352
                %v354 = vld [vmem:[%s326 + $0x9f4] sm:$0xf]
                %355 = vst [vmem:[%s327 + $0x16c] sm:$0xf] %v354
                %v356 = vld [vmem:[%s326 + $0xab8] sm:$0xf]
                %357 = vst [vmem:[%s327 + $0x188] sm:$0xf] %v356
                %v358 = vld [vmem:[%s326 + $0xb7c] sm:$0xf]
                %359 = vst [vmem:[%s327 + $0x1a4] sm:$0xf] %v358
              $region48: #{embedding_forward.5} parent=35 // loop_footer
                %s325 = sadd.s32 1, %s321
              $region49: #{embedding_forward.5} parent=35 // loop_footer_branch
                %320 = sbr.rel target = $region45
              $region50: #{embedding_forward.5} parent=35 // loop_exit
                _
            $region36: #{embedding_forward.5} parent=31 // pred_fallthru
              _
          $region32: #{embedding_forward.5} parent=27 // pred_fallthru
            _
          %360 = vnop
        $region28: #{embedding_forward.5} parent=23 // pred_fallthru
          _
        // Predicated region
        $region51: #{embedding_forward.5} parent=23 // pred_check
          %p361 = pneg %p79
        $region52: #{embedding_forward.5} parent=23 // pred_check_branch
          %363 = sbr.rel (%p361) target = $region54
        $region53: #{embedding_forward.5} parent=23 // pred_region
          %s364 = smul.u32 112, %s19
          %p365 = scmp.lt.s32.totalorder %s364, 783
          %s366 = scalar_select %p365, %s364, 783
          %p367 = scmp.lt.s32.totalorder %s18, 0
          %s368 = scalar_select %p367, %s18, 0
          %s369 = sadd.s32 %s368, %s366
          %s370 = smul.addr %s369, 4
          %s371 = scalar_lea.vmem %s1, %s370
          %s372 = smul.u32 112, %s19
        $region54: #{embedding_forward.5} parent=23 // pred_fallthru
          _
      $region24: #{embedding_forward.5} parent=5 // pred_fallthru
        _
      %p373 = scmp.le.s32.totalorder 1, %s10
      %p374 = scmp.lt.s32.totalorder %s10, 15
      %p375 = pnand %p373, %p374
      %p376 = pneg %p375
      // Predicated region
      $region55: #{embedding_forward.5} parent=5 // pred_check
        _
      $region56: #{embedding_forward.5} parent=5 // pred_check_branch
        %378 = sbr.rel (%p375) target = $region58
      $region57: #{embedding_forward.5} parent=5 // pred_region
        %s379 = ssub.s32 %s10, 1
        %s380 = sand.u32 %s44, 1
        %s381 = sand.u32 %s44, 1
        %s382 = smul.addr %s381, 448
        %s383 = scalar_lea.vmem [#allocation3], %s382
        // Predicated region
        $region59: #{embedding_forward.5} parent=57 // pred_check
          %p384 = pneg %p57
        $region60: #{embedding_forward.5} parent=57 // pred_check_branch
          %386 = sbr.rel (%p384) target = $region62
        $region61: #{embedding_forward.5} parent=57 // pred_region
          _
        $region62: #{embedding_forward.5} parent=57 // pred_fallthru
          _
        %s387 = sand.u32 %s44, 1
        %s388 = sand.u32 %s44, 1
        %s389 = smul.addr %s388, 448
        %s390 = scalar_lea.vmem [#allocation3], %s389
        %p391 = pneg %p57
        %p392 = pneg %p54
        %s393 = smul.u32 112, %s22
        %p394 = scmp.lt.s32.totalorder %s393, 783
        %s395 = scalar_select %p394, %s393, 783
        %p396 = scmp.lt.s32.totalorder %s21, 0
        %s397 = scalar_select %p396, %s21, 0
        %s398 = sadd.s32 %s397, %s395
        %s399 = smul.addr %s398, 4
        %s400 = scalar_lea.vmem %s1, %s399
        %p401 = pneg %p85
        %p402 = pneg %p82
        %p403 = scmp.lt.s32.totalorder %s21, 0
        %s404 = scalar_select %p403, %s21, 0
        %s405 = scalar_lea.vmem %s2, %s404
        %p406 = pneg %p111
        %p407 = pneg %p108
        %p408 = scmp.lt.s32.totalorder %s21, 0
        %s409 = scalar_select %p408, %s21, 0
        %s410 = scalar_lea.vmem %s3, %s409
        %p411 = pneg %p137
        %p412 = pneg %p134
        %p413 = pneg %p165
        %p414 = pneg %p162
        %s415 = smul.u32 16, %s20
        %p416 = scmp.lt.s32.totalorder %s415, 31
        %s417 = scalar_select %p416, %s415, 31
        %p418 = scmp.lt.s32.totalorder %s21, 0
        %s419 = scalar_select %p418, %s21, 0
        %s420 = sadd.s32 %s419, %s417
        %s421 = smul.addr %s420, 4
        %s422 = scalar_lea.vmem %s4, %s421
        %s423 = smul.u32 16, %s20
        %s424 = smul.u32 7, %s22
        %s425 = smul.u32 112, %s22
        %p426 = scmp.lt.s32.totalorder %s425, 783
        %s427 = scalar_select %p426, %s425, 783
        %p428 = scmp.lt.s32.totalorder %s21, 0
        %s429 = scalar_select %p428, %s21, 0
        %s430 = sadd.s32 %s429, %s427
        %s431 = smul.addr %s430, 4
        %s432 = scalar_lea.vmem %s1, %s431
        %s433 = smul.u32 112, %s22
        %p434 = scmp.lt.s32.totalorder %s21, 0
        %s435 = scalar_select %p434, %s21, 0
        %s436 = scalar_lea.vmem %s2, %s435
        %p437 = scmp.lt.s32.totalorder %s21, 0
        %s438 = scalar_select %p437, %s21, 0
        %s439 = scalar_lea.vmem %s3, %s438
        %s440 = smul.u32 16, %s20
        %p441 = scmp.lt.s32.totalorder %s440, 31
        %s442 = scalar_select %p441, %s440, 31
        %p443 = scmp.lt.s32.totalorder %s21, 0
        %s444 = scalar_select %p443, %s21, 0
        %s445 = sadd.s32 %s444, %s442
        %s446 = smul.addr %s445, 4
        %s447 = scalar_lea.vmem %s4, %s446
        %s448 = smul.u32 16, %s20
        %p450 = scmp.eq.s32.totalorder %s22, 0
        // Predicated region
        $region63: #{embedding_forward.5} parent=57 // pred_check
          %p451 = pneg %p450
        $region64: #{embedding_forward.5} parent=57 // pred_check_branch
          %453 = sbr.rel (%p451) target = $region66
        $region65: #{embedding_forward.5} parent=57 // pred_region
          %454 = vst [vmem:[#allocation2] sm:$0xff] 0.0
          %455 = vst [vmem:[#allocation2 + $0x8] sm:$0xff] 0.0
          %456 = vst [vmem:[#allocation2 + $0x10] sm:$0xff] 0.0
          %457 = vst [vmem:[#allocation2 + $0x18] sm:$0xff] 0.0
          %458 = vst [vmem:[#allocation2 + $0x20] sm:$0xff] 0.0
          %459 = vst [vmem:[#allocation2 + $0x28] sm:$0xff] 0.0
          %460 = vst [vmem:[#allocation2 + $0x30] sm:$0xff] 0.0
          %461 = vst [vmem:[#allocation2 + $0x38] sm:$0xff] 0.0
          %462 = vst [vmem:[#allocation2 + $0x40] sm:$0xff] 0.0
          %463 = vst [vmem:[#allocation2 + $0x48] sm:$0xff] 0.0
          %464 = vst [vmem:[#allocation2 + $0x50] sm:$0xff] 0.0
          %465 = vst [vmem:[#allocation2 + $0x58] sm:$0xff] 0.0
          %466 = vst [vmem:[#allocation2 + $0x60] sm:$0xff] 0.0
          %467 = vst [vmem:[#allocation2 + $0x68] sm:$0xff] 0.0
          %468 = vst [vmem:[#allocation2 + $0x70] sm:$0xff] 0.0
          %469 = vst [vmem:[#allocation2 + $0x78] sm:$0xff] 0.0
        $region66: #{embedding_forward.5} parent=57 // pred_fallthru
          _
        %v470 = vld [vmem:[#allocation2] sm:$0xff]
        %v471 = vld [vmem:[#allocation2 + $0x8] sm:$0xff]
        %v472 = vld [vmem:[#allocation2 + $0x10] sm:$0xff]
        %v473 = vld [vmem:[#allocation2 + $0x18] sm:$0xff]
        %v474 = vld [vmem:[#allocation2 + $0x20] sm:$0xff]
        %v475 = vld [vmem:[#allocation2 + $0x28] sm:$0xff]
        %v476 = vld [vmem:[#allocation2 + $0x30] sm:$0xff]
        %v477 = vld [vmem:[#allocation2 + $0x38] sm:$0xff]
        %v478 = vld [vmem:[#allocation2 + $0x40] sm:$0xff]
        %v479 = vld [vmem:[#allocation2 + $0x48] sm:$0xff]
        %v480 = vld [vmem:[#allocation2 + $0x50] sm:$0xff]
        %v481 = vld [vmem:[#allocation2 + $0x58] sm:$0xff]
        %v482 = vld [vmem:[#allocation2 + $0x60] sm:$0xff]
        %v483 = vld [vmem:[#allocation2 + $0x68] sm:$0xff]
        %v484 = vld [vmem:[#allocation2 + $0x70] sm:$0xff]
        %v485 = vld [vmem:[#allocation2 + $0x78] sm:$0xff]
        %v486 = vld [vmem:[%s383] sm:$0xff]
        %v487 = vld [vmem:[%s383 + $0x8] sm:$0xff]
        %v488 = vld [vmem:[%s383 + $0x10] sm:$0xff]
        %v489 = vld [vmem:[%s383 + $0x18] sm:$0xf]
        %v490 = vld [vmem:[%s383 + $0x1c] sm:$0xff]
        %v491 = vld [vmem:[%s383 + $0x24] sm:$0xff]
        %v492 = vld [vmem:[%s383 + $0x2c] sm:$0xff]
        %v493 = vld [vmem:[%s383 + $0x34] sm:$0xf]
        %v494 = vld [vmem:[%s383 + $0x38] sm:$0xff]
        %v495 = vld [vmem:[%s383 + $0x40] sm:$0xff]
        %v496 = vld [vmem:[%s383 + $0x48] sm:$0xff]
        %v497 = vld [vmem:[%s383 + $0x50] sm:$0xf]
        %v498 = vld [vmem:[%s383 + $0x54] sm:$0xff]
        %v499 = vld [vmem:[%s383 + $0x5c] sm:$0xff]
        %v500 = vld [vmem:[%s383 + $0x64] sm:$0xff]
        %v501 = vld [vmem:[%s383 + $0x6c] sm:$0xf]
        %v502 = vld [vmem:[%s383 + $0x70] sm:$0xff]
        %v503 = vld [vmem:[%s383 + $0x78] sm:$0xff]
        %v504 = vld [vmem:[%s383 + $0x80] sm:$0xff]
        %v505 = vld [vmem:[%s383 + $0x88] sm:$0xf]
        %v506 = vld [vmem:[%s383 + $0x8c] sm:$0xff]
        %v507 = vld [vmem:[%s383 + $0x94] sm:$0xff]
        %v508 = vld [vmem:[%s383 + $0x9c] sm:$0xff]
        %v509 = vld [vmem:[%s383 + $0xa4] sm:$0xf]
        %v510 = vld [vmem:[%s383 + $0xa8] sm:$0xff]
        %v511 = vld [vmem:[%s383 + $0xb0] sm:$0xff]
        %v512 = vld [vmem:[%s383 + $0xb8] sm:$0xff]
        %v513 = vld [vmem:[%s383 + $0xc0] sm:$0xf]
        %v514 = vld [vmem:[%s383 + $0xc4] sm:$0xff]
        %v515 = vld [vmem:[%s383 + $0xcc] sm:$0xff]
        %v516 = vld [vmem:[%s383 + $0xd4] sm:$0xff]
        %v517 = vld [vmem:[%s383 + $0xdc] sm:$0xf]
        %v518 = vld [vmem:[%s383 + $0xe0] sm:$0xff]
        %v519 = vld [vmem:[%s383 + $0xe8] sm:$0xff]
        %v520 = vld [vmem:[%s383 + $0xf0] sm:$0xff]
        %v521 = vld [vmem:[%s383 + $0xf8] sm:$0xf]
        %v522 = vld [vmem:[%s383 + $0xfc] sm:$0xff]
        %v523 = vld [vmem:[%s383 + $0x104] sm:$0xff]
        %v524 = vld [vmem:[%s383 + $0x10c] sm:$0xff]
        %v525 = vld [vmem:[%s383 + $0x114] sm:$0xf]
        %v526 = vld [vmem:[%s383 + $0x118] sm:$0xff]
        %v527 = vld [vmem:[%s383 + $0x120] sm:$0xff]
        %v528 = vld [vmem:[%s383 + $0x128] sm:$0xff]
        %v529 = vld [vmem:[%s383 + $0x130] sm:$0xf]
        %v530 = vld [vmem:[%s383 + $0x134] sm:$0xff]
        %v531 = vld [vmem:[%s383 + $0x13c] sm:$0xff]
        %v532 = vld [vmem:[%s383 + $0x144] sm:$0xff]
        %v533 = vld [vmem:[%s383 + $0x14c] sm:$0xf]
        %v534 = vld [vmem:[%s383 + $0x150] sm:$0xff]
        %v535 = vld [vmem:[%s383 + $0x158] sm:$0xff]
        %v536 = vld [vmem:[%s383 + $0x160] sm:$0xff]
        %v537 = vld [vmem:[%s383 + $0x168] sm:$0xf]
        %v538 = vld [vmem:[%s383 + $0x16c] sm:$0xff]
        %v539 = vld [vmem:[%s383 + $0x174] sm:$0xff]
        %v540 = vld [vmem:[%s383 + $0x17c] sm:$0xff]
        %v541 = vld [vmem:[%s383 + $0x184] sm:$0xf]
        %v542 = vld [vmem:[%s383 + $0x188] sm:$0xff]
        %v543 = vld [vmem:[%s383 + $0x190] sm:$0xff]
        %v544 = vld [vmem:[%s383 + $0x198] sm:$0xff]
        %v545 = vld [vmem:[%s383 + $0x1a0] sm:$0xf]
        %v546 = vld [vmem:[%s383 + $0x1a4] sm:$0xff]
        %v547 = vld [vmem:[%s383 + $0x1ac] sm:$0xff]
        %v548 = vld [vmem:[%s383 + $0x1b4] sm:$0xff]
        %v549 = vld [vmem:[%s383 + $0x1bc] sm:$0xf]
        %v550 = vld [vmem:[%s432] sm:$0xf]
        %v551 = vld [vmem:[%s432 + $0x4] sm:$0xf]
        %v552 = vld [vmem:[%s432 + $0x8] sm:$0xf]
        %v553 = vld [vmem:[%s432 + $0xc] sm:$0xf]
        %v554 = vld [vmem:[%s432 + $0x10] sm:$0xf]
        %v555 = vld [vmem:[%s432 + $0x14] sm:$0xf]
        %v556 = vld [vmem:[%s432 + $0x18] sm:$0xf]
        %v557 = vld [vmem:[%s432 + $0x1c] sm:$0xf]
        %v558 = vld [vmem:[%s432 + $0x20] sm:$0xf]
        %v559 = vld [vmem:[%s432 + $0x24] sm:$0xf]
        %v560 = vld [vmem:[%s432 + $0x28] sm:$0xf]
        %v561 = vld [vmem:[%s432 + $0x2c] sm:$0xf]
        %v562 = vld [vmem:[%s432 + $0x30] sm:$0xf]
        %v563 = vld [vmem:[%s432 + $0x34] sm:$0xf]
        %v564 = vld [vmem:[%s432 + $0x38] sm:$0xf]
        %v565 = vld [vmem:[%s432 + $0x3c] sm:$0xf]
        %v566 = vld [vmem:[%s432 + $0x40] sm:$0xf]
        %v567 = vld [vmem:[%s432 + $0x44] sm:$0xf]
        %v568 = vld [vmem:[%s432 + $0x48] sm:$0xf]
        %v569 = vld [vmem:[%s432 + $0x4c] sm:$0xf]
        %v570 = vld [vmem:[%s432 + $0x50] sm:$0xf]
        %v571 = vld [vmem:[%s432 + $0x54] sm:$0xf]
        %v572 = vld [vmem:[%s432 + $0x58] sm:$0xf]
        %v573 = vld [vmem:[%s432 + $0x5c] sm:$0xf]
        %v574 = vld [vmem:[%s432 + $0x60] sm:$0xf]
        %v575 = vld [vmem:[%s432 + $0x64] sm:$0xf]
        %v576 = vld [vmem:[%s432 + $0x68] sm:$0xf]
        %v577 = vld [vmem:[%s432 + $0x6c] sm:$0xf]
        %v578 = vld [vmem:[%s432 + $0x70] sm:$0xf]
        %v579 = vld [vmem:[%s432 + $0x74] sm:$0xf]
        %v580 = vld [vmem:[%s432 + $0x78] sm:$0xf]
        %v581 = vld [vmem:[%s432 + $0x7c] sm:$0xf]
        %v582 = vld [vmem:[%s432 + $0x80] sm:$0xf]
        %v583 = vld [vmem:[%s432 + $0x84] sm:$0xf]
        %v584 = vld [vmem:[%s432 + $0x88] sm:$0xf]
        %v585 = vld [vmem:[%s432 + $0x8c] sm:$0xf]
        %v586 = vld [vmem:[%s432 + $0x90] sm:$0xf]
        %v587 = vld [vmem:[%s432 + $0x94] sm:$0xf]
        %v588 = vld [vmem:[%s432 + $0x98] sm:$0xf]
        %v589 = vld [vmem:[%s432 + $0x9c] sm:$0xf]
        %v590 = vld [vmem:[%s432 + $0xa0] sm:$0xf]
        %v591 = vld [vmem:[%s432 + $0xa4] sm:$0xf]
        %v592 = vld [vmem:[%s432 + $0xa8] sm:$0xf]
        %v593 = vld [vmem:[%s432 + $0xac] sm:$0xf]
        %v594 = vld [vmem:[%s432 + $0xb0] sm:$0xf]
        %v595 = vld [vmem:[%s432 + $0xb4] sm:$0xf]
        %v596 = vld [vmem:[%s432 + $0xb8] sm:$0xf]
        %v597 = vld [vmem:[%s432 + $0xbc] sm:$0xf]
        %v598 = vld [vmem:[%s432 + $0xc0] sm:$0xf]
        %v599 = vld [vmem:[%s432 + $0xc4] sm:$0xf]
        %v600 = vld [vmem:[%s432 + $0xc8] sm:$0xf]
        %v601 = vld [vmem:[%s432 + $0xcc] sm:$0xf]
        %v602 = vld [vmem:[%s432 + $0xd0] sm:$0xf]
        %v603 = vld [vmem:[%s432 + $0xd4] sm:$0xf]
        %v604 = vld [vmem:[%s432 + $0xd8] sm:$0xf]
        %v605 = vld [vmem:[%s432 + $0xdc] sm:$0xf]
        %v606 = vld [vmem:[%s432 + $0xe0] sm:$0xf]
        %v607 = vld [vmem:[%s432 + $0xe4] sm:$0xf]
        %v608 = vld [vmem:[%s432 + $0xe8] sm:$0xf]
        %v609 = vld [vmem:[%s432 + $0xec] sm:$0xf]
        %v610 = vld [vmem:[%s432 + $0xf0] sm:$0xf]
        %v611 = vld [vmem:[%s432 + $0xf4] sm:$0xf]
        %v612 = vld [vmem:[%s432 + $0xf8] sm:$0xf]
        %v613 = vld [vmem:[%s432 + $0xfc] sm:$0xf]
        %v614 = vld [vmem:[%s432 + $0x100] sm:$0xf]
        %v615 = vld [vmem:[%s432 + $0x104] sm:$0xf]
        %v616 = vld [vmem:[%s432 + $0x108] sm:$0xf]
        %v617 = vld [vmem:[%s432 + $0x10c] sm:$0xf]
        %v618 = vld [vmem:[%s432 + $0x110] sm:$0xf]
        %v619 = vld [vmem:[%s432 + $0x114] sm:$0xf]
        %v620 = vld [vmem:[%s432 + $0x118] sm:$0xf]
        %v621 = vld [vmem:[%s432 + $0x11c] sm:$0xf]
        %v622 = vld [vmem:[%s432 + $0x120] sm:$0xf]
        %v623 = vld [vmem:[%s432 + $0x124] sm:$0xf]
        %v624 = vld [vmem:[%s432 + $0x128] sm:$0xf]
        %v625 = vld [vmem:[%s432 + $0x12c] sm:$0xf]
        %v626 = vld [vmem:[%s432 + $0x130] sm:$0xf]
        %v627 = vld [vmem:[%s432 + $0x134] sm:$0xf]
        %v628 = vld [vmem:[%s432 + $0x138] sm:$0xf]
        %v629 = vld [vmem:[%s432 + $0x13c] sm:$0xf]
        %v630 = vld [vmem:[%s432 + $0x140] sm:$0xf]
        %v631 = vld [vmem:[%s432 + $0x144] sm:$0xf]
        %v632 = vld [vmem:[%s432 + $0x148] sm:$0xf]
        %v633 = vld [vmem:[%s432 + $0x14c] sm:$0xf]
        %v634 = vld [vmem:[%s432 + $0x150] sm:$0xf]
        %v635 = vld [vmem:[%s432 + $0x154] sm:$0xf]
        %v636 = vld [vmem:[%s432 + $0x158] sm:$0xf]
        %v637 = vld [vmem:[%s432 + $0x15c] sm:$0xf]
        %v638 = vld [vmem:[%s432 + $0x160] sm:$0xf]
        %v639 = vld [vmem:[%s432 + $0x164] sm:$0xf]
        %v640 = vld [vmem:[%s432 + $0x168] sm:$0xf]
        %v641 = vld [vmem:[%s432 + $0x16c] sm:$0xf]
        %v642 = vld [vmem:[%s432 + $0x170] sm:$0xf]
        %v643 = vld [vmem:[%s432 + $0x174] sm:$0xf]
        %v644 = vld [vmem:[%s432 + $0x178] sm:$0xf]
        %v645 = vld [vmem:[%s432 + $0x17c] sm:$0xf]
        %v646 = vld [vmem:[%s432 + $0x180] sm:$0xf]
        %v647 = vld [vmem:[%s432 + $0x184] sm:$0xf]
        %v648 = vld [vmem:[%s432 + $0x188] sm:$0xf]
        %v649 = vld [vmem:[%s432 + $0x18c] sm:$0xf]
        %v650 = vld [vmem:[%s432 + $0x190] sm:$0xf]
        %v651 = vld [vmem:[%s432 + $0x194] sm:$0xf]
        %v652 = vld [vmem:[%s432 + $0x198] sm:$0xf]
        %v653 = vld [vmem:[%s432 + $0x19c] sm:$0xf]
        %v654 = vld [vmem:[%s432 + $0x1a0] sm:$0xf]
        %v655 = vld [vmem:[%s432 + $0x1a4] sm:$0xf]
        %v656 = vld [vmem:[%s432 + $0x1a8] sm:$0xf]
        %v657 = vld [vmem:[%s432 + $0x1ac] sm:$0xf]
        %v658 = vld [vmem:[%s432 + $0x1b0] sm:$0xf]
        %v659 = vld [vmem:[%s432 + $0x1b4] sm:$0xf]
        %v660 = vld [vmem:[%s432 + $0x1b8] sm:$0xf]
        %v661 = vld [vmem:[%s432 + $0x1bc] sm:$0xf]
        %v726 = vunpack.c.l.b16 %v486
        %v727 = vunpack.c.h.b16 %v486
        %v728 = vunpack.c.l.b16 %v487
        %v729 = vunpack.c.h.b16 %v487
        %v730 = vunpack.c.l.b16 %v488
        %v731 = vunpack.c.h.b16 %v488
        %v732 = vunpack.c.l.b16 %v489
        %v733 = vunpack.c.l.b16 %v490
        %v734 = vunpack.c.h.b16 %v490
        %v735 = vunpack.c.l.b16 %v491
        %v736 = vunpack.c.h.b16 %v491
        %v737 = vunpack.c.l.b16 %v492
        %v738 = vunpack.c.h.b16 %v492
        %v739 = vunpack.c.l.b16 %v493
        %v740 = vunpack.c.l.b16 %v494
        %v741 = vunpack.c.h.b16 %v494
        %v742 = vunpack.c.l.b16 %v495
        %v743 = vunpack.c.h.b16 %v495
        %v744 = vunpack.c.l.b16 %v496
        %v745 = vunpack.c.h.b16 %v496
        %v746 = vunpack.c.l.b16 %v497
        %v747 = vunpack.c.l.b16 %v498
        %v748 = vunpack.c.h.b16 %v498
        %v749 = vunpack.c.l.b16 %v499
        %v750 = vunpack.c.h.b16 %v499
        %v751 = vunpack.c.l.b16 %v500
        %v752 = vunpack.c.h.b16 %v500
        %v753 = vunpack.c.l.b16 %v501
        %v754 = vunpack.c.l.b16 %v502
        %v755 = vunpack.c.h.b16 %v502
        %v756 = vunpack.c.l.b16 %v503
        %v757 = vunpack.c.h.b16 %v503
        %v758 = vunpack.c.l.b16 %v504
        %v759 = vunpack.c.h.b16 %v504
        %v760 = vunpack.c.l.b16 %v505
        %v761 = vunpack.c.l.b16 %v506
        %v762 = vunpack.c.h.b16 %v506
        %v763 = vunpack.c.l.b16 %v507
        %v764 = vunpack.c.h.b16 %v507
        %v765 = vunpack.c.l.b16 %v508
        %v766 = vunpack.c.h.b16 %v508
        %v767 = vunpack.c.l.b16 %v509
        %v768 = vunpack.c.l.b16 %v510
        %v769 = vunpack.c.h.b16 %v510
        %v770 = vunpack.c.l.b16 %v511
        %v771 = vunpack.c.h.b16 %v511
        %v772 = vunpack.c.l.b16 %v512
        %v773 = vunpack.c.h.b16 %v512
        %v774 = vunpack.c.l.b16 %v513
        %v775 = vunpack.c.l.b16 %v514
        %v776 = vunpack.c.h.b16 %v514
        %v777 = vunpack.c.l.b16 %v515
        %v778 = vunpack.c.h.b16 %v515
        %v779 = vunpack.c.l.b16 %v516
        %v780 = vunpack.c.h.b16 %v516
        %v781 = vunpack.c.l.b16 %v517
        %v782 = vunpack.c.l.b16 %v518
        %v783 = vunpack.c.h.b16 %v518
        %v784 = vunpack.c.l.b16 %v519
        %v785 = vunpack.c.h.b16 %v519
        %v786 = vunpack.c.l.b16 %v520
        %v787 = vunpack.c.h.b16 %v520
        %v788 = vunpack.c.l.b16 %v521
        %v789 = vunpack.c.l.b16 %v522
        %v790 = vunpack.c.h.b16 %v522
        %v791 = vunpack.c.l.b16 %v523
        %v792 = vunpack.c.h.b16 %v523
        %v793 = vunpack.c.l.b16 %v524
        %v794 = vunpack.c.h.b16 %v524
        %v795 = vunpack.c.l.b16 %v525
        %v796 = vunpack.c.l.b16 %v526
        %v797 = vunpack.c.h.b16 %v526
        %v798 = vunpack.c.l.b16 %v527
        %v799 = vunpack.c.h.b16 %v527
        %v800 = vunpack.c.l.b16 %v528
        %v801 = vunpack.c.h.b16 %v528
        %v802 = vunpack.c.l.b16 %v529
        %v803 = vunpack.c.l.b16 %v530
        %v804 = vunpack.c.h.b16 %v530
        %v805 = vunpack.c.l.b16 %v531
        %v806 = vunpack.c.h.b16 %v531
        %v807 = vunpack.c.l.b16 %v532
        %v808 = vunpack.c.h.b16 %v532
        %v809 = vunpack.c.l.b16 %v533
        %v810 = vunpack.c.l.b16 %v534
        %v811 = vunpack.c.h.b16 %v534
        %v812 = vunpack.c.l.b16 %v535
        %v813 = vunpack.c.h.b16 %v535
        %v814 = vunpack.c.l.b16 %v536
        %v815 = vunpack.c.h.b16 %v536
        %v816 = vunpack.c.l.b16 %v537
        %v817 = vunpack.c.l.b16 %v538
        %v818 = vunpack.c.h.b16 %v538
        %v819 = vunpack.c.l.b16 %v539
        %v820 = vunpack.c.h.b16 %v539
        %v821 = vunpack.c.l.b16 %v540
        %v822 = vunpack.c.h.b16 %v540
        %v823 = vunpack.c.l.b16 %v541
        %v824 = vunpack.c.l.b16 %v542
        %v825 = vunpack.c.h.b16 %v542
        %v826 = vunpack.c.l.b16 %v543
        %v827 = vunpack.c.h.b16 %v543
        %v828 = vunpack.c.l.b16 %v544
        %v829 = vunpack.c.h.b16 %v544
        %v830 = vunpack.c.l.b16 %v545
        %v831 = vunpack.c.l.b16 %v546
        %v832 = vunpack.c.h.b16 %v546
        %v833 = vunpack.c.l.b16 %v547
        %v834 = vunpack.c.h.b16 %v547
        %v835 = vunpack.c.l.b16 %v548
        %v836 = vunpack.c.h.b16 %v548
        %v837 = vunpack.c.l.b16 %v549
        %v838 = vpack.c.b16 %v733, %v726
        %v839 = vpack.c.b16 %v734, %v727
        %v840 = vpack.c.b16 %v735, %v728
        %v841 = vpack.c.b16 %v736, %v729
        %v842 = vpack.c.b16 %v737, %v730
        %v843 = vpack.c.b16 %v738, %v731
        %v844 = vpack.c.b16 %v739, %v732
        %v845 = vpack.c.b16 %v747, %v740
        %v846 = vpack.c.b16 %v748, %v741
        %v847 = vpack.c.b16 %v749, %v742
        %v848 = vpack.c.b16 %v750, %v743
        %v849 = vpack.c.b16 %v751, %v744
        %v850 = vpack.c.b16 %v752, %v745
        %v851 = vpack.c.b16 %v753, %v746
        %v852 = vpack.c.b16 %v761, %v754
        %v853 = vpack.c.b16 %v762, %v755
        %v854 = vpack.c.b16 %v763, %v756
        %v855 = vpack.c.b16 %v764, %v757
        %v856 = vpack.c.b16 %v765, %v758
        %v857 = vpack.c.b16 %v766, %v759
        %v858 = vpack.c.b16 %v767, %v760
        %v859 = vpack.c.b16 %v775, %v768
        %v860 = vpack.c.b16 %v776, %v769
        %v861 = vpack.c.b16 %v777, %v770
        %v862 = vpack.c.b16 %v778, %v771
        %v863 = vpack.c.b16 %v779, %v772
        %v864 = vpack.c.b16 %v780, %v773
        %v865 = vpack.c.b16 %v781, %v774
        %v866 = vpack.c.b16 %v789, %v782
        %v867 = vpack.c.b16 %v790, %v783
        %v868 = vpack.c.b16 %v791, %v784
        %v869 = vpack.c.b16 %v792, %v785
        %v870 = vpack.c.b16 %v793, %v786
        %v871 = vpack.c.b16 %v794, %v787
        %v872 = vpack.c.b16 %v795, %v788
        %v873 = vpack.c.b16 %v803, %v796
        %v874 = vpack.c.b16 %v804, %v797
        %v875 = vpack.c.b16 %v805, %v798
        %v876 = vpack.c.b16 %v806, %v799
        %v877 = vpack.c.b16 %v807, %v800
        %v878 = vpack.c.b16 %v808, %v801
        %v879 = vpack.c.b16 %v809, %v802
        %v880 = vpack.c.b16 %v817, %v810
        %v881 = vpack.c.b16 %v818, %v811
        %v882 = vpack.c.b16 %v819, %v812
        %v883 = vpack.c.b16 %v820, %v813
        %v884 = vpack.c.b16 %v821, %v814
        %v885 = vpack.c.b16 %v822, %v815
        %v886 = vpack.c.b16 %v823, %v816
        %v887 = vpack.c.b16 %v831, %v824
        %v888 = vpack.c.b16 %v832, %v825
        %v889 = vpack.c.b16 %v833, %v826
        %v890 = vpack.c.b16 %v834, %v827
        %v891 = vpack.c.b16 %v835, %v828
        %v892 = vpack.c.b16 %v836, %v829
        %v893 = vpack.c.b16 %v837, %v830
        %v1062 = vunpack.c.l.b16 %v550
        %v1063 = vunpack.c.l.b16 %v551
        %v1064 = vunpack.c.l.b16 %v552
        %v1065 = vunpack.c.l.b16 %v553
        %v1066 = vunpack.c.l.b16 %v554
        %v1067 = vunpack.c.l.b16 %v555
        %v1068 = vunpack.c.l.b16 %v556
        %v1069 = vunpack.c.l.b16 %v557
        %v1070 = vunpack.c.l.b16 %v558
        %v1071 = vunpack.c.l.b16 %v559
        %v1072 = vunpack.c.l.b16 %v560
        %v1073 = vunpack.c.l.b16 %v561
        %v1074 = vunpack.c.l.b16 %v562
        %v1075 = vunpack.c.l.b16 %v563
        %v1076 = vunpack.c.l.b16 %v564
        %v1077 = vunpack.c.l.b16 %v565
        %v1078 = vunpack.c.l.b16 %v566
        %v1079 = vunpack.c.l.b16 %v567
        %v1080 = vunpack.c.l.b16 %v568
        %v1081 = vunpack.c.l.b16 %v569
        %v1082 = vunpack.c.l.b16 %v570
        %v1083 = vunpack.c.l.b16 %v571
        %v1084 = vunpack.c.l.b16 %v572
        %v1085 = vunpack.c.l.b16 %v573
        %v1086 = vunpack.c.l.b16 %v574
        %v1087 = vunpack.c.l.b16 %v575
        %v1088 = vunpack.c.l.b16 %v576
        %v1089 = vunpack.c.l.b16 %v577
        %v1090 = vunpack.c.l.b16 %v578
        %v1091 = vunpack.c.l.b16 %v579
        %v1092 = vunpack.c.l.b16 %v580
        %v1093 = vunpack.c.l.b16 %v581
        %v1094 = vunpack.c.l.b16 %v582
        %v1095 = vunpack.c.l.b16 %v583
        %v1096 = vunpack.c.l.b16 %v584
        %v1097 = vunpack.c.l.b16 %v585
        %v1098 = vunpack.c.l.b16 %v586
        %v1099 = vunpack.c.l.b16 %v587
        %v1100 = vunpack.c.l.b16 %v588
        %v1101 = vunpack.c.l.b16 %v589
        %v1102 = vunpack.c.l.b16 %v590
        %v1103 = vunpack.c.l.b16 %v591
        %v1104 = vunpack.c.l.b16 %v592
        %v1105 = vunpack.c.l.b16 %v593
        %v1106 = vunpack.c.l.b16 %v594
        %v1107 = vunpack.c.l.b16 %v595
        %v1108 = vunpack.c.l.b16 %v596
        %v1109 = vunpack.c.l.b16 %v597
        %v1110 = vunpack.c.l.b16 %v598
        %v1111 = vunpack.c.l.b16 %v599
        %v1112 = vunpack.c.l.b16 %v600
        %v1113 = vunpack.c.l.b16 %v601
        %v1114 = vunpack.c.l.b16 %v602
        %v1115 = vunpack.c.l.b16 %v603
        %v1116 = vunpack.c.l.b16 %v604
        %v1117 = vunpack.c.l.b16 %v605
        %v1118 = vunpack.c.l.b16 %v606
        %v1119 = vunpack.c.l.b16 %v607
        %v1120 = vunpack.c.l.b16 %v608
        %v1121 = vunpack.c.l.b16 %v609
        %v1122 = vunpack.c.l.b16 %v610
        %v1123 = vunpack.c.l.b16 %v611
        %v1124 = vunpack.c.l.b16 %v612
        %v1125 = vunpack.c.l.b16 %v613
        %v1126 = vunpack.c.l.b16 %v614
        %v1127 = vunpack.c.l.b16 %v615
        %v1128 = vunpack.c.l.b16 %v616
        %v1129 = vunpack.c.l.b16 %v617
        %v1130 = vunpack.c.l.b16 %v618
        %v1131 = vunpack.c.l.b16 %v619
        %v1132 = vunpack.c.l.b16 %v620
        %v1133 = vunpack.c.l.b16 %v621
        %v1134 = vunpack.c.l.b16 %v622
        %v1135 = vunpack.c.l.b16 %v623
        %v1136 = vunpack.c.l.b16 %v624
        %v1137 = vunpack.c.l.b16 %v625
        %v1138 = vunpack.c.l.b16 %v626
        %v1139 = vunpack.c.l.b16 %v627
        %v1140 = vunpack.c.l.b16 %v628
        %v1141 = vunpack.c.l.b16 %v629
        %v1142 = vunpack.c.l.b16 %v630
        %v1143 = vunpack.c.l.b16 %v631
        %v1144 = vunpack.c.l.b16 %v632
        %v1145 = vunpack.c.l.b16 %v633
        %v1146 = vunpack.c.l.b16 %v634
        %v1147 = vunpack.c.l.b16 %v635
        %v1148 = vunpack.c.l.b16 %v636
        %v1149 = vunpack.c.l.b16 %v637
        %v1150 = vunpack.c.l.b16 %v638
        %v1151 = vunpack.c.l.b16 %v639
        %v1152 = vunpack.c.l.b16 %v640
        %v1153 = vunpack.c.l.b16 %v641
        %v1154 = vunpack.c.l.b16 %v642
        %v1155 = vunpack.c.l.b16 %v643
        %v1156 = vunpack.c.l.b16 %v644
        %v1157 = vunpack.c.l.b16 %v645
        %v1158 = vunpack.c.l.b16 %v646
        %v1159 = vunpack.c.l.b16 %v647
        %v1160 = vunpack.c.l.b16 %v648
        %v1161 = vunpack.c.l.b16 %v649
        %v1162 = vunpack.c.l.b16 %v650
        %v1163 = vunpack.c.l.b16 %v651
        %v1164 = vunpack.c.l.b16 %v652
        %v1165 = vunpack.c.l.b16 %v653
        %v1166 = vunpack.c.l.b16 %v654
        %v1167 = vunpack.c.l.b16 %v655
        %v1168 = vunpack.c.l.b16 %v656
        %v1169 = vunpack.c.l.b16 %v657
        %v1170 = vunpack.c.l.b16 %v658
        %v1171 = vunpack.c.l.b16 %v659
        %v1172 = vunpack.c.l.b16 %v660
        %v1173 = vunpack.c.l.b16 %v661
        %v1174 = vpack.c.b16 %v1063, %v1062
        %v1175 = vpack.c.b16 %v1065, %v1064
        %v1176 = vpack.c.b16 %v1067, %v1066
        %v1177 = vpack.c.b16 %v1069, %v1068
        %v1178 = vpack.c.b16 %v1071, %v1070
        %v1179 = vpack.c.b16 %v1073, %v1072
        %v1180 = vpack.c.b16 %v1075, %v1074
        %v1181 = vpack.c.b16 %v1077, %v1076
        %v1182 = vpack.c.b16 %v1079, %v1078
        %v1183 = vpack.c.b16 %v1081, %v1080
        %v1184 = vpack.c.b16 %v1083, %v1082
        %v1185 = vpack.c.b16 %v1085, %v1084
        %v1186 = vpack.c.b16 %v1087, %v1086
        %v1187 = vpack.c.b16 %v1089, %v1088
        %v1188 = vpack.c.b16 %v1091, %v1090
        %v1189 = vpack.c.b16 %v1093, %v1092
        %v1190 = vpack.c.b16 %v1095, %v1094
        %v1191 = vpack.c.b16 %v1097, %v1096
        %v1192 = vpack.c.b16 %v1099, %v1098
        %v1193 = vpack.c.b16 %v1101, %v1100
        %v1194 = vpack.c.b16 %v1103, %v1102
        %v1195 = vpack.c.b16 %v1105, %v1104
        %v1196 = vpack.c.b16 %v1107, %v1106
        %v1197 = vpack.c.b16 %v1109, %v1108
        %v1198 = vpack.c.b16 %v1111, %v1110
        %v1199 = vpack.c.b16 %v1113, %v1112
        %v1200 = vpack.c.b16 %v1115, %v1114
        %v1201 = vpack.c.b16 %v1117, %v1116
        %v1202 = vpack.c.b16 %v1119, %v1118
        %v1203 = vpack.c.b16 %v1121, %v1120
        %v1204 = vpack.c.b16 %v1123, %v1122
        %v1205 = vpack.c.b16 %v1125, %v1124
        %v1206 = vpack.c.b16 %v1127, %v1126
        %v1207 = vpack.c.b16 %v1129, %v1128
        %v1208 = vpack.c.b16 %v1131, %v1130
        %v1209 = vpack.c.b16 %v1133, %v1132
        %v1210 = vpack.c.b16 %v1135, %v1134
        %v1211 = vpack.c.b16 %v1137, %v1136
        %v1212 = vpack.c.b16 %v1139, %v1138
        %v1213 = vpack.c.b16 %v1141, %v1140
        %v1214 = vpack.c.b16 %v1143, %v1142
        %v1215 = vpack.c.b16 %v1145, %v1144
        %v1216 = vpack.c.b16 %v1147, %v1146
        %v1217 = vpack.c.b16 %v1149, %v1148
        %v1218 = vpack.c.b16 %v1151, %v1150
        %v1219 = vpack.c.b16 %v1153, %v1152
        %v1220 = vpack.c.b16 %v1155, %v1154
        %v1221 = vpack.c.b16 %v1157, %v1156
        %v1222 = vpack.c.b16 %v1159, %v1158
        %v1223 = vpack.c.b16 %v1161, %v1160
        %v1224 = vpack.c.b16 %v1163, %v1162
        %v1225 = vpack.c.b16 %v1165, %v1164
        %v1226 = vpack.c.b16 %v1167, %v1166
        %v1227 = vpack.c.b16 %v1169, %v1168
        %v1228 = vpack.c.b16 %v1171, %v1170
        %v1229 = vpack.c.b16 %v1173, %v1172
        %1286 = vmatprep.subr.bf16.mxu0 0
        %1287 = vmatpush1.bf16.msra.mxu0 %v1174
        %1288 = vmatprep.subr.bf16.mxu0 0
        %1289 = vmatpush1.bf16.msra.mxu0 %v1175
        %1290 = vmatprep.subr.bf16.mxu0 0
        %1291 = vmatpush1.bf16.msra.mxu0 %v1176
        %1292 = vmatprep.subr.bf16.mxu0 0
        %1293 = vmatpush1.bf16.msra.mxu0 %v1177
        %1294 = vmatprep.subr.bf16.mxu0 0
        %1295 = vmatpush1.bf16.msra.mxu0 %v1178
        %1296 = vmatprep.subr.bf16.mxu0 0
        %1297 = vmatpush1.bf16.msra.mxu0 %v1179
        %1298 = vmatprep.subr.bf16.mxu0 0
        %1299 = vmatpush1.bf16.msra.mxu0 %v1180
        %1300 = vmatprep.subr.bf16.mxu0 0
        %1301 = vmatpush1.bf16.msra.mxu0 %v1181
        %1302 = vmatprep.subr.bf16.mxu0 0
        %1303 = vmatpush1.bf16.msra.mxu0 %v1182
        %1304 = vmatprep.subr.bf16.mxu0 0
        %1305 = vmatpush1.bf16.msra.mxu0 %v1183
        %1306 = vmatprep.subr.bf16.mxu0 0
        %1307 = vmatpush1.bf16.msra.mxu0 %v1184
        %1308 = vmatprep.subr.bf16.mxu0 0
        %1309 = vmatpush1.bf16.msra.mxu0 %v1185
        %1310 = vmatprep.subr.bf16.mxu0 0
        %1311 = vmatpush1.bf16.msra.mxu0 %v1186
        %1312 = vmatprep.subr.bf16.mxu0 0
        %1313 = vmatpush1.bf16.msra.mxu0 %v1187
        %1314 = vmatprep.subr.bf16.mxu0 0
        %1315 = vmatpush1.bf16.msra.mxu0 %v1188
        %1316 = vmatprep.subr.bf16.mxu0 0
        %1317 = vmatpush1.bf16.msra.mxu0 %v1189
        %1318 = vmatprep.mubr.bf16.mxu0 %v839
        %1319 = vmatmul.mubr.bf16.gmra.mrb[0].mxu0 %v838
        %v1320 = vpop.f32.mrb[0].mxu0
        %v1321 = vadd.f32 0.0, %v1320
        %v1322 = vpop.f32.mrb[0].mxu0
        %v1323 = vpop.f32.mrb[0].mxu0
        %v1324 = vadd.f32 0.0, %v1323
        %v1325 = vpop.f32.mrb[0].mxu0
        %1326 = vmatprep.mubr.bf16.mxu0 %v846
        %1327 = vmatmul.mubr.bf16.gmra.mrb[0].mxu0 %v845
        %v1328 = vpop.f32.mrb[0].mxu0
        %v1329 = vadd.f32 0.0, %v1328
        %v1330 = vpop.f32.mrb[0].mxu0
        %v1331 = vpop.f32.mrb[0].mxu0
        %v1332 = vadd.f32 0.0, %v1331
        %v1333 = vpop.f32.mrb[0].mxu0
        %1334 = vmatprep.mubr.bf16.mxu0 %v853
        %1335 = vmatmul.mubr.bf16.gmra.mrb[0].mxu0 %v852
        %v1336 = vpop.f32.mrb[0].mxu0
        %v1337 = vadd.f32 0.0, %v1336
        %v1338 = vpop.f32.mrb[0].mxu0
        %v1339 = vpop.f32.mrb[0].mxu0
        %v1340 = vadd.f32 0.0, %v1339
        %v1341 = vpop.f32.mrb[0].mxu0
        %1342 = vmatprep.mubr.bf16.mxu0 %v860
        %1343 = vmatmul.mubr.bf16.gmra.mrb[0].mxu0 %v859
        %v1344 = vpop.f32.mrb[0].mxu0
        %v1345 = vadd.f32 0.0, %v1344
        %v1346 = vpop.f32.mrb[0].mxu0
        %v1347 = vpop.f32.mrb[0].mxu0
        %v1348 = vadd.f32 0.0, %v1347
        %v1349 = vpop.f32.mrb[0].mxu0
        %1350 = vmatprep.mubr.bf16.mxu0 %v867
        %1351 = vmatmul.mubr.bf16.gmra.mrb[0].mxu0 %v866
        %v1352 = vpop.f32.mrb[0].mxu0
        %v1353 = vadd.f32 0.0, %v1352
        %v1354 = vpop.f32.mrb[0].mxu0
        %v1355 = vpop.f32.mrb[0].mxu0
        %v1356 = vadd.f32 0.0, %v1355
        %v1357 = vpop.f32.mrb[0].mxu0
        %1358 = vmatprep.mubr.bf16.mxu0 %v874
        %1359 = vmatmul.mubr.bf16.gmra.mrb[0].mxu0 %v873
        %v1360 = vpop.f32.mrb[0].mxu0
        %v1361 = vadd.f32 0.0, %v1360
        %v1362 = vpop.f32.mrb[0].mxu0
        %v1363 = vpop.f32.mrb[0].mxu0
        %v1364 = vadd.f32 0.0, %v1363
        %v1365 = vpop.f32.mrb[0].mxu0
        %1366 = vmatprep.mubr.bf16.mxu0 %v881
        %1367 = vmatmul.mubr.bf16.gmra.mrb[0].mxu0 %v880
        %v1368 = vpop.f32.mrb[0].mxu0
        %v1369 = vadd.f32 0.0, %v1368
        %v1370 = vpop.f32.mrb[0].mxu0
        %v1371 = vpop.f32.mrb[0].mxu0
        %v1372 = vadd.f32 0.0, %v1371
        %v1373 = vpop.f32.mrb[0].mxu0
        %1374 = vmatprep.mubr.bf16.mxu0 %v888
        %1375 = vmatmul.mubr.bf16.gmra.mrb[0].mxu0 %v887
        %v1376 = vpop.f32.mrb[0].mxu0
        %v1377 = vadd.f32 0.0, %v1376
        %v1378 = vpop.f32.mrb[0].mxu0
        %v1379 = vpop.f32.mrb[0].mxu0
        %v1380 = vadd.f32 0.0, %v1379
        %v1381 = vpop.f32.mrb[0].mxu0
        %1382 = vdwg.mxu0
        %1383 = vmatprep.subr.bf16.mxu0 0
        %1384 = vmatpush1.bf16.msra.mxu0 %v1190
        %1385 = vmatprep.subr.bf16.mxu0 0
        %1386 = vmatpush1.bf16.msra.mxu0 %v1191
        %1387 = vmatprep.subr.bf16.mxu0 0
        %1388 = vmatpush1.bf16.msra.mxu0 %v1192
        %1389 = vmatprep.subr.bf16.mxu0 0
        %1390 = vmatpush1.bf16.msra.mxu0 %v1193
        %1391 = vmatprep.subr.bf16.mxu0 0
        %1392 = vmatpush1.bf16.msra.mxu0 %v1194
        %1393 = vmatprep.subr.bf16.mxu0 0
        %1394 = vmatpush1.bf16.msra.mxu0 %v1195
        %1395 = vmatprep.subr.bf16.mxu0 0
        %1396 = vmatpush1.bf16.msra.mxu0 %v1196
        %1397 = vmatprep.subr.bf16.mxu0 0
        %1398 = vmatpush1.bf16.msra.mxu0 %v1197
        %1399 = vmatprep.subr.bf16.mxu0 0
        %1400 = vmatpush1.bf16.msra.mxu0 %v1198
        %1401 = vmatprep.subr.bf16.mxu0 0
        %1402 = vmatpush1.bf16.msra.mxu0 %v1199
        %1403 = vmatprep.subr.bf16.mxu0 0
        %1404 = vmatpush1.bf16.msra.mxu0 %v1200
        %1405 = vmatprep.subr.bf16.mxu0 0
        %1406 = vmatpush1.bf16.msra.mxu0 %v1201
        %1407 = vmatprep.subr.bf16.mxu0 0
        %1408 = vmatpush1.bf16.msra.mxu0 %v1202
        %1409 = vmatprep.subr.bf16.mxu0 0
        %1410 = vmatpush1.bf16.msra.mxu0 %v1203
        %1411 = vmatprep.subr.bf16.mxu0 0
        %1412 = vmatpush1.bf16.msra.mxu0 %v1204
        %1413 = vmatprep.subr.bf16.mxu0 0
        %1414 = vmatpush1.bf16.msra.mxu0 %v1205
        %1415 = vmatprep.mubr.bf16.mxu0 %v841
        %1416 = vmatmul.mubr.bf16.gmra.mrb[0].mxu0 %v840
        %v1417 = vpop.f32.mrb[0].mxu0
        %v1418 = vadd.f32 %v1321, %v1417
        %v1419 = vpop.f32.mrb[0].mxu0
        %v1420 = vpop.f32.mrb[0].mxu0
        %v1421 = vadd.f32 %v1324, %v1420
        %v1422 = vpop.f32.mrb[0].mxu0
        %1423 = vmatprep.mubr.bf16.mxu0 %v848
        %1424 = vmatmul.mubr.bf16.gmra.mrb[0].mxu0 %v847
        %v1425 = vpop.f32.mrb[0].mxu0
        %v1426 = vadd.f32 %v1329, %v1425
        %v1427 = vpop.f32.mrb[0].mxu0
        %v1428 = vpop.f32.mrb[0].mxu0
        %v1429 = vadd.f32 %v1332, %v1428
        %v1430 = vpop.f32.mrb[0].mxu0
        %1431 = vmatprep.mubr.bf16.mxu0 %v855
        %1432 = vmatmul.mubr.bf16.gmra.mrb[0].mxu0 %v854
        %v1433 = vpop.f32.mrb[0].mxu0
        %v1434 = vadd.f32 %v1337, %v1433
        %v1435 = vpop.f32.mrb[0].mxu0
        %v1436 = vpop.f32.mrb[0].mxu0
        %v1437 = vadd.f32 %v1340, %v1436
        %v1438 = vpop.f32.mrb[0].mxu0
        %1439 = vmatprep.mubr.bf16.mxu0 %v862
        %1440 = vmatmul.mubr.bf16.gmra.mrb[0].mxu0 %v861
        %v1441 = vpop.f32.mrb[0].mxu0
        %v1442 = vadd.f32 %v1345, %v1441
        %v1443 = vpop.f32.mrb[0].mxu0
        %v1444 = vpop.f32.mrb[0].mxu0
        %v1445 = vadd.f32 %v1348, %v1444
        %v1446 = vpop.f32.mrb[0].mxu0
        %1447 = vmatprep.mubr.bf16.mxu0 %v869
        %1448 = vmatmul.mubr.bf16.gmra.mrb[0].mxu0 %v868
        %v1449 = vpop.f32.mrb[0].mxu0
        %v1450 = vadd.f32 %v1353, %v1449
        %v1451 = vpop.f32.mrb[0].mxu0
        %v1452 = vpop.f32.mrb[0].mxu0
        %v1453 = vadd.f32 %v1356, %v1452
        %v1454 = vpop.f32.mrb[0].mxu0
        %1455 = vmatprep.mubr.bf16.mxu0 %v876
        %1456 = vmatmul.mubr.bf16.gmra.mrb[0].mxu0 %v875
        %v1457 = vpop.f32.mrb[0].mxu0
        %v1458 = vadd.f32 %v1361, %v1457
        %v1459 = vpop.f32.mrb[0].mxu0
        %v1460 = vpop.f32.mrb[0].mxu0
        %v1461 = vadd.f32 %v1364, %v1460
        %v1462 = vpop.f32.mrb[0].mxu0
        %1463 = vmatprep.mubr.bf16.mxu0 %v883
        %1464 = vmatmul.mubr.bf16.gmra.mrb[0].mxu0 %v882
        %v1465 = vpop.f32.mrb[0].mxu0
        %v1466 = vadd.f32 %v1369, %v1465
        %v1467 = vpop.f32.mrb[0].mxu0
        %v1468 = vpop.f32.mrb[0].mxu0
        %v1469 = vadd.f32 %v1372, %v1468
        %v1470 = vpop.f32.mrb[0].mxu0
        %1471 = vmatprep.mubr.bf16.mxu0 %v890
        %1472 = vmatmul.mubr.bf16.gmra.mrb[0].mxu0 %v889
        %v1473 = vpop.f32.mrb[0].mxu0
        %v1474 = vadd.f32 %v1377, %v1473
        %v1475 = vpop.f32.mrb[0].mxu0
        %v1476 = vpop.f32.mrb[0].mxu0
        %v1477 = vadd.f32 %v1380, %v1476
        %v1478 = vpop.f32.mrb[0].mxu0
        %1479 = vdwg.mxu0
        %1480 = vmatprep.subr.bf16.mxu0 0
        %1481 = vmatpush1.bf16.msra.mxu0 %v1206
        %1482 = vmatprep.subr.bf16.mxu0 0
        %1483 = vmatpush1.bf16.msra.mxu0 %v1207
        %1484 = vmatprep.subr.bf16.mxu0 0
        %1485 = vmatpush1.bf16.msra.mxu0 %v1208
        %1486 = vmatprep.subr.bf16.mxu0 0
        %1487 = vmatpush1.bf16.msra.mxu0 %v1209
        %1488 = vmatprep.subr.bf16.mxu0 0
        %1489 = vmatpush1.bf16.msra.mxu0 %v1210
        %1490 = vmatprep.subr.bf16.mxu0 0
        %1491 = vmatpush1.bf16.msra.mxu0 %v1211
        %1492 = vmatprep.subr.bf16.mxu0 0
        %1493 = vmatpush1.bf16.msra.mxu0 %v1212
        %1494 = vmatprep.subr.bf16.mxu0 0
        %1495 = vmatpush1.bf16.msra.mxu0 %v1213
        %1496 = vmatprep.subr.bf16.mxu0 0
        %1497 = vmatpush1.bf16.msra.mxu0 %v1214
        %1498 = vmatprep.subr.bf16.mxu0 0
        %1499 = vmatpush1.bf16.msra.mxu0 %v1215
        %1500 = vmatprep.subr.bf16.mxu0 0
        %1501 = vmatpush1.bf16.msra.mxu0 %v1216
        %1502 = vmatprep.subr.bf16.mxu0 0
        %1503 = vmatpush1.bf16.msra.mxu0 %v1217
        %1504 = vmatprep.subr.bf16.mxu0 0
        %1505 = vmatpush1.bf16.msra.mxu0 %v1218
        %1506 = vmatprep.subr.bf16.mxu0 0
        %1507 = vmatpush1.bf16.msra.mxu0 %v1219
        %1508 = vmatprep.subr.bf16.mxu0 0
        %1509 = vmatpush1.bf16.msra.mxu0 %v1220
        %1510 = vmatprep.subr.bf16.mxu0 0
        %1511 = vmatpush1.bf16.msra.mxu0 %v1221
        %1512 = vmatprep.mubr.bf16.mxu0 %v843
        %1513 = vmatmul.mubr.bf16.gmra.mrb[0].mxu0 %v842
        %v1514 = vpop.f32.mrb[0].mxu0
        %v1515 = vadd.f32 %v1418, %v1514
        %v1516 = vpop.f32.mrb[0].mxu0
        %v1517 = vpop.f32.mrb[0].mxu0
        %v1518 = vadd.f32 %v1421, %v1517
        %v1519 = vpop.f32.mrb[0].mxu0
        %1520 = vmatprep.mubr.bf16.mxu0 %v850
        %1521 = vmatmul.mubr.bf16.gmra.mrb[0].mxu0 %v849
        %v1522 = vpop.f32.mrb[0].mxu0
        %v1523 = vadd.f32 %v1426, %v1522
        %v1524 = vpop.f32.mrb[0].mxu0
        %v1525 = vpop.f32.mrb[0].mxu0
        %v1526 = vadd.f32 %v1429, %v1525
        %v1527 = vpop.f32.mrb[0].mxu0
        %1528 = vmatprep.mubr.bf16.mxu0 %v857
        %1529 = vmatmul.mubr.bf16.gmra.mrb[0].mxu0 %v856
        %v1530 = vpop.f32.mrb[0].mxu0
        %v1531 = vadd.f32 %v1434, %v1530
        %v1532 = vpop.f32.mrb[0].mxu0
        %v1533 = vpop.f32.mrb[0].mxu0
        %v1534 = vadd.f32 %v1437, %v1533
        %v1535 = vpop.f32.mrb[0].mxu0
        %1536 = vmatprep.mubr.bf16.mxu0 %v864
        %1537 = vmatmul.mubr.bf16.gmra.mrb[0].mxu0 %v863
        %v1538 = vpop.f32.mrb[0].mxu0
        %v1539 = vadd.f32 %v1442, %v1538
        %v1540 = vpop.f32.mrb[0].mxu0
        %v1541 = vpop.f32.mrb[0].mxu0
        %v1542 = vadd.f32 %v1445, %v1541
        %v1543 = vpop.f32.mrb[0].mxu0
        %1544 = vmatprep.mubr.bf16.mxu0 %v871
        %1545 = vmatmul.mubr.bf16.gmra.mrb[0].mxu0 %v870
        %v1546 = vpop.f32.mrb[0].mxu0
        %v1547 = vadd.f32 %v1450, %v1546
        %v1548 = vpop.f32.mrb[0].mxu0
        %v1549 = vpop.f32.mrb[0].mxu0
        %v1550 = vadd.f32 %v1453, %v1549
        %v1551 = vpop.f32.mrb[0].mxu0
        %1552 = vmatprep.mubr.bf16.mxu0 %v878
        %1553 = vmatmul.mubr.bf16.gmra.mrb[0].mxu0 %v877
        %v1554 = vpop.f32.mrb[0].mxu0
        %v1555 = vadd.f32 %v1458, %v1554
        %v1556 = vpop.f32.mrb[0].mxu0
        %v1557 = vpop.f32.mrb[0].mxu0
        %v1558 = vadd.f32 %v1461, %v1557
        %v1559 = vpop.f32.mrb[0].mxu0
        %1560 = vmatprep.mubr.bf16.mxu0 %v885
        %1561 = vmatmul.mubr.bf16.gmra.mrb[0].mxu0 %v884
        %v1562 = vpop.f32.mrb[0].mxu0
        %v1563 = vadd.f32 %v1466, %v1562
        %v1564 = vpop.f32.mrb[0].mxu0
        %v1565 = vpop.f32.mrb[0].mxu0
        %v1566 = vadd.f32 %v1469, %v1565
        %v1567 = vpop.f32.mrb[0].mxu0
        %1568 = vmatprep.mubr.bf16.mxu0 %v892
        %1569 = vmatmul.mubr.bf16.gmra.mrb[0].mxu0 %v891
        %v1570 = vpop.f32.mrb[0].mxu0
        %v1571 = vadd.f32 %v1474, %v1570
        %v1572 = vpop.f32.mrb[0].mxu0
        %v1573 = vpop.f32.mrb[0].mxu0
        %v1574 = vadd.f32 %v1477, %v1573
        %v1575 = vpop.f32.mrb[0].mxu0
        %1576 = vdwg.mxu0
        %1577 = vmatprep.subr.bf16.mxu0 0
        %1578 = vmatpush1.bf16.msra.mxu0 %v1222
        %1579 = vmatprep.subr.bf16.mxu0 0
        %1580 = vmatpush1.bf16.msra.mxu0 %v1223
        %1581 = vmatprep.subr.bf16.mxu0 0
        %1582 = vmatpush1.bf16.msra.mxu0 %v1224
        %1583 = vmatprep.subr.bf16.mxu0 0
        %1584 = vmatpush1.bf16.msra.mxu0 %v1225
        %1585 = vmatprep.subr.bf16.mxu0 0
        %1586 = vmatpush1.bf16.msra.mxu0 %v1226
        %1587 = vmatprep.subr.bf16.mxu0 0
        %1588 = vmatpush1.bf16.msra.mxu0 %v1227
        %1589 = vmatprep.subr.bf16.mxu0 0
        %1590 = vmatpush1.bf16.msra.mxu0 %v1228
        %1591 = vmatprep.subr.bf16.mxu0 0
        %1592 = vmatpush1.bf16.msra.mxu0 %v1229
        %1593 = vmatprep.subr.bf16.mxu0 0
        %1594 = vmatpush1.bf16.msra.mxu0 0
        %1595 = vmatprep.subr.bf16.mxu0 0
        %1596 = vmatpush1.bf16.msra.mxu0 0
        %1597 = vmatprep.subr.bf16.mxu0 0
        %1598 = vmatpush1.bf16.msra.mxu0 0
        %1599 = vmatprep.subr.bf16.mxu0 0
        %1600 = vmatpush1.bf16.msra.mxu0 0
        %1601 = vmatprep.subr.bf16.mxu0 0
        %1602 = vmatpush1.bf16.msra.mxu0 0
        %1603 = vmatprep.subr.bf16.mxu0 0
        %1604 = vmatpush1.bf16.msra.mxu0 0
        %1605 = vmatprep.subr.bf16.mxu0 0
        %1606 = vmatpush1.bf16.msra.mxu0 0
        %1607 = vmatprep.subr.bf16.mxu0 0
        %1608 = vmatpush1.bf16.msra.mxu0 0
        %1609 = vmatprep.mubr.bf16.mxu0 0
        %1610 = vmatmul.mubr.bf16.gmra.mrb[0].mxu0 %v844
        %v1611 = vpop.f32.mrb[0].mxu0
        %v1612 = vadd.f32 %v1515, %v1611
        %v1613 = vpop.f32.mrb[0].mxu0
        %v1614 = vpop.f32.mrb[0].mxu0
        %v1615 = vadd.f32 %v1518, %v1614
        %v1616 = vpop.f32.mrb[0].mxu0
        %1617 = vmatprep.mubr.bf16.mxu0 0
        %1618 = vmatmul.mubr.bf16.gmra.mrb[0].mxu0 %v851
        %v1619 = vpop.f32.mrb[0].mxu0
        %v1620 = vadd.f32 %v1523, %v1619
        %v1621 = vpop.f32.mrb[0].mxu0
        %v1622 = vpop.f32.mrb[0].mxu0
        %v1623 = vadd.f32 %v1526, %v1622
        %v1624 = vpop.f32.mrb[0].mxu0
        %1625 = vmatprep.mubr.bf16.mxu0 0
        %1626 = vmatmul.mubr.bf16.gmra.mrb[0].mxu0 %v858
        %v1627 = vpop.f32.mrb[0].mxu0
        %v1628 = vadd.f32 %v1531, %v1627
        %v1629 = vpop.f32.mrb[0].mxu0
        %v1630 = vpop.f32.mrb[0].mxu0
        %v1631 = vadd.f32 %v1534, %v1630
        %v1632 = vpop.f32.mrb[0].mxu0
        %1633 = vmatprep.mubr.bf16.mxu0 0
        %1634 = vmatmul.mubr.bf16.gmra.mrb[0].mxu0 %v865
        %v1635 = vpop.f32.mrb[0].mxu0
        %v1636 = vadd.f32 %v1539, %v1635
        %v1637 = vpop.f32.mrb[0].mxu0
        %v1638 = vpop.f32.mrb[0].mxu0
        %v1639 = vadd.f32 %v1542, %v1638
        %v1640 = vpop.f32.mrb[0].mxu0
        %1641 = vmatprep.mubr.bf16.mxu0 0
        %1642 = vmatmul.mubr.bf16.gmra.mrb[0].mxu0 %v872
        %v1643 = vpop.f32.mrb[0].mxu0
        %v1644 = vadd.f32 %v1547, %v1643
        %v1645 = vpop.f32.mrb[0].mxu0
        %v1646 = vpop.f32.mrb[0].mxu0
        %v1647 = vadd.f32 %v1550, %v1646
        %v1648 = vpop.f32.mrb[0].mxu0
        %1649 = vmatprep.mubr.bf16.mxu0 0
        %1650 = vmatmul.mubr.bf16.gmra.mrb[0].mxu0 %v879
        %v1651 = vpop.f32.mrb[0].mxu0
        %v1652 = vadd.f32 %v1555, %v1651
        %v1653 = vpop.f32.mrb[0].mxu0
        %v1654 = vpop.f32.mrb[0].mxu0
        %v1655 = vadd.f32 %v1558, %v1654
        %v1656 = vpop.f32.mrb[0].mxu0
        %1657 = vmatprep.mubr.bf16.mxu0 0
        %1658 = vmatmul.mubr.bf16.gmra.mrb[0].mxu0 %v886
        %v1659 = vpop.f32.mrb[0].mxu0
        %v1660 = vadd.f32 %v1563, %v1659
        %v1661 = vpop.f32.mrb[0].mxu0
        %v1662 = vpop.f32.mrb[0].mxu0
        %v1663 = vadd.f32 %v1566, %v1662
        %v1664 = vpop.f32.mrb[0].mxu0
        %1665 = vmatprep.mubr.bf16.mxu0 0
        %1666 = vmatmul.mubr.bf16.gmra.mrb[0].mxu0 %v893
        %v1667 = vpop.f32.mrb[0].mxu0
        %v1668 = vadd.f32 %v1571, %v1667
        %v1669 = vpop.f32.mrb[0].mxu0
        %v1670 = vpop.f32.mrb[0].mxu0
        %v1671 = vadd.f32 %v1574, %v1670
        %v1672 = vpop.f32.mrb[0].mxu0
        %1673 = vdwg.mxu0
        %v1674 = vadd.f32 %v470, %v1612
        %v1675 = vadd.f32 %v471, %v1615
        %v1676 = vadd.f32 %v472, %v1620
        %v1677 = vadd.f32 %v473, %v1623
        %v1678 = vadd.f32 %v474, %v1628
        %v1679 = vadd.f32 %v475, %v1631
        %v1680 = vadd.f32 %v476, %v1636
        %v1681 = vadd.f32 %v477, %v1639
        %v1682 = vadd.f32 %v478, %v1644
        %v1683 = vadd.f32 %v479, %v1647
        %v1684 = vadd.f32 %v480, %v1652
        %v1685 = vadd.f32 %v481, %v1655
        %v1686 = vadd.f32 %v482, %v1660
        %v1687 = vadd.f32 %v483, %v1663
        %v1688 = vadd.f32 %v484, %v1668
        %v1689 = vadd.f32 %v485, %v1671
        %1690 = vst [vmem:[#allocation2] sm:$0xff] %v1674
        %1691 = vst [vmem:[#allocation2 + $0x8] sm:$0xff] %v1675
        %1692 = vst [vmem:[#allocation2 + $0x10] sm:$0xff] %v1676
        %1693 = vst [vmem:[#allocation2 + $0x18] sm:$0xff] %v1677
        %1694 = vst [vmem:[#allocation2 + $0x20] sm:$0xff] %v1678
        %1695 = vst [vmem:[#allocation2 + $0x28] sm:$0xff] %v1679
        %1696 = vst [vmem:[#allocation2 + $0x30] sm:$0xff] %v1680
        %1697 = vst [vmem:[#allocation2 + $0x38] sm:$0xff] %v1681
        %1698 = vst [vmem:[#allocation2 + $0x40] sm:$0xff] %v1682
        %1699 = vst [vmem:[#allocation2 + $0x48] sm:$0xff] %v1683
        %1700 = vst [vmem:[#allocation2 + $0x50] sm:$0xff] %v1684
        %1701 = vst [vmem:[#allocation2 + $0x58] sm:$0xff] %v1685
        %1702 = vst [vmem:[#allocation2 + $0x60] sm:$0xff] %v1686
        %1703 = vst [vmem:[#allocation2 + $0x68] sm:$0xff] %v1687
        %1704 = vst [vmem:[#allocation2 + $0x70] sm:$0xff] %v1688
        %1705 = vst [vmem:[#allocation2 + $0x78] sm:$0xff] %v1689
        %p1706 = scmp.eq.s32.totalorder %s22, 6
        // Predicated region
        $region67: #{embedding_forward.5} parent=57 // pred_check
          %p1707 = pneg %p1706
        $region68: #{embedding_forward.5} parent=57 // pred_check_branch
          %1709 = sbr.rel (%p1707) target = $region70
        $region69: #{embedding_forward.5} parent=57 // pred_region
          %v1710 = vld [vmem:[#allocation2] sm:$0xff]
          %v1711 = vld [vmem:[#allocation2 + $0x8] sm:$0xff]
          %v1712 = vld [vmem:[#allocation2 + $0x10] sm:$0xff]
          %v1713 = vld [vmem:[#allocation2 + $0x18] sm:$0xff]
          %v1714 = vld [vmem:[#allocation2 + $0x20] sm:$0xff]
          %v1715 = vld [vmem:[#allocation2 + $0x28] sm:$0xff]
          %v1716 = vld [vmem:[#allocation2 + $0x30] sm:$0xff]
          %v1717 = vld [vmem:[#allocation2 + $0x38] sm:$0xff]
          %v1718 = vld [vmem:[#allocation2 + $0x40] sm:$0xff]
          %v1719 = vld [vmem:[#allocation2 + $0x48] sm:$0xff]
          %v1720 = vld [vmem:[#allocation2 + $0x50] sm:$0xff]
          %v1721 = vld [vmem:[#allocation2 + $0x58] sm:$0xff]
          %v1722 = vld [vmem:[#allocation2 + $0x60] sm:$0xff]
          %v1723 = vld [vmem:[#allocation2 + $0x68] sm:$0xff]
          %v1724 = vld [vmem:[#allocation2 + $0x70] sm:$0xff]
          %v1725 = vld [vmem:[#allocation2 + $0x78] sm:$0xff]
          %v1726 = vld [vmem:[%s436] sm:$0x1]
          %v1728 = vlaneseq
          %v1729 = vshrl.u32 %v1728, 7
          %v1730 = vsub.s32 0, %v1729
          %v1731 = vrot.slane %v1726, %v1730
          %v1733 = vmul.f32 %v1710, %v1731
          %v1734 = vmul.f32 %v1711, %v1731
          %v1735 = vmul.f32 %v1712, %v1731
          %v1736 = vmul.f32 %v1713, %v1731
          %v1737 = vmul.f32 %v1714, %v1731
          %v1738 = vmul.f32 %v1715, %v1731
          %v1739 = vmul.f32 %v1716, %v1731
          %v1740 = vmul.f32 %v1717, %v1731
          %v1741 = vmul.f32 %v1718, %v1731
          %v1742 = vmul.f32 %v1719, %v1731
          %v1743 = vmul.f32 %v1720, %v1731
          %v1744 = vmul.f32 %v1721, %v1731
          %v1745 = vmul.f32 %v1722, %v1731
          %v1746 = vmul.f32 %v1723, %v1731
          %v1747 = vmul.f32 %v1724, %v1731
          %v1748 = vmul.f32 %v1725, %v1731
          %v1749 = vld [vmem:[%s439] sm:$0x1]
          %v1751 = vlaneseq
          %v1752 = vshrl.u32 %v1751, 7
          %v1753 = vsub.s32 0, %v1752
          %v1754 = vrot.slane %v1749, %v1753
          %v1756 = vadd.f32 %v1733, %v1754
          %v1757 = vadd.f32 %v1734, %v1754
          %v1758 = vadd.f32 %v1735, %v1754
          %v1759 = vadd.f32 %v1736, %v1754
          %v1760 = vadd.f32 %v1737, %v1754
          %v1761 = vadd.f32 %v1738, %v1754
          %v1762 = vadd.f32 %v1739, %v1754
          %v1763 = vadd.f32 %v1740, %v1754
          %v1764 = vadd.f32 %v1741, %v1754
          %v1765 = vadd.f32 %v1742, %v1754
          %v1766 = vadd.f32 %v1743, %v1754
          %v1767 = vadd.f32 %v1744, %v1754
          %v1768 = vadd.f32 %v1745, %v1754
          %v1769 = vadd.f32 %v1746, %v1754
          %v1770 = vadd.f32 %v1747, %v1754
          %v1771 = vadd.f32 %v1748, %v1754
          %vm1772 = vcmp.gt.f32.partialorder %v1756, 0.0
          %vm1773 = vcmp.gt.f32.partialorder %v1757, 0.0
          %vm1774 = vcmp.gt.f32.partialorder %v1758, 0.0
          %vm1775 = vcmp.gt.f32.partialorder %v1759, 0.0
          %vm1776 = vcmp.gt.f32.partialorder %v1760, 0.0
          %vm1777 = vcmp.gt.f32.partialorder %v1761, 0.0
          %vm1778 = vcmp.gt.f32.partialorder %v1762, 0.0
          %vm1779 = vcmp.gt.f32.partialorder %v1763, 0.0
          %vm1780 = vcmp.gt.f32.partialorder %v1764, 0.0
          %vm1781 = vcmp.gt.f32.partialorder %v1765, 0.0
          %vm1782 = vcmp.gt.f32.partialorder %v1766, 0.0
          %vm1783 = vcmp.gt.f32.partialorder %v1767, 0.0
          %vm1784 = vcmp.gt.f32.partialorder %v1768, 0.0
          %vm1785 = vcmp.gt.f32.partialorder %v1769, 0.0
          %vm1786 = vcmp.gt.f32.partialorder %v1770, 0.0
          %vm1787 = vcmp.gt.f32.partialorder %v1771, 0.0
          %v1788 = vmul.f32 %v1756, 0.1
          %v1789 = vmul.f32 %v1757, 0.1
          %v1790 = vmul.f32 %v1758, 0.1
          %v1791 = vmul.f32 %v1759, 0.1
          %v1792 = vmul.f32 %v1760, 0.1
          %v1793 = vmul.f32 %v1761, 0.1
          %v1794 = vmul.f32 %v1762, 0.1
          %v1795 = vmul.f32 %v1763, 0.1
          %v1796 = vmul.f32 %v1764, 0.1
          %v1797 = vmul.f32 %v1765, 0.1
          %v1798 = vmul.f32 %v1766, 0.1
          %v1799 = vmul.f32 %v1767, 0.1
          %v1800 = vmul.f32 %v1768, 0.1
          %v1801 = vmul.f32 %v1769, 0.1
          %v1802 = vmul.f32 %v1770, 0.1
          %v1803 = vmul.f32 %v1771, 0.1
          %v1804 = vsel %vm1772, %v1756, %v1788
          %v1805 = vsel %vm1773, %v1757, %v1789
          %v1806 = vsel %vm1774, %v1758, %v1790
          %v1807 = vsel %vm1775, %v1759, %v1791
          %v1808 = vsel %vm1776, %v1760, %v1792
          %v1809 = vsel %vm1777, %v1761, %v1793
          %v1810 = vsel %vm1778, %v1762, %v1794
          %v1811 = vsel %vm1779, %v1763, %v1795
          %v1812 = vsel %vm1780, %v1764, %v1796
          %v1813 = vsel %vm1781, %v1765, %v1797
          %v1814 = vsel %vm1782, %v1766, %v1798
          %v1815 = vsel %vm1783, %v1767, %v1799
          %v1816 = vsel %vm1784, %v1768, %v1800
          %v1817 = vsel %vm1785, %v1769, %v1801
          %v1818 = vsel %vm1786, %v1770, %v1802
          %v1819 = vsel %vm1787, %v1771, %v1803
          %v1820 = vpack.c.bf16 %v1805, %v1804
          %v1821 = vpack.c.bf16 %v1807, %v1806
          %v1822 = vpack.c.bf16 %v1809, %v1808
          %v1823 = vpack.c.bf16 %v1811, %v1810
          %v1824 = vpack.c.bf16 %v1813, %v1812
          %v1825 = vpack.c.bf16 %v1815, %v1814
          %v1826 = vpack.c.bf16 %v1817, %v1816
          %v1827 = vpack.c.bf16 %v1819, %v1818
          %v1836 = vunpack.c.l.b16 %v1820
          %v1837 = vunpack.c.h.b16 %v1820
          %v1838 = vunpack.c.l.b16 %v1821
          %v1839 = vunpack.c.h.b16 %v1821
          %v1840 = vunpack.c.l.b16 %v1822
          %v1841 = vunpack.c.h.b16 %v1822
          %v1842 = vunpack.c.l.b16 %v1823
          %v1843 = vunpack.c.h.b16 %v1823
          %v1844 = vunpack.c.l.b16 %v1824
          %v1845 = vunpack.c.h.b16 %v1824
          %v1846 = vunpack.c.l.b16 %v1825
          %v1847 = vunpack.c.h.b16 %v1825
          %v1848 = vunpack.c.l.b16 %v1826
          %v1849 = vunpack.c.h.b16 %v1826
          %v1850 = vunpack.c.l.b16 %v1827
          %v1851 = vunpack.c.h.b16 %v1827
          %v1852 = vpack.c.b16 %v1836, %v1836
          %v1853 = vpack.c.b16 %v1837, %v1837
          %v1854 = vpack.c.b16 %v1838, %v1838
          %v1855 = vpack.c.b16 %v1839, %v1839
          %v1856 = vpack.c.b16 %v1840, %v1840
          %v1857 = vpack.c.b16 %v1841, %v1841
          %v1858 = vpack.c.b16 %v1842, %v1842
          %v1859 = vpack.c.b16 %v1843, %v1843
          %v1860 = vpack.c.b16 %v1844, %v1844
          %v1861 = vpack.c.b16 %v1845, %v1845
          %v1862 = vpack.c.b16 %v1846, %v1846
          %v1863 = vpack.c.b16 %v1847, %v1847
          %v1864 = vpack.c.b16 %v1848, %v1848
          %v1865 = vpack.c.b16 %v1849, %v1849
          %v1866 = vpack.c.b16 %v1850, %v1850
          %v1867 = vpack.c.b16 %v1851, %v1851
          %1884 = vst [vmem:[%s447] sm:$0xf] %v1852
          %1885 = vst [vmem:[%s447 + $0x4] sm:$0xf] %v1853
          %1886 = vst [vmem:[%s447 + $0x8] sm:$0xf] %v1854
          %1887 = vst [vmem:[%s447 + $0xc] sm:$0xf] %v1855
          %1888 = vst [vmem:[%s447 + $0x10] sm:$0xf] %v1856
          %1889 = vst [vmem:[%s447 + $0x14] sm:$0xf] %v1857
          %1890 = vst [vmem:[%s447 + $0x18] sm:$0xf] %v1858
          %1891 = vst [vmem:[%s447 + $0x1c] sm:$0xf] %v1859
          %1892 = vst [vmem:[%s447 + $0x20] sm:$0xf] %v1860
          %1893 = vst [vmem:[%s447 + $0x24] sm:$0xf] %v1861
          %1894 = vst [vmem:[%s447 + $0x28] sm:$0xf] %v1862
          %1895 = vst [vmem:[%s447 + $0x2c] sm:$0xf] %v1863
          %1896 = vst [vmem:[%s447 + $0x30] sm:$0xf] %v1864
          %1897 = vst [vmem:[%s447 + $0x34] sm:$0xf] %v1865
          %1898 = vst [vmem:[%s447 + $0x38] sm:$0xf] %v1866
          %1899 = vst [vmem:[%s447 + $0x3c] sm:$0xf] %v1867
        $region70: #{embedding_forward.5} parent=57 // pred_fallthru
          _
        %s1900 = smul.u32 16, %s20
        %p1901 = scmp.lt.s32.totalorder %s1900, 31
        %s1902 = scalar_select %p1901, %s1900, 31
        %p1903 = scmp.lt.s32.totalorder %s21, 0
        %s1904 = scalar_select %p1903, %s21, 0
        %s1905 = sadd.s32 %s1904, %s1902
        %s1906 = smul.addr %s1905, 4
        %s1907 = scalar_lea.vmem %s4, %s1906
        // Predicated region
        $region71: #{embedding_forward.5} parent=57 // pred_check
          %p1908 = pneg %p162
        $region72: #{embedding_forward.5} parent=57 // pred_check_branch
          %1910 = sbr.rel (%p1908) target = $region74
        $region73: #{embedding_forward.5} parent=57 // pred_region
          %s1911 = smul.u32 16, %s20
        $region74: #{embedding_forward.5} parent=57 // pred_fallthru
          _
      $region58: #{embedding_forward.5} parent=5 // pred_fallthru
        _
      %p1912 = scmp.le.s32.totalorder 2, %s10
      // Predicated region
      $region75: #{embedding_forward.5} parent=5 // pred_check
        %p1913 = pneg %p1912
      $region76: #{embedding_forward.5} parent=5 // pred_check_branch
        %1915 = sbr.rel (%p1913) target = $region78
      $region77: #{embedding_forward.5} parent=5 // pred_region
        %s1916 = ssub.s32 %s10, 2
        // Predicated region
        $region79: #{embedding_forward.5} parent=77 // pred_check
          %p1917 = pneg %p168
        $region80: #{embedding_forward.5} parent=77 // pred_check_branch
          %1919 = sbr.rel (%p1917) target = $region82
        $region81: #{embedding_forward.5} parent=77 // pred_region
          %s1920 = smul.u32 16, %s23
          %p1921 = scmp.lt.s32.totalorder %s1920, 31
          %s1922 = scalar_select %p1921, %s1920, 31
          %p1923 = scmp.lt.s32.totalorder %s24, 0
          %s1924 = scalar_select %p1923, %s24, 0
          %s1925 = sadd.s32 %s1924, %s1922
          %s1926 = smul.addr %s1925, 4
          %s1927 = scalar_lea.vmem %s4, %s1926
        $region82: #{embedding_forward.5} parent=77 // pred_fallthru
          _
      $region78: #{embedding_forward.5} parent=5 // pred_fallthru
        _
    $region6: #{embedding_forward.5} parent=1 // loop_footer
      %s14 = sadd.s32 1, %s10
    $region7: #{embedding_forward.5} parent=1 // loop_footer_branch
      %9 = sbr.rel target = $region3
    $region8: #{embedding_forward.5} parent=1 // loop_exit
      _

// kernel: embedding_forward.6
$region0: #{embedding_forward.6}
  #allocation0 [shape = 'u32[]', space=smem, size = 0x4, offset = 0x4, fixed_abs, tag = 'smem constant byte address 0x4 - core index']
  #allocation1 [shape = 'u32[144,128]{1,0:T(1,128)}', space=vmem, size = 0x12000, scoped, tag = 'internal scratch']
  #allocation2 [shape = 'f32[56,512]{1,0:T(8,128)}', space=vmem, size = 0x1c000, scoped, tag = 'scratch operand']
  %s0 = inlined_call_operand.vmem [shape: bf16[56,6272], index: 0, kind: input, shape index: {}]
  %s1 = inlined_call_operand.vmem [shape: s8[6272,1024], index: 1, kind: input, shape index: {}]
  %s2 = inlined_call_operand.vmem [shape: f32[1,1024], index: 2, kind: input, shape index: {}]
  %s3 = inlined_call_operand.vmem [shape: f32[1,1024], index: 3, kind: input, shape index: {}]
  %s4 = inlined_call_operand.vmem [shape: bf16[56,1024], index: 4, kind: output, shape index: {}]
  %s5 = sld [smem:[#allocation0]]
  $region125: #{embedding_forward.6} parent=0
    _
  %s7 = ssub.s32 1, %s5
  %s8 = scalar_select 0, %s7, %s5
  $region1: #{embedding_forward.6} parent=0
    #allocation3 [shape = 'u8[200704]{0}', space=vmem, size = 0x31000, scoped, tag = 'input window, operand 0']
    #allocation4 [shape = 'u8[917504]{0}', space=vmem, size = 0xe0000, scoped, tag = 'input window, operand 1']
    #allocation5 [shape = 'u8[114688]{0}', space=vmem, size = 0x1c000, scoped, tag = 'output window, operand 0']
    loop: start=0, step=1, limit=16
    $region2: #{embedding_forward.6} parent=1 // loop_pre_header
      _
    $region3: #{embedding_forward.6} parent=1 // loop_header
      %s10 = sphi 0, %s14
      %p11 = scmp.ge.s32.totalorder %s10, 16
      %s17 = sphi 0, %s36
      %s18 = sphi 0, %s32
      %s19 = sphi 0, %s28
      %s20 = sphi 0, %s17
      %s21 = sphi 0, %s18
      %s22 = sphi 0, %s19
      %s23 = sphi 0, %s20
      %s24 = sphi 0, %s21
      %s25 = sphi 0, %s22
      %s41 = sphi 0, %s43
      %s44 = sphi 0, %s41
      %s45 = sphi 0, %s44
      %s61 = sphi 0, %s45
      %s69 = sphi 0, %s71
      %s72 = sphi 0, %s69
      %s73 = sphi 0, %s72
      %s89 = sphi 0, %s73
      %s95 = sphi 0, %s97
      %s98 = sphi 0, %s95
      %s99 = sphi 0, %s98
      %s115 = sphi 0, %s99
      %s121 = sphi 0, %s123
      %s124 = sphi 0, %s121
      %s125 = sphi 0, %s124
      %s141 = sphi 0, %s125
      %s149 = sphi 0, %s151
      %s152 = sphi 0, %s149
      %s153 = sphi 0, %s152
      %s169 = sphi 0, %s153
    $region4: #{embedding_forward.6} parent=1 // loop_header_branch
      %13 = sbr.rel (%p11) target = $region8
    $region5: #{embedding_forward.6} parent=1 // loop_body
      %s15 = ssub.s32 %s10, 1
      %s16 = ssub.s32 %s10, 2
      %s26 = sadd.s32 1, %s19
      %p27 = scmp.ge.s32.totalorder %s26, 7
      %s28 = scalar_select %p27, 0, %s26
      %s29 = sadd.s32 1, %s18
      %s30 = scalar_select %p27, %s29, %s18
      %p31 = scmp.ge.s32.totalorder %s30, 2
      %s32 = scalar_select %p31, 0, %s30
      %s33 = sadd.s32 1, %s17
      %s34 = scalar_select %p31, %s33, %s17
      %p35 = scmp.ge.s32.totalorder %s34, 1
      %s36 = scalar_select %p35, 0, %s34
      %s37 = ssub.s32 %s17, %s36
      %s38 = ssub.s32 %s19, %s28
      %s39 = sor.u32 %s37, %s38
      %p40 = scmp.eq.s32.totalorder %s39, 0
      %s42 = sadd.s32 %s41, 1
      %s43 = scalar_select %p40, %s41, %s42
      %p46 = pneg %p40
      %p47 = scmp.eq.s32.totalorder %s10, 13
      %p48 = por %p46, %p47
      %p49 = scmp.ne.s32.totalorder %s41, %s44
      %p50 = scmp.eq.s32.totalorder %s10, 0
      %p51 = por %p49, %p50
      %p52 = scmp.ne.s32.totalorder %s41, %s44
      %p53 = scmp.eq.s32.totalorder %s15, 13
      %p54 = por %p52, %p53
      %p55 = scmp.ne.s32.totalorder %s44, %s45
      %p56 = scmp.eq.s32.totalorder %s15, 0
      %p57 = por %p55, %p56
      %p58 = scmp.ne.s32.totalorder %s44, %s45
      %p59 = scmp.eq.s32.totalorder %s16, 13
      %p60 = por %p58, %p59
      %p62 = scmp.ne.s32.totalorder %s45, %s61
      %p63 = scmp.eq.s32.totalorder %s16, 0
      %p64 = por %p62, %p63
      %s65 = ssub.s32 %s19, %s28
      %s66 = ssub.s32 %s18, %s32
      %s67 = sor.u32 %s65, %s66
      %p68 = scmp.eq.s32.totalorder %s67, 0
      %s70 = sadd.s32 %s69, 1
      %s71 = scalar_select %p68, %s69, %s70
      %p74 = pneg %p68
      %p75 = scmp.eq.s32.totalorder %s10, 13
      %p76 = por %p74, %p75
      %p77 = scmp.ne.s32.totalorder %s69, %s72
      %p78 = scmp.eq.s32.totalorder %s10, 0
      %p79 = por %p77, %p78
      %p80 = scmp.ne.s32.totalorder %s69, %s72
      %p81 = scmp.eq.s32.totalorder %s15, 13
      %p82 = por %p80, %p81
      %p83 = scmp.ne.s32.totalorder %s72, %s73
      %p84 = scmp.eq.s32.totalorder %s15, 0
      %p85 = por %p83, %p84
      %p86 = scmp.ne.s32.totalorder %s72, %s73
      %p87 = scmp.eq.s32.totalorder %s16, 13
      %p88 = por %p86, %p87
      %p90 = scmp.ne.s32.totalorder %s73, %s89
      %p91 = scmp.eq.s32.totalorder %s16, 0
      %p92 = por %p90, %p91
      %s93 = ssub.s32 %s18, %s32
      %p94 = scmp.eq.s32.totalorder %s93, 0
      %s96 = sadd.s32 %s95, 1
      %s97 = scalar_select %p94, %s95, %s96
      %p100 = pneg %p94
      %p101 = scmp.eq.s32.totalorder %s10, 13
      %p102 = por %p100, %p101
      %p103 = scmp.ne.s32.totalorder %s95, %s98
      %p104 = scmp.eq.s32.totalorder %s10, 0
      %p105 = por %p103, %p104
      %p106 = scmp.ne.s32.totalorder %s95, %s98
      %p107 = scmp.eq.s32.totalorder %s15, 13
      %p108 = por %p106, %p107
      %p109 = scmp.ne.s32.totalorder %s98, %s99
      %p110 = scmp.eq.s32.totalorder %s15, 0
      %p111 = por %p109, %p110
      %p112 = scmp.ne.s32.totalorder %s98, %s99
      %p113 = scmp.eq.s32.totalorder %s16, 13
      %p114 = por %p112, %p113
      %p116 = scmp.ne.s32.totalorder %s99, %s115
      %p117 = scmp.eq.s32.totalorder %s16, 0
      %p118 = por %p116, %p117
      %s119 = ssub.s32 %s18, %s32
      %p120 = scmp.eq.s32.totalorder %s119, 0
      %s122 = sadd.s32 %s121, 1
      %s123 = scalar_select %p120, %s121, %s122
      %p126 = pneg %p120
      %p127 = scmp.eq.s32.totalorder %s10, 13
      %p128 = por %p126, %p127
      %p129 = scmp.ne.s32.totalorder %s121, %s124
      %p130 = scmp.eq.s32.totalorder %s10, 0
      %p131 = por %p129, %p130
      %p132 = scmp.ne.s32.totalorder %s121, %s124
      %p133 = scmp.eq.s32.totalorder %s15, 13
      %p134 = por %p132, %p133
      %p135 = scmp.ne.s32.totalorder %s124, %s125
      %p136 = scmp.eq.s32.totalorder %s15, 0
      %p137 = por %p135, %p136
      %p138 = scmp.ne.s32.totalorder %s124, %s125
      %p139 = scmp.eq.s32.totalorder %s16, 13
      %p140 = por %p138, %p139
      %p142 = scmp.ne.s32.totalorder %s125, %s141
      %p143 = scmp.eq.s32.totalorder %s16, 0
      %p144 = por %p142, %p143
      %s145 = ssub.s32 %s17, %s36
      %s146 = ssub.s32 %s18, %s32
      %s147 = sor.u32 %s145, %s146
      %p148 = scmp.eq.s32.totalorder %s147, 0
      %s150 = sadd.s32 %s149, 1
      %s151 = scalar_select %p148, %s149, %s150
      %p154 = pneg %p148
      %p155 = scmp.eq.s32.totalorder %s10, 13
      %p156 = por %p154, %p155
      %p157 = scmp.ne.s32.totalorder %s149, %s152
      %p158 = scmp.eq.s32.totalorder %s10, 0
      %p159 = por %p157, %p158
      %p160 = scmp.ne.s32.totalorder %s149, %s152
      %p161 = scmp.eq.s32.totalorder %s15, 13
      %p162 = por %p160, %p161
      %p163 = scmp.ne.s32.totalorder %s152, %s153
      %p164 = scmp.eq.s32.totalorder %s15, 0
      %p165 = por %p163, %p164
      %p166 = scmp.ne.s32.totalorder %s152, %s153
      %p167 = scmp.eq.s32.totalorder %s16, 13
      %p168 = por %p166, %p167
      %p170 = scmp.ne.s32.totalorder %s153, %s169
      %p171 = scmp.eq.s32.totalorder %s16, 0
      %p172 = por %p170, %p171
      %p173 = scmp.le.s32.totalorder 1, %s10
      %p174 = scmp.lt.s32.totalorder %s10, 15
      %p175 = pnand %p173, %p174
      %p176 = pneg %p175
      // Predicated region
      $region9: #{embedding_forward.6} parent=5 // pred_check
        _
      $region10: #{embedding_forward.6} parent=5 // pred_check_branch
        %178 = sbr.rel (%p175) target = $region12
      $region11: #{embedding_forward.6} parent=5 // pred_region
        %s179 = ssub.s32 %s10, 1
      $region12: #{embedding_forward.6} parent=5 // pred_fallthru
        _
      %p180 = scmp.lt.s32.totalorder %s10, 14
      // Predicated region
      $region13: #{embedding_forward.6} parent=5 // pred_check
        %p181 = pneg %p180
      $region14: #{embedding_forward.6} parent=5 // pred_check_branch
        %183 = sbr.rel (%p181) target = $region16
      $region15: #{embedding_forward.6} parent=5 // pred_region
        // Predicated region
        $region17: #{embedding_forward.6} parent=15 // pred_check
          %p184 = pneg %p51
        $region18: #{embedding_forward.6} parent=15 // pred_check_branch
          %186 = sbr.rel (%p184) target = $region20
        $region19: #{embedding_forward.6} parent=15 // pred_region
          %s187 = sand.u32 %s41, 1
          %s188 = sand.u32 %s41, 1
          %s189 = smul.addr %s188, 196
          %s190 = scalar_lea.vmem [#allocation3], %s189
          %s191 = smul.u32 7, %s17
          %s192 = smul.u32 7, %s19
          %s193 = smul.addr %s191, 49
          %s194 = sadd.s32 %s192, %s193
          %s195 = smul.addr %s194, 4
          %s196 = scalar_lea.vmem %s0, %s195
          // Predicated region
          $region21: #{embedding_forward.6} parent=19 // pred_check
            _
          $region22: #{embedding_forward.6} parent=19 // pred_check_branch
            %198 = sbr.rel (0) target = $region24
          $region23: #{embedding_forward.6} parent=19 // pred_region
            // Predicated region
            $region25: #{embedding_forward.6} parent=23 // pred_check
              _
            $region26: #{embedding_forward.6} parent=23 // pred_check_branch
              %200 = sbr.rel (0) target = $region28
            $region27: #{embedding_forward.6} parent=23 // pred_region
              %s201 = scalar_lea.vmem %s196, 24
              %s202 = scalar_lea.vmem %s190, 24 [#allocation3]
              loop: start=0, step=1, limit=1
              $region29: #{embedding_forward.6} parent=27 // loop_pre_header
                _
              $region30: #{embedding_forward.6} parent=27 // loop_header
                %s204 = sphi 0, %s208
                %p205 = scmp.ge.s32.totalorder %s204, 1
                %s209 = sphi %s196, %s196
                %s210 = sphi %s190, %s190
              $region31: #{embedding_forward.6} parent=27 // loop_header_branch
                %207 = sbr.rel (%p205) target = $region35
              $region32: #{embedding_forward.6} parent=27 // loop_body
                %v211 = vld [vmem:[%s209] sm:$0xff]
                %212 = vst [vmem:[%s210] sm:$0xff] %v211
                %v213 = vld [vmem:[%s209 + $0x8] sm:$0xff]
                %214 = vst [vmem:[%s210 + $0x8] sm:$0xff] %v213
                %v215 = vld [vmem:[%s209 + $0x10] sm:$0xff]
                %216 = vst [vmem:[%s210 + $0x10] sm:$0xff] %v215
                %v217 = vld [vmem:[%s209 + $0xc4] sm:$0xff]
                %218 = vst [vmem:[%s210 + $0x1c] sm:$0xff] %v217
                %v219 = vld [vmem:[%s209 + $0xcc] sm:$0xff]
                %220 = vst [vmem:[%s210 + $0x24] sm:$0xff] %v219
                %v221 = vld [vmem:[%s209 + $0xd4] sm:$0xff]
                %222 = vst [vmem:[%s210 + $0x2c] sm:$0xff] %v221
                %v223 = vld [vmem:[%s209 + $0x188] sm:$0xff]
                %224 = vst [vmem:[%s210 + $0x38] sm:$0xff] %v223
                %v225 = vld [vmem:[%s209 + $0x190] sm:$0xff]
                %226 = vst [vmem:[%s210 + $0x40] sm:$0xff] %v225
                %v227 = vld [vmem:[%s209 + $0x198] sm:$0xff]
                %228 = vst [vmem:[%s210 + $0x48] sm:$0xff] %v227
                %v229 = vld [vmem:[%s209 + $0x24c] sm:$0xff]
                %230 = vst [vmem:[%s210 + $0x54] sm:$0xff] %v229
                %v231 = vld [vmem:[%s209 + $0x254] sm:$0xff]
                %232 = vst [vmem:[%s210 + $0x5c] sm:$0xff] %v231
                %v233 = vld [vmem:[%s209 + $0x25c] sm:$0xff]
                %234 = vst [vmem:[%s210 + $0x64] sm:$0xff] %v233
                %v235 = vld [vmem:[%s209 + $0x310] sm:$0xff]
                %236 = vst [vmem:[%s210 + $0x70] sm:$0xff] %v235
                %v237 = vld [vmem:[%s209 + $0x318] sm:$0xff]
                %238 = vst [vmem:[%s210 + $0x78] sm:$0xff] %v237
                %v239 = vld [vmem:[%s209 + $0x320] sm:$0xff]
                %240 = vst [vmem:[%s210 + $0x80] sm:$0xff] %v239
                %v241 = vld [vmem:[%s209 + $0x3d4] sm:$0xff]
                %242 = vst [vmem:[%s210 + $0x8c] sm:$0xff] %v241
                %v243 = vld [vmem:[%s209 + $0x3dc] sm:$0xff]
                %244 = vst [vmem:[%s210 + $0x94] sm:$0xff] %v243
                %v245 = vld [vmem:[%s209 + $0x3e4] sm:$0xff]
                %246 = vst [vmem:[%s210 + $0x9c] sm:$0xff] %v245
                %v247 = vld [vmem:[%s209 + $0x498] sm:$0xff]
                %248 = vst [vmem:[%s210 + $0xa8] sm:$0xff] %v247
                %v249 = vld [vmem:[%s209 + $0x4a0] sm:$0xff]
                %250 = vst [vmem:[%s210 + $0xb0] sm:$0xff] %v249
                %v251 = vld [vmem:[%s209 + $0x4a8] sm:$0xff]
                %252 = vst [vmem:[%s210 + $0xb8] sm:$0xff] %v251
              $region33: #{embedding_forward.6} parent=27 // loop_footer
                %s208 = sadd.s32 1, %s204
              $region34: #{embedding_forward.6} parent=27 // loop_footer_branch
                %203 = sbr.rel target = $region30
              $region35: #{embedding_forward.6} parent=27 // loop_exit
                _
              loop: start=0, step=1, limit=1
              $region36: #{embedding_forward.6} parent=27 // loop_pre_header
                _
              $region37: #{embedding_forward.6} parent=27 // loop_header
                %s255 = sphi 0, %s259
                %p256 = scmp.ge.s32.totalorder %s255, 1
                %s260 = sphi %s201, %s201
                %s261 = sphi %s202, %s202
              $region38: #{embedding_forward.6} parent=27 // loop_header_branch
                %258 = sbr.rel (%p256) target = $region42
              $region39: #{embedding_forward.6} parent=27 // loop_body
                %v262 = vld [vmem:[%s260] sm:$0xf]
                %263 = vst [vmem:[%s261] sm:$0xf] %v262
                %v264 = vld [vmem:[%s260 + $0xc4] sm:$0xf]
                %265 = vst [vmem:[%s261 + $0x1c] sm:$0xf] %v264
                %v266 = vld [vmem:[%s260 + $0x188] sm:$0xf]
                %267 = vst [vmem:[%s261 + $0x38] sm:$0xf] %v266
                %v268 = vld [vmem:[%s260 + $0x24c] sm:$0xf]
                %269 = vst [vmem:[%s261 + $0x54] sm:$0xf] %v268
                %v270 = vld [vmem:[%s260 + $0x310] sm:$0xf]
                %271 = vst [vmem:[%s261 + $0x70] sm:$0xf] %v270
                %v272 = vld [vmem:[%s260 + $0x3d4] sm:$0xf]
                %273 = vst [vmem:[%s261 + $0x8c] sm:$0xf] %v272
                %v274 = vld [vmem:[%s260 + $0x498] sm:$0xf]
                %275 = vst [vmem:[%s261 + $0xa8] sm:$0xf] %v274
              $region40: #{embedding_forward.6} parent=27 // loop_footer
                %s259 = sadd.s32 1, %s255
              $region41: #{embedding_forward.6} parent=27 // loop_footer_branch
                %254 = sbr.rel target = $region37
              $region42: #{embedding_forward.6} parent=27 // loop_exit
                _
            $region28: #{embedding_forward.6} parent=23 // pred_fallthru
              _
          $region24: #{embedding_forward.6} parent=19 // pred_fallthru
            _
          %276 = vnop
        $region20: #{embedding_forward.6} parent=15 // pred_fallthru
          _
        // Predicated region
        $region43: #{embedding_forward.6} parent=15 // pred_check
          %p277 = pneg %p79
        $region44: #{embedding_forward.6} parent=15 // pred_check_branch
          %279 = sbr.rel (%p277) target = $region46
        $region45: #{embedding_forward.6} parent=15 // pred_region
          %s280 = sand.u32 %s69, 1
          %s281 = sand.u32 %s69, 1
          %s282 = smul.addr %s281, 896
          %s283 = scalar_lea.vmem [#allocation4], %s282
          %s284 = smul.u32 28, %s19
          %s285 = smul.u32 4, %s18
          %s286 = smul.addr %s284, 8
          %s287 = sadd.s32 %s285, %s286
          %s288 = smul.addr %s287, 8
          %s289 = scalar_lea.vmem %s1, %s288
          // Predicated region
          $region47: #{embedding_forward.6} parent=45 // pred_check
            _
          $region48: #{embedding_forward.6} parent=45 // pred_check_branch
            %291 = sbr.rel (0) target = $region50
          $region49: #{embedding_forward.6} parent=45 // pred_region
            // Predicated region
            $region51: #{embedding_forward.6} parent=49 // pred_check
              _
            $region52: #{embedding_forward.6} parent=49 // pred_check_branch
              %293 = sbr.rel (0) target = $region54
            $region53: #{embedding_forward.6} parent=49 // pred_region
              loop: start=0, step=1, limit=1
              $region55: #{embedding_forward.6} parent=53 // loop_pre_header
                _
              $region56: #{embedding_forward.6} parent=53 // loop_header
                %s295 = sphi 0, %s299
                %p296 = scmp.ge.s32.totalorder %s295, 1
                %s300 = sphi %s289, %s289
                %s301 = sphi %s283, %s283
              $region57: #{embedding_forward.6} parent=53 // loop_header_branch
                %298 = sbr.rel (%p296) target = $region61
              $region58: #{embedding_forward.6} parent=53 // loop_body
                %v302 = vld [vmem:[%s300] sm:$0xff]
                %303 = vst [vmem:[%s301] sm:$0xff] %v302
                %v304 = vld [vmem:[%s300 + $0x8] sm:$0xff]
                %305 = vst [vmem:[%s301 + $0x8] sm:$0xff] %v304
                %v306 = vld [vmem:[%s300 + $0x10] sm:$0xff]
                %307 = vst [vmem:[%s301 + $0x10] sm:$0xff] %v306
                %v308 = vld [vmem:[%s300 + $0x18] sm:$0xff]
                %309 = vst [vmem:[%s301 + $0x18] sm:$0xff] %v308
                %v310 = vld [vmem:[%s300 + $0x40] sm:$0xff]
                %311 = vst [vmem:[%s301 + $0x20] sm:$0xff] %v310
                %v312 = vld [vmem:[%s300 + $0x48] sm:$0xff]
                %313 = vst [vmem:[%s301 + $0x28] sm:$0xff] %v312
                %v314 = vld [vmem:[%s300 + $0x50] sm:$0xff]
                %315 = vst [vmem:[%s301 + $0x30] sm:$0xff] %v314
                %v316 = vld [vmem:[%s300 + $0x58] sm:$0xff]
                %317 = vst [vmem:[%s301 + $0x38] sm:$0xff] %v316
                %v318 = vld [vmem:[%s300 + $0x80] sm:$0xff]
                %319 = vst [vmem:[%s301 + $0x40] sm:$0xff] %v318
                %v320 = vld [vmem:[%s300 + $0x88] sm:$0xff]
                %321 = vst [vmem:[%s301 + $0x48] sm:$0xff] %v320
                %v322 = vld [vmem:[%s300 + $0x90] sm:$0xff]
                %323 = vst [vmem:[%s301 + $0x50] sm:$0xff] %v322
                %v324 = vld [vmem:[%s300 + $0x98] sm:$0xff]
                %325 = vst [vmem:[%s301 + $0x58] sm:$0xff] %v324
                %v326 = vld [vmem:[%s300 + $0xc0] sm:$0xff]
                %327 = vst [vmem:[%s301 + $0x60] sm:$0xff] %v326
                %v328 = vld [vmem:[%s300 + $0xc8] sm:$0xff]
                %329 = vst [vmem:[%s301 + $0x68] sm:$0xff] %v328
                %v330 = vld [vmem:[%s300 + $0xd0] sm:$0xff]
                %331 = vst [vmem:[%s301 + $0x70] sm:$0xff] %v330
                %v332 = vld [vmem:[%s300 + $0xd8] sm:$0xff]
                %333 = vst [vmem:[%s301 + $0x78] sm:$0xff] %v332
                %v334 = vld [vmem:[%s300 + $0x100] sm:$0xff]
                %335 = vst [vmem:[%s301 + $0x80] sm:$0xff] %v334
                %v336 = vld [vmem:[%s300 + $0x108] sm:$0xff]
                %337 = vst [vmem:[%s301 + $0x88] sm:$0xff] %v336
                %v338 = vld [vmem:[%s300 + $0x110] sm:$0xff]
                %339 = vst [vmem:[%s301 + $0x90] sm:$0xff] %v338
                %v340 = vld [vmem:[%s300 + $0x118] sm:$0xff]
                %341 = vst [vmem:[%s301 + $0x98] sm:$0xff] %v340
                %v342 = vld [vmem:[%s300 + $0x140] sm:$0xff]
                %343 = vst [vmem:[%s301 + $0xa0] sm:$0xff] %v342
                %v344 = vld [vmem:[%s300 + $0x148] sm:$0xff]
                %345 = vst [vmem:[%s301 + $0xa8] sm:$0xff] %v344
                %v346 = vld [vmem:[%s300 + $0x150] sm:$0xff]
                %347 = vst [vmem:[%s301 + $0xb0] sm:$0xff] %v346
                %v348 = vld [vmem:[%s300 + $0x158] sm:$0xff]
                %349 = vst [vmem:[%s301 + $0xb8] sm:$0xff] %v348
                %v350 = vld [vmem:[%s300 + $0x180] sm:$0xff]
                %351 = vst [vmem:[%s301 + $0xc0] sm:$0xff] %v350
                %v352 = vld [vmem:[%s300 + $0x188] sm:$0xff]
                %353 = vst [vmem:[%s301 + $0xc8] sm:$0xff] %v352
                %v354 = vld [vmem:[%s300 + $0x190] sm:$0xff]
                %355 = vst [vmem:[%s301 + $0xd0] sm:$0xff] %v354
                %v356 = vld [vmem:[%s300 + $0x198] sm:$0xff]
                %357 = vst [vmem:[%s301 + $0xd8] sm:$0xff] %v356
                %v358 = vld [vmem:[%s300 + $0x1c0] sm:$0xff]
                %359 = vst [vmem:[%s301 + $0xe0] sm:$0xff] %v358
                %v360 = vld [vmem:[%s300 + $0x1c8] sm:$0xff]
                %361 = vst [vmem:[%s301 + $0xe8] sm:$0xff] %v360
                %v362 = vld [vmem:[%s300 + $0x1d0] sm:$0xff]
                %363 = vst [vmem:[%s301 + $0xf0] sm:$0xff] %v362
                %v364 = vld [vmem:[%s300 + $0x1d8] sm:$0xff]
                %365 = vst [vmem:[%s301 + $0xf8] sm:$0xff] %v364
                %v366 = vld [vmem:[%s300 + $0x200] sm:$0xff]
                %367 = vst [vmem:[%s301 + $0x100] sm:$0xff] %v366
                %v368 = vld [vmem:[%s300 + $0x208] sm:$0xff]
                %369 = vst [vmem:[%s301 + $0x108] sm:$0xff] %v368
                %v370 = vld [vmem:[%s300 + $0x210] sm:$0xff]
                %371 = vst [vmem:[%s301 + $0x110] sm:$0xff] %v370
                %v372 = vld [vmem:[%s300 + $0x218] sm:$0xff]
                %373 = vst [vmem:[%s301 + $0x118] sm:$0xff] %v372
                %v374 = vld [vmem:[%s300 + $0x240] sm:$0xff]
                %375 = vst [vmem:[%s301 + $0x120] sm:$0xff] %v374
                %v376 = vld [vmem:[%s300 + $0x248] sm:$0xff]
                %377 = vst [vmem:[%s301 + $0x128] sm:$0xff] %v376
                %v378 = vld [vmem:[%s300 + $0x250] sm:$0xff]
                %379 = vst [vmem:[%s301 + $0x130] sm:$0xff] %v378
                %v380 = vld [vmem:[%s300 + $0x258] sm:$0xff]
                %381 = vst [vmem:[%s301 + $0x138] sm:$0xff] %v380
                %v382 = vld [vmem:[%s300 + $0x280] sm:$0xff]
                %383 = vst [vmem:[%s301 + $0x140] sm:$0xff] %v382
                %v384 = vld [vmem:[%s300 + $0x288] sm:$0xff]
                %385 = vst [vmem:[%s301 + $0x148] sm:$0xff] %v384
                %v386 = vld [vmem:[%s300 + $0x290] sm:$0xff]
                %387 = vst [vmem:[%s301 + $0x150] sm:$0xff] %v386
                %v388 = vld [vmem:[%s300 + $0x298] sm:$0xff]
                %389 = vst [vmem:[%s301 + $0x158] sm:$0xff] %v388
                %v390 = vld [vmem:[%s300 + $0x2c0] sm:$0xff]
                %391 = vst [vmem:[%s301 + $0x160] sm:$0xff] %v390
                %v392 = vld [vmem:[%s300 + $0x2c8] sm:$0xff]
                %393 = vst [vmem:[%s301 + $0x168] sm:$0xff] %v392
                %v394 = vld [vmem:[%s300 + $0x2d0] sm:$0xff]
                %395 = vst [vmem:[%s301 + $0x170] sm:$0xff] %v394
                %v396 = vld [vmem:[%s300 + $0x2d8] sm:$0xff]
                %397 = vst [vmem:[%s301 + $0x178] sm:$0xff] %v396
                %v398 = vld [vmem:[%s300 + $0x300] sm:$0xff]
                %399 = vst [vmem:[%s301 + $0x180] sm:$0xff] %v398
                %v400 = vld [vmem:[%s300 + $0x308] sm:$0xff]
                %401 = vst [vmem:[%s301 + $0x188] sm:$0xff] %v400
                %v402 = vld [vmem:[%s300 + $0x310] sm:$0xff]
                %403 = vst [vmem:[%s301 + $0x190] sm:$0xff] %v402
                %v404 = vld [vmem:[%s300 + $0x318] sm:$0xff]
                %405 = vst [vmem:[%s301 + $0x198] sm:$0xff] %v404
                %v406 = vld [vmem:[%s300 + $0x340] sm:$0xff]
                %407 = vst [vmem:[%s301 + $0x1a0] sm:$0xff] %v406
                %v408 = vld [vmem:[%s300 + $0x348] sm:$0xff]
                %409 = vst [vmem:[%s301 + $0x1a8] sm:$0xff] %v408
                %v410 = vld [vmem:[%s300 + $0x350] sm:$0xff]
                %411 = vst [vmem:[%s301 + $0x1b0] sm:$0xff] %v410
                %v412 = vld [vmem:[%s300 + $0x358] sm:$0xff]
                %413 = vst [vmem:[%s301 + $0x1b8] sm:$0xff] %v412
                %v414 = vld [vmem:[%s300 + $0x380] sm:$0xff]
                %415 = vst [vmem:[%s301 + $0x1c0] sm:$0xff] %v414
                %v416 = vld [vmem:[%s300 + $0x388] sm:$0xff]
                %417 = vst [vmem:[%s301 + $0x1c8] sm:$0xff] %v416
                %v418 = vld [vmem:[%s300 + $0x390] sm:$0xff]
                %419 = vst [vmem:[%s301 + $0x1d0] sm:$0xff] %v418
                %v420 = vld [vmem:[%s300 + $0x398] sm:$0xff]
                %421 = vst [vmem:[%s301 + $0x1d8] sm:$0xff] %v420
                %v422 = vld [vmem:[%s300 + $0x3c0] sm:$0xff]
                %423 = vst [vmem:[%s301 + $0x1e0] sm:$0xff] %v422
                %v424 = vld [vmem:[%s300 + $0x3c8] sm:$0xff]
                %425 = vst [vmem:[%s301 + $0x1e8] sm:$0xff] %v424
                %v426 = vld [vmem:[%s300 + $0x3d0] sm:$0xff]
                %427 = vst [vmem:[%s301 + $0x1f0] sm:$0xff] %v426
                %v428 = vld [vmem:[%s300 + $0x3d8] sm:$0xff]
                %429 = vst [vmem:[%s301 + $0x1f8] sm:$0xff] %v428
                %v430 = vld [vmem:[%s300 + $0x400] sm:$0xff]
                %431 = vst [vmem:[%s301 + $0x200] sm:$0xff] %v430
                %v432 = vld [vmem:[%s300 + $0x408] sm:$0xff]
                %433 = vst [vmem:[%s301 + $0x208] sm:$0xff] %v432
                %v434 = vld [vmem:[%s300 + $0x410] sm:$0xff]
                %435 = vst [vmem:[%s301 + $0x210] sm:$0xff] %v434
                %v436 = vld [vmem:[%s300 + $0x418] sm:$0xff]
                %437 = vst [vmem:[%s301 + $0x218] sm:$0xff] %v436
                %v438 = vld [vmem:[%s300 + $0x440] sm:$0xff]
                %439 = vst [vmem:[%s301 + $0x220] sm:$0xff] %v438
                %v440 = vld [vmem:[%s300 + $0x448] sm:$0xff]
                %441 = vst [vmem:[%s301 + $0x228] sm:$0xff] %v440
                %v442 = vld [vmem:[%s300 + $0x450] sm:$0xff]
                %443 = vst [vmem:[%s301 + $0x230] sm:$0xff] %v442
                %v444 = vld [vmem:[%s300 + $0x458] sm:$0xff]
                %445 = vst [vmem:[%s301 + $0x238] sm:$0xff] %v444
                %v446 = vld [vmem:[%s300 + $0x480] sm:$0xff]
                %447 = vst [vmem:[%s301 + $0x240] sm:$0xff] %v446
                %v448 = vld [vmem:[%s300 + $0x488] sm:$0xff]
                %449 = vst [vmem:[%s301 + $0x248] sm:$0xff] %v448
                %v450 = vld [vmem:[%s300 + $0x490] sm:$0xff]
                %451 = vst [vmem:[%s301 + $0x250] sm:$0xff] %v450
                %v452 = vld [vmem:[%s300 + $0x498] sm:$0xff]
                %453 = vst [vmem:[%s301 + $0x258] sm:$0xff] %v452
                %v454 = vld [vmem:[%s300 + $0x4c0] sm:$0xff]
                %455 = vst [vmem:[%s301 + $0x260] sm:$0xff] %v454
                %v456 = vld [vmem:[%s300 + $0x4c8] sm:$0xff]
                %457 = vst [vmem:[%s301 + $0x268] sm:$0xff] %v456
                %v458 = vld [vmem:[%s300 + $0x4d0] sm:$0xff]
                %459 = vst [vmem:[%s301 + $0x270] sm:$0xff] %v458
                %v460 = vld [vmem:[%s300 + $0x4d8] sm:$0xff]
                %461 = vst [vmem:[%s301 + $0x278] sm:$0xff] %v460
                %v462 = vld [vmem:[%s300 + $0x500] sm:$0xff]
                %463 = vst [vmem:[%s301 + $0x280] sm:$0xff] %v462
                %v464 = vld [vmem:[%s300 + $0x508] sm:$0xff]
                %465 = vst [vmem:[%s301 + $0x288] sm:$0xff] %v464
                %v466 = vld [vmem:[%s300 + $0x510] sm:$0xff]
                %467 = vst [vmem:[%s301 + $0x290] sm:$0xff] %v466
                %v468 = vld [vmem:[%s300 + $0x518] sm:$0xff]
                %469 = vst [vmem:[%s301 + $0x298] sm:$0xff] %v468
                %v470 = vld [vmem:[%s300 + $0x540] sm:$0xff]
                %471 = vst [vmem:[%s301 + $0x2a0] sm:$0xff] %v470
                %v472 = vld [vmem:[%s300 + $0x548] sm:$0xff]
                %473 = vst [vmem:[%s301 + $0x2a8] sm:$0xff] %v472
                %v474 = vld [vmem:[%s300 + $0x550] sm:$0xff]
                %475 = vst [vmem:[%s301 + $0x2b0] sm:$0xff] %v474
                %v476 = vld [vmem:[%s300 + $0x558] sm:$0xff]
                %477 = vst [vmem:[%s301 + $0x2b8] sm:$0xff] %v476
                %v478 = vld [vmem:[%s300 + $0x580] sm:$0xff]
                %479 = vst [vmem:[%s301 + $0x2c0] sm:$0xff] %v478
                %v480 = vld [vmem:[%s300 + $0x588] sm:$0xff]
                %481 = vst [vmem:[%s301 + $0x2c8] sm:$0xff] %v480
                %v482 = vld [vmem:[%s300 + $0x590] sm:$0xff]
                %483 = vst [vmem:[%s301 + $0x2d0] sm:$0xff] %v482
                %v484 = vld [vmem:[%s300 + $0x598] sm:$0xff]
                %485 = vst [vmem:[%s301 + $0x2d8] sm:$0xff] %v484
                %v486 = vld [vmem:[%s300 + $0x5c0] sm:$0xff]
                %487 = vst [vmem:[%s301 + $0x2e0] sm:$0xff] %v486
                %v488 = vld [vmem:[%s300 + $0x5c8] sm:$0xff]
                %489 = vst [vmem:[%s301 + $0x2e8] sm:$0xff] %v488
                %v490 = vld [vmem:[%s300 + $0x5d0] sm:$0xff]
                %491 = vst [vmem:[%s301 + $0x2f0] sm:$0xff] %v490
                %v492 = vld [vmem:[%s300 + $0x5d8] sm:$0xff]
                %493 = vst [vmem:[%s301 + $0x2f8] sm:$0xff] %v492
                %v494 = vld [vmem:[%s300 + $0x600] sm:$0xff]
                %495 = vst [vmem:[%s301 + $0x300] sm:$0xff] %v494
                %v496 = vld [vmem:[%s300 + $0x608] sm:$0xff]
                %497 = vst [vmem:[%s301 + $0x308] sm:$0xff] %v496
                %v498 = vld [vmem:[%s300 + $0x610] sm:$0xff]
                %499 = vst [vmem:[%s301 + $0x310] sm:$0xff] %v498
                %v500 = vld [vmem:[%s300 + $0x618] sm:$0xff]
                %501 = vst [vmem:[%s301 + $0x318] sm:$0xff] %v500
                %v502 = vld [vmem:[%s300 + $0x640] sm:$0xff]
                %503 = vst [vmem:[%s301 + $0x320] sm:$0xff] %v502
                %v504 = vld [vmem:[%s300 + $0x648] sm:$0xff]
                %505 = vst [vmem:[%s301 + $0x328] sm:$0xff] %v504
                %v506 = vld [vmem:[%s300 + $0x650] sm:$0xff]
                %507 = vst [vmem:[%s301 + $0x330] sm:$0xff] %v506
                %v508 = vld [vmem:[%s300 + $0x658] sm:$0xff]
                %509 = vst [vmem:[%s301 + $0x338] sm:$0xff] %v508
                %v510 = vld [vmem:[%s300 + $0x680] sm:$0xff]
                %511 = vst [vmem:[%s301 + $0x340] sm:$0xff] %v510
                %v512 = vld [vmem:[%s300 + $0x688] sm:$0xff]
                %513 = vst [vmem:[%s301 + $0x348] sm:$0xff] %v512
                %v514 = vld [vmem:[%s300 + $0x690] sm:$0xff]
                %515 = vst [vmem:[%s301 + $0x350] sm:$0xff] %v514
                %v516 = vld [vmem:[%s300 + $0x698] sm:$0xff]
                %517 = vst [vmem:[%s301 + $0x358] sm:$0xff] %v516
                %v518 = vld [vmem:[%s300 + $0x6c0] sm:$0xff]
                %519 = vst [vmem:[%s301 + $0x360] sm:$0xff] %v518
                %v520 = vld [vmem:[%s300 + $0x6c8] sm:$0xff]
                %521 = vst [vmem:[%s301 + $0x368] sm:$0xff] %v520
                %v522 = vld [vmem:[%s300 + $0x6d0] sm:$0xff]
                %523 = vst [vmem:[%s301 + $0x370] sm:$0xff] %v522
                %v524 = vld [vmem:[%s300 + $0x6d8] sm:$0xff]
                %525 = vst [vmem:[%s301 + $0x378] sm:$0xff] %v524
              $region59: #{embedding_forward.6} parent=53 // loop_footer
                %s299 = sadd.s32 1, %s295
              $region60: #{embedding_forward.6} parent=53 // loop_footer_branch
                %294 = sbr.rel target = $region56
              $region61: #{embedding_forward.6} parent=53 // loop_exit
                _
            $region54: #{embedding_forward.6} parent=49 // pred_fallthru
              _
            // Predicated region
            $region62: #{embedding_forward.6} parent=49 // pred_check
              _
            $region63: #{embedding_forward.6} parent=49 // pred_check_branch
              %527 = sbr.rel target = $region65
            $region64: #{embedding_forward.6} parent=49 // pred_region
              _
            $region65: #{embedding_forward.6} parent=49 // pred_fallthru
              _
          $region50: #{embedding_forward.6} parent=45 // pred_fallthru
            _
          %528 = vnop
        $region46: #{embedding_forward.6} parent=15 // pred_fallthru
          _
        // Predicated region
        $region66: #{embedding_forward.6} parent=15 // pred_check
          %p529 = pneg %p105
        $region67: #{embedding_forward.6} parent=15 // pred_check_branch
          %531 = sbr.rel (%p529) target = $region69
        $region68: #{embedding_forward.6} parent=15 // pred_region
          %s532 = smul.u32 4, %s18
          %p533 = scmp.lt.s32.totalorder %s532, 7
          %s534 = scalar_select %p533, %s532, 7
          %s535 = scalar_lea.vmem %s2, %s534
          %s536 = smul.u32 4, %s18
        $region69: #{embedding_forward.6} parent=15 // pred_fallthru
          _
        // Predicated region
        $region70: #{embedding_forward.6} parent=15 // pred_check
          %p537 = pneg %p131
        $region71: #{embedding_forward.6} parent=15 // pred_check_branch
          %539 = sbr.rel (%p537) target = $region73
        $region72: #{embedding_forward.6} parent=15 // pred_region
          %s540 = smul.u32 4, %s18
          %p541 = scmp.lt.s32.totalorder %s540, 7
          %s542 = scalar_select %p541, %s540, 7
          %s543 = scalar_lea.vmem %s3, %s542
          %s544 = smul.u32 4, %s18
        $region73: #{embedding_forward.6} parent=15 // pred_fallthru
          _
      $region16: #{embedding_forward.6} parent=5 // pred_fallthru
        _
      %p545 = scmp.le.s32.totalorder 1, %s10
      %p546 = scmp.lt.s32.totalorder %s10, 15
      %p547 = pnand %p545, %p546
      %p548 = pneg %p547
      // Predicated region
      $region74: #{embedding_forward.6} parent=5 // pred_check
        _
      $region75: #{embedding_forward.6} parent=5 // pred_check_branch
        %550 = sbr.rel (%p547) target = $region77
      $region76: #{embedding_forward.6} parent=5 // pred_region
        %s551 = ssub.s32 %s10, 1
        %s552 = sand.u32 %s44, 1
        %s553 = sand.u32 %s44, 1
        %s554 = smul.addr %s553, 196
        %s555 = scalar_lea.vmem [#allocation3], %s554
        // Predicated region
        $region78: #{embedding_forward.6} parent=76 // pred_check
          %p556 = pneg %p57
        $region79: #{embedding_forward.6} parent=76 // pred_check_branch
          %558 = sbr.rel (%p556) target = $region81
        $region80: #{embedding_forward.6} parent=76 // pred_region
          _
        $region81: #{embedding_forward.6} parent=76 // pred_fallthru
          _
        %s559 = sand.u32 %s72, 1
        %s560 = sand.u32 %s72, 1
        %s561 = smul.addr %s560, 896
        %s562 = scalar_lea.vmem [#allocation4], %s561
        // Predicated region
        $region82: #{embedding_forward.6} parent=76 // pred_check
          %p563 = pneg %p85
        $region83: #{embedding_forward.6} parent=76 // pred_check_branch
          %565 = sbr.rel (%p563) target = $region85
        $region84: #{embedding_forward.6} parent=76 // pred_region
          _
        $region85: #{embedding_forward.6} parent=76 // pred_fallthru
          _
        %s566 = sand.u32 %s44, 1
        %s567 = sand.u32 %s44, 1
        %s568 = smul.addr %s567, 196
        %s569 = scalar_lea.vmem [#allocation3], %s568
        %p570 = pneg %p57
        %p571 = pneg %p54
        %s572 = sand.u32 %s72, 1
        %s573 = sand.u32 %s72, 1
        %s574 = smul.addr %s573, 896
        %s575 = scalar_lea.vmem [#allocation4], %s574
        %p576 = pneg %p85
        %p577 = pneg %p82
        %s578 = smul.u32 4, %s21
        %p579 = scmp.lt.s32.totalorder %s578, 7
        %s580 = scalar_select %p579, %s578, 7
        %s581 = scalar_lea.vmem %s2, %s580
        %p582 = pneg %p111
        %p583 = pneg %p108
        %s584 = smul.u32 4, %s21
        %p585 = scmp.lt.s32.totalorder %s584, 7
        %s586 = scalar_select %p585, %s584, 7
        %s587 = scalar_lea.vmem %s3, %s586
        %p588 = pneg %p137
        %p589 = pneg %p134
        %p590 = pneg %p165
        %p591 = pneg %p162
        %s592 = sand.u32 %s152, 1
        %s593 = sand.u32 %s152, 1
        %s594 = smul.addr %s593, 112
        %s595 = scalar_lea.vmem [#allocation5], %s594
        %s596 = smul.u32 7, %s20
        %s597 = smul.u32 7, %s22
        %s598 = smul.u32 28, %s22
        %s599 = smul.u32 4, %s21
        %s600 = smul.u32 4, %s21
        %p601 = scmp.lt.s32.totalorder %s600, 7
        %s602 = scalar_select %p601, %s600, 7
        %s603 = scalar_lea.vmem %s2, %s602
        %s604 = smul.u32 4, %s21
        %s605 = smul.u32 4, %s21
        %p606 = scmp.lt.s32.totalorder %s605, 7
        %s607 = scalar_select %p606, %s605, 7
        %s608 = scalar_lea.vmem %s3, %s607
        %s609 = smul.u32 4, %s21
        %s610 = smul.u32 7, %s20
        %s611 = smul.u32 4, %s21
        %p613 = scmp.eq.s32.totalorder %s22, 0
        // Predicated region
        $region86: #{embedding_forward.6} parent=76 // pred_check
          %p614 = pneg %p613
        $region87: #{embedding_forward.6} parent=76 // pred_check_branch
          %616 = sbr.rel (%p614) target = $region89
        $region88: #{embedding_forward.6} parent=76 // pred_region
          %617 = vst [vmem:[#allocation2] sm:$0xff] 0.0
          %618 = vst [vmem:[#allocation2 + $0x8] sm:$0xff] 0.0
          %619 = vst [vmem:[#allocation2 + $0x10] sm:$0xff] 0.0
          %620 = vst [vmem:[#allocation2 + $0x18] sm:$0xff] 0.0
          %621 = vst [vmem:[#allocation2 + $0x20] sm:$0xff] 0.0
          %622 = vst [vmem:[#allocation2 + $0x28] sm:$0xff] 0.0
          %623 = vst [vmem:[#allocation2 + $0x30] sm:$0xff] 0.0
          %624 = vst [vmem:[#allocation2 + $0x38] sm:$0xff] 0.0
          %625 = vst [vmem:[#allocation2 + $0x40] sm:$0xff] 0.0
          %626 = vst [vmem:[#allocation2 + $0x48] sm:$0xff] 0.0
          %627 = vst [vmem:[#allocation2 + $0x50] sm:$0xff] 0.0
          %628 = vst [vmem:[#allocation2 + $0x58] sm:$0xff] 0.0
          %629 = vst [vmem:[#allocation2 + $0x60] sm:$0xff] 0.0
          %630 = vst [vmem:[#allocation2 + $0x68] sm:$0xff] 0.0
          %631 = vst [vmem:[#allocation2 + $0x70] sm:$0xff] 0.0
          %632 = vst [vmem:[#allocation2 + $0x78] sm:$0xff] 0.0
          %633 = vst [vmem:[#allocation2 + $0x80] sm:$0xff] 0.0
          %634 = vst [vmem:[#allocation2 + $0x88] sm:$0xff] 0.0
          %635 = vst [vmem:[#allocation2 + $0x90] sm:$0xff] 0.0
          %636 = vst [vmem:[#allocation2 + $0x98] sm:$0xff] 0.0
          %637 = vst [vmem:[#allocation2 + $0xa0] sm:$0xff] 0.0
          %638 = vst [vmem:[#allocation2 + $0xa8] sm:$0xff] 0.0
          %639 = vst [vmem:[#allocation2 + $0xb0] sm:$0xff] 0.0
          %640 = vst [vmem:[#allocation2 + $0xb8] sm:$0xff] 0.0
          %641 = vst [vmem:[#allocation2 + $0xc0] sm:$0xff] 0.0
          %642 = vst [vmem:[#allocation2 + $0xc8] sm:$0xff] 0.0
          %643 = vst [vmem:[#allocation2 + $0xd0] sm:$0xff] 0.0
          %644 = vst [vmem:[#allocation2 + $0xd8] sm:$0xff] 0.0
        $region89: #{embedding_forward.6} parent=76 // pred_fallthru
          _
        %v645 = vld [vmem:[#allocation2] sm:$0xff]
        %v646 = vld [vmem:[#allocation2 + $0x8] sm:$0xff]
        %v647 = vld [vmem:[#allocation2 + $0x10] sm:$0xff]
        %v648 = vld [vmem:[#allocation2 + $0x18] sm:$0xff]
        %v649 = vld [vmem:[#allocation2 + $0x20] sm:$0xff]
        %v650 = vld [vmem:[#allocation2 + $0x28] sm:$0xff]
        %v651 = vld [vmem:[#allocation2 + $0x30] sm:$0xff]
        %v652 = vld [vmem:[#allocation2 + $0x38] sm:$0xff]
        %v653 = vld [vmem:[#allocation2 + $0x40] sm:$0xff]
        %v654 = vld [vmem:[#allocation2 + $0x48] sm:$0xff]
        %v655 = vld [vmem:[#allocation2 + $0x50] sm:$0xff]
        %v656 = vld [vmem:[#allocation2 + $0x58] sm:$0xff]
        %v657 = vld [vmem:[#allocation2 + $0x60] sm:$0xff]
        %v658 = vld [vmem:[#allocation2 + $0x68] sm:$0xff]
        %v659 = vld [vmem:[#allocation2 + $0x70] sm:$0xff]
        %v660 = vld [vmem:[#allocation2 + $0x78] sm:$0xff]
        %v661 = vld [vmem:[#allocation2 + $0x80] sm:$0xff]
        %v662 = vld [vmem:[#allocation2 + $0x88] sm:$0xff]
        %v663 = vld [vmem:[#allocation2 + $0x90] sm:$0xff]
        %v664 = vld [vmem:[#allocation2 + $0x98] sm:$0xff]
        %v665 = vld [vmem:[#allocation2 + $0xa0] sm:$0xff]
        %v666 = vld [vmem:[#allocation2 + $0xa8] sm:$0xff]
        %v667 = vld [vmem:[#allocation2 + $0xb0] sm:$0xff]
        %v668 = vld [vmem:[#allocation2 + $0xb8] sm:$0xff]
        %v669 = vld [vmem:[#allocation2 + $0xc0] sm:$0xff]
        %v670 = vld [vmem:[#allocation2 + $0xc8] sm:$0xff]
        %v671 = vld [vmem:[#allocation2 + $0xd0] sm:$0xff]
        %v672 = vld [vmem:[#allocation2 + $0xd8] sm:$0xff]
        %v673 = vld [vmem:[%s555] sm:$0xff]
        %v674 = vld [vmem:[%s555 + $0x8] sm:$0xff]
        %v675 = vld [vmem:[%s555 + $0x10] sm:$0xff]
        %v676 = vld [vmem:[%s555 + $0x18] sm:$0xf]
        %v677 = vld [vmem:[%s555 + $0x1c] sm:$0xff]
        %v678 = vld [vmem:[%s555 + $0x24] sm:$0xff]
        %v679 = vld [vmem:[%s555 + $0x2c] sm:$0xff]
        %v680 = vld [vmem:[%s555 + $0x34] sm:$0xf]
        %v681 = vld [vmem:[%s555 + $0x38] sm:$0xff]
        %v682 = vld [vmem:[%s555 + $0x40] sm:$0xff]
        %v683 = vld [vmem:[%s555 + $0x48] sm:$0xff]
        %v684 = vld [vmem:[%s555 + $0x50] sm:$0xf]
        %v685 = vld [vmem:[%s555 + $0x54] sm:$0xff]
        %v686 = vld [vmem:[%s555 + $0x5c] sm:$0xff]
        %v687 = vld [vmem:[%s555 + $0x64] sm:$0xff]
        %v688 = vld [vmem:[%s555 + $0x6c] sm:$0xf]
        %v689 = vld [vmem:[%s555 + $0x70] sm:$0xff]
        %v690 = vld [vmem:[%s555 + $0x78] sm:$0xff]
        %v691 = vld [vmem:[%s555 + $0x80] sm:$0xff]
        %v692 = vld [vmem:[%s555 + $0x88] sm:$0xf]
        %v693 = vld [vmem:[%s555 + $0x8c] sm:$0xff]
        %v694 = vld [vmem:[%s555 + $0x94] sm:$0xff]
        %v695 = vld [vmem:[%s555 + $0x9c] sm:$0xff]
        %v696 = vld [vmem:[%s555 + $0xa4] sm:$0xf]
        %v697 = vld [vmem:[%s555 + $0xa8] sm:$0xff]
        %v698 = vld [vmem:[%s555 + $0xb0] sm:$0xff]
        %v699 = vld [vmem:[%s555 + $0xb8] sm:$0xff]
        %v700 = vld [vmem:[%s555 + $0xc0] sm:$0xf]
        %v701 = vld [vmem:[%s562] sm:$0xff]
        %v702 = vld [vmem:[%s562 + $0x8] sm:$0xff]
        %v703 = vld [vmem:[%s562 + $0x10] sm:$0xff]
        %v704 = vld [vmem:[%s562 + $0x18] sm:$0xff]
        %v705 = vld [vmem:[%s562 + $0x20] sm:$0xff]
        %v706 = vld [vmem:[%s562 + $0x28] sm:$0xff]
        %v707 = vld [vmem:[%s562 + $0x30] sm:$0xff]
        %v708 = vld [vmem:[%s562 + $0x38] sm:$0xff]
        %v709 = vld [vmem:[%s562 + $0x40] sm:$0xff]
        %v710 = vld [vmem:[%s562 + $0x48] sm:$0xff]
        %v711 = vld [vmem:[%s562 + $0x50] sm:$0xff]
        %v712 = vld [vmem:[%s562 + $0x58] sm:$0xff]
        %v713 = vld [vmem:[%s562 + $0x60] sm:$0xff]
        %v714 = vld [vmem:[%s562 + $0x68] sm:$0xff]
        %v715 = vld [vmem:[%s562 + $0x70] sm:$0xff]
        %v716 = vld [vmem:[%s562 + $0x78] sm:$0xff]
        %v717 = vld [vmem:[%s562 + $0x80] sm:$0xff]
        %v718 = vld [vmem:[%s562 + $0x88] sm:$0xff]
        %v719 = vld [vmem:[%s562 + $0x90] sm:$0xff]
        %v720 = vld [vmem:[%s562 + $0x98] sm:$0xff]
        %v721 = vld [vmem:[%s562 + $0xa0] sm:$0xff]
        %v722 = vld [vmem:[%s562 + $0xa8] sm:$0xff]
        %v723 = vld [vmem:[%s562 + $0xb0] sm:$0xff]
        %v724 = vld [vmem:[%s562 + $0xb8] sm:$0xff]
        %v725 = vld [vmem:[%s562 + $0xc0] sm:$0xff]
        %v726 = vld [vmem:[%s562 + $0xc8] sm:$0xff]
        %v727 = vld [vmem:[%s562 + $0xd0] sm:$0xff]
        %v728 = vld [vmem:[%s562 + $0xd8] sm:$0xff]
        %v729 = vld [vmem:[%s562 + $0xe0] sm:$0xff]
        %v730 = vld [vmem:[%s562 + $0xe8] sm:$0xff]
        %v731 = vld [vmem:[%s562 + $0xf0] sm:$0xff]
        %v732 = vld [vmem:[%s562 + $0xf8] sm:$0xff]
        %v733 = vld [vmem:[%s562 + $0x100] sm:$0xff]
        %v734 = vld [vmem:[%s562 + $0x108] sm:$0xff]
        %v735 = vld [vmem:[%s562 + $0x110] sm:$0xff]
        %v736 = vld [vmem:[%s562 + $0x118] sm:$0xff]
        %v737 = vld [vmem:[%s562 + $0x120] sm:$0xff]
        %v738 = vld [vmem:[%s562 + $0x128] sm:$0xff]
        %v739 = vld [vmem:[%s562 + $0x130] sm:$0xff]
        %v740 = vld [vmem:[%s562 + $0x138] sm:$0xff]
        %v741 = vld [vmem:[%s562 + $0x140] sm:$0xff]
        %v742 = vld [vmem:[%s562 + $0x148] sm:$0xff]
        %v743 = vld [vmem:[%s562 + $0x150] sm:$0xff]
        %v744 = vld [vmem:[%s562 + $0x158] sm:$0xff]
        %v745 = vld [vmem:[%s562 + $0x160] sm:$0xff]
        %v746 = vld [vmem:[%s562 + $0x168] sm:$0xff]
        %v747 = vld [vmem:[%s562 + $0x170] sm:$0xff]
        %v748 = vld [vmem:[%s562 + $0x178] sm:$0xff]
        %v749 = vld [vmem:[%s562 + $0x180] sm:$0xff]
        %v750 = vld [vmem:[%s562 + $0x188] sm:$0xff]
        %v751 = vld [vmem:[%s562 + $0x190] sm:$0xff]
        %v752 = vld [vmem:[%s562 + $0x198] sm:$0xff]
        %v753 = vld [vmem:[%s562 + $0x1a0] sm:$0xff]
        %v754 = vld [vmem:[%s562 + $0x1a8] sm:$0xff]
        %v755 = vld [vmem:[%s562 + $0x1b0] sm:$0xff]
        %v756 = vld [vmem:[%s562 + $0x1b8] sm:$0xff]
        %v757 = vld [vmem:[%s562 + $0x1c0] sm:$0xff]
        %v758 = vld [vmem:[%s562 + $0x1c8] sm:$0xff]
        %v759 = vld [vmem:[%s562 + $0x1d0] sm:$0xff]
        %v760 = vld [vmem:[%s562 + $0x1d8] sm:$0xff]
        %v761 = vld [vmem:[%s562 + $0x1e0] sm:$0xff]
        %v762 = vld [vmem:[%s562 + $0x1e8] sm:$0xff]
        %v763 = vld [vmem:[%s562 + $0x1f0] sm:$0xff]
        %v764 = vld [vmem:[%s562 + $0x1f8] sm:$0xff]
        %v765 = vld [vmem:[%s562 + $0x200] sm:$0xff]
        %v766 = vld [vmem:[%s562 + $0x208] sm:$0xff]
        %v767 = vld [vmem:[%s562 + $0x210] sm:$0xff]
        %v768 = vld [vmem:[%s562 + $0x218] sm:$0xff]
        %v769 = vld [vmem:[%s562 + $0x220] sm:$0xff]
        %v770 = vld [vmem:[%s562 + $0x228] sm:$0xff]
        %v771 = vld [vmem:[%s562 + $0x230] sm:$0xff]
        %v772 = vld [vmem:[%s562 + $0x238] sm:$0xff]
        %v773 = vld [vmem:[%s562 + $0x240] sm:$0xff]
        %v774 = vld [vmem:[%s562 + $0x248] sm:$0xff]
        %v775 = vld [vmem:[%s562 + $0x250] sm:$0xff]
        %v776 = vld [vmem:[%s562 + $0x258] sm:$0xff]
        %v777 = vld [vmem:[%s562 + $0x260] sm:$0xff]
        %v778 = vld [vmem:[%s562 + $0x268] sm:$0xff]
        %v779 = vld [vmem:[%s562 + $0x270] sm:$0xff]
        %v780 = vld [vmem:[%s562 + $0x278] sm:$0xff]
        %v781 = vld [vmem:[%s562 + $0x280] sm:$0xff]
        %v782 = vld [vmem:[%s562 + $0x288] sm:$0xff]
        %v783 = vld [vmem:[%s562 + $0x290] sm:$0xff]
        %v784 = vld [vmem:[%s562 + $0x298] sm:$0xff]
        %v785 = vld [vmem:[%s562 + $0x2a0] sm:$0xff]
        %v786 = vld [vmem:[%s562 + $0x2a8] sm:$0xff]
        %v787 = vld [vmem:[%s562 + $0x2b0] sm:$0xff]
        %v788 = vld [vmem:[%s562 + $0x2b8] sm:$0xff]
        %v789 = vld [vmem:[%s562 + $0x2c0] sm:$0xff]
        %v790 = vld [vmem:[%s562 + $0x2c8] sm:$0xff]
        %v791 = vld [vmem:[%s562 + $0x2d0] sm:$0xff]
        %v792 = vld [vmem:[%s562 + $0x2d8] sm:$0xff]
        %v793 = vld [vmem:[%s562 + $0x2e0] sm:$0xff]
        %v794 = vld [vmem:[%s562 + $0x2e8] sm:$0xff]
        %v795 = vld [vmem:[%s562 + $0x2f0] sm:$0xff]
        %v796 = vld [vmem:[%s562 + $0x2f8] sm:$0xff]
        %v797 = vld [vmem:[%s562 + $0x300] sm:$0xff]
        %v798 = vld [vmem:[%s562 + $0x308] sm:$0xff]
        %v799 = vld [vmem:[%s562 + $0x310] sm:$0xff]
        %v800 = vld [vmem:[%s562 + $0x318] sm:$0xff]
        %v801 = vld [vmem:[%s562 + $0x320] sm:$0xff]
        %v802 = vld [vmem:[%s562 + $0x328] sm:$0xff]
        %v803 = vld [vmem:[%s562 + $0x330] sm:$0xff]
        %v804 = vld [vmem:[%s562 + $0x338] sm:$0xff]
        %v805 = vld [vmem:[%s562 + $0x340] sm:$0xff]
        %v806 = vld [vmem:[%s562 + $0x348] sm:$0xff]
        %v807 = vld [vmem:[%s562 + $0x350] sm:$0xff]
        %v808 = vld [vmem:[%s562 + $0x358] sm:$0xff]
        %v809 = vld [vmem:[%s562 + $0x360] sm:$0xff]
        %v810 = vld [vmem:[%s562 + $0x368] sm:$0xff]
        %v811 = vld [vmem:[%s562 + $0x370] sm:$0xff]
        %v812 = vld [vmem:[%s562 + $0x378] sm:$0xff]
        %v813 = vunpack.c.l.s8.bf16 %v701
        %v814 = vunpack.c.l.s8.bf16 %v702
        %v815 = vunpack.c.l.s8.bf16 %v703
        %v816 = vunpack.c.l.s8.bf16 %v704
        %v817 = vunpack.c.h.s8.bf16 %v701
        %v818 = vunpack.c.h.s8.bf16 %v702
        %v819 = vunpack.c.h.s8.bf16 %v703
        %v820 = vunpack.c.h.s8.bf16 %v704
        %v821 = vunpack.c.l.s8.bf16 %v705
        %v822 = vunpack.c.l.s8.bf16 %v706
        %v823 = vunpack.c.l.s8.bf16 %v707
        %v824 = vunpack.c.l.s8.bf16 %v708
        %v825 = vunpack.c.h.s8.bf16 %v705
        %v826 = vunpack.c.h.s8.bf16 %v706
        %v827 = vunpack.c.h.s8.bf16 %v707
        %v828 = vunpack.c.h.s8.bf16 %v708
        %v829 = vunpack.c.l.s8.bf16 %v709
        %v830 = vunpack.c.l.s8.bf16 %v710
        %v831 = vunpack.c.l.s8.bf16 %v711
        %v832 = vunpack.c.l.s8.bf16 %v712
        %v833 = vunpack.c.h.s8.bf16 %v709
        %v834 = vunpack.c.h.s8.bf16 %v710
        %v835 = vunpack.c.h.s8.bf16 %v711
        %v836 = vunpack.c.h.s8.bf16 %v712
        %v837 = vunpack.c.l.s8.bf16 %v713
        %v838 = vunpack.c.l.s8.bf16 %v714
        %v839 = vunpack.c.l.s8.bf16 %v715
        %v840 = vunpack.c.l.s8.bf16 %v716
        %v841 = vunpack.c.h.s8.bf16 %v713
        %v842 = vunpack.c.h.s8.bf16 %v714
        %v843 = vunpack.c.h.s8.bf16 %v715
        %v844 = vunpack.c.h.s8.bf16 %v716
        %v845 = vunpack.c.l.s8.bf16 %v717
        %v846 = vunpack.c.l.s8.bf16 %v718
        %v847 = vunpack.c.l.s8.bf16 %v719
        %v848 = vunpack.c.l.s8.bf16 %v720
        %v849 = vunpack.c.h.s8.bf16 %v717
        %v850 = vunpack.c.h.s8.bf16 %v718
        %v851 = vunpack.c.h.s8.bf16 %v719
        %v852 = vunpack.c.h.s8.bf16 %v720
        %v853 = vunpack.c.l.s8.bf16 %v721
        %v854 = vunpack.c.l.s8.bf16 %v722
        %v855 = vunpack.c.l.s8.bf16 %v723
        %v856 = vunpack.c.l.s8.bf16 %v724
        %v857 = vunpack.c.h.s8.bf16 %v721
        %v858 = vunpack.c.h.s8.bf16 %v722
        %v859 = vunpack.c.h.s8.bf16 %v723
        %v860 = vunpack.c.h.s8.bf16 %v724
        %v861 = vunpack.c.l.s8.bf16 %v725
        %v862 = vunpack.c.l.s8.bf16 %v726
        %v863 = vunpack.c.l.s8.bf16 %v727
        %v864 = vunpack.c.l.s8.bf16 %v728
        %v865 = vunpack.c.h.s8.bf16 %v725
        %v866 = vunpack.c.h.s8.bf16 %v726
        %v867 = vunpack.c.h.s8.bf16 %v727
        %v868 = vunpack.c.h.s8.bf16 %v728
        %v869 = vunpack.c.l.s8.bf16 %v729
        %v870 = vunpack.c.l.s8.bf16 %v730
        %v871 = vunpack.c.l.s8.bf16 %v731
        %v872 = vunpack.c.l.s8.bf16 %v732
        %v873 = vunpack.c.h.s8.bf16 %v729
        %v874 = vunpack.c.h.s8.bf16 %v730
        %v875 = vunpack.c.h.s8.bf16 %v731
        %v876 = vunpack.c.h.s8.bf16 %v732
        %v877 = vunpack.c.l.s8.bf16 %v733
        %v878 = vunpack.c.l.s8.bf16 %v734
        %v879 = vunpack.c.l.s8.bf16 %v735
        %v880 = vunpack.c.l.s8.bf16 %v736
        %v881 = vunpack.c.h.s8.bf16 %v733
        %v882 = vunpack.c.h.s8.bf16 %v734
        %v883 = vunpack.c.h.s8.bf16 %v735
        %v884 = vunpack.c.h.s8.bf16 %v736
        %v885 = vunpack.c.l.s8.bf16 %v737
        %v886 = vunpack.c.l.s8.bf16 %v738
        %v887 = vunpack.c.l.s8.bf16 %v739
        %v888 = vunpack.c.l.s8.bf16 %v740
        %v889 = vunpack.c.h.s8.bf16 %v737
        %v890 = vunpack.c.h.s8.bf16 %v738
        %v891 = vunpack.c.h.s8.bf16 %v739
        %v892 = vunpack.c.h.s8.bf16 %v740
        %v893 = vunpack.c.l.s8.bf16 %v741
        %v894 = vunpack.c.l.s8.bf16 %v742
        %v895 = vunpack.c.l.s8.bf16 %v743
        %v896 = vunpack.c.l.s8.bf16 %v744
        %v897 = vunpack.c.h.s8.bf16 %v741
        %v898 = vunpack.c.h.s8.bf16 %v742
        %v899 = vunpack.c.h.s8.bf16 %v743
        %v900 = vunpack.c.h.s8.bf16 %v744
        %v901 = vunpack.c.l.s8.bf16 %v745
        %v902 = vunpack.c.l.s8.bf16 %v746
        %v903 = vunpack.c.l.s8.bf16 %v747
        %v904 = vunpack.c.l.s8.bf16 %v748
        %v905 = vunpack.c.h.s8.bf16 %v745
        %v906 = vunpack.c.h.s8.bf16 %v746
        %v907 = vunpack.c.h.s8.bf16 %v747
        %v908 = vunpack.c.h.s8.bf16 %v748
        %v909 = vunpack.c.l.s8.bf16 %v749
        %v910 = vunpack.c.l.s8.bf16 %v750
        %v911 = vunpack.c.l.s8.bf16 %v751
        %v912 = vunpack.c.l.s8.bf16 %v752
        %v913 = vunpack.c.h.s8.bf16 %v749
        %v914 = vunpack.c.h.s8.bf16 %v750
        %v915 = vunpack.c.h.s8.bf16 %v751
        %v916 = vunpack.c.h.s8.bf16 %v752
        %v917 = vunpack.c.l.s8.bf16 %v753
        %v918 = vunpack.c.l.s8.bf16 %v754
        %v919 = vunpack.c.l.s8.bf16 %v755
        %v920 = vunpack.c.l.s8.bf16 %v756
        %v921 = vunpack.c.h.s8.bf16 %v753
        %v922 = vunpack.c.h.s8.bf16 %v754
        %v923 = vunpack.c.h.s8.bf16 %v755
        %v924 = vunpack.c.h.s8.bf16 %v756
        %v925 = vunpack.c.l.s8.bf16 %v757
        %v926 = vunpack.c.l.s8.bf16 %v758
        %v927 = vunpack.c.l.s8.bf16 %v759
        %v928 = vunpack.c.l.s8.bf16 %v760
        %v929 = vunpack.c.h.s8.bf16 %v757
        %v930 = vunpack.c.h.s8.bf16 %v758
        %v931 = vunpack.c.h.s8.bf16 %v759
        %v932 = vunpack.c.h.s8.bf16 %v760
        %v933 = vunpack.c.l.s8.bf16 %v761
        %v934 = vunpack.c.l.s8.bf16 %v762
        %v935 = vunpack.c.l.s8.bf16 %v763
        %v936 = vunpack.c.l.s8.bf16 %v764
        %v937 = vunpack.c.h.s8.bf16 %v761
        %v938 = vunpack.c.h.s8.bf16 %v762
        %v939 = vunpack.c.h.s8.bf16 %v763
        %v940 = vunpack.c.h.s8.bf16 %v764
        %v941 = vunpack.c.l.s8.bf16 %v765
        %v942 = vunpack.c.l.s8.bf16 %v766
        %v943 = vunpack.c.l.s8.bf16 %v767
        %v944 = vunpack.c.l.s8.bf16 %v768
        %v945 = vunpack.c.h.s8.bf16 %v765
        %v946 = vunpack.c.h.s8.bf16 %v766
        %v947 = vunpack.c.h.s8.bf16 %v767
        %v948 = vunpack.c.h.s8.bf16 %v768
        %v949 = vunpack.c.l.s8.bf16 %v769
        %v950 = vunpack.c.l.s8.bf16 %v770
        %v951 = vunpack.c.l.s8.bf16 %v771
        %v952 = vunpack.c.l.s8.bf16 %v772
        %v953 = vunpack.c.h.s8.bf16 %v769
        %v954 = vunpack.c.h.s8.bf16 %v770
        %v955 = vunpack.c.h.s8.bf16 %v771
        %v956 = vunpack.c.h.s8.bf16 %v772
        %v957 = vunpack.c.l.s8.bf16 %v773
        %v958 = vunpack.c.l.s8.bf16 %v774
        %v959 = vunpack.c.l.s8.bf16 %v775
        %v960 = vunpack.c.l.s8.bf16 %v776
        %v961 = vunpack.c.h.s8.bf16 %v773
        %v962 = vunpack.c.h.s8.bf16 %v774
        %v963 = vunpack.c.h.s8.bf16 %v775
        %v964 = vunpack.c.h.s8.bf16 %v776
        %v965 = vunpack.c.l.s8.bf16 %v777
        %v966 = vunpack.c.l.s8.bf16 %v778
        %v967 = vunpack.c.l.s8.bf16 %v779
        %v968 = vunpack.c.l.s8.bf16 %v780
        %v969 = vunpack.c.h.s8.bf16 %v777
        %v970 = vunpack.c.h.s8.bf16 %v778
        %v971 = vunpack.c.h.s8.bf16 %v779
        %v972 = vunpack.c.h.s8.bf16 %v780
        %v973 = vunpack.c.l.s8.bf16 %v781
        %v974 = vunpack.c.l.s8.bf16 %v782
        %v975 = vunpack.c.l.s8.bf16 %v783
        %v976 = vunpack.c.l.s8.bf16 %v784
        %v977 = vunpack.c.h.s8.bf16 %v781
        %v978 = vunpack.c.h.s8.bf16 %v782
        %v979 = vunpack.c.h.s8.bf16 %v783
        %v980 = vunpack.c.h.s8.bf16 %v784
        %v981 = vunpack.c.l.s8.bf16 %v785
        %v982 = vunpack.c.l.s8.bf16 %v786
        %v983 = vunpack.c.l.s8.bf16 %v787
        %v984 = vunpack.c.l.s8.bf16 %v788
        %v985 = vunpack.c.h.s8.bf16 %v785
        %v986 = vunpack.c.h.s8.bf16 %v786
        %v987 = vunpack.c.h.s8.bf16 %v787
        %v988 = vunpack.c.h.s8.bf16 %v788
        %v989 = vunpack.c.l.s8.bf16 %v789
        %v990 = vunpack.c.l.s8.bf16 %v790
        %v991 = vunpack.c.l.s8.bf16 %v791
        %v992 = vunpack.c.l.s8.bf16 %v792
        %v993 = vunpack.c.h.s8.bf16 %v789
        %v994 = vunpack.c.h.s8.bf16 %v790
        %v995 = vunpack.c.h.s8.bf16 %v791
        %v996 = vunpack.c.h.s8.bf16 %v792
        %v997 = vunpack.c.l.s8.bf16 %v793
        %v998 = vunpack.c.l.s8.bf16 %v794
        %v999 = vunpack.c.l.s8.bf16 %v795
        %v1000 = vunpack.c.l.s8.bf16 %v796
        %v1001 = vunpack.c.h.s8.bf16 %v793
        %v1002 = vunpack.c.h.s8.bf16 %v794
        %v1003 = vunpack.c.h.s8.bf16 %v795
        %v1004 = vunpack.c.h.s8.bf16 %v796
        %v1005 = vunpack.c.l.s8.bf16 %v797
        %v1006 = vunpack.c.l.s8.bf16 %v798
        %v1007 = vunpack.c.l.s8.bf16 %v799
        %v1008 = vunpack.c.l.s8.bf16 %v800
        %v1009 = vunpack.c.h.s8.bf16 %v797
        %v1010 = vunpack.c.h.s8.bf16 %v798
        %v1011 = vunpack.c.h.s8.bf16 %v799
        %v1012 = vunpack.c.h.s8.bf16 %v800
        %v1013 = vunpack.c.l.s8.bf16 %v801
        %v1014 = vunpack.c.l.s8.bf16 %v802
        %v1015 = vunpack.c.l.s8.bf16 %v803
        %v1016 = vunpack.c.l.s8.bf16 %v804
        %v1017 = vunpack.c.h.s8.bf16 %v801
        %v1018 = vunpack.c.h.s8.bf16 %v802
        %v1019 = vunpack.c.h.s8.bf16 %v803
        %v1020 = vunpack.c.h.s8.bf16 %v804
        %v1021 = vunpack.c.l.s8.bf16 %v805
        %v1022 = vunpack.c.l.s8.bf16 %v806
        %v1023 = vunpack.c.l.s8.bf16 %v807
        %v1024 = vunpack.c.l.s8.bf16 %v808
        %v1025 = vunpack.c.h.s8.bf16 %v805
        %v1026 = vunpack.c.h.s8.bf16 %v806
        %v1027 = vunpack.c.h.s8.bf16 %v807
        %v1028 = vunpack.c.h.s8.bf16 %v808
        %v1029 = vunpack.c.l.s8.bf16 %v809
        %v1030 = vunpack.c.l.s8.bf16 %v810
        %v1031 = vunpack.c.l.s8.bf16 %v811
        %v1032 = vunpack.c.l.s8.bf16 %v812
        %v1033 = vunpack.c.h.s8.bf16 %v809
        %v1034 = vunpack.c.h.s8.bf16 %v810
        %v1035 = vunpack.c.h.s8.bf16 %v811
        %v1036 = vunpack.c.h.s8.bf16 %v812
        %v1065 = vunpack.c.l.b16 %v673
        %v1066 = vunpack.c.h.b16 %v673
        %v1067 = vunpack.c.l.b16 %v674
        %v1068 = vunpack.c.h.b16 %v674
        %v1069 = vunpack.c.l.b16 %v675
        %v1070 = vunpack.c.h.b16 %v675
        %v1071 = vunpack.c.l.b16 %v676
        %v1072 = vunpack.c.l.b16 %v677
        %v1073 = vunpack.c.h.b16 %v677
        %v1074 = vunpack.c.l.b16 %v678
        %v1075 = vunpack.c.h.b16 %v678
        %v1076 = vunpack.c.l.b16 %v679
        %v1077 = vunpack.c.h.b16 %v679
        %v1078 = vunpack.c.l.b16 %v680
        %v1079 = vunpack.c.l.b16 %v681
        %v1080 = vunpack.c.h.b16 %v681
        %v1081 = vunpack.c.l.b16 %v682
        %v1082 = vunpack.c.h.b16 %v682
        %v1083 = vunpack.c.l.b16 %v683
        %v1084 = vunpack.c.h.b16 %v683
        %v1085 = vunpack.c.l.b16 %v684
        %v1086 = vunpack.c.l.b16 %v685
        %v1087 = vunpack.c.h.b16 %v685
        %v1088 = vunpack.c.l.b16 %v686
        %v1089 = vunpack.c.h.b16 %v686
        %v1090 = vunpack.c.l.b16 %v687
        %v1091 = vunpack.c.h.b16 %v687
        %v1092 = vunpack.c.l.b16 %v688
        %v1093 = vunpack.c.l.b16 %v689
        %v1094 = vunpack.c.h.b16 %v689
        %v1095 = vunpack.c.l.b16 %v690
        %v1096 = vunpack.c.h.b16 %v690
        %v1097 = vunpack.c.l.b16 %v691
        %v1098 = vunpack.c.h.b16 %v691
        %v1099 = vunpack.c.l.b16 %v692
        %v1100 = vunpack.c.l.b16 %v693
        %v1101 = vunpack.c.h.b16 %v693
        %v1102 = vunpack.c.l.b16 %v694
        %v1103 = vunpack.c.h.b16 %v694
        %v1104 = vunpack.c.l.b16 %v695
        %v1105 = vunpack.c.h.b16 %v695
        %v1106 = vunpack.c.l.b16 %v696
        %v1107 = vunpack.c.l.b16 %v697
        %v1108 = vunpack.c.h.b16 %v697
        %v1109 = vunpack.c.l.b16 %v698
        %v1110 = vunpack.c.h.b16 %v698
        %v1111 = vunpack.c.l.b16 %v699
        %v1112 = vunpack.c.h.b16 %v699
        %v1113 = vunpack.c.l.b16 %v700
        %v1114 = vpack.c.b16 %v1072, %v1065
        %v1115 = vpack.c.b16 %v1073, %v1066
        %v1116 = vpack.c.b16 %v1074, %v1067
        %v1117 = vpack.c.b16 %v1075, %v1068
        %v1118 = vpack.c.b16 %v1076, %v1069
        %v1119 = vpack.c.b16 %v1077, %v1070
        %v1120 = vpack.c.b16 %v1078, %v1071
        %v1121 = vpack.c.b16 %v1086, %v1079
        %v1122 = vpack.c.b16 %v1087, %v1080
        %v1123 = vpack.c.b16 %v1088, %v1081
        %v1124 = vpack.c.b16 %v1089, %v1082
        %v1125 = vpack.c.b16 %v1090, %v1083
        %v1126 = vpack.c.b16 %v1091, %v1084
        %v1127 = vpack.c.b16 %v1092, %v1085
        %v1128 = vpack.c.b16 %v1100, %v1093
        %v1129 = vpack.c.b16 %v1101, %v1094
        %v1130 = vpack.c.b16 %v1102, %v1095
        %v1131 = vpack.c.b16 %v1103, %v1096
        %v1132 = vpack.c.b16 %v1104, %v1097
        %v1133 = vpack.c.b16 %v1105, %v1098
        %v1134 = vpack.c.b16 %v1106, %v1099
        %v1135 = vpack.c.b16 %v1107, %v1107
        %v1136 = vpack.c.b16 %v1108, %v1108
        %v1137 = vpack.c.b16 %v1109, %v1109
        %v1138 = vpack.c.b16 %v1110, %v1110
        %v1139 = vpack.c.b16 %v1111, %v1111
        %v1140 = vpack.c.b16 %v1112, %v1112
        %v1141 = vpack.c.b16 %v1113, %v1113
        %1170 = vmatprep.subr.bf16.mxu0 %v814
        %1171 = vmatpush1.bf16.msra.mxu0 %v813
        %1172 = vmatprep.subr.bf16.mxu0 %v818
        %1173 = vmatpush1.bf16.msra.mxu0 %v817
        %1174 = vmatprep.subr.bf16.mxu0 %v822
        %1175 = vmatpush1.bf16.msra.mxu0 %v821
        %1176 = vmatprep.subr.bf16.mxu0 %v826
        %1177 = vmatpush1.bf16.msra.mxu0 %v825
        %1178 = vmatprep.subr.bf16.mxu0 %v830
        %1179 = vmatpush1.bf16.msra.mxu0 %v829
        %1180 = vmatprep.subr.bf16.mxu0 %v834
        %1181 = vmatpush1.bf16.msra.mxu0 %v833
        %1182 = vmatprep.subr.bf16.mxu0 %v838
        %1183 = vmatpush1.bf16.msra.mxu0 %v837
        %1184 = vmatprep.subr.bf16.mxu0 %v842
        %1185 = vmatpush1.bf16.msra.mxu0 %v841
        %1186 = vmatprep.subr.bf16.mxu0 %v846
        %1187 = vmatpush1.bf16.msra.mxu0 %v845
        %1188 = vmatprep.subr.bf16.mxu0 %v850
        %1189 = vmatpush1.bf16.msra.mxu0 %v849
        %1190 = vmatprep.subr.bf16.mxu0 %v854
        %1191 = vmatpush1.bf16.msra.mxu0 %v853
        %1192 = vmatprep.subr.bf16.mxu0 %v858
        %1193 = vmatpush1.bf16.msra.mxu0 %v857
        %1194 = vmatprep.subr.bf16.mxu0 %v862
        %1195 = vmatpush1.bf16.msra.mxu0 %v861
        %1196 = vmatprep.subr.bf16.mxu0 %v866
        %1197 = vmatpush1.bf16.msra.mxu0 %v865
        %1198 = vmatprep.subr.bf16.mxu0 %v870
        %1199 = vmatpush1.bf16.msra.mxu0 %v869
        %1200 = vmatprep.subr.bf16.mxu0 %v874
        %1201 = vmatpush1.bf16.msra.mxu0 %v873
        %1202 = vmatprep.mubr.bf16.mxu0 %v1115
        %1203 = vmatmul.mubr.bf16.gmra.mrb[0].mxu0 %v1114
        %v1204 = vpop.f32.mrb[0].mxu0
        %v1205 = vadd.f32 0.0, %v1204
        %v1206 = vpop.f32.mrb[0].mxu0
        %v1207 = vadd.f32 0.0, %v1206
        %v1208 = vpop.f32.mrb[0].mxu0
        %v1209 = vadd.f32 0.0, %v1208
        %v1210 = vpop.f32.mrb[0].mxu0
        %v1211 = vadd.f32 0.0, %v1210
        %1212 = vmatprep.mubr.bf16.mxu0 %v1122
        %1213 = vmatmul.mubr.bf16.gmra.mrb[0].mxu0 %v1121
        %v1214 = vpop.f32.mrb[0].mxu0
        %v1215 = vadd.f32 0.0, %v1214
        %v1216 = vpop.f32.mrb[0].mxu0
        %v1217 = vadd.f32 0.0, %v1216
        %v1218 = vpop.f32.mrb[0].mxu0
        %v1219 = vadd.f32 0.0, %v1218
        %v1220 = vpop.f32.mrb[0].mxu0
        %v1221 = vadd.f32 0.0, %v1220
        %1222 = vmatprep.mubr.bf16.mxu0 %v1129
        %1223 = vmatmul.mubr.bf16.gmra.mrb[0].mxu0 %v1128
        %v1224 = vpop.f32.mrb[0].mxu0
        %v1225 = vadd.f32 0.0, %v1224
        %v1226 = vpop.f32.mrb[0].mxu0
        %v1227 = vadd.f32 0.0, %v1226
        %v1228 = vpop.f32.mrb[0].mxu0
        %v1229 = vadd.f32 0.0, %v1228
        %v1230 = vpop.f32.mrb[0].mxu0
        %v1231 = vadd.f32 0.0, %v1230
        %1232 = vmatprep.mubr.bf16.mxu0 %v1136
        %1233 = vmatmul.mubr.bf16.gmra.mrb[0].mxu0 %v1135
        %v1234 = vpop.f32.mrb[0].mxu0
        %v1235 = vadd.f32 0.0, %v1234
        %v1236 = vpop.f32.mrb[0].mxu0
        %v1237 = vadd.f32 0.0, %v1236
        %v1238 = vpop.f32.mrb[0].mxu0
        %v1239 = vpop.f32.mrb[0].mxu0
        %1240 = vdwg.mxu0
        %1241 = vmatprep.subr.bf16.mxu0 %v878
        %1242 = vmatpush1.bf16.msra.mxu0 %v877
        %1243 = vmatprep.subr.bf16.mxu0 %v882
        %1244 = vmatpush1.bf16.msra.mxu0 %v881
        %1245 = vmatprep.subr.bf16.mxu0 %v886
        %1246 = vmatpush1.bf16.msra.mxu0 %v885
        %1247 = vmatprep.subr.bf16.mxu0 %v890
        %1248 = vmatpush1.bf16.msra.mxu0 %v889
        %1249 = vmatprep.subr.bf16.mxu0 %v894
        %1250 = vmatpush1.bf16.msra.mxu0 %v893
        %1251 = vmatprep.subr.bf16.mxu0 %v898
        %1252 = vmatpush1.bf16.msra.mxu0 %v897
        %1253 = vmatprep.subr.bf16.mxu0 %v902
        %1254 = vmatpush1.bf16.msra.mxu0 %v901
        %1255 = vmatprep.subr.bf16.mxu0 %v906
        %1256 = vmatpush1.bf16.msra.mxu0 %v905
        %1257 = vmatprep.subr.bf16.mxu0 %v910
        %1258 = vmatpush1.bf16.msra.mxu0 %v909
        %1259 = vmatprep.subr.bf16.mxu0 %v914
        %1260 = vmatpush1.bf16.msra.mxu0 %v913
        %1261 = vmatprep.subr.bf16.mxu0 %v918
        %1262 = vmatpush1.bf16.msra.mxu0 %v917
        %1263 = vmatprep.subr.bf16.mxu0 %v922
        %1264 = vmatpush1.bf16.msra.mxu0 %v921
        %1265 = vmatprep.subr.bf16.mxu0 %v926
        %1266 = vmatpush1.bf16.msra.mxu0 %v925
        %1267 = vmatprep.subr.bf16.mxu0 %v930
        %1268 = vmatpush1.bf16.msra.mxu0 %v929
        %1269 = vmatprep.subr.bf16.mxu0 %v934
        %1270 = vmatpush1.bf16.msra.mxu0 %v933
        %1271 = vmatprep.subr.bf16.mxu0 %v938
        %1272 = vmatpush1.bf16.msra.mxu0 %v937
        %1273 = vmatprep.mubr.bf16.mxu0 %v1117
        %1274 = vmatmul.mubr.bf16.gmra.mrb[0].mxu0 %v1116
        %v1275 = vpop.f32.mrb[0].mxu0
        %v1276 = vadd.f32 %v1205, %v1275
        %v1277 = vpop.f32.mrb[0].mxu0
        %v1278 = vadd.f32 %v1207, %v1277
        %v1279 = vpop.f32.mrb[0].mxu0
        %v1280 = vadd.f32 %v1209, %v1279
        %v1281 = vpop.f32.mrb[0].mxu0
        %v1282 = vadd.f32 %v1211, %v1281
        %1283 = vmatprep.mubr.bf16.mxu0 %v1124
        %1284 = vmatmul.mubr.bf16.gmra.mrb[0].mxu0 %v1123
        %v1285 = vpop.f32.mrb[0].mxu0
        %v1286 = vadd.f32 %v1215, %v1285
        %v1287 = vpop.f32.mrb[0].mxu0
        %v1288 = vadd.f32 %v1217, %v1287
        %v1289 = vpop.f32.mrb[0].mxu0
        %v1290 = vadd.f32 %v1219, %v1289
        %v1291 = vpop.f32.mrb[0].mxu0
        %v1292 = vadd.f32 %v1221, %v1291
        %1293 = vmatprep.mubr.bf16.mxu0 %v1131
        %1294 = vmatmul.mubr.bf16.gmra.mrb[0].mxu0 %v1130
        %v1295 = vpop.f32.mrb[0].mxu0
        %v1296 = vadd.f32 %v1225, %v1295
        %v1297 = vpop.f32.mrb[0].mxu0
        %v1298 = vadd.f32 %v1227, %v1297
        %v1299 = vpop.f32.mrb[0].mxu0
        %v1300 = vadd.f32 %v1229, %v1299
        %v1301 = vpop.f32.mrb[0].mxu0
        %v1302 = vadd.f32 %v1231, %v1301
        %1303 = vmatprep.mubr.bf16.mxu0 %v1138
        %1304 = vmatmul.mubr.bf16.gmra.mrb[0].mxu0 %v1137
        %v1305 = vpop.f32.mrb[0].mxu0
        %v1306 = vadd.f32 %v1235, %v1305
        %v1307 = vpop.f32.mrb[0].mxu0
        %v1308 = vadd.f32 %v1237, %v1307
        %v1309 = vpop.f32.mrb[0].mxu0
        %v1310 = vpop.f32.mrb[0].mxu0
        %1311 = vdwg.mxu0
        %1312 = vmatprep.subr.bf16.mxu0 %v942
        %1313 = vmatpush1.bf16.msra.mxu0 %v941
        %1314 = vmatprep.subr.bf16.mxu0 %v946
        %1315 = vmatpush1.bf16.msra.mxu0 %v945
        %1316 = vmatprep.subr.bf16.mxu0 %v950
        %1317 = vmatpush1.bf16.msra.mxu0 %v949
        %1318 = vmatprep.subr.bf16.mxu0 %v954
        %1319 = vmatpush1.bf16.msra.mxu0 %v953
        %1320 = vmatprep.subr.bf16.mxu0 %v958
        %1321 = vmatpush1.bf16.msra.mxu0 %v957
        %1322 = vmatprep.subr.bf16.mxu0 %v962
        %1323 = vmatpush1.bf16.msra.mxu0 %v961
        %1324 = vmatprep.subr.bf16.mxu0 %v966
        %1325 = vmatpush1.bf16.msra.mxu0 %v965
        %1326 = vmatprep.subr.bf16.mxu0 %v970
        %1327 = vmatpush1.bf16.msra.mxu0 %v969
        %1328 = vmatprep.subr.bf16.mxu0 %v974
        %1329 = vmatpush1.bf16.msra.mxu0 %v973
        %1330 = vmatprep.subr.bf16.mxu0 %v978
        %1331 = vmatpush1.bf16.msra.mxu0 %v977
        %1332 = vmatprep.subr.bf16.mxu0 %v982
        %1333 = vmatpush1.bf16.msra.mxu0 %v981
        %1334 = vmatprep.subr.bf16.mxu0 %v986
        %1335 = vmatpush1.bf16.msra.mxu0 %v985
        %1336 = vmatprep.subr.bf16.mxu0 %v990
        %1337 = vmatpush1.bf16.msra.mxu0 %v989
        %1338 = vmatprep.subr.bf16.mxu0 %v994
        %1339 = vmatpush1.bf16.msra.mxu0 %v993
        %1340 = vmatprep.subr.bf16.mxu0 %v998
        %1341 = vmatpush1.bf16.msra.mxu0 %v997
        %1342 = vmatprep.subr.bf16.mxu0 %v1002
        %1343 = vmatpush1.bf16.msra.mxu0 %v1001
        %1344 = vmatprep.mubr.bf16.mxu0 %v1119
        %1345 = vmatmul.mubr.bf16.gmra.mrb[0].mxu0 %v1118
        %v1346 = vpop.f32.mrb[0].mxu0
        %v1347 = vadd.f32 %v1276, %v1346
        %v1348 = vpop.f32.mrb[0].mxu0
        %v1349 = vadd.f32 %v1278, %v1348
        %v1350 = vpop.f32.mrb[0].mxu0
        %v1351 = vadd.f32 %v1280, %v1350
        %v1352 = vpop.f32.mrb[0].mxu0
        %v1353 = vadd.f32 %v1282, %v1352
        %1354 = vmatprep.mubr.bf16.mxu0 %v1126
        %1355 = vmatmul.mubr.bf16.gmra.mrb[0].mxu0 %v1125
        %v1356 = vpop.f32.mrb[0].mxu0
        %v1357 = vadd.f32 %v1286, %v1356
        %v1358 = vpop.f32.mrb[0].mxu0
        %v1359 = vadd.f32 %v1288, %v1358
        %v1360 = vpop.f32.mrb[0].mxu0
        %v1361 = vadd.f32 %v1290, %v1360
        %v1362 = vpop.f32.mrb[0].mxu0
        %v1363 = vadd.f32 %v1292, %v1362
        %1364 = vmatprep.mubr.bf16.mxu0 %v1133
        %1365 = vmatmul.mubr.bf16.gmra.mrb[0].mxu0 %v1132
        %v1366 = vpop.f32.mrb[0].mxu0
        %v1367 = vadd.f32 %v1296, %v1366
        %v1368 = vpop.f32.mrb[0].mxu0
        %v1369 = vadd.f32 %v1298, %v1368
        %v1370 = vpop.f32.mrb[0].mxu0
        %v1371 = vadd.f32 %v1300, %v1370
        %v1372 = vpop.f32.mrb[0].mxu0
        %v1373 = vadd.f32 %v1302, %v1372
        %1374 = vmatprep.mubr.bf16.mxu0 %v1140
        %1375 = vmatmul.mubr.bf16.gmra.mrb[0].mxu0 %v1139
        %v1376 = vpop.f32.mrb[0].mxu0
        %v1377 = vadd.f32 %v1306, %v1376
        %v1378 = vpop.f32.mrb[0].mxu0
        %v1379 = vadd.f32 %v1308, %v1378
        %v1380 = vpop.f32.mrb[0].mxu0
        %v1381 = vpop.f32.mrb[0].mxu0
        %1382 = vdwg.mxu0
        %1383 = vmatprep.subr.bf16.mxu0 %v1006
        %1384 = vmatpush1.bf16.msra.mxu0 %v1005
        %1385 = vmatprep.subr.bf16.mxu0 %v1010
        %1386 = vmatpush1.bf16.msra.mxu0 %v1009
        %1387 = vmatprep.subr.bf16.mxu0 %v1014
        %1388 = vmatpush1.bf16.msra.mxu0 %v1013
        %1389 = vmatprep.subr.bf16.mxu0 %v1018
        %1390 = vmatpush1.bf16.msra.mxu0 %v1017
        %1391 = vmatprep.subr.bf16.mxu0 %v1022
        %1392 = vmatpush1.bf16.msra.mxu0 %v1021
        %1393 = vmatprep.subr.bf16.mxu0 %v1026
        %1394 = vmatpush1.bf16.msra.mxu0 %v1025
        %1395 = vmatprep.subr.bf16.mxu0 %v1030
        %1396 = vmatpush1.bf16.msra.mxu0 %v1029
        %1397 = vmatprep.subr.bf16.mxu0 %v1034
        %1398 = vmatpush1.bf16.msra.mxu0 %v1033
        %1399 = vmatprep.subr.bf16.mxu0 0
        %1400 = vmatpush1.bf16.msra.mxu0 0
        %1401 = vmatprep.subr.bf16.mxu0 0
        %1402 = vmatpush1.bf16.msra.mxu0 0
        %1403 = vmatprep.subr.bf16.mxu0 0
        %1404 = vmatpush1.bf16.msra.mxu0 0
        %1405 = vmatprep.subr.bf16.mxu0 0
        %1406 = vmatpush1.bf16.msra.mxu0 0
        %1407 = vmatprep.subr.bf16.mxu0 0
        %1408 = vmatpush1.bf16.msra.mxu0 0
        %1409 = vmatprep.subr.bf16.mxu0 0
        %1410 = vmatpush1.bf16.msra.mxu0 0
        %1411 = vmatprep.subr.bf16.mxu0 0
        %1412 = vmatpush1.bf16.msra.mxu0 0
        %1413 = vmatprep.subr.bf16.mxu0 0
        %1414 = vmatpush1.bf16.msra.mxu0 0
        %1415 = vmatprep.mubr.bf16.mxu0 0
        %1416 = vmatmul.mubr.bf16.gmra.mrb[0].mxu0 %v1120
        %v1417 = vpop.f32.mrb[0].mxu0
        %v1418 = vadd.f32 %v1347, %v1417
        %v1419 = vpop.f32.mrb[0].mxu0
        %v1420 = vadd.f32 %v1349, %v1419
        %v1421 = vpop.f32.mrb[0].mxu0
        %v1422 = vadd.f32 %v1351, %v1421
        %v1423 = vpop.f32.mrb[0].mxu0
        %v1424 = vadd.f32 %v1353, %v1423
        %1425 = vmatprep.mubr.bf16.mxu0 0
        %1426 = vmatmul.mubr.bf16.gmra.mrb[0].mxu0 %v1127
        %v1427 = vpop.f32.mrb[0].mxu0
        %v1428 = vadd.f32 %v1357, %v1427
        %v1429 = vpop.f32.mrb[0].mxu0
        %v1430 = vadd.f32 %v1359, %v1429
        %v1431 = vpop.f32.mrb[0].mxu0
        %v1432 = vadd.f32 %v1361, %v1431
        %v1433 = vpop.f32.mrb[0].mxu0
        %v1434 = vadd.f32 %v1363, %v1433
        %1435 = vmatprep.mubr.bf16.mxu0 0
        %1436 = vmatmul.mubr.bf16.gmra.mrb[0].mxu0 %v1134
        %v1437 = vpop.f32.mrb[0].mxu0
        %v1438 = vadd.f32 %v1367, %v1437
        %v1439 = vpop.f32.mrb[0].mxu0
        %v1440 = vadd.f32 %v1369, %v1439
        %v1441 = vpop.f32.mrb[0].mxu0
        %v1442 = vadd.f32 %v1371, %v1441
        %v1443 = vpop.f32.mrb[0].mxu0
        %v1444 = vadd.f32 %v1373, %v1443
        %1445 = vmatprep.mubr.bf16.mxu0 0
        %1446 = vmatmul.mubr.bf16.gmra.mrb[0].mxu0 %v1141
        %v1447 = vpop.f32.mrb[0].mxu0
        %v1448 = vadd.f32 %v1377, %v1447
        %v1449 = vpop.f32.mrb[0].mxu0
        %v1450 = vadd.f32 %v1379, %v1449
        %v1451 = vpop.f32.mrb[0].mxu0
        %v1452 = vpop.f32.mrb[0].mxu0
        %1453 = vdwg.mxu0
        %1454 = vmatprep.subr.bf16.mxu0 %v816
        %1455 = vmatpush1.bf16.msra.mxu0 %v815
        %1456 = vmatprep.subr.bf16.mxu0 %v820
        %1457 = vmatpush1.bf16.msra.mxu0 %v819
        %1458 = vmatprep.subr.bf16.mxu0 %v824
        %1459 = vmatpush1.bf16.msra.mxu0 %v823
        %1460 = vmatprep.subr.bf16.mxu0 %v828
        %1461 = vmatpush1.bf16.msra.mxu0 %v827
        %1462 = vmatprep.subr.bf16.mxu0 %v832
        %1463 = vmatpush1.bf16.msra.mxu0 %v831
        %1464 = vmatprep.subr.bf16.mxu0 %v836
        %1465 = vmatpush1.bf16.msra.mxu0 %v835
        %1466 = vmatprep.subr.bf16.mxu0 %v840
        %1467 = vmatpush1.bf16.msra.mxu0 %v839
        %1468 = vmatprep.subr.bf16.mxu0 %v844
        %1469 = vmatpush1.bf16.msra.mxu0 %v843
        %1470 = vmatprep.subr.bf16.mxu0 %v848
        %1471 = vmatpush1.bf16.msra.mxu0 %v847
        %1472 = vmatprep.subr.bf16.mxu0 %v852
        %1473 = vmatpush1.bf16.msra.mxu0 %v851
        %1474 = vmatprep.subr.bf16.mxu0 %v856
        %1475 = vmatpush1.bf16.msra.mxu0 %v855
        %1476 = vmatprep.subr.bf16.mxu0 %v860
        %1477 = vmatpush1.bf16.msra.mxu0 %v859
        %1478 = vmatprep.subr.bf16.mxu0 %v864
        %1479 = vmatpush1.bf16.msra.mxu0 %v863
        %1480 = vmatprep.subr.bf16.mxu0 %v868
        %1481 = vmatpush1.bf16.msra.mxu0 %v867
        %1482 = vmatprep.subr.bf16.mxu0 %v872
        %1483 = vmatpush1.bf16.msra.mxu0 %v871
        %1484 = vmatprep.subr.bf16.mxu0 %v876
        %1485 = vmatpush1.bf16.msra.mxu0 %v875
        %1486 = vmatprep.mubr.bf16.mxu0 %v1115
        %1487 = vmatmul.mubr.bf16.gmra.mrb[0].mxu0 %v1114
        %v1488 = vpop.f32.mrb[0].mxu0
        %v1489 = vadd.f32 0.0, %v1488
        %v1490 = vpop.f32.mrb[0].mxu0
        %v1491 = vadd.f32 0.0, %v1490
        %v1492 = vpop.f32.mrb[0].mxu0
        %v1493 = vadd.f32 0.0, %v1492
        %v1494 = vpop.f32.mrb[0].mxu0
        %v1495 = vadd.f32 0.0, %v1494
        %1496 = vmatprep.mubr.bf16.mxu0 %v1122
        %1497 = vmatmul.mubr.bf16.gmra.mrb[0].mxu0 %v1121
        %v1498 = vpop.f32.mrb[0].mxu0
        %v1499 = vadd.f32 0.0, %v1498
        %v1500 = vpop.f32.mrb[0].mxu0
        %v1501 = vadd.f32 0.0, %v1500
        %v1502 = vpop.f32.mrb[0].mxu0
        %v1503 = vadd.f32 0.0, %v1502
        %v1504 = vpop.f32.mrb[0].mxu0
        %v1505 = vadd.f32 0.0, %v1504
        %1506 = vmatprep.mubr.bf16.mxu0 %v1129
        %1507 = vmatmul.mubr.bf16.gmra.mrb[0].mxu0 %v1128
        %v1508 = vpop.f32.mrb[0].mxu0
        %v1509 = vadd.f32 0.0, %v1508
        %v1510 = vpop.f32.mrb[0].mxu0
        %v1511 = vadd.f32 0.0, %v1510
        %v1512 = vpop.f32.mrb[0].mxu0
        %v1513 = vadd.f32 0.0, %v1512
        %v1514 = vpop.f32.mrb[0].mxu0
        %v1515 = vadd.f32 0.0, %v1514
        %1516 = vmatprep.mubr.bf16.mxu0 %v1136
        %1517 = vmatmul.mubr.bf16.gmra.mrb[0].mxu0 %v1135
        %v1518 = vpop.f32.mrb[0].mxu0
        %v1519 = vadd.f32 0.0, %v1518
        %v1520 = vpop.f32.mrb[0].mxu0
        %v1521 = vadd.f32 0.0, %v1520
        %v1522 = vpop.f32.mrb[0].mxu0
        %v1523 = vpop.f32.mrb[0].mxu0
        %1524 = vdwg.mxu0
        %1525 = vmatprep.subr.bf16.mxu0 %v880
        %1526 = vmatpush1.bf16.msra.mxu0 %v879
        %1527 = vmatprep.subr.bf16.mxu0 %v884
        %1528 = vmatpush1.bf16.msra.mxu0 %v883
        %1529 = vmatprep.subr.bf16.mxu0 %v888
        %1530 = vmatpush1.bf16.msra.mxu0 %v887
        %1531 = vmatprep.subr.bf16.mxu0 %v892
        %1532 = vmatpush1.bf16.msra.mxu0 %v891
        %1533 = vmatprep.subr.bf16.mxu0 %v896
        %1534 = vmatpush1.bf16.msra.mxu0 %v895
        %1535 = vmatprep.subr.bf16.mxu0 %v900
        %1536 = vmatpush1.bf16.msra.mxu0 %v899
        %1537 = vmatprep.subr.bf16.mxu0 %v904
        %1538 = vmatpush1.bf16.msra.mxu0 %v903
        %1539 = vmatprep.subr.bf16.mxu0 %v908
        %1540 = vmatpush1.bf16.msra.mxu0 %v907
        %1541 = vmatprep.subr.bf16.mxu0 %v912
        %1542 = vmatpush1.bf16.msra.mxu0 %v911
        %1543 = vmatprep.subr.bf16.mxu0 %v916
        %1544 = vmatpush1.bf16.msra.mxu0 %v915
        %1545 = vmatprep.subr.bf16.mxu0 %v920
        %1546 = vmatpush1.bf16.msra.mxu0 %v919
        %1547 = vmatprep.subr.bf16.mxu0 %v924
        %1548 = vmatpush1.bf16.msra.mxu0 %v923
        %1549 = vmatprep.subr.bf16.mxu0 %v928
        %1550 = vmatpush1.bf16.msra.mxu0 %v927
        %1551 = vmatprep.subr.bf16.mxu0 %v932
        %1552 = vmatpush1.bf16.msra.mxu0 %v931
        %1553 = vmatprep.subr.bf16.mxu0 %v936
        %1554 = vmatpush1.bf16.msra.mxu0 %v935
        %1555 = vmatprep.subr.bf16.mxu0 %v940
        %1556 = vmatpush1.bf16.msra.mxu0 %v939
        %1557 = vmatprep.mubr.bf16.mxu0 %v1117
        %1558 = vmatmul.mubr.bf16.gmra.mrb[0].mxu0 %v1116
        %v1559 = vpop.f32.mrb[0].mxu0
        %v1560 = vadd.f32 %v1489, %v1559
        %v1561 = vpop.f32.mrb[0].mxu0
        %v1562 = vadd.f32 %v1491, %v1561
        %v1563 = vpop.f32.mrb[0].mxu0
        %v1564 = vadd.f32 %v1493, %v1563
        %v1565 = vpop.f32.mrb[0].mxu0
        %v1566 = vadd.f32 %v1495, %v1565
        %1567 = vmatprep.mubr.bf16.mxu0 %v1124
        %1568 = vmatmul.mubr.bf16.gmra.mrb[0].mxu0 %v1123
        %v1569 = vpop.f32.mrb[0].mxu0
        %v1570 = vadd.f32 %v1499, %v1569
        %v1571 = vpop.f32.mrb[0].mxu0
        %v1572 = vadd.f32 %v1501, %v1571
        %v1573 = vpop.f32.mrb[0].mxu0
        %v1574 = vadd.f32 %v1503, %v1573
        %v1575 = vpop.f32.mrb[0].mxu0
        %v1576 = vadd.f32 %v1505, %v1575
        %1577 = vmatprep.mubr.bf16.mxu0 %v1131
        %1578 = vmatmul.mubr.bf16.gmra.mrb[0].mxu0 %v1130
        %v1579 = vpop.f32.mrb[0].mxu0
        %v1580 = vadd.f32 %v1509, %v1579
        %v1581 = vpop.f32.mrb[0].mxu0
        %v1582 = vadd.f32 %v1511, %v1581
        %v1583 = vpop.f32.mrb[0].mxu0
        %v1584 = vadd.f32 %v1513, %v1583
        %v1585 = vpop.f32.mrb[0].mxu0
        %v1586 = vadd.f32 %v1515, %v1585
        %1587 = vmatprep.mubr.bf16.mxu0 %v1138
        %1588 = vmatmul.mubr.bf16.gmra.mrb[0].mxu0 %v1137
        %v1589 = vpop.f32.mrb[0].mxu0
        %v1590 = vadd.f32 %v1519, %v1589
        %v1591 = vpop.f32.mrb[0].mxu0
        %v1592 = vadd.f32 %v1521, %v1591
        %v1593 = vpop.f32.mrb[0].mxu0
        %v1594 = vpop.f32.mrb[0].mxu0
        %1595 = vdwg.mxu0
        %1596 = vmatprep.subr.bf16.mxu0 %v944
        %1597 = vmatpush1.bf16.msra.mxu0 %v943
        %1598 = vmatprep.subr.bf16.mxu0 %v948
        %1599 = vmatpush1.bf16.msra.mxu0 %v947
        %1600 = vmatprep.subr.bf16.mxu0 %v952
        %1601 = vmatpush1.bf16.msra.mxu0 %v951
        %1602 = vmatprep.subr.bf16.mxu0 %v956
        %1603 = vmatpush1.bf16.msra.mxu0 %v955
        %1604 = vmatprep.subr.bf16.mxu0 %v960
        %1605 = vmatpush1.bf16.msra.mxu0 %v959
        %1606 = vmatprep.subr.bf16.mxu0 %v964
        %1607 = vmatpush1.bf16.msra.mxu0 %v963
        %1608 = vmatprep.subr.bf16.mxu0 %v968
        %1609 = vmatpush1.bf16.msra.mxu0 %v967
        %1610 = vmatprep.subr.bf16.mxu0 %v972
        %1611 = vmatpush1.bf16.msra.mxu0 %v971
        %1612 = vmatprep.subr.bf16.mxu0 %v976
        %1613 = vmatpush1.bf16.msra.mxu0 %v975
        %1614 = vmatprep.subr.bf16.mxu0 %v980
        %1615 = vmatpush1.bf16.msra.mxu0 %v979
        %1616 = vmatprep.subr.bf16.mxu0 %v984
        %1617 = vmatpush1.bf16.msra.mxu0 %v983
        %1618 = vmatprep.subr.bf16.mxu0 %v988
        %1619 = vmatpush1.bf16.msra.mxu0 %v987
        %1620 = vmatprep.subr.bf16.mxu0 %v992
        %1621 = vmatpush1.bf16.msra.mxu0 %v991
        %1622 = vmatprep.subr.bf16.mxu0 %v996
        %1623 = vmatpush1.bf16.msra.mxu0 %v995
        %1624 = vmatprep.subr.bf16.mxu0 %v1000
        %1625 = vmatpush1.bf16.msra.mxu0 %v999
        %1626 = vmatprep.subr.bf16.mxu0 %v1004
        %1627 = vmatpush1.bf16.msra.mxu0 %v1003
        %1628 = vmatprep.mubr.bf16.mxu0 %v1119
        %1629 = vmatmul.mubr.bf16.gmra.mrb[0].mxu0 %v1118
        %v1630 = vpop.f32.mrb[0].mxu0
        %v1631 = vadd.f32 %v1560, %v1630
        %v1632 = vpop.f32.mrb[0].mxu0
        %v1633 = vadd.f32 %v1562, %v1632
        %v1634 = vpop.f32.mrb[0].mxu0
        %v1635 = vadd.f32 %v1564, %v1634
        %v1636 = vpop.f32.mrb[0].mxu0
        %v1637 = vadd.f32 %v1566, %v1636
        %1638 = vmatprep.mubr.bf16.mxu0 %v1126
        %1639 = vmatmul.mubr.bf16.gmra.mrb[0].mxu0 %v1125
        %v1640 = vpop.f32.mrb[0].mxu0
        %v1641 = vadd.f32 %v1570, %v1640
        %v1642 = vpop.f32.mrb[0].mxu0
        %v1643 = vadd.f32 %v1572, %v1642
        %v1644 = vpop.f32.mrb[0].mxu0
        %v1645 = vadd.f32 %v1574, %v1644
        %v1646 = vpop.f32.mrb[0].mxu0
        %v1647 = vadd.f32 %v1576, %v1646
        %1648 = vmatprep.mubr.bf16.mxu0 %v1133
        %1649 = vmatmul.mubr.bf16.gmra.mrb[0].mxu0 %v1132
        %v1650 = vpop.f32.mrb[0].mxu0
        %v1651 = vadd.f32 %v1580, %v1650
        %v1652 = vpop.f32.mrb[0].mxu0
        %v1653 = vadd.f32 %v1582, %v1652
        %v1654 = vpop.f32.mrb[0].mxu0
        %v1655 = vadd.f32 %v1584, %v1654
        %v1656 = vpop.f32.mrb[0].mxu0
        %v1657 = vadd.f32 %v1586, %v1656
        %1658 = vmatprep.mubr.bf16.mxu0 %v1140
        %1659 = vmatmul.mubr.bf16.gmra.mrb[0].mxu0 %v1139
        %v1660 = vpop.f32.mrb[0].mxu0
        %v1661 = vadd.f32 %v1590, %v1660
        %v1662 = vpop.f32.mrb[0].mxu0
        %v1663 = vadd.f32 %v1592, %v1662
        %v1664 = vpop.f32.mrb[0].mxu0
        %v1665 = vpop.f32.mrb[0].mxu0
        %1666 = vdwg.mxu0
        %1667 = vmatprep.subr.bf16.mxu0 %v1008
        %1668 = vmatpush1.bf16.msra.mxu0 %v1007
        %1669 = vmatprep.subr.bf16.mxu0 %v1012
        %1670 = vmatpush1.bf16.msra.mxu0 %v1011
        %1671 = vmatprep.subr.bf16.mxu0 %v1016
        %1672 = vmatpush1.bf16.msra.mxu0 %v1015
        %1673 = vmatprep.subr.bf16.mxu0 %v1020
        %1674 = vmatpush1.bf16.msra.mxu0 %v1019
        %1675 = vmatprep.subr.bf16.mxu0 %v1024
        %1676 = vmatpush1.bf16.msra.mxu0 %v1023
        %1677 = vmatprep.subr.bf16.mxu0 %v1028
        %1678 = vmatpush1.bf16.msra.mxu0 %v1027
        %1679 = vmatprep.subr.bf16.mxu0 %v1032
        %1680 = vmatpush1.bf16.msra.mxu0 %v1031
        %1681 = vmatprep.subr.bf16.mxu0 %v1036
        %1682 = vmatpush1.bf16.msra.mxu0 %v1035
        %1683 = vmatprep.subr.bf16.mxu0 0
        %1684 = vmatpush1.bf16.msra.mxu0 0
        %1685 = vmatprep.subr.bf16.mxu0 0
        %1686 = vmatpush1.bf16.msra.mxu0 0
        %1687 = vmatprep.subr.bf16.mxu0 0
        %1688 = vmatpush1.bf16.msra.mxu0 0
        %1689 = vmatprep.subr.bf16.mxu0 0
        %1690 = vmatpush1.bf16.msra.mxu0 0
        %1691 = vmatprep.subr.bf16.mxu0 0
        %1692 = vmatpush1.bf16.msra.mxu0 0
        %1693 = vmatprep.subr.bf16.mxu0 0
        %1694 = vmatpush1.bf16.msra.mxu0 0
        %1695 = vmatprep.subr.bf16.mxu0 0
        %1696 = vmatpush1.bf16.msra.mxu0 0
        %1697 = vmatprep.subr.bf16.mxu0 0
        %1698 = vmatpush1.bf16.msra.mxu0 0
        %1699 = vmatprep.mubr.bf16.mxu0 0
        %1700 = vmatmul.mubr.bf16.gmra.mrb[0].mxu0 %v1120
        %v1701 = vpop.f32.mrb[0].mxu0
        %v1702 = vadd.f32 %v1631, %v1701
        %v1703 = vpop.f32.mrb[0].mxu0
        %v1704 = vadd.f32 %v1633, %v1703
        %v1705 = vpop.f32.mrb[0].mxu0
        %v1706 = vadd.f32 %v1635, %v1705
        %v1707 = vpop.f32.mrb[0].mxu0
        %v1708 = vadd.f32 %v1637, %v1707
        %1709 = vmatprep.mubr.bf16.mxu0 0
        %1710 = vmatmul.mubr.bf16.gmra.mrb[0].mxu0 %v1127
        %v1711 = vpop.f32.mrb[0].mxu0
        %v1712 = vadd.f32 %v1641, %v1711
        %v1713 = vpop.f32.mrb[0].mxu0
        %v1714 = vadd.f32 %v1643, %v1713
        %v1715 = vpop.f32.mrb[0].mxu0
        %v1716 = vadd.f32 %v1645, %v1715
        %v1717 = vpop.f32.mrb[0].mxu0
        %v1718 = vadd.f32 %v1647, %v1717
        %1719 = vmatprep.mubr.bf16.mxu0 0
        %1720 = vmatmul.mubr.bf16.gmra.mrb[0].mxu0 %v1134
        %v1721 = vpop.f32.mrb[0].mxu0
        %v1722 = vadd.f32 %v1651, %v1721
        %v1723 = vpop.f32.mrb[0].mxu0
        %v1724 = vadd.f32 %v1653, %v1723
        %v1725 = vpop.f32.mrb[0].mxu0
        %v1726 = vadd.f32 %v1655, %v1725
        %v1727 = vpop.f32.mrb[0].mxu0
        %v1728 = vadd.f32 %v1657, %v1727
        %1729 = vmatprep.mubr.bf16.mxu0 0
        %1730 = vmatmul.mubr.bf16.gmra.mrb[0].mxu0 %v1141
        %v1731 = vpop.f32.mrb[0].mxu0
        %v1732 = vadd.f32 %v1661, %v1731
        %v1733 = vpop.f32.mrb[0].mxu0
        %v1734 = vadd.f32 %v1663, %v1733
        %v1735 = vpop.f32.mrb[0].mxu0
        %v1736 = vpop.f32.mrb[0].mxu0
        %1737 = vdwg.mxu0
        %v1738 = vadd.f32 %v645, %v1418
        %v1739 = vadd.f32 %v646, %v1420
        %v1740 = vadd.f32 %v647, %v1702
        %v1741 = vadd.f32 %v648, %v1704
        %v1742 = vadd.f32 %v649, %v1422
        %v1743 = vadd.f32 %v650, %v1424
        %v1744 = vadd.f32 %v651, %v1706
        %v1745 = vadd.f32 %v652, %v1708
        %v1746 = vadd.f32 %v653, %v1428
        %v1747 = vadd.f32 %v654, %v1430
        %v1748 = vadd.f32 %v655, %v1712
        %v1749 = vadd.f32 %v656, %v1714
        %v1750 = vadd.f32 %v657, %v1432
        %v1751 = vadd.f32 %v658, %v1434
        %v1752 = vadd.f32 %v659, %v1716
        %v1753 = vadd.f32 %v660, %v1718
        %v1754 = vadd.f32 %v661, %v1438
        %v1755 = vadd.f32 %v662, %v1440
        %v1756 = vadd.f32 %v663, %v1722
        %v1757 = vadd.f32 %v664, %v1724
        %v1758 = vadd.f32 %v665, %v1442
        %v1759 = vadd.f32 %v666, %v1444
        %v1760 = vadd.f32 %v667, %v1726
        %v1761 = vadd.f32 %v668, %v1728
        %v1762 = vadd.f32 %v669, %v1448
        %v1763 = vadd.f32 %v670, %v1450
        %v1764 = vadd.f32 %v671, %v1732
        %v1765 = vadd.f32 %v672, %v1734
        %1766 = vst [vmem:[#allocation2] sm:$0xff] %v1738
        %1767 = vst [vmem:[#allocation2 + $0x8] sm:$0xff] %v1739
        %1768 = vst [vmem:[#allocation2 + $0x10] sm:$0xff] %v1740
        %1769 = vst [vmem:[#allocation2 + $0x18] sm:$0xff] %v1741
        %1770 = vst [vmem:[#allocation2 + $0x20] sm:$0xff] %v1742
        %1771 = vst [vmem:[#allocation2 + $0x28] sm:$0xff] %v1743
        %1772 = vst [vmem:[#allocation2 + $0x30] sm:$0xff] %v1744
        %1773 = vst [vmem:[#allocation2 + $0x38] sm:$0xff] %v1745
        %1774 = vst [vmem:[#allocation2 + $0x40] sm:$0xff] %v1746
        %1775 = vst [vmem:[#allocation2 + $0x48] sm:$0xff] %v1747
        %1776 = vst [vmem:[#allocation2 + $0x50] sm:$0xff] %v1748
        %1777 = vst [vmem:[#allocation2 + $0x58] sm:$0xff] %v1749
        %1778 = vst [vmem:[#allocation2 + $0x60] sm:$0xff] %v1750
        %1779 = vst [vmem:[#allocation2 + $0x68] sm:$0xff] %v1751
        %1780 = vst [vmem:[#allocation2 + $0x70] sm:$0xff] %v1752
        %1781 = vst [vmem:[#allocation2 + $0x78] sm:$0xff] %v1753
        %1782 = vst [vmem:[#allocation2 + $0x80] sm:$0xff] %v1754
        %1783 = vst [vmem:[#allocation2 + $0x88] sm:$0xff] %v1755
        %1784 = vst [vmem:[#allocation2 + $0x90] sm:$0xff] %v1756
        %1785 = vst [vmem:[#allocation2 + $0x98] sm:$0xff] %v1757
        %1786 = vst [vmem:[#allocation2 + $0xa0] sm:$0xff] %v1758
        %1787 = vst [vmem:[#allocation2 + $0xa8] sm:$0xff] %v1759
        %1788 = vst [vmem:[#allocation2 + $0xb0] sm:$0xff] %v1760
        %1789 = vst [vmem:[#allocation2 + $0xb8] sm:$0xff] %v1761
        %1790 = vst [vmem:[#allocation2 + $0xc0] sm:$0xff] %v1762
        %1791 = vst [vmem:[#allocation2 + $0xc8] sm:$0xff] %v1763
        %1792 = vst [vmem:[#allocation2 + $0xd0] sm:$0xff] %v1764
        %1793 = vst [vmem:[#allocation2 + $0xd8] sm:$0xff] %v1765
        %p1794 = scmp.eq.s32.totalorder %s22, 6
        // Predicated region
        $region90: #{embedding_forward.6} parent=76 // pred_check
          %p1795 = pneg %p1794
        $region91: #{embedding_forward.6} parent=76 // pred_check_branch
          %1797 = sbr.rel (%p1795) target = $region93
        $region92: #{embedding_forward.6} parent=76 // pred_region
          %v1798 = vld [vmem:[#allocation2] sm:$0xff]
          %v1799 = vld [vmem:[#allocation2 + $0x8] sm:$0xff]
          %v1800 = vld [vmem:[#allocation2 + $0x10] sm:$0xff]
          %v1801 = vld [vmem:[#allocation2 + $0x18] sm:$0xff]
          %v1802 = vld [vmem:[#allocation2 + $0x20] sm:$0xff]
          %v1803 = vld [vmem:[#allocation2 + $0x28] sm:$0xff]
          %v1804 = vld [vmem:[#allocation2 + $0x30] sm:$0xff]
          %v1805 = vld [vmem:[#allocation2 + $0x38] sm:$0xff]
          %v1806 = vld [vmem:[#allocation2 + $0x40] sm:$0xff]
          %v1807 = vld [vmem:[#allocation2 + $0x48] sm:$0xff]
          %v1808 = vld [vmem:[#allocation2 + $0x50] sm:$0xff]
          %v1809 = vld [vmem:[#allocation2 + $0x58] sm:$0xff]
          %v1810 = vld [vmem:[#allocation2 + $0x60] sm:$0xff]
          %v1811 = vld [vmem:[#allocation2 + $0x68] sm:$0xff]
          %v1812 = vld [vmem:[#allocation2 + $0x70] sm:$0xff]
          %v1813 = vld [vmem:[#allocation2 + $0x78] sm:$0xff]
          %v1814 = vld [vmem:[#allocation2 + $0x80] sm:$0xff]
          %v1815 = vld [vmem:[#allocation2 + $0x88] sm:$0xff]
          %v1816 = vld [vmem:[#allocation2 + $0x90] sm:$0xff]
          %v1817 = vld [vmem:[#allocation2 + $0x98] sm:$0xff]
          %v1818 = vld [vmem:[#allocation2 + $0xa0] sm:$0xff]
          %v1819 = vld [vmem:[#allocation2 + $0xa8] sm:$0xff]
          %v1820 = vld [vmem:[#allocation2 + $0xb0] sm:$0xff]
          %v1821 = vld [vmem:[#allocation2 + $0xb8] sm:$0xff]
          %v1822 = vld [vmem:[#allocation2 + $0xc0] sm:$0xff]
          %v1823 = vld [vmem:[#allocation2 + $0xc8] sm:$0xff]
          %v1824 = vld [vmem:[#allocation2 + $0xd0] sm:$0xff]
          %v1825 = vld [vmem:[#allocation2 + $0xd8] sm:$0xff]
          %v1826 = vld [vmem:[%s603] sm:$0xf]
          %v1828 = vlaneseq
          %v1829 = vshrl.u32 %v1828, 7
          %v1830 = vsub.s32 0, %v1829
          %v1831 = vrot.slane %v1826, %v1830
          %v1832 = vlaneseq
          %v1833 = vshrl.u32 %v1832, 7
          %v1834 = vsub.s32 1, %v1833
          %v1835 = vrot.slane %v1826, %v1834
          %v1836 = vlaneseq
          %v1837 = vshrl.u32 %v1836, 7
          %v1838 = vsub.s32 2, %v1837
          %v1839 = vrot.slane %v1826, %v1838
          %v1840 = vlaneseq
          %v1841 = vshrl.u32 %v1840, 7
          %v1842 = vsub.s32 3, %v1841
          %v1843 = vrot.slane %v1826, %v1842
          %v1848 = vmul.f32 %v1798, %v1831
          %v1849 = vmul.f32 %v1799, %v1835
          %v1850 = vmul.f32 %v1800, %v1839
          %v1851 = vmul.f32 %v1801, %v1843
          %v1852 = vmul.f32 %v1802, %v1831
          %v1853 = vmul.f32 %v1803, %v1835
          %v1854 = vmul.f32 %v1804, %v1839
          %v1855 = vmul.f32 %v1805, %v1843
          %v1856 = vmul.f32 %v1806, %v1831
          %v1857 = vmul.f32 %v1807, %v1835
          %v1858 = vmul.f32 %v1808, %v1839
          %v1859 = vmul.f32 %v1809, %v1843
          %v1860 = vmul.f32 %v1810, %v1831
          %v1861 = vmul.f32 %v1811, %v1835
          %v1862 = vmul.f32 %v1812, %v1839
          %v1863 = vmul.f32 %v1813, %v1843
          %v1864 = vmul.f32 %v1814, %v1831
          %v1865 = vmul.f32 %v1815, %v1835
          %v1866 = vmul.f32 %v1816, %v1839
          %v1867 = vmul.f32 %v1817, %v1843
          %v1868 = vmul.f32 %v1818, %v1831
          %v1869 = vmul.f32 %v1819, %v1835
          %v1870 = vmul.f32 %v1820, %v1839
          %v1871 = vmul.f32 %v1821, %v1843
          %v1872 = vmul.f32 %v1822, %v1831
          %v1873 = vmul.f32 %v1823, %v1835
          %v1874 = vmul.f32 %v1824, %v1839
          %v1875 = vmul.f32 %v1825, %v1843
          %v1876 = vld [vmem:[%s608] sm:$0xf]
          %v1878 = vlaneseq
          %v1879 = vshrl.u32 %v1878, 7
          %v1880 = vsub.s32 0, %v1879
          %v1881 = vrot.slane %v1876, %v1880
          %v1882 = vlaneseq
          %v1883 = vshrl.u32 %v1882, 7
          %v1884 = vsub.s32 1, %v1883
          %v1885 = vrot.slane %v1876, %v1884
          %v1886 = vlaneseq
          %v1887 = vshrl.u32 %v1886, 7
          %v1888 = vsub.s32 2, %v1887
          %v1889 = vrot.slane %v1876, %v1888
          %v1890 = vlaneseq
          %v1891 = vshrl.u32 %v1890, 7
          %v1892 = vsub.s32 3, %v1891
          %v1893 = vrot.slane %v1876, %v1892
          %v1898 = vadd.f32 %v1848, %v1881
          %v1899 = vadd.f32 %v1849, %v1885
          %v1900 = vadd.f32 %v1850, %v1889
          %v1901 = vadd.f32 %v1851, %v1893
          %v1902 = vadd.f32 %v1852, %v1881
          %v1903 = vadd.f32 %v1853, %v1885
          %v1904 = vadd.f32 %v1854, %v1889
          %v1905 = vadd.f32 %v1855, %v1893
          %v1906 = vadd.f32 %v1856, %v1881
          %v1907 = vadd.f32 %v1857, %v1885
          %v1908 = vadd.f32 %v1858, %v1889
          %v1909 = vadd.f32 %v1859, %v1893
          %v1910 = vadd.f32 %v1860, %v1881
          %v1911 = vadd.f32 %v1861, %v1885
          %v1912 = vadd.f32 %v1862, %v1889
          %v1913 = vadd.f32 %v1863, %v1893
          %v1914 = vadd.f32 %v1864, %v1881
          %v1915 = vadd.f32 %v1865, %v1885
          %v1916 = vadd.f32 %v1866, %v1889
          %v1917 = vadd.f32 %v1867, %v1893
          %v1918 = vadd.f32 %v1868, %v1881
          %v1919 = vadd.f32 %v1869, %v1885
          %v1920 = vadd.f32 %v1870, %v1889
          %v1921 = vadd.f32 %v1871, %v1893
          %v1922 = vadd.f32 %v1872, %v1881
          %v1923 = vadd.f32 %v1873, %v1885
          %v1924 = vadd.f32 %v1874, %v1889
          %v1925 = vadd.f32 %v1875, %v1893
          %vm1926 = vcmp.gt.f32.partialorder %v1898, 0.0
          %vm1927 = vcmp.gt.f32.partialorder %v1899, 0.0
          %vm1928 = vcmp.gt.f32.partialorder %v1900, 0.0
          %vm1929 = vcmp.gt.f32.partialorder %v1901, 0.0
          %vm1930 = vcmp.gt.f32.partialorder %v1902, 0.0
          %vm1931 = vcmp.gt.f32.partialorder %v1903, 0.0
          %vm1932 = vcmp.gt.f32.partialorder %v1904, 0.0
          %vm1933 = vcmp.gt.f32.partialorder %v1905, 0.0
          %vm1934 = vcmp.gt.f32.partialorder %v1906, 0.0
          %vm1935 = vcmp.gt.f32.partialorder %v1907, 0.0
          %vm1936 = vcmp.gt.f32.partialorder %v1908, 0.0
          %vm1937 = vcmp.gt.f32.partialorder %v1909, 0.0
          %vm1938 = vcmp.gt.f32.partialorder %v1910, 0.0
          %vm1939 = vcmp.gt.f32.partialorder %v1911, 0.0
          %vm1940 = vcmp.gt.f32.partialorder %v1912, 0.0
          %vm1941 = vcmp.gt.f32.partialorder %v1913, 0.0
          %vm1942 = vcmp.gt.f32.partialorder %v1914, 0.0
          %vm1943 = vcmp.gt.f32.partialorder %v1915, 0.0
          %vm1944 = vcmp.gt.f32.partialorder %v1916, 0.0
          %vm1945 = vcmp.gt.f32.partialorder %v1917, 0.0
          %vm1946 = vcmp.gt.f32.partialorder %v1918, 0.0
          %vm1947 = vcmp.gt.f32.partialorder %v1919, 0.0
          %vm1948 = vcmp.gt.f32.partialorder %v1920, 0.0
          %vm1949 = vcmp.gt.f32.partialorder %v1921, 0.0
          %vm1950 = vcmp.gt.f32.partialorder %v1922, 0.0
          %vm1951 = vcmp.gt.f32.partialorder %v1923, 0.0
          %vm1952 = vcmp.gt.f32.partialorder %v1924, 0.0
          %vm1953 = vcmp.gt.f32.partialorder %v1925, 0.0
          %v1954 = vmul.f32 %v1898, 0.1
          %v1955 = vmul.f32 %v1899, 0.1
          %v1956 = vmul.f32 %v1900, 0.1
          %v1957 = vmul.f32 %v1901, 0.1
          %v1958 = vmul.f32 %v1902, 0.1
          %v1959 = vmul.f32 %v1903, 0.1
          %v1960 = vmul.f32 %v1904, 0.1
          %v1961 = vmul.f32 %v1905, 0.1
          %v1962 = vmul.f32 %v1906, 0.1
          %v1963 = vmul.f32 %v1907, 0.1
          %v1964 = vmul.f32 %v1908, 0.1
          %v1965 = vmul.f32 %v1909, 0.1
          %v1966 = vmul.f32 %v1910, 0.1
          %v1967 = vmul.f32 %v1911, 0.1
          %v1968 = vmul.f32 %v1912, 0.1
          %v1969 = vmul.f32 %v1913, 0.1
          %v1970 = vmul.f32 %v1914, 0.1
          %v1971 = vmul.f32 %v1915, 0.1
          %v1972 = vmul.f32 %v1916, 0.1
          %v1973 = vmul.f32 %v1917, 0.1
          %v1974 = vmul.f32 %v1918, 0.1
          %v1975 = vmul.f32 %v1919, 0.1
          %v1976 = vmul.f32 %v1920, 0.1
          %v1977 = vmul.f32 %v1921, 0.1
          %v1978 = vmul.f32 %v1922, 0.1
          %v1979 = vmul.f32 %v1923, 0.1
          %v1980 = vmul.f32 %v1924, 0.1
          %v1981 = vmul.f32 %v1925, 0.1
          %v1982 = vsel %vm1926, %v1898, %v1954
          %v1983 = vsel %vm1927, %v1899, %v1955
          %v1984 = vsel %vm1928, %v1900, %v1956
          %v1985 = vsel %vm1929, %v1901, %v1957
          %v1986 = vsel %vm1930, %v1902, %v1958
          %v1987 = vsel %vm1931, %v1903, %v1959
          %v1988 = vsel %vm1932, %v1904, %v1960
          %v1989 = vsel %vm1933, %v1905, %v1961
          %v1990 = vsel %vm1934, %v1906, %v1962
          %v1991 = vsel %vm1935, %v1907, %v1963
          %v1992 = vsel %vm1936, %v1908, %v1964
          %v1993 = vsel %vm1937, %v1909, %v1965
          %v1994 = vsel %vm1938, %v1910, %v1966
          %v1995 = vsel %vm1939, %v1911, %v1967
          %v1996 = vsel %vm1940, %v1912, %v1968
          %v1997 = vsel %vm1941, %v1913, %v1969
          %v1998 = vsel %vm1942, %v1914, %v1970
          %v1999 = vsel %vm1943, %v1915, %v1971
          %v2000 = vsel %vm1944, %v1916, %v1972
          %v2001 = vsel %vm1945, %v1917, %v1973
          %v2002 = vsel %vm1946, %v1918, %v1974
          %v2003 = vsel %vm1947, %v1919, %v1975
          %v2004 = vsel %vm1948, %v1920, %v1976
          %v2005 = vsel %vm1949, %v1921, %v1977
          %v2006 = vsel %vm1950, %v1922, %v1978
          %v2007 = vsel %vm1951, %v1923, %v1979
          %v2008 = vsel %vm1952, %v1924, %v1980
          %v2009 = vsel %vm1953, %v1925, %v1981
          %v2010 = vpack.c.bf16 %v1986, %v1982
          %v2011 = vpack.c.bf16 %v1987, %v1983
          %v2012 = vpack.c.bf16 %v1988, %v1984
          %v2013 = vpack.c.bf16 %v1989, %v1985
          %v2014 = vpack.c.bf16 %v1994, %v1990
          %v2015 = vpack.c.bf16 %v1995, %v1991
          %v2016 = vpack.c.bf16 %v1996, %v1992
          %v2017 = vpack.c.bf16 %v1997, %v1993
          %v2018 = vpack.c.bf16 %v2002, %v1998
          %v2019 = vpack.c.bf16 %v2003, %v1999
          %v2020 = vpack.c.bf16 %v2004, %v2000
          %v2021 = vpack.c.bf16 %v2005, %v2001
          %v2022 = vpack.c.bf16 %v2006, %v2006
          %v2023 = vpack.c.bf16 %v2007, %v2007
          %v2024 = vpack.c.bf16 %v2008, %v2008
          %v2025 = vpack.c.bf16 %v2009, %v2009
          %v2042 = vunpack.c.l.b16 %v2010
          %v2043 = vunpack.c.l.b16 %v2011
          %v2044 = vunpack.c.l.b16 %v2012
          %v2045 = vunpack.c.l.b16 %v2013
          %v2046 = vunpack.c.h.b16 %v2010
          %v2047 = vunpack.c.h.b16 %v2011
          %v2048 = vunpack.c.h.b16 %v2012
          %v2049 = vunpack.c.h.b16 %v2013
          %v2050 = vunpack.c.l.b16 %v2014
          %v2051 = vunpack.c.l.b16 %v2015
          %v2052 = vunpack.c.l.b16 %v2016
          %v2053 = vunpack.c.l.b16 %v2017
          %v2054 = vunpack.c.h.b16 %v2014
          %v2055 = vunpack.c.h.b16 %v2015
          %v2056 = vunpack.c.h.b16 %v2016
          %v2057 = vunpack.c.h.b16 %v2017
          %v2058 = vunpack.c.l.b16 %v2018
          %v2059 = vunpack.c.l.b16 %v2019
          %v2060 = vunpack.c.l.b16 %v2020
          %v2061 = vunpack.c.l.b16 %v2021
          %v2062 = vunpack.c.h.b16 %v2018
          %v2063 = vunpack.c.h.b16 %v2019
          %v2064 = vunpack.c.h.b16 %v2020
          %v2065 = vunpack.c.h.b16 %v2021
          %v2066 = vunpack.c.l.b16 %v2022
          %v2067 = vunpack.c.l.b16 %v2023
          %v2068 = vunpack.c.l.b16 %v2024
          %v2069 = vunpack.c.l.b16 %v2025
          %v2070 = vpack.c.b16 %v2043, %v2042
          %v2071 = vpack.c.b16 %v2045, %v2044
          %v2072 = vpack.c.b16 %v2047, %v2046
          %v2073 = vpack.c.b16 %v2049, %v2048
          %v2074 = vpack.c.b16 %v2051, %v2050
          %v2075 = vpack.c.b16 %v2053, %v2052
          %v2076 = vpack.c.b16 %v2055, %v2054
          %v2077 = vpack.c.b16 %v2057, %v2056
          %v2078 = vpack.c.b16 %v2059, %v2058
          %v2079 = vpack.c.b16 %v2061, %v2060
          %v2080 = vpack.c.b16 %v2063, %v2062
          %v2081 = vpack.c.b16 %v2065, %v2064
          %v2082 = vpack.c.b16 %v2067, %v2066
          %v2083 = vpack.c.b16 %v2069, %v2068
          %2098 = vst [vmem:[%s595] sm:$0xff] %v2070
          %2099 = vst [vmem:[%s595 + $0x8] sm:$0xff] %v2071
          %2100 = vst [vmem:[%s595 + $0x10] sm:$0xff] %v2072
          %2101 = vst [vmem:[%s595 + $0x18] sm:$0xff] %v2073
          %2102 = vst [vmem:[%s595 + $0x20] sm:$0xff] %v2074
          %2103 = vst [vmem:[%s595 + $0x28] sm:$0xff] %v2075
          %2104 = vst [vmem:[%s595 + $0x30] sm:$0xff] %v2076
          %2105 = vst [vmem:[%s595 + $0x38] sm:$0xff] %v2077
          %2106 = vst [vmem:[%s595 + $0x40] sm:$0xff] %v2078
          %2107 = vst [vmem:[%s595 + $0x48] sm:$0xff] %v2079
          %2108 = vst [vmem:[%s595 + $0x50] sm:$0xff] %v2080
          %2109 = vst [vmem:[%s595 + $0x58] sm:$0xff] %v2081
          %2110 = vst [vmem:[%s595 + $0x60] sm:$0xff] %v2082
          %2111 = vst [vmem:[%s595 + $0x68] sm:$0xff] %v2083
        $region93: #{embedding_forward.6} parent=76 // pred_fallthru
          _
        %s2112 = sand.u32 %s152, 1
        %s2113 = sand.u32 %s152, 1
        %s2114 = smul.addr %s2113, 112
        %s2115 = scalar_lea.vmem [#allocation5], %s2114
        // Predicated region
        $region94: #{embedding_forward.6} parent=76 // pred_check
          %p2116 = pneg %p162
        $region95: #{embedding_forward.6} parent=76 // pred_check_branch
          %2118 = sbr.rel (%p2116) target = $region97
        $region96: #{embedding_forward.6} parent=76 // pred_region
          %s2119 = smul.u32 7, %s20
          %s2120 = smul.u32 4, %s21
          %s2121 = smul.addr %s2119, 8
          %s2122 = sadd.s32 %s2120, %s2121
          %s2123 = smul.addr %s2122, 4
          %s2124 = scalar_lea.vmem %s4, %s2123
          // Predicated region
          $region98: #{embedding_forward.6} parent=96 // pred_check
            _
          $region99: #{embedding_forward.6} parent=96 // pred_check_branch
            %2126 = sbr.rel (0) target = $region101
          $region100: #{embedding_forward.6} parent=96 // pred_region
            // Predicated region
            $region102: #{embedding_forward.6} parent=100 // pred_check
              _
            $region103: #{embedding_forward.6} parent=100 // pred_check_branch
              %2128 = sbr.rel (0) target = $region105
            $region104: #{embedding_forward.6} parent=100 // pred_region
              loop: start=0, step=1, limit=1
              $region106: #{embedding_forward.6} parent=104 // loop_pre_header
                _
              $region107: #{embedding_forward.6} parent=104 // loop_header
                %s2130 = sphi 0, %s2134
                %p2131 = scmp.ge.s32.totalorder %s2130, 1
                %s2135 = sphi %s2115, %s2115
                %s2136 = sphi %s2124, %s2124
              $region108: #{embedding_forward.6} parent=104 // loop_header_branch
                %2133 = sbr.rel (%p2131) target = $region112
              $region109: #{embedding_forward.6} parent=104 // loop_body
                %v2137 = vld [vmem:[%s2135] sm:$0xff]
                %2138 = vst [vmem:[%s2136] sm:$0xff] %v2137
                %v2139 = vld [vmem:[%s2135 + $0x8] sm:$0xff]
                %2140 = vst [vmem:[%s2136 + $0x8] sm:$0xff] %v2139
                %v2141 = vld [vmem:[%s2135 + $0x10] sm:$0xff]
                %2142 = vst [vmem:[%s2136 + $0x20] sm:$0xff] %v2141
                %v2143 = vld [vmem:[%s2135 + $0x18] sm:$0xff]
                %2144 = vst [vmem:[%s2136 + $0x28] sm:$0xff] %v2143
                %v2145 = vld [vmem:[%s2135 + $0x20] sm:$0xff]
                %2146 = vst [vmem:[%s2136 + $0x40] sm:$0xff] %v2145
                %v2147 = vld [vmem:[%s2135 + $0x28] sm:$0xff]
                %2148 = vst [vmem:[%s2136 + $0x48] sm:$0xff] %v2147
                %v2149 = vld [vmem:[%s2135 + $0x30] sm:$0xff]
                %2150 = vst [vmem:[%s2136 + $0x60] sm:$0xff] %v2149
                %v2151 = vld [vmem:[%s2135 + $0x38] sm:$0xff]
                %2152 = vst [vmem:[%s2136 + $0x68] sm:$0xff] %v2151
                %v2153 = vld [vmem:[%s2135 + $0x40] sm:$0xff]
                %2154 = vst [vmem:[%s2136 + $0x80] sm:$0xff] %v2153
                %v2155 = vld [vmem:[%s2135 + $0x48] sm:$0xff]
                %2156 = vst [vmem:[%s2136 + $0x88] sm:$0xff] %v2155
                %v2157 = vld [vmem:[%s2135 + $0x50] sm:$0xff]
                %2158 = vst [vmem:[%s2136 + $0xa0] sm:$0xff] %v2157
                %v2159 = vld [vmem:[%s2135 + $0x58] sm:$0xff]
                %2160 = vst [vmem:[%s2136 + $0xa8] sm:$0xff] %v2159
                %v2161 = vld [vmem:[%s2135 + $0x60] sm:$0xff]
                %2162 = vst [vmem:[%s2136 + $0xc0] sm:$0xff] %v2161
                %v2163 = vld [vmem:[%s2135 + $0x68] sm:$0xff]
                %2164 = vst [vmem:[%s2136 + $0xc8] sm:$0xff] %v2163
              $region110: #{embedding_forward.6} parent=104 // loop_footer
                %s2134 = sadd.s32 1, %s2130
              $region111: #{embedding_forward.6} parent=104 // loop_footer_branch
                %2129 = sbr.rel target = $region107
              $region112: #{embedding_forward.6} parent=104 // loop_exit
                _
            $region105: #{embedding_forward.6} parent=100 // pred_fallthru
              _
            // Predicated region
            $region113: #{embedding_forward.6} parent=100 // pred_check
              _
            $region114: #{embedding_forward.6} parent=100 // pred_check_branch
              %2166 = sbr.rel target = $region116
            $region115: #{embedding_forward.6} parent=100 // pred_region
              _
            $region116: #{embedding_forward.6} parent=100 // pred_fallthru
              _
          $region101: #{embedding_forward.6} parent=96 // pred_fallthru
            _
          %2167 = vnop
        $region97: #{embedding_forward.6} parent=76 // pred_fallthru
          _
      $region77: #{embedding_forward.6} parent=5 // pred_fallthru
        _
      %p2168 = scmp.le.s32.totalorder 2, %s10
      // Predicated region
      $region117: #{embedding_forward.6} parent=5 // pred_check
        %p2169 = pneg %p2168
      $region118: #{embedding_forward.6} parent=5 // pred_check_branch
        %2171 = sbr.rel (%p2169) target = $region120
      $region119: #{embedding_forward.6} parent=5 // pred_region
        %s2172 = ssub.s32 %s10, 2
        // Predicated region
        $region121: #{embedding_forward.6} parent=119 // pred_check
          %p2173 = pneg %p168
        $region122: #{embedding_forward.6} parent=119 // pred_check_branch
          %2175 = sbr.rel (%p2173) target = $region124
        $region123: #{embedding_forward.6} parent=119 // pred_region
          %s2176 = sand.u32 %s153, 1
          %s2177 = sand.u32 %s153, 1
          %s2178 = smul.addr %s2177, 112
          %s2179 = scalar_lea.vmem [#allocation5], %s2178
        $region124: #{embedding_forward.6} parent=119 // pred_fallthru
          _
      $region120: #{embedding_forward.6} parent=5 // pred_fallthru
        _
    $region6: #{embedding_forward.6} parent=1 // loop_footer
      %s14 = sadd.s32 1, %s10
    $region7: #{embedding_forward.6} parent=1 // loop_footer_branch
      %9 = sbr.rel target = $region3
    $region8: #{embedding_forward.6} parent=1 // loop_exit
      _

// kernel: embedding_forward.7
$region0: #{embedding_forward.7}
  #allocation0 [shape = 'u32[]', space=smem, size = 0x4, offset = 0x4, fixed_abs, tag = 'smem constant byte address 0x4 - core index']
  #allocation1 [shape = 'u32[144,128]{1,0:T(1,128)}', space=vmem, size = 0x12000, scoped, tag = 'internal scratch']
  #allocation2 [shape = 'f32[8,128]{1,0:T(8,128)}', space=vmem, size = 0x1000, scoped, tag = 'scratch operand']
  %s0 = inlined_call_operand.vmem [shape: bf16[8,25600], index: 0, kind: input, shape index: {}]
  %s1 = inlined_call_operand.vmem [shape: s8[25600,128], index: 1, kind: input, shape index: {}]
  %s2 = inlined_call_operand.vmem [shape: f32[1,128], index: 2, kind: input, shape index: {}]
  %s3 = inlined_call_operand.vmem [shape: f32[1,128], index: 3, kind: input, shape index: {}]
  %s4 = inlined_call_operand.vmem [shape: f32[128,128], index: 4, kind: input, shape index: {}]
  %s5 = inlined_call_operand.vmem [shape: f32[1,128], index: 5, kind: input, shape index: {}]
  %s6 = inlined_call_operand.vmem [shape: f32[8,128], index: 6, kind: output, shape index: {}]
  %s7 = sld [smem:[#allocation0]]
  $region65: #{embedding_forward.7} parent=0
    _
  %s9 = ssub.s32 1, %s7
  %s10 = scalar_select 0, %s9, %s7
  loop: start=0, step=1, limit=10
  $region2: #{embedding_forward.7} parent=0 // loop_pre_header
    _
  $region3: #{embedding_forward.7} parent=0 // loop_header
    %s12 = sphi 0, %s16
    %p13 = scmp.ge.s32.totalorder %s12, 10
    %s22 = sphi 0, %s24
    %s25 = sphi 0, %s22
    %s26 = sphi 0, %s25
    %s42 = sphi 0, %s26
    %s48 = sphi 0, %s50
    %s51 = sphi 0, %s48
    %s52 = sphi 0, %s51
    %s68 = sphi 0, %s52
    %s72 = sphi 0, %s72
    %s74 = sphi 0, %s72
    %s75 = sphi 0, %s74
    %s89 = sphi 0, %s75
    %s93 = sphi 0, %s93
    %s95 = sphi 0, %s93
    %s96 = sphi 0, %s95
    %s110 = sphi 0, %s96
    %s114 = sphi 0, %s114
    %s116 = sphi 0, %s114
    %s117 = sphi 0, %s116
    %s131 = sphi 0, %s117
    %s135 = sphi 0, %s135
    %s137 = sphi 0, %s135
    %s138 = sphi 0, %s137
    %s152 = sphi 0, %s138
    %s156 = sphi 0, %s156
    %s158 = sphi 0, %s156
    %s159 = sphi 0, %s158
    %s173 = sphi 0, %s159
  $region4: #{embedding_forward.7} parent=0 // loop_header_branch
    %15 = sbr.rel (%p13) target = $region8
  $region5: #{embedding_forward.7} parent=0 // loop_body
    %s17 = ssub.s32 %s12, 1
    %s18 = ssub.s32 %s12, 2
    %s19 = sadd.s32 %s12, 1
    %s20 = ssub.s32 %s12, %s19
    %p21 = scmp.eq.s32.totalorder %s20, 0
    %s23 = sadd.s32 %s22, 1
    %s24 = scalar_select %p21, %s22, %s23
    %p27 = pneg %p21
    %p28 = scmp.eq.s32.totalorder %s12, 7
    %p29 = por %p27, %p28
    %p30 = scmp.ne.s32.totalorder %s22, %s25
    %p31 = scmp.eq.s32.totalorder %s12, 0
    %p32 = por %p30, %p31
    %p33 = scmp.ne.s32.totalorder %s22, %s25
    %p34 = scmp.eq.s32.totalorder %s17, 7
    %p35 = por %p33, %p34
    %p36 = scmp.ne.s32.totalorder %s25, %s26
    %p37 = scmp.eq.s32.totalorder %s17, 0
    %p38 = por %p36, %p37
    %p39 = scmp.ne.s32.totalorder %s25, %s26
    %p40 = scmp.eq.s32.totalorder %s18, 7
    %p41 = por %p39, %p40
    %p43 = scmp.ne.s32.totalorder %s26, %s42
    %p44 = scmp.eq.s32.totalorder %s18, 0
    %p45 = por %p43, %p44
    %s46 = ssub.s32 %s12, %s19
    %p47 = scmp.eq.s32.totalorder %s46, 0
    %s49 = sadd.s32 %s48, 1
    %s50 = scalar_select %p47, %s48, %s49
    %p53 = pneg %p47
    %p54 = scmp.eq.s32.totalorder %s12, 7
    %p55 = por %p53, %p54
    %p56 = scmp.ne.s32.totalorder %s48, %s51
    %p57 = scmp.eq.s32.totalorder %s12, 0
    %p58 = por %p56, %p57
    %p59 = scmp.ne.s32.totalorder %s48, %s51
    %p60 = scmp.eq.s32.totalorder %s17, 7
    %p61 = por %p59, %p60
    %p62 = scmp.ne.s32.totalorder %s51, %s52
    %p63 = scmp.eq.s32.totalorder %s17, 0
    %p64 = por %p62, %p63
    %p65 = scmp.ne.s32.totalorder %s51, %s52
    %p66 = scmp.eq.s32.totalorder %s18, 7
    %p67 = por %p65, %p66
    %p69 = scmp.ne.s32.totalorder %s52, %s68
    %p70 = scmp.eq.s32.totalorder %s18, 0
    %p71 = por %p69, %p70
    %s73 = sadd.s32 %s72, 1
    %p76 = scmp.eq.s32.totalorder %s12, 7
    %p77 = scmp.ne.s32.totalorder %s72, %s74
    %p78 = scmp.eq.s32.totalorder %s12, 0
    %p79 = por %p77, %p78
    %p80 = scmp.ne.s32.totalorder %s72, %s74
    %p81 = scmp.eq.s32.totalorder %s17, 7
    %p82 = por %p80, %p81
    %p83 = scmp.ne.s32.totalorder %s74, %s75
    %p84 = scmp.eq.s32.totalorder %s17, 0
    %p85 = por %p83, %p84
    %p86 = scmp.ne.s32.totalorder %s74, %s75
    %p87 = scmp.eq.s32.totalorder %s18, 7
    %p88 = por %p86, %p87
    %p90 = scmp.ne.s32.totalorder %s75, %s89
    %p91 = scmp.eq.s32.totalorder %s18, 0
    %p92 = por %p90, %p91
    %s94 = sadd.s32 %s93, 1
    %p97 = scmp.eq.s32.totalorder %s12, 7
    %p98 = scmp.ne.s32.totalorder %s93, %s95
    %p99 = scmp.eq.s32.totalorder %s12, 0
    %p100 = por %p98, %p99
    %p101 = scmp.ne.s32.totalorder %s93, %s95
    %p102 = scmp.eq.s32.totalorder %s17, 7
    %p103 = por %p101, %p102
    %p104 = scmp.ne.s32.totalorder %s95, %s96
    %p105 = scmp.eq.s32.totalorder %s17, 0
    %p106 = por %p104, %p105
    %p107 = scmp.ne.s32.totalorder %s95, %s96
    %p108 = scmp.eq.s32.totalorder %s18, 7
    %p109 = por %p107, %p108
    %p111 = scmp.ne.s32.totalorder %s96, %s110
    %p112 = scmp.eq.s32.totalorder %s18, 0
    %p113 = por %p111, %p112
    %s115 = sadd.s32 %s114, 1
    %p118 = scmp.eq.s32.totalorder %s12, 7
    %p119 = scmp.ne.s32.totalorder %s114, %s116
    %p120 = scmp.eq.s32.totalorder %s12, 0
    %p121 = por %p119, %p120
    %p122 = scmp.ne.s32.totalorder %s114, %s116
    %p123 = scmp.eq.s32.totalorder %s17, 7
    %p124 = por %p122, %p123
    %p125 = scmp.ne.s32.totalorder %s116, %s117
    %p126 = scmp.eq.s32.totalorder %s17, 0
    %p127 = por %p125, %p126
    %p128 = scmp.ne.s32.totalorder %s116, %s117
    %p129 = scmp.eq.s32.totalorder %s18, 7
    %p130 = por %p128, %p129
    %p132 = scmp.ne.s32.totalorder %s117, %s131
    %p133 = scmp.eq.s32.totalorder %s18, 0
    %p134 = por %p132, %p133
    %s136 = sadd.s32 %s135, 1
    %p139 = scmp.eq.s32.totalorder %s12, 7
    %p140 = scmp.ne.s32.totalorder %s135, %s137
    %p141 = scmp.eq.s32.totalorder %s12, 0
    %p142 = por %p140, %p141
    %p143 = scmp.ne.s32.totalorder %s135, %s137
    %p144 = scmp.eq.s32.totalorder %s17, 7
    %p145 = por %p143, %p144
    %p146 = scmp.ne.s32.totalorder %s137, %s138
    %p147 = scmp.eq.s32.totalorder %s17, 0
    %p148 = por %p146, %p147
    %p149 = scmp.ne.s32.totalorder %s137, %s138
    %p150 = scmp.eq.s32.totalorder %s18, 7
    %p151 = por %p149, %p150
    %p153 = scmp.ne.s32.totalorder %s138, %s152
    %p154 = scmp.eq.s32.totalorder %s18, 0
    %p155 = por %p153, %p154
    %s157 = sadd.s32 %s156, 1
    %p160 = scmp.eq.s32.totalorder %s12, 7
    %p161 = scmp.ne.s32.totalorder %s156, %s158
    %p162 = scmp.eq.s32.totalorder %s12, 0
    %p163 = por %p161, %p162
    %p164 = scmp.ne.s32.totalorder %s156, %s158
    %p165 = scmp.eq.s32.totalorder %s17, 7
    %p166 = por %p164, %p165
    %p167 = scmp.ne.s32.totalorder %s158, %s159
    %p168 = scmp.eq.s32.totalorder %s17, 0
    %p169 = por %p167, %p168
    %p170 = scmp.ne.s32.totalorder %s158, %s159
    %p171 = scmp.eq.s32.totalorder %s18, 7
    %p172 = por %p170, %p171
    %p174 = scmp.ne.s32.totalorder %s159, %s173
    %p175 = scmp.eq.s32.totalorder %s18, 0
    %p176 = por %p174, %p175
    %p177 = scmp.le.s32.totalorder 1, %s12
    %p178 = scmp.lt.s32.totalorder %s12, 9
    %p179 = pnand %p177, %p178
    %p180 = pneg %p179
    // Predicated region
    $region9: #{embedding_forward.7} parent=5 // pred_check
      _
    $region10: #{embedding_forward.7} parent=5 // pred_check_branch
      %182 = sbr.rel (%p179) target = $region12
    $region11: #{embedding_forward.7} parent=5 // pred_region
      %s183 = ssub.s32 %s12, 1
      // Predicated region
      $region13: #{embedding_forward.7} parent=11 // pred_check
        %p184 = pneg %p85
      $region14: #{embedding_forward.7} parent=11 // pred_check_branch
        %186 = sbr.rel (%p184) target = $region16
      $region15: #{embedding_forward.7} parent=11 // pred_region
        _
      $region16: #{embedding_forward.7} parent=11 // pred_fallthru
        _
      // Predicated region
      $region17: #{embedding_forward.7} parent=11 // pred_check
        %p187 = pneg %p106
      $region18: #{embedding_forward.7} parent=11 // pred_check_branch
        %189 = sbr.rel (%p187) target = $region20
      $region19: #{embedding_forward.7} parent=11 // pred_region
        _
      $region20: #{embedding_forward.7} parent=11 // pred_fallthru
        _
      // Predicated region
      $region21: #{embedding_forward.7} parent=11 // pred_check
        %p190 = pneg %p127
      $region22: #{embedding_forward.7} parent=11 // pred_check_branch
        %192 = sbr.rel (%p190) target = $region24
      $region23: #{embedding_forward.7} parent=11 // pred_region
        _
      $region24: #{embedding_forward.7} parent=11 // pred_fallthru
        _
      // Predicated region
      $region25: #{embedding_forward.7} parent=11 // pred_check
        %p193 = pneg %p148
      $region26: #{embedding_forward.7} parent=11 // pred_check_branch
        %195 = sbr.rel (%p193) target = $region28
      $region27: #{embedding_forward.7} parent=11 // pred_region
        _
      $region28: #{embedding_forward.7} parent=11 // pred_fallthru
        _
    $region12: #{embedding_forward.7} parent=5 // pred_fallthru
      _
    %p196 = scmp.lt.s32.totalorder %s12, 8
    // Predicated region
    $region29: #{embedding_forward.7} parent=5 // pred_check
      %p197 = pneg %p196
    $region30: #{embedding_forward.7} parent=5 // pred_check_branch
      %199 = sbr.rel (%p197) target = $region32
    $region31: #{embedding_forward.7} parent=5 // pred_region
      // Predicated region
      $region33: #{embedding_forward.7} parent=31 // pred_check
        %p200 = pneg %p32
      $region34: #{embedding_forward.7} parent=31 // pred_check_branch
        %202 = sbr.rel (%p200) target = $region36
      $region35: #{embedding_forward.7} parent=31 // pred_region
        %s203 = smul.u32 25, %s12
        %p204 = scmp.lt.s32.totalorder %s203, 199
        %s205 = scalar_select %p204, %s203, 199
        %s206 = smul.addr %s205, 4
        %s207 = scalar_lea.vmem %s0, %s206
        %s208 = smul.u32 25, %s12
      $region36: #{embedding_forward.7} parent=31 // pred_fallthru
        _
      // Predicated region
      $region37: #{embedding_forward.7} parent=31 // pred_check
        %p209 = pneg %p58
      $region38: #{embedding_forward.7} parent=31 // pred_check_branch
        %211 = sbr.rel (%p209) target = $region40
      $region39: #{embedding_forward.7} parent=31 // pred_region
        %s212 = smul.u32 100, %s12
        %p213 = scmp.lt.s32.totalorder %s212, 799
        %s214 = scalar_select %p213, %s212, 799
        %s215 = smul.addr %s214, 8
        %s216 = scalar_lea.vmem %s1, %s215
        %s217 = smul.u32 100, %s12
      $region40: #{embedding_forward.7} parent=31 // pred_fallthru
        _
    $region32: #{embedding_forward.7} parent=5 // pred_fallthru
      _
    %p218 = scmp.le.s32.totalorder 1, %s12
    %p219 = scmp.lt.s32.totalorder %s12, 9
    %p220 = pnand %p218, %p219
    %p221 = pneg %p220
    // Predicated region
    $region41: #{embedding_forward.7} parent=5 // pred_check
      _
    $region42: #{embedding_forward.7} parent=5 // pred_check_branch
      %223 = sbr.rel (%p220) target = $region44
    $region43: #{embedding_forward.7} parent=5 // pred_region
      %s224 = ssub.s32 %s12, 1
      %s225 = smul.u32 25, %s17
      %p226 = scmp.lt.s32.totalorder %s225, 199
      %s227 = scalar_select %p226, %s225, 199
      %s228 = smul.addr %s227, 4
      %s229 = scalar_lea.vmem %s0, %s228
      %p230 = pneg %p38
      %p231 = pneg %p35
      %s232 = smul.u32 100, %s17
      %p233 = scmp.lt.s32.totalorder %s232, 799
      %s234 = scalar_select %p233, %s232, 799
      %s235 = smul.addr %s234, 8
      %s236 = scalar_lea.vmem %s1, %s235
      %p237 = pneg %p64
      %p238 = pneg %p61
      %p239 = pneg %p85
      %p240 = pneg %p82
      %p241 = pneg %p106
      %p242 = pneg %p103
      %p243 = pneg %p127
      %p244 = pneg %p124
      %p245 = pneg %p148
      %p246 = pneg %p145
      %p247 = pneg %p169
      %p248 = pneg %p166
      %s249 = smul.u32 25, %s17
      %p250 = scmp.lt.s32.totalorder %s249, 199
      %s251 = scalar_select %p250, %s249, 199
      %s252 = smul.addr %s251, 4
      %s253 = scalar_lea.vmem %s0, %s252
      %s254 = smul.u32 25, %s17
      %s255 = smul.u32 100, %s17
      %p256 = scmp.lt.s32.totalorder %s255, 799
      %s257 = scalar_select %p256, %s255, 799
      %s258 = smul.addr %s257, 8
      %s259 = scalar_lea.vmem %s1, %s258
      %s260 = smul.u32 100, %s17
      %p262 = scmp.eq.s32.totalorder %s17, 0
      // Predicated region
      $region45: #{embedding_forward.7} parent=43 // pred_check
        %p263 = pneg %p262
      $region46: #{embedding_forward.7} parent=43 // pred_check_branch
        %265 = sbr.rel (%p263) target = $region48
      $region47: #{embedding_forward.7} parent=43 // pred_region
        %266 = vst [vmem:[#allocation2] sm:$0xff] 0.0
      $region48: #{embedding_forward.7} parent=43 // pred_fallthru
        _
      %v267 = vld [vmem:[#allocation2] sm:$0xff]
      %v268 = vld [vmem:[%s253] sm:$0xff]
      %v269 = vld [vmem:[%s253 + $0x8] sm:$0xff]
      %v270 = vld [vmem:[%s253 + $0x10] sm:$0xff]
      %v271 = vld [vmem:[%s253 + $0x18] sm:$0xff]
      %v272 = vld [vmem:[%s253 + $0x20] sm:$0xff]
      %v273 = vld [vmem:[%s253 + $0x28] sm:$0xff]
      %v274 = vld [vmem:[%s253 + $0x30] sm:$0xff]
      %v275 = vld [vmem:[%s253 + $0x38] sm:$0xff]
      %v276 = vld [vmem:[%s253 + $0x40] sm:$0xff]
      %v277 = vld [vmem:[%s253 + $0x48] sm:$0xff]
      %v278 = vld [vmem:[%s253 + $0x50] sm:$0xff]
      %v279 = vld [vmem:[%s253 + $0x58] sm:$0xff]
      %v280 = vld [vmem:[%s253 + $0x60] sm:$0xf]
      %v281 = vld [vmem:[%s259] sm:$0xff]
      %v282 = vld [vmem:[%s259 + $0x8] sm:$0xff]
      %v283 = vld [vmem:[%s259 + $0x10] sm:$0xff]
      %v284 = vld [vmem:[%s259 + $0x18] sm:$0xff]
      %v285 = vld [vmem:[%s259 + $0x20] sm:$0xff]
      %v286 = vld [vmem:[%s259 + $0x28] sm:$0xff]
      %v287 = vld [vmem:[%s259 + $0x30] sm:$0xff]
      %v288 = vld [vmem:[%s259 + $0x38] sm:$0xff]
      %v289 = vld [vmem:[%s259 + $0x40] sm:$0xff]
      %v290 = vld [vmem:[%s259 + $0x48] sm:$0xff]
      %v291 = vld [vmem:[%s259 + $0x50] sm:$0xff]
      %v292 = vld [vmem:[%s259 + $0x58] sm:$0xff]
      %v293 = vld [vmem:[%s259 + $0x60] sm:$0xff]
      %v294 = vld [vmem:[%s259 + $0x68] sm:$0xff]
      %v295 = vld [vmem:[%s259 + $0x70] sm:$0xff]
      %v296 = vld [vmem:[%s259 + $0x78] sm:$0xff]
      %v297 = vld [vmem:[%s259 + $0x80] sm:$0xff]
      %v298 = vld [vmem:[%s259 + $0x88] sm:$0xff]
      %v299 = vld [vmem:[%s259 + $0x90] sm:$0xff]
      %v300 = vld [vmem:[%s259 + $0x98] sm:$0xff]
      %v301 = vld [vmem:[%s259 + $0xa0] sm:$0xff]
      %v302 = vld [vmem:[%s259 + $0xa8] sm:$0xff]
      %v303 = vld [vmem:[%s259 + $0xb0] sm:$0xff]
      %v304 = vld [vmem:[%s259 + $0xb8] sm:$0xff]
      %v305 = vld [vmem:[%s259 + $0xc0] sm:$0xff]
      %v306 = vld [vmem:[%s259 + $0xc8] sm:$0xff]
      %v307 = vld [vmem:[%s259 + $0xd0] sm:$0xff]
      %v308 = vld [vmem:[%s259 + $0xd8] sm:$0xff]
      %v309 = vld [vmem:[%s259 + $0xe0] sm:$0xff]
      %v310 = vld [vmem:[%s259 + $0xe8] sm:$0xff]
      %v311 = vld [vmem:[%s259 + $0xf0] sm:$0xff]
      %v312 = vld [vmem:[%s259 + $0xf8] sm:$0xff]
      %v313 = vld [vmem:[%s259 + $0x100] sm:$0xff]
      %v314 = vld [vmem:[%s259 + $0x108] sm:$0xff]
      %v315 = vld [vmem:[%s259 + $0x110] sm:$0xff]
      %v316 = vld [vmem:[%s259 + $0x118] sm:$0xff]
      %v317 = vld [vmem:[%s259 + $0x120] sm:$0xff]
      %v318 = vld [vmem:[%s259 + $0x128] sm:$0xff]
      %v319 = vld [vmem:[%s259 + $0x130] sm:$0xff]
      %v320 = vld [vmem:[%s259 + $0x138] sm:$0xff]
      %v321 = vld [vmem:[%s259 + $0x140] sm:$0xff]
      %v322 = vld [vmem:[%s259 + $0x148] sm:$0xff]
      %v323 = vld [vmem:[%s259 + $0x150] sm:$0xff]
      %v324 = vld [vmem:[%s259 + $0x158] sm:$0xff]
      %v325 = vld [vmem:[%s259 + $0x160] sm:$0xff]
      %v326 = vld [vmem:[%s259 + $0x168] sm:$0xff]
      %v327 = vld [vmem:[%s259 + $0x170] sm:$0xff]
      %v328 = vld [vmem:[%s259 + $0x178] sm:$0xff]
      %v329 = vld [vmem:[%s259 + $0x180] sm:$0xff]
      %v330 = vld [vmem:[%s259 + $0x188] sm:$0xff]
      %v331 = vld [vmem:[%s259 + $0x190] sm:$0xff]
      %v332 = vld [vmem:[%s259 + $0x198] sm:$0xff]
      %v333 = vld [vmem:[%s259 + $0x1a0] sm:$0xff]
      %v334 = vld [vmem:[%s259 + $0x1a8] sm:$0xff]
      %v335 = vld [vmem:[%s259 + $0x1b0] sm:$0xff]
      %v336 = vld [vmem:[%s259 + $0x1b8] sm:$0xff]
      %v337 = vld [vmem:[%s259 + $0x1c0] sm:$0xff]
      %v338 = vld [vmem:[%s259 + $0x1c8] sm:$0xff]
      %v339 = vld [vmem:[%s259 + $0x1d0] sm:$0xff]
      %v340 = vld [vmem:[%s259 + $0x1d8] sm:$0xff]
      %v341 = vld [vmem:[%s259 + $0x1e0] sm:$0xff]
      %v342 = vld [vmem:[%s259 + $0x1e8] sm:$0xff]
      %v343 = vld [vmem:[%s259 + $0x1f0] sm:$0xff]
      %v344 = vld [vmem:[%s259 + $0x1f8] sm:$0xff]
      %v345 = vld [vmem:[%s259 + $0x200] sm:$0xff]
      %v346 = vld [vmem:[%s259 + $0x208] sm:$0xff]
      %v347 = vld [vmem:[%s259 + $0x210] sm:$0xff]
      %v348 = vld [vmem:[%s259 + $0x218] sm:$0xff]
      %v349 = vld [vmem:[%s259 + $0x220] sm:$0xff]
      %v350 = vld [vmem:[%s259 + $0x228] sm:$0xff]
      %v351 = vld [vmem:[%s259 + $0x230] sm:$0xff]
      %v352 = vld [vmem:[%s259 + $0x238] sm:$0xff]
      %v353 = vld [vmem:[%s259 + $0x240] sm:$0xff]
      %v354 = vld [vmem:[%s259 + $0x248] sm:$0xff]
      %v355 = vld [vmem:[%s259 + $0x250] sm:$0xff]
      %v356 = vld [vmem:[%s259 + $0x258] sm:$0xff]
      %v357 = vld [vmem:[%s259 + $0x260] sm:$0xff]
      %v358 = vld [vmem:[%s259 + $0x268] sm:$0xff]
      %v359 = vld [vmem:[%s259 + $0x270] sm:$0xff]
      %v360 = vld [vmem:[%s259 + $0x278] sm:$0xff]
      %v361 = vld [vmem:[%s259 + $0x280] sm:$0xff]
      %v362 = vld [vmem:[%s259 + $0x288] sm:$0xff]
      %v363 = vld [vmem:[%s259 + $0x290] sm:$0xff]
      %v364 = vld [vmem:[%s259 + $0x298] sm:$0xff]
      %v365 = vld [vmem:[%s259 + $0x2a0] sm:$0xff]
      %v366 = vld [vmem:[%s259 + $0x2a8] sm:$0xff]
      %v367 = vld [vmem:[%s259 + $0x2b0] sm:$0xff]
      %v368 = vld [vmem:[%s259 + $0x2b8] sm:$0xff]
      %v369 = vld [vmem:[%s259 + $0x2c0] sm:$0xff]
      %v370 = vld [vmem:[%s259 + $0x2c8] sm:$0xff]
      %v371 = vld [vmem:[%s259 + $0x2d0] sm:$0xff]
      %v372 = vld [vmem:[%s259 + $0x2d8] sm:$0xff]
      %v373 = vld [vmem:[%s259 + $0x2e0] sm:$0xff]
      %v374 = vld [vmem:[%s259 + $0x2e8] sm:$0xff]
      %v375 = vld [vmem:[%s259 + $0x2f0] sm:$0xff]
      %v376 = vld [vmem:[%s259 + $0x2f8] sm:$0xff]
      %v377 = vld [vmem:[%s259 + $0x300] sm:$0xff]
      %v378 = vld [vmem:[%s259 + $0x308] sm:$0xff]
      %v379 = vld [vmem:[%s259 + $0x310] sm:$0xff]
      %v380 = vld [vmem:[%s259 + $0x318] sm:$0xff]
      %v381 = vunpack.c.l.s8.bf16 %v281
      %v382 = vunpack.c.h.s8.bf16 %v281
      %v383 = vunpack.c.l.s8.bf16 %v282
      %v384 = vunpack.c.h.s8.bf16 %v282
      %v385 = vunpack.c.l.s8.bf16 %v283
      %v386 = vunpack.c.h.s8.bf16 %v283
      %v387 = vunpack.c.l.s8.bf16 %v284
      %v388 = vunpack.c.h.s8.bf16 %v284
      %v389 = vunpack.c.l.s8.bf16 %v285
      %v390 = vunpack.c.h.s8.bf16 %v285
      %v391 = vunpack.c.l.s8.bf16 %v286
      %v392 = vunpack.c.h.s8.bf16 %v286
      %v393 = vunpack.c.l.s8.bf16 %v287
      %v394 = vunpack.c.h.s8.bf16 %v287
      %v395 = vunpack.c.l.s8.bf16 %v288
      %v396 = vunpack.c.h.s8.bf16 %v288
      %v397 = vunpack.c.l.s8.bf16 %v289
      %v398 = vunpack.c.h.s8.bf16 %v289
      %v399 = vunpack.c.l.s8.bf16 %v290
      %v400 = vunpack.c.h.s8.bf16 %v290
      %v401 = vunpack.c.l.s8.bf16 %v291
      %v402 = vunpack.c.h.s8.bf16 %v291
      %v403 = vunpack.c.l.s8.bf16 %v292
      %v404 = vunpack.c.h.s8.bf16 %v292
      %v405 = vunpack.c.l.s8.bf16 %v293
      %v406 = vunpack.c.h.s8.bf16 %v293
      %v407 = vunpack.c.l.s8.bf16 %v294
      %v408 = vunpack.c.h.s8.bf16 %v294
      %v409 = vunpack.c.l.s8.bf16 %v295
      %v410 = vunpack.c.h.s8.bf16 %v295
      %v411 = vunpack.c.l.s8.bf16 %v296
      %v412 = vunpack.c.h.s8.bf16 %v296
      %v413 = vunpack.c.l.s8.bf16 %v297
      %v414 = vunpack.c.h.s8.bf16 %v297
      %v415 = vunpack.c.l.s8.bf16 %v298
      %v416 = vunpack.c.h.s8.bf16 %v298
      %v417 = vunpack.c.l.s8.bf16 %v299
      %v418 = vunpack.c.h.s8.bf16 %v299
      %v419 = vunpack.c.l.s8.bf16 %v300
      %v420 = vunpack.c.h.s8.bf16 %v300
      %v421 = vunpack.c.l.s8.bf16 %v301
      %v422 = vunpack.c.h.s8.bf16 %v301
      %v423 = vunpack.c.l.s8.bf16 %v302
      %v424 = vunpack.c.h.s8.bf16 %v302
      %v425 = vunpack.c.l.s8.bf16 %v303
      %v426 = vunpack.c.h.s8.bf16 %v303
      %v427 = vunpack.c.l.s8.bf16 %v304
      %v428 = vunpack.c.h.s8.bf16 %v304
      %v429 = vunpack.c.l.s8.bf16 %v305
      %v430 = vunpack.c.h.s8.bf16 %v305
      %v431 = vunpack.c.l.s8.bf16 %v306
      %v432 = vunpack.c.h.s8.bf16 %v306
      %v433 = vunpack.c.l.s8.bf16 %v307
      %v434 = vunpack.c.h.s8.bf16 %v307
      %v435 = vunpack.c.l.s8.bf16 %v308
      %v436 = vunpack.c.h.s8.bf16 %v308
      %v437 = vunpack.c.l.s8.bf16 %v309
      %v438 = vunpack.c.h.s8.bf16 %v309
      %v439 = vunpack.c.l.s8.bf16 %v310
      %v440 = vunpack.c.h.s8.bf16 %v310
      %v441 = vunpack.c.l.s8.bf16 %v311
      %v442 = vunpack.c.h.s8.bf16 %v311
      %v443 = vunpack.c.l.s8.bf16 %v312
      %v444 = vunpack.c.h.s8.bf16 %v312
      %v445 = vunpack.c.l.s8.bf16 %v313
      %v446 = vunpack.c.h.s8.bf16 %v313
      %v447 = vunpack.c.l.s8.bf16 %v314
      %v448 = vunpack.c.h.s8.bf16 %v314
      %v449 = vunpack.c.l.s8.bf16 %v315
      %v450 = vunpack.c.h.s8.bf16 %v315
      %v451 = vunpack.c.l.s8.bf16 %v316
      %v452 = vunpack.c.h.s8.bf16 %v316
      %v453 = vunpack.c.l.s8.bf16 %v317
      %v454 = vunpack.c.h.s8.bf16 %v317
      %v455 = vunpack.c.l.s8.bf16 %v318
      %v456 = vunpack.c.h.s8.bf16 %v318
      %v457 = vunpack.c.l.s8.bf16 %v319
      %v458 = vunpack.c.h.s8.bf16 %v319
      %v459 = vunpack.c.l.s8.bf16 %v320
      %v460 = vunpack.c.h.s8.bf16 %v320
      %v461 = vunpack.c.l.s8.bf16 %v321
      %v462 = vunpack.c.h.s8.bf16 %v321
      %v463 = vunpack.c.l.s8.bf16 %v322
      %v464 = vunpack.c.h.s8.bf16 %v322
      %v465 = vunpack.c.l.s8.bf16 %v323
      %v466 = vunpack.c.h.s8.bf16 %v323
      %v467 = vunpack.c.l.s8.bf16 %v324
      %v468 = vunpack.c.h.s8.bf16 %v324
      %v469 = vunpack.c.l.s8.bf16 %v325
      %v470 = vunpack.c.h.s8.bf16 %v325
      %v471 = vunpack.c.l.s8.bf16 %v326
      %v472 = vunpack.c.h.s8.bf16 %v326
      %v473 = vunpack.c.l.s8.bf16 %v327
      %v474 = vunpack.c.h.s8.bf16 %v327
      %v475 = vunpack.c.l.s8.bf16 %v328
      %v476 = vunpack.c.h.s8.bf16 %v328
      %v477 = vunpack.c.l.s8.bf16 %v329
      %v478 = vunpack.c.h.s8.bf16 %v329
      %v479 = vunpack.c.l.s8.bf16 %v330
      %v480 = vunpack.c.h.s8.bf16 %v330
      %v481 = vunpack.c.l.s8.bf16 %v331
      %v482 = vunpack.c.h.s8.bf16 %v331
      %v483 = vunpack.c.l.s8.bf16 %v332
      %v484 = vunpack.c.h.s8.bf16 %v332
      %v485 = vunpack.c.l.s8.bf16 %v333
      %v486 = vunpack.c.h.s8.bf16 %v333
      %v487 = vunpack.c.l.s8.bf16 %v334
      %v488 = vunpack.c.h.s8.bf16 %v334
      %v489 = vunpack.c.l.s8.bf16 %v335
      %v490 = vunpack.c.h.s8.bf16 %v335
      %v491 = vunpack.c.l.s8.bf16 %v336
      %v492 = vunpack.c.h.s8.bf16 %v336
      %v493 = vunpack.c.l.s8.bf16 %v337
      %v494 = vunpack.c.h.s8.bf16 %v337
      %v495 = vunpack.c.l.s8.bf16 %v338
      %v496 = vunpack.c.h.s8.bf16 %v338
      %v497 = vunpack.c.l.s8.bf16 %v339
      %v498 = vunpack.c.h.s8.bf16 %v339
      %v499 = vunpack.c.l.s8.bf16 %v340
      %v500 = vunpack.c.h.s8.bf16 %v340
      %v501 = vunpack.c.l.s8.bf16 %v341
      %v502 = vunpack.c.h.s8.bf16 %v341
      %v503 = vunpack.c.l.s8.bf16 %v342
      %v504 = vunpack.c.h.s8.bf16 %v342
      %v505 = vunpack.c.l.s8.bf16 %v343
      %v506 = vunpack.c.h.s8.bf16 %v343
      %v507 = vunpack.c.l.s8.bf16 %v344
      %v508 = vunpack.c.h.s8.bf16 %v344
      %v509 = vunpack.c.l.s8.bf16 %v345
      %v510 = vunpack.c.h.s8.bf16 %v345
      %v511 = vunpack.c.l.s8.bf16 %v346
      %v512 = vunpack.c.h.s8.bf16 %v346
      %v513 = vunpack.c.l.s8.bf16 %v347
      %v514 = vunpack.c.h.s8.bf16 %v347
      %v515 = vunpack.c.l.s8.bf16 %v348
      %v516 = vunpack.c.h.s8.bf16 %v348
      %v517 = vunpack.c.l.s8.bf16 %v349
      %v518 = vunpack.c.h.s8.bf16 %v349
      %v519 = vunpack.c.l.s8.bf16 %v350
      %v520 = vunpack.c.h.s8.bf16 %v350
      %v521 = vunpack.c.l.s8.bf16 %v351
      %v522 = vunpack.c.h.s8.bf16 %v351
      %v523 = vunpack.c.l.s8.bf16 %v352
      %v524 = vunpack.c.h.s8.bf16 %v352
      %v525 = vunpack.c.l.s8.bf16 %v353
      %v526 = vunpack.c.h.s8.bf16 %v353
      %v527 = vunpack.c.l.s8.bf16 %v354
      %v528 = vunpack.c.h.s8.bf16 %v354
      %v529 = vunpack.c.l.s8.bf16 %v355
      %v530 = vunpack.c.h.s8.bf16 %v355
      %v531 = vunpack.c.l.s8.bf16 %v356
      %v532 = vunpack.c.h.s8.bf16 %v356
      %v533 = vunpack.c.l.s8.bf16 %v357
      %v534 = vunpack.c.h.s8.bf16 %v357
      %v535 = vunpack.c.l.s8.bf16 %v358
      %v536 = vunpack.c.h.s8.bf16 %v358
      %v537 = vunpack.c.l.s8.bf16 %v359
      %v538 = vunpack.c.h.s8.bf16 %v359
      %v539 = vunpack.c.l.s8.bf16 %v360
      %v540 = vunpack.c.h.s8.bf16 %v360
      %v541 = vunpack.c.l.s8.bf16 %v361
      %v542 = vunpack.c.h.s8.bf16 %v361
      %v543 = vunpack.c.l.s8.bf16 %v362
      %v544 = vunpack.c.h.s8.bf16 %v362
      %v545 = vunpack.c.l.s8.bf16 %v363
      %v546 = vunpack.c.h.s8.bf16 %v363
      %v547 = vunpack.c.l.s8.bf16 %v364
      %v548 = vunpack.c.h.s8.bf16 %v364
      %v549 = vunpack.c.l.s8.bf16 %v365
      %v550 = vunpack.c.h.s8.bf16 %v365
      %v551 = vunpack.c.l.s8.bf16 %v366
      %v552 = vunpack.c.h.s8.bf16 %v366
      %v553 = vunpack.c.l.s8.bf16 %v367
      %v554 = vunpack.c.h.s8.bf16 %v367
      %v555 = vunpack.c.l.s8.bf16 %v368
      %v556 = vunpack.c.h.s8.bf16 %v368
      %v557 = vunpack.c.l.s8.bf16 %v369
      %v558 = vunpack.c.h.s8.bf16 %v369
      %v559 = vunpack.c.l.s8.bf16 %v370
      %v560 = vunpack.c.h.s8.bf16 %v370
      %v561 = vunpack.c.l.s8.bf16 %v371
      %v562 = vunpack.c.h.s8.bf16 %v371
      %v563 = vunpack.c.l.s8.bf16 %v372
      %v564 = vunpack.c.h.s8.bf16 %v372
      %v565 = vunpack.c.l.s8.bf16 %v373
      %v566 = vunpack.c.h.s8.bf16 %v373
      %v567 = vunpack.c.l.s8.bf16 %v374
      %v568 = vunpack.c.h.s8.bf16 %v374
      %v569 = vunpack.c.l.s8.bf16 %v375
      %v570 = vunpack.c.h.s8.bf16 %v375
      %v571 = vunpack.c.l.s8.bf16 %v376
      %v572 = vunpack.c.h.s8.bf16 %v376
      %v573 = vunpack.c.l.s8.bf16 %v377
      %v574 = vunpack.c.h.s8.bf16 %v377
      %v575 = vunpack.c.l.s8.bf16 %v378
      %v576 = vunpack.c.h.s8.bf16 %v378
      %v577 = vunpack.c.l.s8.bf16 %v379
      %v578 = vunpack.c.h.s8.bf16 %v379
      %v579 = vunpack.c.l.s8.bf16 %v380
      %v580 = vunpack.c.h.s8.bf16 %v380
      %v594 = vunpack.c.l.b16 %v268
      %v595 = vunpack.c.h.b16 %v268
      %v596 = vunpack.c.l.b16 %v269
      %v597 = vunpack.c.h.b16 %v269
      %v598 = vunpack.c.l.b16 %v270
      %v599 = vunpack.c.h.b16 %v270
      %v600 = vunpack.c.l.b16 %v271
      %v601 = vunpack.c.h.b16 %v271
      %v602 = vunpack.c.l.b16 %v272
      %v603 = vunpack.c.h.b16 %v272
      %v604 = vunpack.c.l.b16 %v273
      %v605 = vunpack.c.h.b16 %v273
      %v606 = vunpack.c.l.b16 %v274
      %v607 = vunpack.c.h.b16 %v274
      %v608 = vunpack.c.l.b16 %v275
      %v609 = vunpack.c.h.b16 %v275
      %v610 = vunpack.c.l.b16 %v276
      %v611 = vunpack.c.h.b16 %v276
      %v612 = vunpack.c.l.b16 %v277
      %v613 = vunpack.c.h.b16 %v277
      %v614 = vunpack.c.l.b16 %v278
      %v615 = vunpack.c.h.b16 %v278
      %v616 = vunpack.c.l.b16 %v279
      %v617 = vunpack.c.h.b16 %v279
      %v618 = vunpack.c.l.b16 %v280
      %v619 = vpack.c.b16 %v594, %v594
      %v620 = vpack.c.b16 %v595, %v595
      %v621 = vpack.c.b16 %v596, %v596
      %v622 = vpack.c.b16 %v597, %v597
      %v623 = vpack.c.b16 %v598, %v598
      %v624 = vpack.c.b16 %v599, %v599
      %v625 = vpack.c.b16 %v600, %v600
      %v626 = vpack.c.b16 %v601, %v601
      %v627 = vpack.c.b16 %v602, %v602
      %v628 = vpack.c.b16 %v603, %v603
      %v629 = vpack.c.b16 %v604, %v604
      %v630 = vpack.c.b16 %v605, %v605
      %v631 = vpack.c.b16 %v606, %v606
      %v632 = vpack.c.b16 %v607, %v607
      %v633 = vpack.c.b16 %v608, %v608
      %v634 = vpack.c.b16 %v609, %v609
      %v635 = vpack.c.b16 %v610, %v610
      %v636 = vpack.c.b16 %v611, %v611
      %v637 = vpack.c.b16 %v612, %v612
      %v638 = vpack.c.b16 %v613, %v613
      %v639 = vpack.c.b16 %v614, %v614
      %v640 = vpack.c.b16 %v615, %v615
      %v641 = vpack.c.b16 %v616, %v616
      %v642 = vpack.c.b16 %v617, %v617
      %v643 = vpack.c.b16 %v618, %v618
      %669 = vmatprep.subr.bf16.mxu0 0
      %670 = vmatpush1.bf16.msra.mxu0 %v381
      %671 = vmatprep.subr.bf16.mxu0 0
      %672 = vmatpush1.bf16.msra.mxu0 %v382
      %673 = vmatprep.subr.bf16.mxu0 0
      %674 = vmatpush1.bf16.msra.mxu0 %v383
      %675 = vmatprep.subr.bf16.mxu0 0
      %676 = vmatpush1.bf16.msra.mxu0 %v384
      %677 = vmatprep.subr.bf16.mxu0 0
      %678 = vmatpush1.bf16.msra.mxu0 %v385
      %679 = vmatprep.subr.bf16.mxu0 0
      %680 = vmatpush1.bf16.msra.mxu0 %v386
      %681 = vmatprep.subr.bf16.mxu0 0
      %682 = vmatpush1.bf16.msra.mxu0 %v387
      %683 = vmatprep.subr.bf16.mxu0 0
      %684 = vmatpush1.bf16.msra.mxu0 %v388
      %685 = vmatprep.subr.bf16.mxu0 0
      %686 = vmatpush1.bf16.msra.mxu0 %v389
      %687 = vmatprep.subr.bf16.mxu0 0
      %688 = vmatpush1.bf16.msra.mxu0 %v390
      %689 = vmatprep.subr.bf16.mxu0 0
      %690 = vmatpush1.bf16.msra.mxu0 %v391
      %691 = vmatprep.subr.bf16.mxu0 0
      %692 = vmatpush1.bf16.msra.mxu0 %v392
      %693 = vmatprep.subr.bf16.mxu0 0
      %694 = vmatpush1.bf16.msra.mxu0 %v393
      %695 = vmatprep.subr.bf16.mxu0 0
      %696 = vmatpush1.bf16.msra.mxu0 %v394
      %697 = vmatprep.subr.bf16.mxu0 0
      %698 = vmatpush1.bf16.msra.mxu0 %v395
      %699 = vmatprep.subr.bf16.mxu0 0
      %700 = vmatpush1.bf16.msra.mxu0 %v396
      %701 = vmatprep.mubr.bf16.mxu0 %v620
      %702 = vmatmul.mubr.bf16.gmra.mrb[0].mxu0 %v619
      %v703 = vpop.f32.mrb[0].mxu0
      %v704 = vadd.f32 0.0, %v703
      %v705 = vpop.f32.mrb[0].mxu0
      %v706 = vpop.f32.mrb[0].mxu0
      %v707 = vpop.f32.mrb[0].mxu0
      %708 = vdwg.mxu0
      %709 = vmatprep.subr.bf16.mxu0 0
      %710 = vmatpush1.bf16.msra.mxu0 %v397
      %711 = vmatprep.subr.bf16.mxu0 0
      %712 = vmatpush1.bf16.msra.mxu0 %v398
      %713 = vmatprep.subr.bf16.mxu0 0
      %714 = vmatpush1.bf16.msra.mxu0 %v399
      %715 = vmatprep.subr.bf16.mxu0 0
      %716 = vmatpush1.bf16.msra.mxu0 %v400
      %717 = vmatprep.subr.bf16.mxu0 0
      %718 = vmatpush1.bf16.msra.mxu0 %v401
      %719 = vmatprep.subr.bf16.mxu0 0
      %720 = vmatpush1.bf16.msra.mxu0 %v402
      %721 = vmatprep.subr.bf16.mxu0 0
      %722 = vmatpush1.bf16.msra.mxu0 %v403
      %723 = vmatprep.subr.bf16.mxu0 0
      %724 = vmatpush1.bf16.msra.mxu0 %v404
      %725 = vmatprep.subr.bf16.mxu0 0
      %726 = vmatpush1.bf16.msra.mxu0 %v405
      %727 = vmatprep.subr.bf16.mxu0 0
      %728 = vmatpush1.bf16.msra.mxu0 %v406
      %729 = vmatprep.subr.bf16.mxu0 0
      %730 = vmatpush1.bf16.msra.mxu0 %v407
      %731 = vmatprep.subr.bf16.mxu0 0
      %732 = vmatpush1.bf16.msra.mxu0 %v408
      %733 = vmatprep.subr.bf16.mxu0 0
      %734 = vmatpush1.bf16.msra.mxu0 %v409
      %735 = vmatprep.subr.bf16.mxu0 0
      %736 = vmatpush1.bf16.msra.mxu0 %v410
      %737 = vmatprep.subr.bf16.mxu0 0
      %738 = vmatpush1.bf16.msra.mxu0 %v411
      %739 = vmatprep.subr.bf16.mxu0 0
      %740 = vmatpush1.bf16.msra.mxu0 %v412
      %741 = vmatprep.mubr.bf16.mxu0 %v622
      %742 = vmatmul.mubr.bf16.gmra.mrb[0].mxu0 %v621
      %v743 = vpop.f32.mrb[0].mxu0
      %v744 = vadd.f32 %v704, %v743
      %v745 = vpop.f32.mrb[0].mxu0
      %v746 = vpop.f32.mrb[0].mxu0
      %v747 = vpop.f32.mrb[0].mxu0
      %748 = vdwg.mxu0
      %749 = vmatprep.subr.bf16.mxu0 0
      %750 = vmatpush1.bf16.msra.mxu0 %v413
      %751 = vmatprep.subr.bf16.mxu0 0
      %752 = vmatpush1.bf16.msra.mxu0 %v414
      %753 = vmatprep.subr.bf16.mxu0 0
      %754 = vmatpush1.bf16.msra.mxu0 %v415
      %755 = vmatprep.subr.bf16.mxu0 0
      %756 = vmatpush1.bf16.msra.mxu0 %v416
      %757 = vmatprep.subr.bf16.mxu0 0
      %758 = vmatpush1.bf16.msra.mxu0 %v417
      %759 = vmatprep.subr.bf16.mxu0 0
      %760 = vmatpush1.bf16.msra.mxu0 %v418
      %761 = vmatprep.subr.bf16.mxu0 0
      %762 = vmatpush1.bf16.msra.mxu0 %v419
      %763 = vmatprep.subr.bf16.mxu0 0
      %764 = vmatpush1.bf16.msra.mxu0 %v420
      %765 = vmatprep.subr.bf16.mxu0 0
      %766 = vmatpush1.bf16.msra.mxu0 %v421
      %767 = vmatprep.subr.bf16.mxu0 0
      %768 = vmatpush1.bf16.msra.mxu0 %v422
      %769 = vmatprep.subr.bf16.mxu0 0
      %770 = vmatpush1.bf16.msra.mxu0 %v423
      %771 = vmatprep.subr.bf16.mxu0 0
      %772 = vmatpush1.bf16.msra.mxu0 %v424
      %773 = vmatprep.subr.bf16.mxu0 0
      %774 = vmatpush1.bf16.msra.mxu0 %v425
      %775 = vmatprep.subr.bf16.mxu0 0
      %776 = vmatpush1.bf16.msra.mxu0 %v426
      %777 = vmatprep.subr.bf16.mxu0 0
      %778 = vmatpush1.bf16.msra.mxu0 %v427
      %779 = vmatprep.subr.bf16.mxu0 0
      %780 = vmatpush1.bf16.msra.mxu0 %v428
      %781 = vmatprep.mubr.bf16.mxu0 %v624
      %782 = vmatmul.mubr.bf16.gmra.mrb[0].mxu0 %v623
      %v783 = vpop.f32.mrb[0].mxu0
      %v784 = vadd.f32 %v744, %v783
      %v785 = vpop.f32.mrb[0].mxu0
      %v786 = vpop.f32.mrb[0].mxu0
      %v787 = vpop.f32.mrb[0].mxu0
      %788 = vdwg.mxu0
      %789 = vmatprep.subr.bf16.mxu0 0
      %790 = vmatpush1.bf16.msra.mxu0 %v429
      %791 = vmatprep.subr.bf16.mxu0 0
      %792 = vmatpush1.bf16.msra.mxu0 %v430
      %793 = vmatprep.subr.bf16.mxu0 0
      %794 = vmatpush1.bf16.msra.mxu0 %v431
      %795 = vmatprep.subr.bf16.mxu0 0
      %796 = vmatpush1.bf16.msra.mxu0 %v432
      %797 = vmatprep.subr.bf16.mxu0 0
      %798 = vmatpush1.bf16.msra.mxu0 %v433
      %799 = vmatprep.subr.bf16.mxu0 0
      %800 = vmatpush1.bf16.msra.mxu0 %v434
      %801 = vmatprep.subr.bf16.mxu0 0
      %802 = vmatpush1.bf16.msra.mxu0 %v435
      %803 = vmatprep.subr.bf16.mxu0 0
      %804 = vmatpush1.bf16.msra.mxu0 %v436
      %805 = vmatprep.subr.bf16.mxu0 0
      %806 = vmatpush1.bf16.msra.mxu0 %v437
      %807 = vmatprep.subr.bf16.mxu0 0
      %808 = vmatpush1.bf16.msra.mxu0 %v438
      %809 = vmatprep.subr.bf16.mxu0 0
      %810 = vmatpush1.bf16.msra.mxu0 %v439
      %811 = vmatprep.subr.bf16.mxu0 0
      %812 = vmatpush1.bf16.msra.mxu0 %v440
      %813 = vmatprep.subr.bf16.mxu0 0
      %814 = vmatpush1.bf16.msra.mxu0 %v441
      %815 = vmatprep.subr.bf16.mxu0 0
      %816 = vmatpush1.bf16.msra.mxu0 %v442
      %817 = vmatprep.subr.bf16.mxu0 0
      %818 = vmatpush1.bf16.msra.mxu0 %v443
      %819 = vmatprep.subr.bf16.mxu0 0
      %820 = vmatpush1.bf16.msra.mxu0 %v444
      %821 = vmatprep.mubr.bf16.mxu0 %v626
      %822 = vmatmul.mubr.bf16.gmra.mrb[0].mxu0 %v625
      %v823 = vpop.f32.mrb[0].mxu0
      %v824 = vadd.f32 %v784, %v823
      %v825 = vpop.f32.mrb[0].mxu0
      %v826 = vpop.f32.mrb[0].mxu0
      %v827 = vpop.f32.mrb[0].mxu0
      %828 = vdwg.mxu0
      %829 = vmatprep.subr.bf16.mxu0 0
      %830 = vmatpush1.bf16.msra.mxu0 %v445
      %831 = vmatprep.subr.bf16.mxu0 0
      %832 = vmatpush1.bf16.msra.mxu0 %v446
      %833 = vmatprep.subr.bf16.mxu0 0
      %834 = vmatpush1.bf16.msra.mxu0 %v447
      %835 = vmatprep.subr.bf16.mxu0 0
      %836 = vmatpush1.bf16.msra.mxu0 %v448
      %837 = vmatprep.subr.bf16.mxu0 0
      %838 = vmatpush1.bf16.msra.mxu0 %v449
      %839 = vmatprep.subr.bf16.mxu0 0
      %840 = vmatpush1.bf16.msra.mxu0 %v450
      %841 = vmatprep.subr.bf16.mxu0 0
      %842 = vmatpush1.bf16.msra.mxu0 %v451
      %843 = vmatprep.subr.bf16.mxu0 0
      %844 = vmatpush1.bf16.msra.mxu0 %v452
      %845 = vmatprep.subr.bf16.mxu0 0
      %846 = vmatpush1.bf16.msra.mxu0 %v453
      %847 = vmatprep.subr.bf16.mxu0 0
      %848 = vmatpush1.bf16.msra.mxu0 %v454
      %849 = vmatprep.subr.bf16.mxu0 0
      %850 = vmatpush1.bf16.msra.mxu0 %v455
      %851 = vmatprep.subr.bf16.mxu0 0
      %852 = vmatpush1.bf16.msra.mxu0 %v456
      %853 = vmatprep.subr.bf16.mxu0 0
      %854 = vmatpush1.bf16.msra.mxu0 %v457
      %855 = vmatprep.subr.bf16.mxu0 0
      %856 = vmatpush1.bf16.msra.mxu0 %v458
      %857 = vmatprep.subr.bf16.mxu0 0
      %858 = vmatpush1.bf16.msra.mxu0 %v459
      %859 = vmatprep.subr.bf16.mxu0 0
      %860 = vmatpush1.bf16.msra.mxu0 %v460
      %861 = vmatprep.mubr.bf16.mxu0 %v628
      %862 = vmatmul.mubr.bf16.gmra.mrb[0].mxu0 %v627
      %v863 = vpop.f32.mrb[0].mxu0
      %v864 = vadd.f32 %v824, %v863
      %v865 = vpop.f32.mrb[0].mxu0
      %v866 = vpop.f32.mrb[0].mxu0
      %v867 = vpop.f32.mrb[0].mxu0
      %868 = vdwg.mxu0
      %869 = vmatprep.subr.bf16.mxu0 0
      %870 = vmatpush1.bf16.msra.mxu0 %v461
      %871 = vmatprep.subr.bf16.mxu0 0
      %872 = vmatpush1.bf16.msra.mxu0 %v462
      %873 = vmatprep.subr.bf16.mxu0 0
      %874 = vmatpush1.bf16.msra.mxu0 %v463
      %875 = vmatprep.subr.bf16.mxu0 0
      %876 = vmatpush1.bf16.msra.mxu0 %v464
      %877 = vmatprep.subr.bf16.mxu0 0
      %878 = vmatpush1.bf16.msra.mxu0 %v465
      %879 = vmatprep.subr.bf16.mxu0 0
      %880 = vmatpush1.bf16.msra.mxu0 %v466
      %881 = vmatprep.subr.bf16.mxu0 0
      %882 = vmatpush1.bf16.msra.mxu0 %v467
      %883 = vmatprep.subr.bf16.mxu0 0
      %884 = vmatpush1.bf16.msra.mxu0 %v468
      %885 = vmatprep.subr.bf16.mxu0 0
      %886 = vmatpush1.bf16.msra.mxu0 %v469
      %887 = vmatprep.subr.bf16.mxu0 0
      %888 = vmatpush1.bf16.msra.mxu0 %v470
      %889 = vmatprep.subr.bf16.mxu0 0
      %890 = vmatpush1.bf16.msra.mxu0 %v471
      %891 = vmatprep.subr.bf16.mxu0 0
      %892 = vmatpush1.bf16.msra.mxu0 %v472
      %893 = vmatprep.subr.bf16.mxu0 0
      %894 = vmatpush1.bf16.msra.mxu0 %v473
      %895 = vmatprep.subr.bf16.mxu0 0
      %896 = vmatpush1.bf16.msra.mxu0 %v474
      %897 = vmatprep.subr.bf16.mxu0 0
      %898 = vmatpush1.bf16.msra.mxu0 %v475
      %899 = vmatprep.subr.bf16.mxu0 0
      %900 = vmatpush1.bf16.msra.mxu0 %v476
      %901 = vmatprep.mubr.bf16.mxu0 %v630
      %902 = vmatmul.mubr.bf16.gmra.mrb[0].mxu0 %v629
      %v903 = vpop.f32.mrb[0].mxu0
      %v904 = vadd.f32 %v864, %v903
      %v905 = vpop.f32.mrb[0].mxu0
      %v906 = vpop.f32.mrb[0].mxu0
      %v907 = vpop.f32.mrb[0].mxu0
      %908 = vdwg.mxu0
      %909 = vmatprep.subr.bf16.mxu0 0
      %910 = vmatpush1.bf16.msra.mxu0 %v477
      %911 = vmatprep.subr.bf16.mxu0 0
      %912 = vmatpush1.bf16.msra.mxu0 %v478
      %913 = vmatprep.subr.bf16.mxu0 0
      %914 = vmatpush1.bf16.msra.mxu0 %v479
      %915 = vmatprep.subr.bf16.mxu0 0
      %916 = vmatpush1.bf16.msra.mxu0 %v480
      %917 = vmatprep.subr.bf16.mxu0 0
      %918 = vmatpush1.bf16.msra.mxu0 %v481
      %919 = vmatprep.subr.bf16.mxu0 0
      %920 = vmatpush1.bf16.msra.mxu0 %v482
      %921 = vmatprep.subr.bf16.mxu0 0
      %922 = vmatpush1.bf16.msra.mxu0 %v483
      %923 = vmatprep.subr.bf16.mxu0 0
      %924 = vmatpush1.bf16.msra.mxu0 %v484
      %925 = vmatprep.subr.bf16.mxu0 0
      %926 = vmatpush1.bf16.msra.mxu0 %v485
      %927 = vmatprep.subr.bf16.mxu0 0
      %928 = vmatpush1.bf16.msra.mxu0 %v486
      %929 = vmatprep.subr.bf16.mxu0 0
      %930 = vmatpush1.bf16.msra.mxu0 %v487
      %931 = vmatprep.subr.bf16.mxu0 0
      %932 = vmatpush1.bf16.msra.mxu0 %v488
      %933 = vmatprep.subr.bf16.mxu0 0
      %934 = vmatpush1.bf16.msra.mxu0 %v489
      %935 = vmatprep.subr.bf16.mxu0 0
      %936 = vmatpush1.bf16.msra.mxu0 %v490
      %937 = vmatprep.subr.bf16.mxu0 0
      %938 = vmatpush1.bf16.msra.mxu0 %v491
      %939 = vmatprep.subr.bf16.mxu0 0
      %940 = vmatpush1.bf16.msra.mxu0 %v492
      %941 = vmatprep.mubr.bf16.mxu0 %v632
      %942 = vmatmul.mubr.bf16.gmra.mrb[0].mxu0 %v631
      %v943 = vpop.f32.mrb[0].mxu0
      %v944 = vadd.f32 %v904, %v943
      %v945 = vpop.f32.mrb[0].mxu0
      %v946 = vpop.f32.mrb[0].mxu0
      %v947 = vpop.f32.mrb[0].mxu0
      %948 = vdwg.mxu0
      %949 = vmatprep.subr.bf16.mxu0 0
      %950 = vmatpush1.bf16.msra.mxu0 %v493
      %951 = vmatprep.subr.bf16.mxu0 0
      %952 = vmatpush1.bf16.msra.mxu0 %v494
      %953 = vmatprep.subr.bf16.mxu0 0
      %954 = vmatpush1.bf16.msra.mxu0 %v495
      %955 = vmatprep.subr.bf16.mxu0 0
      %956 = vmatpush1.bf16.msra.mxu0 %v496
      %957 = vmatprep.subr.bf16.mxu0 0
      %958 = vmatpush1.bf16.msra.mxu0 %v497
      %959 = vmatprep.subr.bf16.mxu0 0
      %960 = vmatpush1.bf16.msra.mxu0 %v498
      %961 = vmatprep.subr.bf16.mxu0 0
      %962 = vmatpush1.bf16.msra.mxu0 %v499
      %963 = vmatprep.subr.bf16.mxu0 0
      %964 = vmatpush1.bf16.msra.mxu0 %v500
      %965 = vmatprep.subr.bf16.mxu0 0
      %966 = vmatpush1.bf16.msra.mxu0 %v501
      %967 = vmatprep.subr.bf16.mxu0 0
      %968 = vmatpush1.bf16.msra.mxu0 %v502
      %969 = vmatprep.subr.bf16.mxu0 0
      %970 = vmatpush1.bf16.msra.mxu0 %v503
      %971 = vmatprep.subr.bf16.mxu0 0
      %972 = vmatpush1.bf16.msra.mxu0 %v504
      %973 = vmatprep.subr.bf16.mxu0 0
      %974 = vmatpush1.bf16.msra.mxu0 %v505
      %975 = vmatprep.subr.bf16.mxu0 0
      %976 = vmatpush1.bf16.msra.mxu0 %v506
      %977 = vmatprep.subr.bf16.mxu0 0
      %978 = vmatpush1.bf16.msra.mxu0 %v507
      %979 = vmatprep.subr.bf16.mxu0 0
      %980 = vmatpush1.bf16.msra.mxu0 %v508
      %981 = vmatprep.mubr.bf16.mxu0 %v634
      %982 = vmatmul.mubr.bf16.gmra.mrb[0].mxu0 %v633
      %v983 = vpop.f32.mrb[0].mxu0
      %v984 = vadd.f32 %v944, %v983
      %v985 = vpop.f32.mrb[0].mxu0
      %v986 = vpop.f32.mrb[0].mxu0
      %v987 = vpop.f32.mrb[0].mxu0
      %988 = vdwg.mxu0
      %989 = vmatprep.subr.bf16.mxu0 0
      %990 = vmatpush1.bf16.msra.mxu0 %v509
      %991 = vmatprep.subr.bf16.mxu0 0
      %992 = vmatpush1.bf16.msra.mxu0 %v510
      %993 = vmatprep.subr.bf16.mxu0 0
      %994 = vmatpush1.bf16.msra.mxu0 %v511
      %995 = vmatprep.subr.bf16.mxu0 0
      %996 = vmatpush1.bf16.msra.mxu0 %v512
      %997 = vmatprep.subr.bf16.mxu0 0
      %998 = vmatpush1.bf16.msra.mxu0 %v513
      %999 = vmatprep.subr.bf16.mxu0 0
      %1000 = vmatpush1.bf16.msra.mxu0 %v514
      %1001 = vmatprep.subr.bf16.mxu0 0
      %1002 = vmatpush1.bf16.msra.mxu0 %v515
      %1003 = vmatprep.subr.bf16.mxu0 0
      %1004 = vmatpush1.bf16.msra.mxu0 %v516
      %1005 = vmatprep.subr.bf16.mxu0 0
      %1006 = vmatpush1.bf16.msra.mxu0 %v517
      %1007 = vmatprep.subr.bf16.mxu0 0
      %1008 = vmatpush1.bf16.msra.mxu0 %v518
      %1009 = vmatprep.subr.bf16.mxu0 0
      %1010 = vmatpush1.bf16.msra.mxu0 %v519
      %1011 = vmatprep.subr.bf16.mxu0 0
      %1012 = vmatpush1.bf16.msra.mxu0 %v520
      %1013 = vmatprep.subr.bf16.mxu0 0
      %1014 = vmatpush1.bf16.msra.mxu0 %v521
      %1015 = vmatprep.subr.bf16.mxu0 0
      %1016 = vmatpush1.bf16.msra.mxu0 %v522
      %1017 = vmatprep.subr.bf16.mxu0 0
      %1018 = vmatpush1.bf16.msra.mxu0 %v523
      %1019 = vmatprep.subr.bf16.mxu0 0
      %1020 = vmatpush1.bf16.msra.mxu0 %v524
      %1021 = vmatprep.mubr.bf16.mxu0 %v636
      %1022 = vmatmul.mubr.bf16.gmra.mrb[0].mxu0 %v635
      %v1023 = vpop.f32.mrb[0].mxu0
      %v1024 = vadd.f32 %v984, %v1023
      %v1025 = vpop.f32.mrb[0].mxu0
      %v1026 = vpop.f32.mrb[0].mxu0
      %v1027 = vpop.f32.mrb[0].mxu0
      %1028 = vdwg.mxu0
      %1029 = vmatprep.subr.bf16.mxu0 0
      %1030 = vmatpush1.bf16.msra.mxu0 %v525
      %1031 = vmatprep.subr.bf16.mxu0 0
      %1032 = vmatpush1.bf16.msra.mxu0 %v526
      %1033 = vmatprep.subr.bf16.mxu0 0
      %1034 = vmatpush1.bf16.msra.mxu0 %v527
      %1035 = vmatprep.subr.bf16.mxu0 0
      %1036 = vmatpush1.bf16.msra.mxu0 %v528
      %1037 = vmatprep.subr.bf16.mxu0 0
      %1038 = vmatpush1.bf16.msra.mxu0 %v529
      %1039 = vmatprep.subr.bf16.mxu0 0
      %1040 = vmatpush1.bf16.msra.mxu0 %v530
      %1041 = vmatprep.subr.bf16.mxu0 0
      %1042 = vmatpush1.bf16.msra.mxu0 %v531
      %1043 = vmatprep.subr.bf16.mxu0 0
      %1044 = vmatpush1.bf16.msra.mxu0 %v532
      %1045 = vmatprep.subr.bf16.mxu0 0
      %1046 = vmatpush1.bf16.msra.mxu0 %v533
      %1047 = vmatprep.subr.bf16.mxu0 0
      %1048 = vmatpush1.bf16.msra.mxu0 %v534
      %1049 = vmatprep.subr.bf16.mxu0 0
      %1050 = vmatpush1.bf16.msra.mxu0 %v535
      %1051 = vmatprep.subr.bf16.mxu0 0
      %1052 = vmatpush1.bf16.msra.mxu0 %v536
      %1053 = vmatprep.subr.bf16.mxu0 0
      %1054 = vmatpush1.bf16.msra.mxu0 %v537
      %1055 = vmatprep.subr.bf16.mxu0 0
      %1056 = vmatpush1.bf16.msra.mxu0 %v538
      %1057 = vmatprep.subr.bf16.mxu0 0
      %1058 = vmatpush1.bf16.msra.mxu0 %v539
      %1059 = vmatprep.subr.bf16.mxu0 0
      %1060 = vmatpush1.bf16.msra.mxu0 %v540
      %1061 = vmatprep.mubr.bf16.mxu0 %v638
      %1062 = vmatmul.mubr.bf16.gmra.mrb[0].mxu0 %v637
      %v1063 = vpop.f32.mrb[0].mxu0
      %v1064 = vadd.f32 %v1024, %v1063
      %v1065 = vpop.f32.mrb[0].mxu0
      %v1066 = vpop.f32.mrb[0].mxu0
      %v1067 = vpop.f32.mrb[0].mxu0
      %1068 = vdwg.mxu0
      %1069 = vmatprep.subr.bf16.mxu0 0
      %1070 = vmatpush1.bf16.msra.mxu0 %v541
      %1071 = vmatprep.subr.bf16.mxu0 0
      %1072 = vmatpush1.bf16.msra.mxu0 %v542
      %1073 = vmatprep.subr.bf16.mxu0 0
      %1074 = vmatpush1.bf16.msra.mxu0 %v543
      %1075 = vmatprep.subr.bf16.mxu0 0
      %1076 = vmatpush1.bf16.msra.mxu0 %v544
      %1077 = vmatprep.subr.bf16.mxu0 0
      %1078 = vmatpush1.bf16.msra.mxu0 %v545
      %1079 = vmatprep.subr.bf16.mxu0 0
      %1080 = vmatpush1.bf16.msra.mxu0 %v546
      %1081 = vmatprep.subr.bf16.mxu0 0
      %1082 = vmatpush1.bf16.msra.mxu0 %v547
      %1083 = vmatprep.subr.bf16.mxu0 0
      %1084 = vmatpush1.bf16.msra.mxu0 %v548
      %1085 = vmatprep.subr.bf16.mxu0 0
      %1086 = vmatpush1.bf16.msra.mxu0 %v549
      %1087 = vmatprep.subr.bf16.mxu0 0
      %1088 = vmatpush1.bf16.msra.mxu0 %v550
      %1089 = vmatprep.subr.bf16.mxu0 0
      %1090 = vmatpush1.bf16.msra.mxu0 %v551
      %1091 = vmatprep.subr.bf16.mxu0 0
      %1092 = vmatpush1.bf16.msra.mxu0 %v552
      %1093 = vmatprep.subr.bf16.mxu0 0
      %1094 = vmatpush1.bf16.msra.mxu0 %v553
      %1095 = vmatprep.subr.bf16.mxu0 0
      %1096 = vmatpush1.bf16.msra.mxu0 %v554
      %1097 = vmatprep.subr.bf16.mxu0 0
      %1098 = vmatpush1.bf16.msra.mxu0 %v555
      %1099 = vmatprep.subr.bf16.mxu0 0
      %1100 = vmatpush1.bf16.msra.mxu0 %v556
      %1101 = vmatprep.mubr.bf16.mxu0 %v640
      %1102 = vmatmul.mubr.bf16.gmra.mrb[0].mxu0 %v639
      %v1103 = vpop.f32.mrb[0].mxu0
      %v1104 = vadd.f32 %v1064, %v1103
      %v1105 = vpop.f32.mrb[0].mxu0
      %v1106 = vpop.f32.mrb[0].mxu0
      %v1107 = vpop.f32.mrb[0].mxu0
      %1108 = vdwg.mxu0
      %1109 = vmatprep.subr.bf16.mxu0 0
      %1110 = vmatpush1.bf16.msra.mxu0 %v557
      %1111 = vmatprep.subr.bf16.mxu0 0
      %1112 = vmatpush1.bf16.msra.mxu0 %v558
      %1113 = vmatprep.subr.bf16.mxu0 0
      %1114 = vmatpush1.bf16.msra.mxu0 %v559
      %1115 = vmatprep.subr.bf16.mxu0 0
      %1116 = vmatpush1.bf16.msra.mxu0 %v560
      %1117 = vmatprep.subr.bf16.mxu0 0
      %1118 = vmatpush1.bf16.msra.mxu0 %v561
      %1119 = vmatprep.subr.bf16.mxu0 0
      %1120 = vmatpush1.bf16.msra.mxu0 %v562
      %1121 = vmatprep.subr.bf16.mxu0 0
      %1122 = vmatpush1.bf16.msra.mxu0 %v563
      %1123 = vmatprep.subr.bf16.mxu0 0
      %1124 = vmatpush1.bf16.msra.mxu0 %v564
      %1125 = vmatprep.subr.bf16.mxu0 0
      %1126 = vmatpush1.bf16.msra.mxu0 %v565
      %1127 = vmatprep.subr.bf16.mxu0 0
      %1128 = vmatpush1.bf16.msra.mxu0 %v566
      %1129 = vmatprep.subr.bf16.mxu0 0
      %1130 = vmatpush1.bf16.msra.mxu0 %v567
      %1131 = vmatprep.subr.bf16.mxu0 0
      %1132 = vmatpush1.bf16.msra.mxu0 %v568
      %1133 = vmatprep.subr.bf16.mxu0 0
      %1134 = vmatpush1.bf16.msra.mxu0 %v569
      %1135 = vmatprep.subr.bf16.mxu0 0
      %1136 = vmatpush1.bf16.msra.mxu0 %v570
      %1137 = vmatprep.subr.bf16.mxu0 0
      %1138 = vmatpush1.bf16.msra.mxu0 %v571
      %1139 = vmatprep.subr.bf16.mxu0 0
      %1140 = vmatpush1.bf16.msra.mxu0 %v572
      %1141 = vmatprep.mubr.bf16.mxu0 %v642
      %1142 = vmatmul.mubr.bf16.gmra.mrb[0].mxu0 %v641
      %v1143 = vpop.f32.mrb[0].mxu0
      %v1144 = vadd.f32 %v1104, %v1143
      %v1145 = vpop.f32.mrb[0].mxu0
      %v1146 = vpop.f32.mrb[0].mxu0
      %v1147 = vpop.f32.mrb[0].mxu0
      %1148 = vdwg.mxu0
      %1149 = vmatprep.subr.bf16.mxu0 0
      %1150 = vmatpush1.bf16.msra.mxu0 %v573
      %1151 = vmatprep.subr.bf16.mxu0 0
      %1152 = vmatpush1.bf16.msra.mxu0 %v574
      %1153 = vmatprep.subr.bf16.mxu0 0
      %1154 = vmatpush1.bf16.msra.mxu0 %v575
      %1155 = vmatprep.subr.bf16.mxu0 0
      %1156 = vmatpush1.bf16.msra.mxu0 %v576
      %1157 = vmatprep.subr.bf16.mxu0 0
      %1158 = vmatpush1.bf16.msra.mxu0 %v577
      %1159 = vmatprep.subr.bf16.mxu0 0
      %1160 = vmatpush1.bf16.msra.mxu0 %v578
      %1161 = vmatprep.subr.bf16.mxu0 0
      %1162 = vmatpush1.bf16.msra.mxu0 %v579
      %1163 = vmatprep.subr.bf16.mxu0 0
      %1164 = vmatpush1.bf16.msra.mxu0 %v580
      %1165 = vmatprep.subr.bf16.mxu0 0
      %1166 = vmatpush1.bf16.msra.mxu0 0
      %1167 = vmatprep.subr.bf16.mxu0 0
      %1168 = vmatpush1.bf16.msra.mxu0 0
      %1169 = vmatprep.subr.bf16.mxu0 0
      %1170 = vmatpush1.bf16.msra.mxu0 0
      %1171 = vmatprep.subr.bf16.mxu0 0
      %1172 = vmatpush1.bf16.msra.mxu0 0
      %1173 = vmatprep.subr.bf16.mxu0 0
      %1174 = vmatpush1.bf16.msra.mxu0 0
      %1175 = vmatprep.subr.bf16.mxu0 0
      %1176 = vmatpush1.bf16.msra.mxu0 0
      %1177 = vmatprep.subr.bf16.mxu0 0
      %1178 = vmatpush1.bf16.msra.mxu0 0
      %1179 = vmatprep.subr.bf16.mxu0 0
      %1180 = vmatpush1.bf16.msra.mxu0 0
      %1181 = vmatprep.mubr.bf16.mxu0 0
      %1182 = vmatmul.mubr.bf16.gmra.mrb[0].mxu0 %v643
      %v1183 = vpop.f32.mrb[0].mxu0
      %v1184 = vadd.f32 %v1144, %v1183
      %v1185 = vpop.f32.mrb[0].mxu0
      %v1186 = vpop.f32.mrb[0].mxu0
      %v1187 = vpop.f32.mrb[0].mxu0
      %1188 = vdwg.mxu0
      %v1189 = vadd.f32 %v267, %v1184
      %1190 = vst [vmem:[#allocation2] sm:$0xff] %v1189
      %p1191 = scmp.eq.s32.totalorder %s17, 7
      // Predicated region
      $region49: #{embedding_forward.7} parent=43 // pred_check
        %p1192 = pneg %p1191
      $region50: #{embedding_forward.7} parent=43 // pred_check_branch
        %1194 = sbr.rel (%p1192) target = $region52
      $region51: #{embedding_forward.7} parent=43 // pred_region
        %v1195 = vld [vmem:[#allocation2] sm:$0xff]
        %v1196 = vld [vmem:[%s2] sm:$0x1]
        %v1198 = vlaneseq
        %v1199 = vshrl.u32 %v1198, 7
        %v1200 = vsub.s32 0, %v1199
        %v1201 = vrot.slane %v1196, %v1200
        %v1203 = vmul.f32 %v1195, %v1201
        %v1204 = vld [vmem:[%s3] sm:$0x1]
        %v1206 = vlaneseq
        %v1207 = vshrl.u32 %v1206, 7
        %v1208 = vsub.s32 0, %v1207
        %v1209 = vrot.slane %v1204, %v1208
        %v1211 = vadd.f32 %v1203, %v1209
        %vm1212 = vcmp.gt.f32.partialorder %v1211, 0.0
        %v1213 = vmul.f32 %v1211, 0.1
        %v1214 = vsel %vm1212, %v1211, %v1213
        %v1215 = vld [vmem:[%s4] sm:$0xff]
        %v1216 = vld [vmem:[%s4 + $0x8] sm:$0xff]
        %v1217 = vld [vmem:[%s4 + $0x10] sm:$0xff]
        %v1218 = vld [vmem:[%s4 + $0x18] sm:$0xff]
        %v1219 = vld [vmem:[%s4 + $0x20] sm:$0xff]
        %v1220 = vld [vmem:[%s4 + $0x28] sm:$0xff]
        %v1221 = vld [vmem:[%s4 + $0x30] sm:$0xff]
        %v1222 = vld [vmem:[%s4 + $0x38] sm:$0xff]
        %v1223 = vld [vmem:[%s4 + $0x40] sm:$0xff]
        %v1224 = vld [vmem:[%s4 + $0x48] sm:$0xff]
        %v1225 = vld [vmem:[%s4 + $0x50] sm:$0xff]
        %v1226 = vld [vmem:[%s4 + $0x58] sm:$0xff]
        %v1227 = vld [vmem:[%s4 + $0x60] sm:$0xff]
        %v1228 = vld [vmem:[%s4 + $0x68] sm:$0xff]
        %v1229 = vld [vmem:[%s4 + $0x70] sm:$0xff]
        %v1230 = vld [vmem:[%s4 + $0x78] sm:$0xff]
        %v1231 = vld [vmem:[%s5] sm:$0x1]
        %v1233 = vlaneseq
        %v1234 = vshrl.u32 %v1233, 7
        %v1235 = vsub.s32 0, %v1234
        %v1236 = vrot.slane %v1231, %v1235
        %1238 = vmatprep.subr.mxu0 0.0
        %1239 = vmatpush1.msra.mxu0 %v1215
        %1240 = vmatprep.subr.mxu0 0.0
        %1241 = vmatpush1.msra.mxu0 %v1216
        %1242 = vmatprep.subr.mxu0 0.0
        %1243 = vmatpush1.msra.mxu0 %v1217
        %1244 = vmatprep.subr.mxu0 0.0
        %1245 = vmatpush1.msra.mxu0 %v1218
        %1246 = vmatprep.subr.mxu0 0.0
        %1247 = vmatpush1.msra.mxu0 %v1219
        %1248 = vmatprep.subr.mxu0 0.0
        %1249 = vmatpush1.msra.mxu0 %v1220
        %1250 = vmatprep.subr.mxu0 0.0
        %1251 = vmatpush1.msra.mxu0 %v1221
        %1252 = vmatprep.subr.mxu0 0.0
        %1253 = vmatpush1.msra.mxu0 %v1222
        %1254 = vmatprep.subr.mxu0 0.0
        %1255 = vmatpush1.msra.mxu0 %v1223
        %1256 = vmatprep.subr.mxu0 0.0
        %1257 = vmatpush1.msra.mxu0 %v1224
        %1258 = vmatprep.subr.mxu0 0.0
        %1259 = vmatpush1.msra.mxu0 %v1225
        %1260 = vmatprep.subr.mxu0 0.0
        %1261 = vmatpush1.msra.mxu0 %v1226
        %1262 = vmatprep.subr.mxu0 0.0
        %1263 = vmatpush1.msra.mxu0 %v1227
        %1264 = vmatprep.subr.mxu0 0.0
        %1265 = vmatpush1.msra.mxu0 %v1228
        %1266 = vmatprep.subr.mxu0 0.0
        %1267 = vmatpush1.msra.mxu0 %v1229
        %1268 = vmatprep.subr.mxu0 0.0
        %1269 = vmatpush1.msra.mxu0 %v1230
        %1270 = vmatprep.subr.mxu0 0.0
        %1271 = vmatpush1.msra.mxu0 0.0
        %1272 = vmatprep.subr.mxu0 0.0
        %1273 = vmatpush1.msra.mxu0 0.0
        %1274 = vmatprep.subr.mxu0 0.0
        %1275 = vmatpush1.msra.mxu0 0.0
        %1276 = vmatprep.subr.mxu0 0.0
        %1277 = vmatpush1.msra.mxu0 0.0
        %1278 = vmatprep.subr.mxu0 0.0
        %1279 = vmatpush1.msra.mxu0 0.0
        %1280 = vmatprep.subr.mxu0 0.0
        %1281 = vmatpush1.msra.mxu0 0.0
        %1282 = vmatprep.subr.mxu0 0.0
        %1283 = vmatpush1.msra.mxu0 0.0
        %1284 = vmatprep.subr.mxu0 0.0
        %1285 = vmatpush1.msra.mxu0 0.0
        %1286 = vmatprep.subr.mxu0 0.0
        %1287 = vmatpush1.msra.mxu0 0.0
        %1288 = vmatprep.subr.mxu0 0.0
        %1289 = vmatpush1.msra.mxu0 0.0
        %1290 = vmatprep.subr.mxu0 0.0
        %1291 = vmatpush1.msra.mxu0 0.0
        %1292 = vmatprep.subr.mxu0 0.0
        %1293 = vmatpush1.msra.mxu0 0.0
        %1294 = vmatprep.subr.mxu0 0.0
        %1295 = vmatpush1.msra.mxu0 0.0
        %1296 = vmatprep.subr.mxu0 0.0
        %1297 = vmatpush1.msra.mxu0 0.0
        %1298 = vmatprep.subr.mxu0 0.0
        %1299 = vmatpush1.msra.mxu0 0.0
        %1300 = vmatprep.subr.mxu0 0.0
        %1301 = vmatpush1.msra.mxu0 0.0
        %1302 = vmatprep.mubr.f32.mxu0 0.0
        %1303 = vmatmul.mubr.f32.gmra.mrb[0].mxu0 %v1214
        %v1304 = vpop.f32.mrb[0].mxu0
        %v1305 = vadd.f32 %v1236, %v1304
        %v1306 = vpop.f32.mrb[0].mxu0
        %1307 = vdwg.mxu0
        %v1308 = vtanh.pop %v1305
        %1309 = vst [vmem:[%s6] sm:$0xff] %v1308
      $region52: #{embedding_forward.7} parent=43 // pred_fallthru
        _
      // Predicated region
      $region53: #{embedding_forward.7} parent=43 // pred_check
        %p1310 = pneg %p166
      $region54: #{embedding_forward.7} parent=43 // pred_check_branch
        %1312 = sbr.rel (%p1310) target = $region56
      $region55: #{embedding_forward.7} parent=43 // pred_region
        _
      $region56: #{embedding_forward.7} parent=43 // pred_fallthru
        _
      // Predicated region
      $region57: #{embedding_forward.7} parent=43 // pred_check
        %p1313 = pneg %p166
      $region58: #{embedding_forward.7} parent=43 // pred_check_branch
        %1315 = sbr.rel (%p1313) target = $region60
      $region59: #{embedding_forward.7} parent=43 // pred_region
        _
      $region60: #{embedding_forward.7} parent=43 // pred_fallthru
        _
    $region44: #{embedding_forward.7} parent=5 // pred_fallthru
      _
    %p1316 = scmp.le.s32.totalorder 2, %s12
    // Predicated region
    $region61: #{embedding_forward.7} parent=5 // pred_check
      %p1317 = pneg %p1316
    $region62: #{embedding_forward.7} parent=5 // pred_check_branch
      %1319 = sbr.rel (%p1317) target = $region64
    $region63: #{embedding_forward.7} parent=5 // pred_region
      %s1320 = ssub.s32 %s12, 2
    $region64: #{embedding_forward.7} parent=5 // pred_fallthru
      _
  $region6: #{embedding_forward.7} parent=0 // loop_footer
    %s16 = sadd.s32 1, %s12
  $region7: #{embedding_forward.7} parent=0 // loop_footer_branch
    %11 = sbr.rel target = $region3
  $region8: #{embedding_forward.7} parent=0 // loop_exit
    _

</llo_original>
